<compile_context>
chip_gen: v5e
topology: v5e:2x2
jax: 0.10.0
libtpu: 0.0.40
codegen_flags: <defaults>
</compile_context>

<pallas_src>
import functools

import jax
import jax.numpy as jnp
import numpy as np
from jax import lax
from jax.experimental import pallas as pl
from jax.experimental.pallas import tpu as pltpu

L0 = 112      # signal length (fc1.in_features 448 = 64 ch * 7  ->  L0 = 7 * 16)
K = 7         # conv kernel size (stride 1, padding 3)
FC = 1024     # fc1 width
ROWS = 7      # valid sublane rows per example (112 = 7 * 16)
R8 = 8        # stored rows per example (row 7 is an all-zero row)


def _row_shift(a, rho):
    """a: (BT, 8, W) with row 7 all-zero.  Returns s with s[:, r, :] = a[:, r+rho, :] when
    0 <= r+rho < 7, and zeros for rows outside the signal and for row 7."""
    if rho == 0:
        return a
    bt, rr, w = a.shape
    lo = max(0, -rho)                    # leading zero rows
    hi = min(ROWS, ROWS - rho)           # exclusive end of data rows
    ndata = hi - lo
    parts = []
    if lo:
        parts.append(jnp.zeros((bt, lo, w), a.dtype))
    parts.append(a[:, lo + rho:lo + rho + ndata, :])
    tail = rr - lo - ndata
    if tail:
        parts.append(jnp.zeros((bt, tail, w), a.dtype))
    return jnp.concatenate(parts, axis=1)


def _conv_pool(a, m_ref, b_ref, f, cout, p):
    """Conv1d(k=7,pad=3) + ReLU + MaxPool1d(2) on the folded layout.

    a:     (BT, 8, W_in) bf16; row r holds the f valid input positions r*f + d along lanes.
    m_ref: (2p+1, W_in, f*cout) block-Toeplitz conv weights (one block per row shift).
    b_ref: (1, 8, f*cout) f32 bias, row 7 zero (keeps the zero-row invariant alive).
    Returns (BT, 8, (f-1)*cout) bf16; pooled position e sits at lane offset 2*e*cout.
    """
    bt, rr, w = a.shape
    acc = None
    for i, rho in enumerate(range(-p, p + 1)):
        lhs = _row_shift(a, rho).reshape(bt * rr, w)
        y = jnp.dot(lhs, m_ref[i], preferred_element_type=jnp.float32)
        acc = y if acc is None else acc + y
    y = acc.reshape(bt, rr, f * cout) + b_ref[...]
    y = jnp.maximum(y, 0.0)
    # MaxPool1d(2): positions live on lanes, so pooling is a max of two contiguous lane
    # slices of the value -- no pre-pool scratch, no stride-2 sublane reads.
    pooled = jnp.maximum(y[:, :, :(f - 1) * cout], y[:, :, cout:])
    return pooled.astype(jnp.bfloat16)


def noise_detector_kernel(x_ref,
                          m1, b1, m2, b2, m3, b3, m4, b4,
                          fw1, fb1, fw2, fb2,
                          o_ref):
    # Dropout layers are eval-mode identities (deterministic inference).
    # TODO(synk): training-mode dropout (pltpu.prng_* masks) not implemented.
    bt = x_ref.shape[0]
    a = x_ref[...]                                    # (BT, 8, 16) bf16, row 7 zero

    a = _conv_pool(a, m1, b1, f=16, cout=32, p=1)     # (BT, 8, 480)
    a = _conv_pool(a, m2, b2, f=8,  cout=32, p=1)     # (BT, 8, 224)
    a = _conv_pool(a, m3, b3, f=4,  cout=64, p=1)     # (BT, 8, 192)
    a = _conv_pool(a, m4, b4, f=2,  cout=64, p=2)     # (BT, 8, 64)

    # Flatten + fc1 + ReLU + fc2.  The flatten is a plain reshape; the dead row-7 lanes map
    # to zero rows of the packed fc1 weight, so no strided gathers / scratch are needed.
    h = a.reshape(bt, R8 * 64)
    h = jnp.dot(h, fw1[...], preferred_element_type=jnp.float32) + fb1[...]
    h = jnp.maximum(h, 0.0).astype(jnp.bfloat16)
    # NOTE: the (BT, 1) output is a 1-lane masked store; a lane-dense (1, BT) writeback is a
    # possible micro-follow-up once everything else is tuned.
    o_ref[...] = jnp.dot(h, fw2[...], preferred_element_type=jnp.float32) + fb2[...]


def pack_params(params):
    """Host-side (numpy) repacking of the PyTorch-layout weights into the kernel's folded
    block-Toeplitz layout.  Pure layout plumbing, done once per set of weights."""
    pf = [(np.asarray(w, np.float32), np.asarray(b, np.float32)) for (w, b) in params]
    (w1, b1), (w2, b2), (w3, b3), (w4, b4), (fw1, fb1), (fw2, fb2) = pf

    def conv_matrix(w, f, cin, cout, win, stride, p):
        # M[rho+p, d*stride+ci, d2*cout+c] = w[c, ci, k]  with  k = rho*f + d - d2 + 3,
        # so that (sum_rho row_shift(a, rho) @ M[rho+p])[b*8+r, d2*cout+c] equals the
        # Conv1d output at signal position r*f + d2, output channel c.
        wr = 2 * p + 1
        m = np.zeros((wr, win, f * cout), np.float32)
        for ri in range(wr):
            rho = ri - p
            for d in range(f):
                for ci in range(cin):
                    lane = d * stride + ci
                    for d2 in range(f):
                        k = rho * f + d - d2 + 3
                        if 0 <= k < K:
                            m[ri, lane, d2 * cout:(d2 + 1) * cout] = w[:, ci, k]
        return m

    def conv_bias(b, f):
        cout = b.shape[0]
        bias = np.zeros((1, R8, f * cout), np.float32)
        bias[0, :ROWS, :] = np.tile(b, f)        # row 7 stays zero -> zero-row invariant
        return bias

    m1 = conv_matrix(w1, f=16, cin=1,  cout=32, win=16,  stride=1,   p=1)
    m2 = conv_matrix(w2, f=8,  cin=32, cout=32, win=480, stride=64,  p=1)
    m3 = conv_matrix(w3, f=4,  cin=32, cout=64, win=224, stride=64,  p=1)
    m4 = conv_matrix(w4, f=2,  cin=64, cout=64, win=192, stride=128, p=2)

    # fc1: torch flattens (C=64, L=7) channel-major (index c*7 + l); the kernel feeds the
    # folded (row l)*64 + c order with a dead 8th row -> permute and zero-pad to 512 rows.
    kfw1 = np.zeros((R8 * 64, FC), np.float32)
    kfw1[:ROWS * 64] = fw1.reshape(FC, 64, ROWS).transpose(2, 1, 0).reshape(ROWS * 64, FC)
    kfw2 = np.ascontiguousarray(fw2.T)                                  # (1024, 1)

    bf16 = jnp.bfloat16
    return (jnp.asarray(m1, bf16), jnp.asarray(conv_bias(b1, 16), jnp.float32),
            jnp.asarray(m2, bf16), jnp.asarray(conv_bias(b2, 8), jnp.float32),
            jnp.asarray(m3, bf16), jnp.asarray(conv_bias(b3, 4), jnp.float32),
            jnp.asarray(m4, bf16), jnp.asarray(conv_bias(b4, 2), jnp.float32),
            jnp.asarray(kfw1, bf16), jnp.asarray(fb1.reshape(1, FC), jnp.float32),
            jnp.asarray(kfw2, bf16), jnp.asarray(fb2.reshape(1, 1), jnp.float32))


def _const_idx(ndim, g):
    return (0,) * ndim


def noise_detector_forward(x_ncl, packed, block_b=128):
    """x_ncl: (B, 1, 112) float32 (PyTorch NCL layout); packed = pack_params(params)."""
    B = x_ncl.shape[0]
    assert x_ncl.shape[1] == 1 and x_ncl.shape[2] == L0

    # Batch tile.  BT <= 128 keeps the per-step footprint ~10 MB (fits v7x's 64 MiB VMEM with
    # large headroom; v5e/v6e could take 256).  Shrink BT so small batches still give >= 2
    # "parallel" grid steps and both v7x TensorCores get work.
    BT = max(8, (int(block_b) // 8) * 8)
    while BT > 8 and (B + BT - 1) // BT < 2:
        BT //= 2
    Bp = ((B + BT - 1) // BT) * BT
    G = Bp // BT

    # Host-side layout plumbing (no arithmetic): (B,1,112) -> (Bp, 8, 16) bf16 with 16 signal
    # positions per row and one all-zero row per example (doubles as the conv edge padding).
    xs = x_ncl[:, 0, :].astype(jnp.bfloat16).reshape(B, ROWS, 16)
    xp = jnp.zeros((Bp, R8, 16), jnp.bfloat16).at[:B, :ROWS, :].set(xs)

    in_specs = [pl.BlockSpec((BT, R8, 16), lambda g: (g, 0, 0))]
    # Grid-invariant weights/biases (~2.6 MB total in bf16): constant index maps.  Their
    # default double-buffering costs < 3 MB, so pl.Buffered(1) is left as an optional knob.
    in_specs += [pl.BlockSpec(a.shape, functools.partial(_const_idx, a.ndim)) for a in packed]

    out = pl.pallas_call(
        noise_detector_kernel,
        out_shape=jax.ShapeDtypeStruct((Bp, 1), jnp.float32),
        grid=(G,),
        in_specs=in_specs,
        out_specs=pl.BlockSpec((BT, 1), lambda g: (g, 0)),
        compiler_params=pltpu.CompilerParams(
            dimension_semantics=("parallel",),
            vmem_limit_bytes=32 * 1024 * 1024),
    )(xp, *packed)
    return out[:B]


# ------------------------- pure-JAX reference (PyTorch semantics) -------------------------
def reference_forward(x_ncl, params):
    (w1, b1), (w2, b2), (w3, b3), (w4, b4), (fw1, fb1), (fw2, fb2) = params

    def conv1d(x, w, b):   # x (B, Cin, L), w (Cout, Cin, K)
        y = lax.conv_general_dilated(x, w, window_strides=(1,), padding=[(3, 3)],
                                     dimension_numbers=('NCH', 'OIH', 'NCH'))
        return y + b[None, :, None]

    def block(x, w, b):
        y = jnp.maximum(conv1d(x, w, b), 0.0)
        bn, c, l = y.shape
        return y.reshape(bn, c, l // 2, 2).max(axis=-1)

    x = block(x_ncl, w1, b1)
    x = block(x, w2, b2)
    x = block(x, w3, b3)
    x = block(x, w4, b4)
    flat = x.reshape(x.shape[0], -1)            # (B, 448), channel-major like torch Flatten
    h = jnp.maximum(flat @ fw1.T + fb1, 0.0)
    return h @ fw2.T + fb2


def init_params(key):
    ks = jax.random.split(key, 12)
    w = lambda k, shape, fan_in: jax.random.normal(k, shape, jnp.float32) / np.sqrt(fan_in)
    return [
        (w(ks[0], (32, 1, K), 1 * K),   w(ks[1], (32,), 1 * K)),
        (w(ks[2], (32, 32, K), 32 * K), w(ks[3], (32,), 32 * K)),
        (w(ks[4], (64, 32, K), 32 * K), w(ks[5], (64,), 32 * K)),
        (w(ks[6], (64, 64, K), 64 * K), w(ks[7], (64,), 64 * K)),
        (w(ks[8], (FC, 448), 448),      w(ks[9], (FC,), 448)),
        (w(ks[10], (1, FC), FC),        w(ks[11], (1,), FC)),
    ]


if __name__ == "__main__":
    key = jax.random.PRNGKey(0)
    pkey, xkey = jax.random.split(key)
    params = init_params(pkey)
    packed = pack_params(params)

    # Small demo batch: (16 examples, 1 channel, length 112).  The auto batch-tiling picks
    # BT=8 -> a 2-step "parallel" grid, exercising the tiling and megacore sharding.
    x = jax.random.normal(xkey, (16, 1, L0), jnp.float32)

    fwd = jax.jit(functools.partial(noise_detector_forward, block_b=128))
    out = jax.block_until_ready(fwd(x, packed))

    ref = reference_forward(x, params)
    # bf16 MXU operands with f32 accumulation -> compare against the f32 reference with a
    # correspondingly relaxed tolerance.
    np.testing.assert_allclose(np.asarray(out, np.float32), np.asarray(ref, np.float32),
                               rtol=5e-2, atol=5e-2)
    print("KERNEL_OK")
</pallas_src>

<mosaic_0001>
module attributes {stable_mosaic.version = 11 : i64} {
  func.func @noise_detector_kernel(%arg0: i32, %arg1: memref<8x8x16xbf16, #tpu.memory_space<vmem>>, %arg2: memref<3x16x512xbf16, #tpu.memory_space<vmem>>, %arg3: memref<1x8x512xf32, #tpu.memory_space<vmem>>, %arg4: memref<3x480x256xbf16, #tpu.memory_space<vmem>>, %arg5: memref<1x8x256xf32, #tpu.memory_space<vmem>>, %arg6: memref<3x224x256xbf16, #tpu.memory_space<vmem>>, %arg7: memref<1x8x256xf32, #tpu.memory_space<vmem>>, %arg8: memref<5x192x128xbf16, #tpu.memory_space<vmem>>, %arg9: memref<1x8x128xf32, #tpu.memory_space<vmem>>, %arg10: memref<512x1024xbf16, #tpu.memory_space<vmem>>, %arg11: memref<1x1024xf32, #tpu.memory_space<vmem>>, %arg12: memref<1024x1xbf16, #tpu.memory_space<vmem>>, %arg13: memref<1x1xf32, #tpu.memory_space<vmem>>, %arg14: memref<8x1xf32, #tpu.memory_space<vmem>>) attributes {dimension_semantics = [#tpu.dimension_semantics<parallel>], iteration_bounds = array<i64: 2>, scalar_prefetch = 0 : i64, scratch_operands = 0 : i64, tpu.core_type = #tpu.core_type<tc>, window_params = [{transform_indices = @transform_0, window_bounds = array<i64: 8, 8, 16>}, {pipeline_mode = #tpu.pipeline_mode<synchronous>, transform_indices = @transform_1, window_bounds = array<i64: 3, 16, 512>}, {pipeline_mode = #tpu.pipeline_mode<synchronous>, transform_indices = @transform_2, window_bounds = array<i64: 1, 8, 512>}, {pipeline_mode = #tpu.pipeline_mode<synchronous>, transform_indices = @transform_3, window_bounds = array<i64: 3, 480, 256>}, {pipeline_mode = #tpu.pipeline_mode<synchronous>, transform_indices = @transform_4, window_bounds = array<i64: 1, 8, 256>}, {pipeline_mode = #tpu.pipeline_mode<synchronous>, transform_indices = @transform_5, window_bounds = array<i64: 3, 224, 256>}, {pipeline_mode = #tpu.pipeline_mode<synchronous>, transform_indices = @transform_6, window_bounds = array<i64: 1, 8, 256>}, {pipeline_mode = #tpu.pipeline_mode<synchronous>, transform_indices = @transform_7, window_bounds = array<i64: 5, 192, 128>}, {pipeline_mode = #tpu.pipeline_mode<synchronous>, transform_indices = @transform_8, window_bounds = array<i64: 1, 8, 128>}, {pipeline_mode = #tpu.pipeline_mode<synchronous>, transform_indices = @transform_9, window_bounds = array<i64: 512, 1024>}, {pipeline_mode = #tpu.pipeline_mode<synchronous>, transform_indices = @transform_10, window_bounds = array<i64: 1, 1024>}, {pipeline_mode = #tpu.pipeline_mode<synchronous>, transform_indices = @transform_11, window_bounds = array<i64: 1024, 1>}, {pipeline_mode = #tpu.pipeline_mode<synchronous>, transform_indices = @transform_12, window_bounds = array<i64: 1, 1>}, {transform_indices = @transform_13, window_bounds = array<i64: 8, 1>}]} {
    %c0 = arith.constant 0 : index
    %c0_0 = arith.constant 0 : index
    %c0_1 = arith.constant 0 : index
    %0 = vector.load %arg1[%c0, %c0_0, %c0_1] : memref<8x8x16xbf16, #tpu.memory_space<vmem>>, vector<8x8x16xbf16>
    %cst = arith.constant 0.000000e+00 : bf16
    %1 = vector.broadcast %cst : bf16 to vector<8x1x16xbf16>
    %2 = vector.extract_strided_slice %0 {offsets = [0, 0, 0], sizes = [8, 6, 16], strides = [1, 1, 1]} : vector<8x8x16xbf16> to vector<8x6x16xbf16>
    %cst_2 = arith.constant 0.000000e+00 : bf16
    %3 = vector.broadcast %cst_2 : bf16 to vector<8x1x16xbf16>
    %4 = tpu.concatenate %1, %2, %3 in 1 : vector<8x1x16xbf16>, vector<8x6x16xbf16>, vector<8x1x16xbf16> -> vector<8x8x16xbf16>
    %5 = vector.shape_cast %4 : vector<8x8x16xbf16> to vector<64x16xbf16>
    %c0_3 = arith.constant 0 : index
    %c0_4 = arith.constant 0 : index
    %c0_5 = arith.constant 0 : index
    %6 = vector.load %arg2[%c0_3, %c0_4, %c0_5] : memref<3x16x512xbf16, #tpu.memory_space<vmem>>, vector<1x16x512xbf16>
    %7 = vector.shape_cast %6 : vector<1x16x512xbf16> to vector<16x512xbf16>
    %cst_6 = arith.constant dense<0.000000e+00> : vector<64x512xf32>
    %8 = tpu.matmul %5, %7, %cst_6 {dimension_numbers = #tpu.dot_dimension_numbers<[1], [0], [0], [1], [0, 0, 1, 1], [], []>} : vector<64x16xbf16>, vector<16x512xbf16>, vector<64x512xf32> -> vector<64x512xf32>
    %9 = vector.shape_cast %0 : vector<8x8x16xbf16> to vector<64x16xbf16>
    %c1 = arith.constant 1 : index
    %c0_7 = arith.constant 0 : index
    %c0_8 = arith.constant 0 : index
    %10 = vector.load %arg2[%c1, %c0_7, %c0_8] : memref<3x16x512xbf16, #tpu.memory_space<vmem>>, vector<1x16x512xbf16>
    %11 = vector.shape_cast %10 : vector<1x16x512xbf16> to vector<16x512xbf16>
    %cst_9 = arith.constant dense<0.000000e+00> : vector<64x512xf32>
    %12 = tpu.matmul %9, %11, %cst_9 {dimension_numbers = #tpu.dot_dimension_numbers<[1], [0], [0], [1], [0, 0, 1, 1], [], []>} : vector<64x16xbf16>, vector<16x512xbf16>, vector<64x512xf32> -> vector<64x512xf32>
    %13 = arith.addf %8, %12 : vector<64x512xf32>
    %14 = vector.extract_strided_slice %0 {offsets = [0, 1, 0], sizes = [8, 6, 16], strides = [1, 1, 1]} : vector<8x8x16xbf16> to vector<8x6x16xbf16>
    %cst_10 = arith.constant 0.000000e+00 : bf16
    %15 = vector.broadcast %cst_10 : bf16 to vector<8x2x16xbf16>
    %16 = tpu.concatenate %14, %15 in 1 : vector<8x6x16xbf16>, vector<8x2x16xbf16> -> vector<8x8x16xbf16>
    %17 = vector.shape_cast %16 : vector<8x8x16xbf16> to vector<64x16xbf16>
    %c2 = arith.constant 2 : index
    %c0_11 = arith.constant 0 : index
    %c0_12 = arith.constant 0 : index
    %18 = vector.load %arg2[%c2, %c0_11, %c0_12] : memref<3x16x512xbf16, #tpu.memory_space<vmem>>, vector<1x16x512xbf16>
    %19 = vector.shape_cast %18 : vector<1x16x512xbf16> to vector<16x512xbf16>
    %cst_13 = arith.constant dense<0.000000e+00> : vector<64x512xf32>
    %20 = tpu.matmul %17, %19, %cst_13 {dimension_numbers = #tpu.dot_dimension_numbers<[1], [0], [0], [1], [0, 0, 1, 1], [], []>} : vector<64x16xbf16>, vector<16x512xbf16>, vector<64x512xf32> -> vector<64x512xf32>
    %21 = arith.addf %13, %20 : vector<64x512xf32>
    %22 = vector.shape_cast %21 : vector<64x512xf32> to vector<8x8x512xf32>
    %c0_14 = arith.constant 0 : index
    %c0_15 = arith.constant 0 : index
    %c0_16 = arith.constant 0 : index
    %23 = vector.load %arg3[%c0_14, %c0_15, %c0_16] : memref<1x8x512xf32, #tpu.memory_space<vmem>>, vector<1x8x512xf32>
    %24 = vector.broadcast %23 : vector<1x8x512xf32> to vector<8x8x512xf32>
    %25 = arith.addf %22, %24 : vector<8x8x512xf32>
    %cst_17 = arith.constant 0.000000e+00 : f32
    %26 = vector.broadcast %cst_17 : f32 to vector<8x8x512xf32>
    %27 = arith.maximumf %25, %26 : vector<8x8x512xf32>
    %28 = vector.extract_strided_slice %27 {offsets = [0, 0, 0], sizes = [8, 8, 480], strides = [1, 1, 1]} : vector<8x8x512xf32> to vector<8x8x480xf32>
    %29 = vector.extract_strided_slice %27 {offsets = [0, 0, 32], sizes = [8, 8, 480], strides = [1, 1, 1]} : vector<8x8x512xf32> to vector<8x8x480xf32>
    %30 = arith.maximumf %28, %29 : vector<8x8x480xf32>
    %31 = arith.truncf %30 : vector<8x8x480xf32> to vector<8x8x480xbf16>
    %cst_18 = arith.constant 0.000000e+00 : bf16
    %32 = vector.broadcast %cst_18 : bf16 to vector<8x1x480xbf16>
    %33 = vector.extract_strided_slice %31 {offsets = [0, 0, 0], sizes = [8, 6, 480], strides = [1, 1, 1]} : vector<8x8x480xbf16> to vector<8x6x480xbf16>
    %cst_19 = arith.constant 0.000000e+00 : bf16
    %34 = vector.broadcast %cst_19 : bf16 to vector<8x1x480xbf16>
    %35 = tpu.concatenate %32, %33, %34 in 1 : vector<8x1x480xbf16>, vector<8x6x480xbf16>, vector<8x1x480xbf16> -> vector<8x8x480xbf16>
    %36 = vector.shape_cast %35 : vector<8x8x480xbf16> to vector<64x480xbf16>
    %c0_20 = arith.constant 0 : index
    %c0_21 = arith.constant 0 : index
    %c0_22 = arith.constant 0 : index
    %37 = vector.load %arg4[%c0_20, %c0_21, %c0_22] : memref<3x480x256xbf16, #tpu.memory_space<vmem>>, vector<1x480x256xbf16>
    %38 = vector.shape_cast %37 : vector<1x480x256xbf16> to vector<480x256xbf16>
    %cst_23 = arith.constant dense<0.000000e+00> : vector<64x256xf32>
    %39 = tpu.matmul %36, %38, %cst_23 {dimension_numbers = #tpu.dot_dimension_numbers<[1], [0], [0], [1], [0, 0, 1, 1], [], []>} : vector<64x480xbf16>, vector<480x256xbf16>, vector<64x256xf32> -> vector<64x256xf32>
    %40 = vector.shape_cast %31 : vector<8x8x480xbf16> to vector<64x480xbf16>
    %c1_24 = arith.constant 1 : index
    %c0_25 = arith.constant 0 : index
    %c0_26 = arith.constant 0 : index
    %41 = vector.load %arg4[%c1_24, %c0_25, %c0_26] : memref<3x480x256xbf16, #tpu.memory_space<vmem>>, vector<1x480x256xbf16>
    %42 = vector.shape_cast %41 : vector<1x480x256xbf16> to vector<480x256xbf16>
    %cst_27 = arith.constant dense<0.000000e+00> : vector<64x256xf32>
    %43 = tpu.matmul %40, %42, %cst_27 {dimension_numbers = #tpu.dot_dimension_numbers<[1], [0], [0], [1], [0, 0, 1, 1], [], []>} : vector<64x480xbf16>, vector<480x256xbf16>, vector<64x256xf32> -> vector<64x256xf32>
    %44 = arith.addf %39, %43 : vector<64x256xf32>
    %45 = vector.extract_strided_slice %31 {offsets = [0, 1, 0], sizes = [8, 6, 480], strides = [1, 1, 1]} : vector<8x8x480xbf16> to vector<8x6x480xbf16>
    %cst_28 = arith.constant 0.000000e+00 : bf16
    %46 = vector.broadcast %cst_28 : bf16 to vector<8x2x480xbf16>
    %47 = tpu.concatenate %45, %46 in 1 : vector<8x6x480xbf16>, vector<8x2x480xbf16> -> vector<8x8x480xbf16>
    %48 = vector.shape_cast %47 : vector<8x8x480xbf16> to vector<64x480xbf16>
    %c2_29 = arith.constant 2 : index
    %c0_30 = arith.constant 0 : index
    %c0_31 = arith.constant 0 : index
    %49 = vector.load %arg4[%c2_29, %c0_30, %c0_31] : memref<3x480x256xbf16, #tpu.memory_space<vmem>>, vector<1x480x256xbf16>
    %50 = vector.shape_cast %49 : vector<1x480x256xbf16> to vector<480x256xbf16>
    %cst_32 = arith.constant dense<0.000000e+00> : vector<64x256xf32>
    %51 = tpu.matmul %48, %50, %cst_32 {dimension_numbers = #tpu.dot_dimension_numbers<[1], [0], [0], [1], [0, 0, 1, 1], [], []>} : vector<64x480xbf16>, vector<480x256xbf16>, vector<64x256xf32> -> vector<64x256xf32>
    %52 = arith.addf %44, %51 : vector<64x256xf32>
    %53 = vector.shape_cast %52 : vector<64x256xf32> to vector<8x8x256xf32>
    %c0_33 = arith.constant 0 : index
    %c0_34 = arith.constant 0 : index
    %c0_35 = arith.constant 0 : index
    %54 = vector.load %arg5[%c0_33, %c0_34, %c0_35] : memref<1x8x256xf32, #tpu.memory_space<vmem>>, vector<1x8x256xf32>
    %55 = vector.broadcast %54 : vector<1x8x256xf32> to vector<8x8x256xf32>
    %56 = arith.addf %53, %55 : vector<8x8x256xf32>
    %cst_36 = arith.constant 0.000000e+00 : f32
    %57 = vector.broadcast %cst_36 : f32 to vector<8x8x256xf32>
    %58 = arith.maximumf %56, %57 : vector<8x8x256xf32>
    %59 = vector.extract_strided_slice %58 {offsets = [0, 0, 0], sizes = [8, 8, 224], strides = [1, 1, 1]} : vector<8x8x256xf32> to vector<8x8x224xf32>
    %60 = vector.extract_strided_slice %58 {offsets = [0, 0, 32], sizes = [8, 8, 224], strides = [1, 1, 1]} : vector<8x8x256xf32> to vector<8x8x224xf32>
    %61 = arith.maximumf %59, %60 : vector<8x8x224xf32>
    %62 = arith.truncf %61 : vector<8x8x224xf32> to vector<8x8x224xbf16>
    %cst_37 = arith.constant 0.000000e+00 : bf16
    %63 = vector.broadcast %cst_37 : bf16 to vector<8x1x224xbf16>
    %64 = vector.extract_strided_slice %62 {offsets = [0, 0, 0], sizes = [8, 6, 224], strides = [1, 1, 1]} : vector<8x8x224xbf16> to vector<8x6x224xbf16>
    %cst_38 = arith.constant 0.000000e+00 : bf16
    %65 = vector.broadcast %cst_38 : bf16 to vector<8x1x224xbf16>
    %66 = tpu.concatenate %63, %64, %65 in 1 : vector<8x1x224xbf16>, vector<8x6x224xbf16>, vector<8x1x224xbf16> -> vector<8x8x224xbf16>
    %67 = vector.shape_cast %66 : vector<8x8x224xbf16> to vector<64x224xbf16>
    %c0_39 = arith.constant 0 : index
    %c0_40 = arith.constant 0 : index
    %c0_41 = arith.constant 0 : index
    %68 = vector.load %arg6[%c0_39, %c0_40, %c0_41] : memref<3x224x256xbf16, #tpu.memory_space<vmem>>, vector<1x224x256xbf16>
    %69 = vector.shape_cast %68 : vector<1x224x256xbf16> to vector<224x256xbf16>
    %cst_42 = arith.constant dense<0.000000e+00> : vector<64x256xf32>
    %70 = tpu.matmul %67, %69, %cst_42 {dimension_numbers = #tpu.dot_dimension_numbers<[1], [0], [0], [1], [0, 0, 1, 1], [], []>} : vector<64x224xbf16>, vector<224x256xbf16>, vector<64x256xf32> -> vector<64x256xf32>
    %71 = vector.shape_cast %62 : vector<8x8x224xbf16> to vector<64x224xbf16>
    %c1_43 = arith.constant 1 : index
    %c0_44 = arith.constant 0 : index
    %c0_45 = arith.constant 0 : index
    %72 = vector.load %arg6[%c1_43, %c0_44, %c0_45] : memref<3x224x256xbf16, #tpu.memory_space<vmem>>, vector<1x224x256xbf16>
    %73 = vector.shape_cast %72 : vector<1x224x256xbf16> to vector<224x256xbf16>
    %cst_46 = arith.constant dense<0.000000e+00> : vector<64x256xf32>
    %74 = tpu.matmul %71, %73, %cst_46 {dimension_numbers = #tpu.dot_dimension_numbers<[1], [0], [0], [1], [0, 0, 1, 1], [], []>} : vector<64x224xbf16>, vector<224x256xbf16>, vector<64x256xf32> -> vector<64x256xf32>
    %75 = arith.addf %70, %74 : vector<64x256xf32>
    %76 = vector.extract_strided_slice %62 {offsets = [0, 1, 0], sizes = [8, 6, 224], strides = [1, 1, 1]} : vector<8x8x224xbf16> to vector<8x6x224xbf16>
    %cst_47 = arith.constant 0.000000e+00 : bf16
    %77 = vector.broadcast %cst_47 : bf16 to vector<8x2x224xbf16>
    %78 = tpu.concatenate %76, %77 in 1 : vector<8x6x224xbf16>, vector<8x2x224xbf16> -> vector<8x8x224xbf16>
    %79 = vector.shape_cast %78 : vector<8x8x224xbf16> to vector<64x224xbf16>
    %c2_48 = arith.constant 2 : index
    %c0_49 = arith.constant 0 : index
    %c0_50 = arith.constant 0 : index
    %80 = vector.load %arg6[%c2_48, %c0_49, %c0_50] : memref<3x224x256xbf16, #tpu.memory_space<vmem>>, vector<1x224x256xbf16>
    %81 = vector.shape_cast %80 : vector<1x224x256xbf16> to vector<224x256xbf16>
    %cst_51 = arith.constant dense<0.000000e+00> : vector<64x256xf32>
    %82 = tpu.matmul %79, %81, %cst_51 {dimension_numbers = #tpu.dot_dimension_numbers<[1], [0], [0], [1], [0, 0, 1, 1], [], []>} : vector<64x224xbf16>, vector<224x256xbf16>, vector<64x256xf32> -> vector<64x256xf32>
    %83 = arith.addf %75, %82 : vector<64x256xf32>
    %84 = vector.shape_cast %83 : vector<64x256xf32> to vector<8x8x256xf32>
    %c0_52 = arith.constant 0 : index
    %c0_53 = arith.constant 0 : index
    %c0_54 = arith.constant 0 : index
    %85 = vector.load %arg7[%c0_52, %c0_53, %c0_54] : memref<1x8x256xf32, #tpu.memory_space<vmem>>, vector<1x8x256xf32>
    %86 = vector.broadcast %85 : vector<1x8x256xf32> to vector<8x8x256xf32>
    %87 = arith.addf %84, %86 : vector<8x8x256xf32>
    %cst_55 = arith.constant 0.000000e+00 : f32
    %88 = vector.broadcast %cst_55 : f32 to vector<8x8x256xf32>
    %89 = arith.maximumf %87, %88 : vector<8x8x256xf32>
    %90 = vector.extract_strided_slice %89 {offsets = [0, 0, 0], sizes = [8, 8, 192], strides = [1, 1, 1]} : vector<8x8x256xf32> to vector<8x8x192xf32>
    %91 = vector.extract_strided_slice %89 {offsets = [0, 0, 64], sizes = [8, 8, 192], strides = [1, 1, 1]} : vector<8x8x256xf32> to vector<8x8x192xf32>
    %92 = arith.maximumf %90, %91 : vector<8x8x192xf32>
    %93 = arith.truncf %92 : vector<8x8x192xf32> to vector<8x8x192xbf16>
    %cst_56 = arith.constant 0.000000e+00 : bf16
    %94 = vector.broadcast %cst_56 : bf16 to vector<8x2x192xbf16>
    %95 = vector.extract_strided_slice %93 {offsets = [0, 0, 0], sizes = [8, 5, 192], strides = [1, 1, 1]} : vector<8x8x192xbf16> to vector<8x5x192xbf16>
    %cst_57 = arith.constant 0.000000e+00 : bf16
    %96 = vector.broadcast %cst_57 : bf16 to vector<8x1x192xbf16>
    %97 = tpu.concatenate %94, %95, %96 in 1 : vector<8x2x192xbf16>, vector<8x5x192xbf16>, vector<8x1x192xbf16> -> vector<8x8x192xbf16>
    %98 = vector.shape_cast %97 : vector<8x8x192xbf16> to vector<64x192xbf16>
    %c0_58 = arith.constant 0 : index
    %c0_59 = arith.constant 0 : index
    %c0_60 = arith.constant 0 : index
    %99 = vector.load %arg8[%c0_58, %c0_59, %c0_60] : memref<5x192x128xbf16, #tpu.memory_space<vmem>>, vector<1x192x128xbf16>
    %100 = vector.shape_cast %99 : vector<1x192x128xbf16> to vector<192x128xbf16>
    %cst_61 = arith.constant dense<0.000000e+00> : vector<64x128xf32>
    %101 = tpu.matmul %98, %100, %cst_61 {dimension_numbers = #tpu.dot_dimension_numbers<[1], [0], [0], [1], [0, 0, 1, 1], [], []>} : vector<64x192xbf16>, vector<192x128xbf16>, vector<64x128xf32> -> vector<64x128xf32>
    %cst_62 = arith.constant 0.000000e+00 : bf16
    %102 = vector.broadcast %cst_62 : bf16 to vector<8x1x192xbf16>
    %103 = vector.extract_strided_slice %93 {offsets = [0, 0, 0], sizes = [8, 6, 192], strides = [1, 1, 1]} : vector<8x8x192xbf16> to vector<8x6x192xbf16>
    %cst_63 = arith.constant 0.000000e+00 : bf16
    %104 = vector.broadcast %cst_63 : bf16 to vector<8x1x192xbf16>
    %105 = tpu.concatenate %102, %103, %104 in 1 : vector<8x1x192xbf16>, vector<8x6x192xbf16>, vector<8x1x192xbf16> -> vector<8x8x192xbf16>
    %106 = vector.shape_cast %105 : vector<8x8x192xbf16> to vector<64x192xbf16>
    %c1_64 = arith.constant 1 : index
    %c0_65 = arith.constant 0 : index
    %c0_66 = arith.constant 0 : index
    %107 = vector.load %arg8[%c1_64, %c0_65, %c0_66] : memref<5x192x128xbf16, #tpu.memory_space<vmem>>, vector<1x192x128xbf16>
    %108 = vector.shape_cast %107 : vector<1x192x128xbf16> to vector<192x128xbf16>
    %cst_67 = arith.constant dense<0.000000e+00> : vector<64x128xf32>
    %109 = tpu.matmul %106, %108, %cst_67 {dimension_numbers = #tpu.dot_dimension_numbers<[1], [0], [0], [1], [0, 0, 1, 1], [], []>} : vector<64x192xbf16>, vector<192x128xbf16>, vector<64x128xf32> -> vector<64x128xf32>
    %110 = arith.addf %101, %109 : vector<64x128xf32>
    %111 = vector.shape_cast %93 : vector<8x8x192xbf16> to vector<64x192xbf16>
    %c2_68 = arith.constant 2 : index
    %c0_69 = arith.constant 0 : index
    %c0_70 = arith.constant 0 : index
    %112 = vector.load %arg8[%c2_68, %c0_69, %c0_70] : memref<5x192x128xbf16, #tpu.memory_space<vmem>>, vector<1x192x128xbf16>
    %113 = vector.shape_cast %112 : vector<1x192x128xbf16> to vector<192x128xbf16>
    %cst_71 = arith.constant dense<0.000000e+00> : vector<64x128xf32>
    %114 = tpu.matmul %111, %113, %cst_71 {dimension_numbers = #tpu.dot_dimension_numbers<[1], [0], [0], [1], [0, 0, 1, 1], [], []>} : vector<64x192xbf16>, vector<192x128xbf16>, vector<64x128xf32> -> vector<64x128xf32>
    %115 = arith.addf %110, %114 : vector<64x128xf32>
    %116 = vector.extract_strided_slice %93 {offsets = [0, 1, 0], sizes = [8, 6, 192], strides = [1, 1, 1]} : vector<8x8x192xbf16> to vector<8x6x192xbf16>
    %cst_72 = arith.constant 0.000000e+00 : bf16
    %117 = vector.broadcast %cst_72 : bf16 to vector<8x2x192xbf16>
    %118 = tpu.concatenate %116, %117 in 1 : vector<8x6x192xbf16>, vector<8x2x192xbf16> -> vector<8x8x192xbf16>
    %119 = vector.shape_cast %118 : vector<8x8x192xbf16> to vector<64x192xbf16>
    %c3 = arith.constant 3 : index
    %c0_73 = arith.constant 0 : index
    %c0_74 = arith.constant 0 : index
    %120 = vector.load %arg8[%c3, %c0_73, %c0_74] : memref<5x192x128xbf16, #tpu.memory_space<vmem>>, vector<1x192x128xbf16>
    %121 = vector.shape_cast %120 : vector<1x192x128xbf16> to vector<192x128xbf16>
    %cst_75 = arith.constant dense<0.000000e+00> : vector<64x128xf32>
    %122 = tpu.matmul %119, %121, %cst_75 {dimension_numbers = #tpu.dot_dimension_numbers<[1], [0], [0], [1], [0, 0, 1, 1], [], []>} : vector<64x192xbf16>, vector<192x128xbf16>, vector<64x128xf32> -> vector<64x128xf32>
    %123 = arith.addf %115, %122 : vector<64x128xf32>
    %124 = vector.extract_strided_slice %93 {offsets = [0, 2, 0], sizes = [8, 5, 192], strides = [1, 1, 1]} : vector<8x8x192xbf16> to vector<8x5x192xbf16>
    %cst_76 = arith.constant 0.000000e+00 : bf16
    %125 = vector.broadcast %cst_76 : bf16 to vector<8x3x192xbf16>
    %126 = tpu.concatenate %124, %125 in 1 : vector<8x5x192xbf16>, vector<8x3x192xbf16> -> vector<8x8x192xbf16>
    %127 = vector.shape_cast %126 : vector<8x8x192xbf16> to vector<64x192xbf16>
    %c4 = arith.constant 4 : index
    %c0_77 = arith.constant 0 : index
    %c0_78 = arith.constant 0 : index
    %128 = vector.load %arg8[%c4, %c0_77, %c0_78] : memref<5x192x128xbf16, #tpu.memory_space<vmem>>, vector<1x192x128xbf16>
    %129 = vector.shape_cast %128 : vector<1x192x128xbf16> to vector<192x128xbf16>
    %cst_79 = arith.constant dense<0.000000e+00> : vector<64x128xf32>
    %130 = tpu.matmul %127, %129, %cst_79 {dimension_numbers = #tpu.dot_dimension_numbers<[1], [0], [0], [1], [0, 0, 1, 1], [], []>} : vector<64x192xbf16>, vector<192x128xbf16>, vector<64x128xf32> -> vector<64x128xf32>
    %131 = arith.addf %123, %130 : vector<64x128xf32>
    %132 = vector.shape_cast %131 : vector<64x128xf32> to vector<8x8x128xf32>
    %c0_80 = arith.constant 0 : index
    %c0_81 = arith.constant 0 : index
    %c0_82 = arith.constant 0 : index
    %133 = vector.load %arg9[%c0_80, %c0_81, %c0_82] : memref<1x8x128xf32, #tpu.memory_space<vmem>>, vector<1x8x128xf32>
    %134 = vector.broadcast %133 : vector<1x8x128xf32> to vector<8x8x128xf32>
    %135 = arith.addf %132, %134 : vector<8x8x128xf32>
    %cst_83 = arith.constant 0.000000e+00 : f32
    %136 = vector.broadcast %cst_83 : f32 to vector<8x8x128xf32>
    %137 = arith.maximumf %135, %136 : vector<8x8x128xf32>
    %138 = vector.extract_strided_slice %137 {offsets = [0, 0, 0], sizes = [8, 8, 64], strides = [1, 1, 1]} : vector<8x8x128xf32> to vector<8x8x64xf32>
    %139 = vector.extract_strided_slice %137 {offsets = [0, 0, 64], sizes = [8, 8, 64], strides = [1, 1, 1]} : vector<8x8x128xf32> to vector<8x8x64xf32>
    %140 = arith.maximumf %138, %139 : vector<8x8x64xf32>
    %141 = arith.truncf %140 : vector<8x8x64xf32> to vector<8x8x64xbf16>
    %142 = vector.shape_cast %141 : vector<8x8x64xbf16> to vector<8x512xbf16>
    %c0_84 = arith.constant 0 : index
    %c0_85 = arith.constant 0 : index
    %143 = vector.load %arg10[%c0_84, %c0_85] : memref<512x1024xbf16, #tpu.memory_space<vmem>>, vector<512x1024xbf16>
    %cst_86 = arith.constant dense<0.000000e+00> : vector<8x1024xf32>
    %144 = tpu.matmul %142, %143, %cst_86 {dimension_numbers = #tpu.dot_dimension_numbers<[1], [0], [0], [1], [0, 0, 1, 1], [], []>} : vector<8x512xbf16>, vector<512x1024xbf16>, vector<8x1024xf32> -> vector<8x1024xf32>
    %c0_87 = arith.constant 0 : index
    %c0_88 = arith.constant 0 : index
    %145 = vector.load %arg11[%c0_87, %c0_88] : memref<1x1024xf32, #tpu.memory_space<vmem>>, vector<1x1024xf32>
    %146 = vector.broadcast %145 : vector<1x1024xf32> to vector<8x1024xf32>
    %147 = arith.addf %144, %146 : vector<8x1024xf32>
    %cst_89 = arith.constant 0.000000e+00 : f32
    %148 = vector.broadcast %cst_89 : f32 to vector<8x1024xf32>
    %149 = arith.maximumf %147, %148 : vector<8x1024xf32>
    %150 = arith.truncf %149 : vector<8x1024xf32> to vector<8x1024xbf16>
    %c0_90 = arith.constant 0 : index
    %c0_91 = arith.constant 0 : index
    %151 = vector.load %arg12[%c0_90, %c0_91] : memref<1024x1xbf16, #tpu.memory_space<vmem>>, vector<1024x1xbf16>
    %cst_92 = arith.constant dense<0.000000e+00> : vector<8x1xf32>
    %152 = tpu.matmul %150, %151, %cst_92 {dimension_numbers = #tpu.dot_dimension_numbers<[1], [0], [0], [1], [0, 0, 1, 1], [], []>} : vector<8x1024xbf16>, vector<1024x1xbf16>, vector<8x1xf32> -> vector<8x1xf32>
    %c0_93 = arith.constant 0 : index
    %c0_94 = arith.constant 0 : index
    %153 = vector.load %arg13[%c0_93, %c0_94] : memref<1x1xf32, #tpu.memory_space<vmem>>, vector<1x1xf32>
    %154 = vector.broadcast %153 : vector<1x1xf32> to vector<8x1xf32>
    %155 = arith.addf %152, %154 : vector<8x1xf32>
    %c0_95 = arith.constant 0 : index
    %c0_96 = arith.constant 0 : index
    %156 = vector.load %arg14[%c0_95, %c0_96] : memref<8x1xf32, #tpu.memory_space<vmem>>, vector<8x1xf32>
    tpu.vector_store %arg14[%c0_95, %c0_96], %155 {strides = array<i32>} : memref<8x1xf32, #tpu.memory_space<vmem>>, vector<8x1xf32>,
    return
  }
  func.func @transform_0(%arg0: i32) -> (i32, i32, i32) {
    %c0_i32 = arith.constant 0 : i32
    %c0_i32_0 = arith.constant 0 : i32
    %c0_i32_1 = arith.constant 0 : i32
    return %arg0, %c0_i32, %c0_i32_0 : i32, i32, i32
  }
  func.func @transform_1(%arg0: i32) -> (i32, i32, i32) {
    %c0_i32 = arith.constant 0 : i32
    %c0_i32_0 = arith.constant 0 : i32
    %c0_i32_1 = arith.constant 0 : i32
    %c0_i32_2 = arith.constant 0 : i32
    return %c0_i32, %c0_i32_0, %c0_i32_1 : i32, i32, i32
  }
  func.func @transform_2(%arg0: i32) -> (i32, i32, i32) {
    %c0_i32 = arith.constant 0 : i32
    %c0_i32_0 = arith.constant 0 : i32
    %c0_i32_1 = arith.constant 0 : i32
    %c0_i32_2 = arith.constant 0 : i32
    return %c0_i32, %c0_i32_0, %c0_i32_1 : i32, i32, i32
  }
  func.func @transform_3(%arg0: i32) -> (i32, i32, i32) {
    %c0_i32 = arith.constant 0 : i32
    %c0_i32_0 = arith.constant 0 : i32
    %c0_i32_1 = arith.constant 0 : i32
    %c0_i32_2 = arith.constant 0 : i32
    return %c0_i32, %c0_i32_0, %c0_i32_1 : i32, i32, i32
  }
  func.func @transform_4(%arg0: i32) -> (i32, i32, i32) {
    %c0_i32 = arith.constant 0 : i32
    %c0_i32_0 = arith.constant 0 : i32
    %c0_i32_1 = arith.constant 0 : i32
    %c0_i32_2 = arith.constant 0 : i32
    return %c0_i32, %c0_i32_0, %c0_i32_1 : i32, i32, i32
  }
  func.func @transform_5(%arg0: i32) -> (i32, i32, i32) {
    %c0_i32 = arith.constant 0 : i32
    %c0_i32_0 = arith.constant 0 : i32
    %c0_i32_1 = arith.constant 0 : i32
    %c0_i32_2 = arith.constant 0 : i32
    return %c0_i32, %c0_i32_0, %c0_i32_1 : i32, i32, i32
  }
  func.func @transform_6(%arg0: i32) -> (i32, i32, i32) {
    %c0_i32 = arith.constant 0 : i32
    %c0_i32_0 = arith.constant 0 : i32
    %c0_i32_1 = arith.constant 0 : i32
    %c0_i32_2 = arith.constant 0 : i32
    return %c0_i32, %c0_i32_0, %c0_i32_1 : i32, i32, i32
  }
  func.func @transform_7(%arg0: i32) -> (i32, i32, i32) {
    %c0_i32 = arith.constant 0 : i32
    %c0_i32_0 = arith.constant 0 : i32
    %c0_i32_1 = arith.constant 0 : i32
    %c0_i32_2 = arith.constant 0 : i32
    return %c0_i32, %c0_i32_0, %c0_i32_1 : i32, i32, i32
  }
  func.func @transform_8(%arg0: i32) -> (i32, i32, i32) {
    %c0_i32 = arith.constant 0 : i32
    %c0_i32_0 = arith.constant 0 : i32
    %c0_i32_1 = arith.constant 0 : i32
    %c0_i32_2 = arith.constant 0 : i32
    return %c0_i32, %c0_i32_0, %c0_i32_1 : i32, i32, i32
  }
  func.func @transform_9(%arg0: i32) -> (i32, i32) {
    %c0_i32 = arith.constant 0 : i32
    %c0_i32_0 = arith.constant 0 : i32
    %c0_i32_1 = arith.constant 0 : i32
    return %c0_i32, %c0_i32_0 : i32, i32
  }
  func.func @transform_10(%arg0: i32) -> (i32, i32) {
    %c0_i32 = arith.constant 0 : i32
    %c0_i32_0 = arith.constant 0 : i32
    %c0_i32_1 = arith.constant 0 : i32
    return %c0_i32, %c0_i32_0 : i32, i32
  }
  func.func @transform_11(%arg0: i32) -> (i32, i32) {
    %c0_i32 = arith.constant 0 : i32
    %c0_i32_0 = arith.constant 0 : i32
    %c0_i32_1 = arith.constant 0 : i32
    return %c0_i32, %c0_i32_0 : i32, i32
  }
  func.func @transform_12(%arg0: i32) -> (i32, i32) {
    %c0_i32 = arith.constant 0 : i32
    %c0_i32_0 = arith.constant 0 : i32
    %c0_i32_1 = arith.constant 0 : i32
    return %c0_i32, %c0_i32_0 : i32, i32
  }
  func.func @transform_13(%arg0: i32) -> (i32, i32) {
    %c0_i32 = arith.constant 0 : i32
    %c0_i32_0 = arith.constant 0 : i32
    return %arg0, %c0_i32 : i32, i32
  }
}

</mosaic_0001>

<llo_original>
// kernel: noise_detector_forward.1
$region0: #{noise_detector_forward.1}
  #allocation0 [shape = 'u32[]', space=smem, size = 0x4, offset = 0x4, fixed_abs, tag = 'smem constant byte address 0x4 - core index']
  #allocation1 [shape = 'u32[72,128]{1,0:T(1,128)}', space=vmem, size = 0x9000, scoped, tag = 'internal scratch']
  #allocation2 [shape = 'f32[1,1]{1,0:T(1,128)S(1)}', space=vmem, size = 0x200, scoped, tag = 'scoped memory for noise_detector_forward.1']
  %s0 = inlined_call_operand.vmem [shape: bf16[16,8,16], index: 0, kind: input, shape index: {}]
  %s1 = inlined_call_operand.vmem [shape: bf16[3,16,512], index: 1, kind: input, shape index: {}]
  %s2 = inlined_call_operand.vmem [shape: f32[1,8,512], index: 2, kind: input, shape index: {}]
  %s3 = inlined_call_operand.hbm [shape: bf16[3,480,256], index: 3, kind: input, shape index: {}]
  %s4 = inlined_call_operand.vmem [shape: f32[1,8,256], index: 4, kind: input, shape index: {}]
  %s5 = inlined_call_operand.hbm [shape: bf16[3,224,256], index: 5, kind: input, shape index: {}]
  %s6 = inlined_call_operand.vmem [shape: f32[1,8,256], index: 6, kind: input, shape index: {}]
  %s7 = inlined_call_operand.vmem [shape: bf16[5,192,128], index: 7, kind: input, shape index: {}]
  %s8 = inlined_call_operand.vmem [shape: f32[1,8,128], index: 8, kind: input, shape index: {}]
  %s9 = inlined_call_operand.hbm [shape: bf16[512,1024], index: 9, kind: input, shape index: {}]
  %s10 = inlined_call_operand.vmem [shape: f32[1,1024], index: 10, kind: input, shape index: {}]
  %s11 = inlined_call_operand.vmem [shape: bf16[1024,1], index: 11, kind: input, shape index: {}]
  %s12 = inlined_call_operand.<no memory space> [shape: f32[1,1], index: 12, kind: input, shape index: {}]
  %s13 = inlined_call_operand.vmem [shape: f32[16,1], index: 13, kind: output, shape index: {}]
  %s14 = sld [smem:[#allocation0]]
  $region97: #{noise_detector_forward.1} parent=0
    _
  %s16 = ssub.s32 1, %s14
  %s17 = scalar_select 0, %s16, %s14
  %v18 = vstv %s12
  %19 = vst [vmem:[#allocation2] sm:$0x1] %v18
  $region1: #{noise_detector_forward.1} parent=0
    #allocation3 [shape = 'u8[737280]{0}', space=vmem, size = 0xb4000, scoped, tag = 'input window, operand 3, single buffered']
    #allocation4 [shape = 's32[2]{0}', space=sflag, size = 0x8, scoped, tag = 'scoped memory for noise_detector_forward.1']
    #allocation5 [shape = 'u8[344064]{0}', space=vmem, size = 0x54000, scoped, tag = 'input window, operand 5, single buffered']
    #allocation6 [shape = 's32[1]{0}', space=sflag, size = 0x4, scoped, tag = 'scoped memory for noise_detector_forward.1']
    #allocation7 [shape = 'u8[1048576]{0}', space=vmem, size = 0x100000, scoped, tag = 'input window, operand 9, single buffered']
    %20 = vsyncpa [#allocation4], 0
    %21 = vsyncpa [#allocation6], 0
    loop: start=0, step=1, limit=4
    $region2: #{noise_detector_forward.1} parent=1 // loop_pre_header
      _
    $region3: #{noise_detector_forward.1} parent=1 // loop_header
      %s23 = sphi 0, %s27
      %p24 = scmp.ge.s32.totalorder %s23, 4
      %s33 = sphi 0, %s35
      %s36 = sphi 0, %s33
      %s37 = sphi 0, %s36
      %s53 = sphi 0, %s37
      %s57 = sphi 0, %s57
      %s59 = sphi 0, %s57
      %s60 = sphi 0, %s59
      %s74 = sphi 0, %s60
      %s78 = sphi 0, %s78
      %s80 = sphi 0, %s78
      %s81 = sphi 0, %s80
      %s95 = sphi 0, %s81
      %s99 = sphi 0, %s99
      %s101 = sphi 0, %s99
      %s102 = sphi 0, %s101
      %s116 = sphi 0, %s102
      %s120 = sphi 0, %s120
      %s122 = sphi 0, %s120
      %s123 = sphi 0, %s122
      %s137 = sphi 0, %s123
      %s141 = sphi 0, %s141
      %s143 = sphi 0, %s141
      %s144 = sphi 0, %s143
      %s158 = sphi 0, %s144
      %s162 = sphi 0, %s162
      %s164 = sphi 0, %s162
      %s165 = sphi 0, %s164
      %s179 = sphi 0, %s165
      %s183 = sphi 0, %s183
      %s185 = sphi 0, %s183
      %s186 = sphi 0, %s185
      %s200 = sphi 0, %s186
      %s204 = sphi 0, %s204
      %s206 = sphi 0, %s204
      %s207 = sphi 0, %s206
      %s221 = sphi 0, %s207
      %s225 = sphi 0, %s225
      %s227 = sphi 0, %s225
      %s228 = sphi 0, %s227
      %s242 = sphi 0, %s228
      %s246 = sphi 0, %s246
      %s248 = sphi 0, %s246
      %s249 = sphi 0, %s248
      %s263 = sphi 0, %s249
      %s267 = sphi 0, %s267
      %s269 = sphi 0, %s267
      %s270 = sphi 0, %s269
      %s284 = sphi 0, %s270
      %s288 = sphi 0, %s288
      %s290 = sphi 0, %s288
      %s291 = sphi 0, %s290
      %s305 = sphi 0, %s291
      %s311 = sphi 0, %s313
      %s314 = sphi 0, %s311
      %s315 = sphi 0, %s314
      %s331 = sphi 0, %s315
    $region4: #{noise_detector_forward.1} parent=1 // loop_header_branch
      %26 = sbr.rel (%p24) target = $region8
    $region5: #{noise_detector_forward.1} parent=1 // loop_body
      %s28 = ssub.s32 %s23, 1
      %s29 = ssub.s32 %s23, 2
      %s30 = sadd.s32 %s23, 1
      %s31 = ssub.s32 %s23, %s30
      %p32 = scmp.eq.s32.totalorder %s31, 0
      %s34 = sadd.s32 %s33, 1
      %s35 = scalar_select %p32, %s33, %s34
      %p38 = pneg %p32
      %p39 = scmp.eq.s32.totalorder %s23, 1
      %p40 = por %p38, %p39
      %p41 = scmp.ne.s32.totalorder %s33, %s36
      %p42 = scmp.eq.s32.totalorder %s23, 0
      %p43 = por %p41, %p42
      %p44 = scmp.ne.s32.totalorder %s33, %s36
      %p45 = scmp.eq.s32.totalorder %s28, 1
      %p46 = por %p44, %p45
      %p47 = scmp.ne.s32.totalorder %s36, %s37
      %p48 = scmp.eq.s32.totalorder %s28, 0
      %p49 = por %p47, %p48
      %p50 = scmp.ne.s32.totalorder %s36, %s37
      %p51 = scmp.eq.s32.totalorder %s29, 1
      %p52 = por %p50, %p51
      %p54 = scmp.ne.s32.totalorder %s37, %s53
      %p55 = scmp.eq.s32.totalorder %s29, 0
      %p56 = por %p54, %p55
      %s58 = sadd.s32 %s57, 1
      %p61 = scmp.eq.s32.totalorder %s23, 1
      %p62 = scmp.ne.s32.totalorder %s57, %s59
      %p63 = scmp.eq.s32.totalorder %s23, 0
      %p64 = por %p62, %p63
      %p65 = scmp.ne.s32.totalorder %s57, %s59
      %p66 = scmp.eq.s32.totalorder %s28, 1
      %p67 = por %p65, %p66
      %p68 = scmp.ne.s32.totalorder %s59, %s60
      %p69 = scmp.eq.s32.totalorder %s28, 0
      %p70 = por %p68, %p69
      %p71 = scmp.ne.s32.totalorder %s59, %s60
      %p72 = scmp.eq.s32.totalorder %s29, 1
      %p73 = por %p71, %p72
      %p75 = scmp.ne.s32.totalorder %s60, %s74
      %p76 = scmp.eq.s32.totalorder %s29, 0
      %p77 = por %p75, %p76
      %s79 = sadd.s32 %s78, 1
      %p82 = scmp.eq.s32.totalorder %s23, 1
      %p83 = scmp.ne.s32.totalorder %s78, %s80
      %p84 = scmp.eq.s32.totalorder %s23, 0
      %p85 = por %p83, %p84
      %p86 = scmp.ne.s32.totalorder %s78, %s80
      %p87 = scmp.eq.s32.totalorder %s28, 1
      %p88 = por %p86, %p87
      %p89 = scmp.ne.s32.totalorder %s80, %s81
      %p90 = scmp.eq.s32.totalorder %s28, 0
      %p91 = por %p89, %p90
      %p92 = scmp.ne.s32.totalorder %s80, %s81
      %p93 = scmp.eq.s32.totalorder %s29, 1
      %p94 = por %p92, %p93
      %p96 = scmp.ne.s32.totalorder %s81, %s95
      %p97 = scmp.eq.s32.totalorder %s29, 0
      %p98 = por %p96, %p97
      %s100 = sadd.s32 %s99, 1
      %p103 = scmp.eq.s32.totalorder %s23, 1
      %p104 = scmp.ne.s32.totalorder %s99, %s101
      %p105 = scmp.eq.s32.totalorder %s23, 0
      %p106 = por %p104, %p105
      %p107 = scmp.ne.s32.totalorder %s99, %s101
      %p108 = scmp.eq.s32.totalorder %s28, 1
      %p109 = por %p107, %p108
      %p110 = scmp.ne.s32.totalorder %s101, %s102
      %p111 = scmp.eq.s32.totalorder %s28, 0
      %p112 = por %p110, %p111
      %p113 = scmp.ne.s32.totalorder %s101, %s102
      %p114 = scmp.eq.s32.totalorder %s29, 1
      %p115 = por %p113, %p114
      %p117 = scmp.ne.s32.totalorder %s102, %s116
      %p118 = scmp.eq.s32.totalorder %s29, 0
      %p119 = por %p117, %p118
      %s121 = sadd.s32 %s120, 1
      %p124 = scmp.eq.s32.totalorder %s23, 1
      %p125 = scmp.ne.s32.totalorder %s120, %s122
      %p126 = scmp.eq.s32.totalorder %s23, 0
      %p127 = por %p125, %p126
      %p128 = scmp.ne.s32.totalorder %s120, %s122
      %p129 = scmp.eq.s32.totalorder %s28, 1
      %p130 = por %p128, %p129
      %p131 = scmp.ne.s32.totalorder %s122, %s123
      %p132 = scmp.eq.s32.totalorder %s28, 0
      %p133 = por %p131, %p132
      %p134 = scmp.ne.s32.totalorder %s122, %s123
      %p135 = scmp.eq.s32.totalorder %s29, 1
      %p136 = por %p134, %p135
      %p138 = scmp.ne.s32.totalorder %s123, %s137
      %p139 = scmp.eq.s32.totalorder %s29, 0
      %p140 = por %p138, %p139
      %s142 = sadd.s32 %s141, 1
      %p145 = scmp.eq.s32.totalorder %s23, 1
      %p146 = scmp.ne.s32.totalorder %s141, %s143
      %p147 = scmp.eq.s32.totalorder %s23, 0
      %p148 = por %p146, %p147
      %p149 = scmp.ne.s32.totalorder %s141, %s143
      %p150 = scmp.eq.s32.totalorder %s28, 1
      %p151 = por %p149, %p150
      %p152 = scmp.ne.s32.totalorder %s143, %s144
      %p153 = scmp.eq.s32.totalorder %s28, 0
      %p154 = por %p152, %p153
      %p155 = scmp.ne.s32.totalorder %s143, %s144
      %p156 = scmp.eq.s32.totalorder %s29, 1
      %p157 = por %p155, %p156
      %p159 = scmp.ne.s32.totalorder %s144, %s158
      %p160 = scmp.eq.s32.totalorder %s29, 0
      %p161 = por %p159, %p160
      %s163 = sadd.s32 %s162, 1
      %p166 = scmp.eq.s32.totalorder %s23, 1
      %p167 = scmp.ne.s32.totalorder %s162, %s164
      %p168 = scmp.eq.s32.totalorder %s23, 0
      %p169 = por %p167, %p168
      %p170 = scmp.ne.s32.totalorder %s162, %s164
      %p171 = scmp.eq.s32.totalorder %s28, 1
      %p172 = por %p170, %p171
      %p173 = scmp.ne.s32.totalorder %s164, %s165
      %p174 = scmp.eq.s32.totalorder %s28, 0
      %p175 = por %p173, %p174
      %p176 = scmp.ne.s32.totalorder %s164, %s165
      %p177 = scmp.eq.s32.totalorder %s29, 1
      %p178 = por %p176, %p177
      %p180 = scmp.ne.s32.totalorder %s165, %s179
      %p181 = scmp.eq.s32.totalorder %s29, 0
      %p182 = por %p180, %p181
      %s184 = sadd.s32 %s183, 1
      %p187 = scmp.eq.s32.totalorder %s23, 1
      %p188 = scmp.ne.s32.totalorder %s183, %s185
      %p189 = scmp.eq.s32.totalorder %s23, 0
      %p190 = por %p188, %p189
      %p191 = scmp.ne.s32.totalorder %s183, %s185
      %p192 = scmp.eq.s32.totalorder %s28, 1
      %p193 = por %p191, %p192
      %p194 = scmp.ne.s32.totalorder %s185, %s186
      %p195 = scmp.eq.s32.totalorder %s28, 0
      %p196 = por %p194, %p195
      %p197 = scmp.ne.s32.totalorder %s185, %s186
      %p198 = scmp.eq.s32.totalorder %s29, 1
      %p199 = por %p197, %p198
      %p201 = scmp.ne.s32.totalorder %s186, %s200
      %p202 = scmp.eq.s32.totalorder %s29, 0
      %p203 = por %p201, %p202
      %s205 = sadd.s32 %s204, 1
      %p208 = scmp.eq.s32.totalorder %s23, 1
      %p209 = scmp.ne.s32.totalorder %s204, %s206
      %p210 = scmp.eq.s32.totalorder %s23, 0
      %p211 = por %p209, %p210
      %p212 = scmp.ne.s32.totalorder %s204, %s206
      %p213 = scmp.eq.s32.totalorder %s28, 1
      %p214 = por %p212, %p213
      %p215 = scmp.ne.s32.totalorder %s206, %s207
      %p216 = scmp.eq.s32.totalorder %s28, 0
      %p217 = por %p215, %p216
      %p218 = scmp.ne.s32.totalorder %s206, %s207
      %p219 = scmp.eq.s32.totalorder %s29, 1
      %p220 = por %p218, %p219
      %p222 = scmp.ne.s32.totalorder %s207, %s221
      %p223 = scmp.eq.s32.totalorder %s29, 0
      %p224 = por %p222, %p223
      %s226 = sadd.s32 %s225, 1
      %p229 = scmp.eq.s32.totalorder %s23, 1
      %p230 = scmp.ne.s32.totalorder %s225, %s227
      %p231 = scmp.eq.s32.totalorder %s23, 0
      %p232 = por %p230, %p231
      %p233 = scmp.ne.s32.totalorder %s225, %s227
      %p234 = scmp.eq.s32.totalorder %s28, 1
      %p235 = por %p233, %p234
      %p236 = scmp.ne.s32.totalorder %s227, %s228
      %p237 = scmp.eq.s32.totalorder %s28, 0
      %p238 = por %p236, %p237
      %p239 = scmp.ne.s32.totalorder %s227, %s228
      %p240 = scmp.eq.s32.totalorder %s29, 1
      %p241 = por %p239, %p240
      %p243 = scmp.ne.s32.totalorder %s228, %s242
      %p244 = scmp.eq.s32.totalorder %s29, 0
      %p245 = por %p243, %p244
      %s247 = sadd.s32 %s246, 1
      %p250 = scmp.eq.s32.totalorder %s23, 1
      %p251 = scmp.ne.s32.totalorder %s246, %s248
      %p252 = scmp.eq.s32.totalorder %s23, 0
      %p253 = por %p251, %p252
      %p254 = scmp.ne.s32.totalorder %s246, %s248
      %p255 = scmp.eq.s32.totalorder %s28, 1
      %p256 = por %p254, %p255
      %p257 = scmp.ne.s32.totalorder %s248, %s249
      %p258 = scmp.eq.s32.totalorder %s28, 0
      %p259 = por %p257, %p258
      %p260 = scmp.ne.s32.totalorder %s248, %s249
      %p261 = scmp.eq.s32.totalorder %s29, 1
      %p262 = por %p260, %p261
      %p264 = scmp.ne.s32.totalorder %s249, %s263
      %p265 = scmp.eq.s32.totalorder %s29, 0
      %p266 = por %p264, %p265
      %s268 = sadd.s32 %s267, 1
      %p271 = scmp.eq.s32.totalorder %s23, 1
      %p272 = scmp.ne.s32.totalorder %s267, %s269
      %p273 = scmp.eq.s32.totalorder %s23, 0
      %p274 = por %p272, %p273
      %p275 = scmp.ne.s32.totalorder %s267, %s269
      %p276 = scmp.eq.s32.totalorder %s28, 1
      %p277 = por %p275, %p276
      %p278 = scmp.ne.s32.totalorder %s269, %s270
      %p279 = scmp.eq.s32.totalorder %s28, 0
      %p280 = por %p278, %p279
      %p281 = scmp.ne.s32.totalorder %s269, %s270
      %p282 = scmp.eq.s32.totalorder %s29, 1
      %p283 = por %p281, %p282
      %p285 = scmp.ne.s32.totalorder %s270, %s284
      %p286 = scmp.eq.s32.totalorder %s29, 0
      %p287 = por %p285, %p286
      %s289 = sadd.s32 %s288, 1
      %p292 = scmp.eq.s32.totalorder %s23, 1
      %p293 = scmp.ne.s32.totalorder %s288, %s290
      %p294 = scmp.eq.s32.totalorder %s23, 0
      %p295 = por %p293, %p294
      %p296 = scmp.ne.s32.totalorder %s288, %s290
      %p297 = scmp.eq.s32.totalorder %s28, 1
      %p298 = por %p296, %p297
      %p299 = scmp.ne.s32.totalorder %s290, %s291
      %p300 = scmp.eq.s32.totalorder %s28, 0
      %p301 = por %p299, %p300
      %p302 = scmp.ne.s32.totalorder %s290, %s291
      %p303 = scmp.eq.s32.totalorder %s29, 1
      %p304 = por %p302, %p303
      %p306 = scmp.ne.s32.totalorder %s291, %s305
      %p307 = scmp.eq.s32.totalorder %s29, 0
      %p308 = por %p306, %p307
      %s309 = ssub.s32 %s23, %s30
      %p310 = scmp.eq.s32.totalorder %s309, 0
      %s312 = sadd.s32 %s311, 1
      %s313 = scalar_select %p310, %s311, %s312
      %p316 = pneg %p310
      %p317 = scmp.eq.s32.totalorder %s23, 1
      %p318 = por %p316, %p317
      %p319 = scmp.ne.s32.totalorder %s311, %s314
      %p320 = scmp.eq.s32.totalorder %s23, 0
      %p321 = por %p319, %p320
      %p322 = scmp.ne.s32.totalorder %s311, %s314
      %p323 = scmp.eq.s32.totalorder %s28, 1
      %p324 = por %p322, %p323
      %p325 = scmp.ne.s32.totalorder %s314, %s315
      %p326 = scmp.eq.s32.totalorder %s28, 0
      %p327 = por %p325, %p326
      %p328 = scmp.ne.s32.totalorder %s314, %s315
      %p329 = scmp.eq.s32.totalorder %s29, 1
      %p330 = por %p328, %p329
      %p332 = scmp.ne.s32.totalorder %s315, %s331
      %p333 = scmp.eq.s32.totalorder %s29, 0
      %p334 = por %p332, %p333
      %p335 = scmp.le.s32.totalorder 1, %s23
      %p336 = scmp.lt.s32.totalorder %s23, 3
      %p337 = pnand %p335, %p336
      %p338 = pneg %p337
      // Predicated region
      $region9: #{noise_detector_forward.1} parent=5 // pred_check
        _
      $region10: #{noise_detector_forward.1} parent=5 // pred_check_branch
        %340 = sbr.rel (%p337) target = $region12
      $region11: #{noise_detector_forward.1} parent=5 // pred_region
        %s341 = ssub.s32 %s23, 1
        // Predicated region
        $region13: #{noise_detector_forward.1} parent=11 // pred_check
          %p342 = pneg %p70
        $region14: #{noise_detector_forward.1} parent=11 // pred_check_branch
          %344 = sbr.rel (%p342) target = $region16
        $region15: #{noise_detector_forward.1} parent=11 // pred_region
          _
        $region16: #{noise_detector_forward.1} parent=11 // pred_fallthru
          _
        // Predicated region
        $region17: #{noise_detector_forward.1} parent=11 // pred_check
          %p345 = pneg %p91
        $region18: #{noise_detector_forward.1} parent=11 // pred_check_branch
          %347 = sbr.rel (%p345) target = $region20
        $region19: #{noise_detector_forward.1} parent=11 // pred_region
          _
        $region20: #{noise_detector_forward.1} parent=11 // pred_fallthru
          _
        // Predicated region
        $region21: #{noise_detector_forward.1} parent=11 // pred_check
          %p348 = pneg %p112
        $region22: #{noise_detector_forward.1} parent=11 // pred_check_branch
          %350 = sbr.rel (%p348) target = $region24
        $region23: #{noise_detector_forward.1} parent=11 // pred_region
          %352 = vsyncadd [#allocation4], 0
          %s353 = sshll.u32 %s3, 4
          %s354 = int_to_ptr.hbm [resolvable:$true] %s353
          %s355 = sshll.u32 [#allocation3], 4
          %s356 = int_to_ptr.vmem [resolvable:$true] %s355
          %361 = dma.hbm_to_vmem [thread:$0]  %s354, 23040, %s356, [#allocation4], 128, 128, 8
        $region24: #{noise_detector_forward.1} parent=11 // pred_fallthru
          _
        // Predicated region
        $region25: #{noise_detector_forward.1} parent=11 // pred_check
          %p362 = pneg %p133
        $region26: #{noise_detector_forward.1} parent=11 // pred_check_branch
          %364 = sbr.rel (%p362) target = $region28
        $region27: #{noise_detector_forward.1} parent=11 // pred_region
          _
        $region28: #{noise_detector_forward.1} parent=11 // pred_fallthru
          _
        // Predicated region
        $region29: #{noise_detector_forward.1} parent=11 // pred_check
          %p365 = pneg %p154
        $region30: #{noise_detector_forward.1} parent=11 // pred_check_branch
          %367 = sbr.rel (%p365) target = $region32
        $region31: #{noise_detector_forward.1} parent=11 // pred_region
          %369 = vsyncadd [#allocation6], 0
          %s370 = sshll.u32 %s5, 4
          %s371 = int_to_ptr.hbm [resolvable:$true] %s370
          %s372 = sshll.u32 [#allocation5], 4
          %s373 = int_to_ptr.vmem [resolvable:$true] %s372
          %378 = dma.hbm_to_vmem [thread:$0]  %s371, 10752, %s373, [#allocation6], 128, 128, 8
        $region32: #{noise_detector_forward.1} parent=11 // pred_fallthru
          _
        // Predicated region
        $region33: #{noise_detector_forward.1} parent=11 // pred_check
          %p379 = pneg %p175
        $region34: #{noise_detector_forward.1} parent=11 // pred_check_branch
          %381 = sbr.rel (%p379) target = $region36
        $region35: #{noise_detector_forward.1} parent=11 // pred_region
          _
        $region36: #{noise_detector_forward.1} parent=11 // pred_fallthru
          _
        // Predicated region
        $region37: #{noise_detector_forward.1} parent=11 // pred_check
          %p382 = pneg %p196
        $region38: #{noise_detector_forward.1} parent=11 // pred_check_branch
          %384 = sbr.rel (%p382) target = $region40
        $region39: #{noise_detector_forward.1} parent=11 // pred_region
          _
        $region40: #{noise_detector_forward.1} parent=11 // pred_fallthru
          _
        // Predicated region
        $region41: #{noise_detector_forward.1} parent=11 // pred_check
          %p385 = pneg %p217
        $region42: #{noise_detector_forward.1} parent=11 // pred_check_branch
          %387 = sbr.rel (%p385) target = $region44
        $region43: #{noise_detector_forward.1} parent=11 // pred_region
          _
        $region44: #{noise_detector_forward.1} parent=11 // pred_fallthru
          _
        // Predicated region
        $region45: #{noise_detector_forward.1} parent=11 // pred_check
          %p388 = pneg %p238
        $region46: #{noise_detector_forward.1} parent=11 // pred_check_branch
          %390 = sbr.rel (%p388) target = $region48
        $region47: #{noise_detector_forward.1} parent=11 // pred_region
          %392 = vsyncadd [#allocation6], 0
          %s393 = sshll.u32 %s9, 4
          %s394 = int_to_ptr.hbm [resolvable:$true] %s393
          %s395 = sshll.u32 [#allocation7], 4
          %s396 = int_to_ptr.vmem [resolvable:$true] %s395
          %401 = dma.hbm_to_vmem [thread:$0]  %s394, 32768, %s396, [#allocation6], 512, 512, 32
        $region48: #{noise_detector_forward.1} parent=11 // pred_fallthru
          _
        // Predicated region
        $region49: #{noise_detector_forward.1} parent=11 // pred_check
          %p402 = pneg %p259
        $region50: #{noise_detector_forward.1} parent=11 // pred_check_branch
          %404 = sbr.rel (%p402) target = $region52
        $region51: #{noise_detector_forward.1} parent=11 // pred_region
          _
        $region52: #{noise_detector_forward.1} parent=11 // pred_fallthru
          _
        // Predicated region
        $region53: #{noise_detector_forward.1} parent=11 // pred_check
          %p405 = pneg %p280
        $region54: #{noise_detector_forward.1} parent=11 // pred_check_branch
          %407 = sbr.rel (%p405) target = $region56
        $region55: #{noise_detector_forward.1} parent=11 // pred_region
          _
        $region56: #{noise_detector_forward.1} parent=11 // pred_fallthru
          _
        // Predicated region
        $region57: #{noise_detector_forward.1} parent=11 // pred_check
          %p408 = pneg %p301
        $region58: #{noise_detector_forward.1} parent=11 // pred_check_branch
          %410 = sbr.rel (%p408) target = $region60
        $region59: #{noise_detector_forward.1} parent=11 // pred_region
          _
        $region60: #{noise_detector_forward.1} parent=11 // pred_fallthru
          _
      $region12: #{noise_detector_forward.1} parent=5 // pred_fallthru
        _
      %p411 = scmp.lt.s32.totalorder %s23, 2
      // Predicated region
      $region61: #{noise_detector_forward.1} parent=5 // pred_check
        %p412 = pneg %p411
      $region62: #{noise_detector_forward.1} parent=5 // pred_check_branch
        %414 = sbr.rel (%p412) target = $region64
      $region63: #{noise_detector_forward.1} parent=5 // pred_region
        // Predicated region
        $region65: #{noise_detector_forward.1} parent=63 // pred_check
          %p415 = pneg %p43
        $region66: #{noise_detector_forward.1} parent=63 // pred_check_branch
          %417 = sbr.rel (%p415) target = $region68
        $region67: #{noise_detector_forward.1} parent=63 // pred_region
          %s418 = smul.u32 8, %s23
          %p419 = scmp.lt.s32.totalorder %s418, 15
          %s420 = scalar_select %p419, %s418, 15
          %s421 = smul.addr %s420, 4
          %s422 = scalar_lea.vmem %s0, %s421
          %s423 = smul.u32 8, %s23
        $region68: #{noise_detector_forward.1} parent=63 // pred_fallthru
          _
      $region64: #{noise_detector_forward.1} parent=5 // pred_fallthru
        _
      %p424 = scmp.le.s32.totalorder 1, %s23
      %p425 = scmp.lt.s32.totalorder %s23, 3
      %p426 = pnand %p424, %p425
      %p427 = pneg %p426
      // Predicated region
      $region69: #{noise_detector_forward.1} parent=5 // pred_check
        _
      $region70: #{noise_detector_forward.1} parent=5 // pred_check_branch
        %429 = sbr.rel (%p426) target = $region72
      $region71: #{noise_detector_forward.1} parent=5 // pred_region
        %s430 = ssub.s32 %s23, 1
        // Predicated region
        $region73: #{noise_detector_forward.1} parent=71 // pred_check
          %p431 = pneg %p112
        $region74: #{noise_detector_forward.1} parent=71 // pred_check_branch
          %433 = sbr.rel (%p431) target = $region76
        $region75: #{noise_detector_forward.1} parent=71 // pred_region
          %435 = dma.done [#allocation4], 23040
        $region76: #{noise_detector_forward.1} parent=71 // pred_fallthru
          _
        // Predicated region
        $region77: #{noise_detector_forward.1} parent=71 // pred_check
          %p436 = pneg %p154
        $region78: #{noise_detector_forward.1} parent=71 // pred_check_branch
          %438 = sbr.rel (%p436) target = $region80
        $region79: #{noise_detector_forward.1} parent=71 // pred_region
          %440 = dma.done [#allocation6], 10752
        $region80: #{noise_detector_forward.1} parent=71 // pred_fallthru
          _
        // Predicated region
        $region81: #{noise_detector_forward.1} parent=71 // pred_check
          %p441 = pneg %p238
        $region82: #{noise_detector_forward.1} parent=71 // pred_check_branch
          %443 = sbr.rel (%p441) target = $region84
        $region83: #{noise_detector_forward.1} parent=71 // pred_region
          %445 = dma.done [#allocation6], 32768
        $region84: #{noise_detector_forward.1} parent=71 // pred_fallthru
          _
        %s446 = smul.u32 8, %s28
        %p447 = scmp.lt.s32.totalorder %s446, 15
        %s448 = scalar_select %p447, %s446, 15
        %s449 = smul.addr %s448, 4
        %s450 = scalar_lea.vmem %s0, %s449
        %p451 = pneg %p49
        %p452 = pneg %p46
        %p453 = pneg %p70
        %p454 = pneg %p67
        %p455 = pneg %p91
        %p456 = pneg %p88
        %p457 = pneg %p112
        %p458 = pneg %p109
        %p459 = pneg %p133
        %p460 = pneg %p130
        %p461 = pneg %p154
        %p462 = pneg %p151
        %p463 = pneg %p175
        %p464 = pneg %p172
        %p465 = pneg %p196
        %p466 = pneg %p193
        %p467 = pneg %p217
        %p468 = pneg %p214
        %p469 = pneg %p238
        %p470 = pneg %p235
        %p471 = pneg %p259
        %p472 = pneg %p256
        %p473 = pneg %p280
        %p474 = pneg %p277
        %p475 = pneg %p301
        %p476 = pneg %p298
        %p477 = pneg %p327
        %p478 = pneg %p324
        %p479 = scmp.lt.s32.totalorder %s28, 1
        %s480 = scalar_select %p479, %s28, 1
        %s481 = smul.addr %s480, 8
        %s482 = scalar_lea.vmem %s13, %s481
        %s483 = smul.u32 8, %s28
        %p484 = scmp.lt.s32.totalorder %s483, 15
        %s485 = scalar_select %p484, %s483, 15
        %s486 = smul.addr %s485, 4
        %s487 = scalar_lea.vmem %s0, %s486
        %s488 = smul.u32 8, %s28
        %p489 = scmp.lt.s32.totalorder %s28, 1
        %s490 = scalar_select %p489, %s28, 1
        %s491 = smul.addr %s490, 8
        %s492 = scalar_lea.vmem %s13, %s491
        %v494 = vld [vmem:[%s487] sm:$0xf]
        %v495 = vld [vmem:[%s487 + $0x4] sm:$0xf]
        %v496 = vld [vmem:[%s487 + $0x8] sm:$0xf]
        %v497 = vld [vmem:[%s487 + $0xc] sm:$0xf]
        %v498 = vld [vmem:[%s487 + $0x10] sm:$0xf]
        %v499 = vld [vmem:[%s487 + $0x14] sm:$0xf]
        %v500 = vld [vmem:[%s487 + $0x18] sm:$0xf]
        %v501 = vld [vmem:[%s487 + $0x1c] sm:$0xf]
        %v510 = vunpack.c.l.b16 %v494
        %v511 = vunpack.c.l.b16 %v495
        %v512 = vunpack.c.l.b16 %v496
        %v513 = vunpack.c.l.b16 %v497
        %v514 = vunpack.c.l.b16 %v498
        %v515 = vunpack.c.l.b16 %v499
        %v516 = vunpack.c.l.b16 %v500
        %v517 = vunpack.c.l.b16 %v501
        %v518 = vpack.c.b16 %v510, %v510
        %v519 = vpack.c.b16 %v511, %v511
        %v520 = vpack.c.b16 %v512, %v512
        %v521 = vpack.c.b16 %v513, %v513
        %v522 = vpack.c.b16 %v514, %v514
        %v523 = vpack.c.b16 %v515, %v515
        %v524 = vpack.c.b16 %v516, %v516
        %v525 = vpack.c.b16 %v517, %v517
        %v527 = vshrl.u32 %v518, 16
        %v529 = vrot.slane %v527, 7
        %v530 = vshll.u32 %v518, 16
        %v532 = vor.u32 %v529, %v530
        %v534 = vshrl.u32 %v519, 16
        %v536 = vrot.slane %v534, 7
        %v537 = vshll.u32 %v519, 16
        %v539 = vor.u32 %v536, %v537
        %v541 = vshrl.u32 %v520, 16
        %v543 = vrot.slane %v541, 7
        %v544 = vshll.u32 %v520, 16
        %v546 = vor.u32 %v543, %v544
        %v548 = vshrl.u32 %v521, 16
        %v550 = vrot.slane %v548, 7
        %v551 = vshll.u32 %v521, 16
        %v553 = vor.u32 %v550, %v551
        %v555 = vshrl.u32 %v522, 16
        %v557 = vrot.slane %v555, 7
        %v558 = vshll.u32 %v522, 16
        %v560 = vor.u32 %v557, %v558
        %v562 = vshrl.u32 %v523, 16
        %v564 = vrot.slane %v562, 7
        %v565 = vshll.u32 %v523, 16
        %v567 = vor.u32 %v564, %v565
        %v569 = vshrl.u32 %v524, 16
        %v571 = vrot.slane %v569, 7
        %v572 = vshll.u32 %v524, 16
        %v574 = vor.u32 %v571, %v572
        %v576 = vshrl.u32 %v525, 16
        %v578 = vrot.slane %v576, 7
        %v579 = vshll.u32 %v525, 16
        %v581 = vor.u32 %v578, %v579
        %vm590 = vcmask 1040384
        %vm591 = vsmask.f32 256
        %vm592 = vmand %vm590, %vm591
        %v593 = vsel %vm592, 0, %v532
        %v594 = vsel %vm592, 0, %v539
        %v595 = vsel %vm592, 0, %v546
        %v596 = vsel %vm592, 0, %v553
        %v597 = vsel %vm592, 0, %v560
        %v598 = vsel %vm592, 0, %v567
        %v599 = vsel %vm592, 0, %v574
        %v600 = vsel %vm592, 0, %v581
        %vm601 = vcmask 1043456
        %vm602 = vsmask.f32 3328
        %vm603 = vmand %vm601, %vm602
        %v604 = vsel %vm603, %v593, 0
        %v605 = vsel %vm603, %v594, 0
        %v606 = vsel %vm603, %v595, 0
        %v607 = vsel %vm603, %v596, 0
        %v608 = vsel %vm603, %v597, 0
        %v609 = vsel %vm603, %v598, 0
        %v610 = vsel %vm603, %v599, 0
        %v611 = vsel %vm603, %v600, 0
        %v612 = vld [vmem:[%s1] sm:$0xff]
        %v613 = vld [vmem:[%s1 + $0x8] sm:$0xff]
        %v614 = vld [vmem:[%s1 + $0x10] sm:$0xff]
        %v615 = vld [vmem:[%s1 + $0x18] sm:$0xff]
        %s616 = scalar_lea.vmem %s1, 32
        %v617 = vld [vmem:[%s616] sm:$0xff]
        %v618 = vld [vmem:[%s616 + $0x8] sm:$0xff]
        %v619 = vld [vmem:[%s616 + $0x10] sm:$0xff]
        %v620 = vld [vmem:[%s616 + $0x18] sm:$0xff]
        %v621 = vpack.c.b16 %v511, %v510
        %v622 = vpack.c.b16 %v513, %v512
        %v623 = vpack.c.b16 %v515, %v514
        %v624 = vpack.c.b16 %v517, %v516
        %v629 = vunpack.c.l.b16 %v617
        %v630 = vunpack.c.h.b16 %v617
        %v631 = vunpack.c.l.b16 %v618
        %v632 = vunpack.c.h.b16 %v618
        %v633 = vunpack.c.l.b16 %v619
        %v634 = vunpack.c.h.b16 %v619
        %v635 = vunpack.c.l.b16 %v620
        %v636 = vunpack.c.h.b16 %v620
        %v637 = vpack.c.b16 %v633, %v629
        %v638 = vpack.c.b16 %v634, %v630
        %v639 = vpack.c.b16 %v635, %v631
        %v640 = vpack.c.b16 %v636, %v632
        %vm645 = vcmask 130048
        %v647 = vsel %vm645, %v621, 0
        %v650 = vsel %vm645, %v622, 0
        %v653 = vsel %vm645, %v623, 0
        %v656 = vsel %vm645, %v624, 0
        %658 = vmatpush.bf16.msra.mxu0 0
        %659 = vmatpush.bf16.msra.mxu0 0
        %660 = vmatpush.bf16.msra.mxu0 0
        %661 = vmatpush.bf16.msra.mxu0 0
        %662 = vmatpush.bf16.msra.mxu0 0
        %663 = vmatpush.bf16.msra.mxu0 0
        %664 = vmatpush.bf16.msra.mxu0 0
        %665 = vmatpush.bf16.msra.mxu0 %v637
        %666 = vmatmul.bf16.gmra.mxu0 %v647
        %v667 = vpop.f32.mrf.mxu0
        %v668 = vadd.f32 0.0, %v667
        %v669 = vpop.f32.mrf.mxu0
        %v670 = vadd.f32 0.0, %v669
        %671 = vmatmul.bf16.gmra.mxu0 %v650
        %v672 = vpop.f32.mrf.mxu0
        %v673 = vadd.f32 0.0, %v672
        %v674 = vpop.f32.mrf.mxu0
        %v675 = vadd.f32 0.0, %v674
        %676 = vmatmul.bf16.gmra.mxu0 %v653
        %v677 = vpop.f32.mrf.mxu0
        %v678 = vadd.f32 0.0, %v677
        %v679 = vpop.f32.mrf.mxu0
        %v680 = vadd.f32 0.0, %v679
        %681 = vmatmul.bf16.gmra.mxu0 %v656
        %v682 = vpop.f32.mrf.mxu0
        %v683 = vadd.f32 0.0, %v682
        %v684 = vpop.f32.mrf.mxu0
        %v685 = vadd.f32 0.0, %v684
        %686 = vdwg.mxu0
        %687 = vmatpush.bf16.msra.mxu0 0
        %688 = vmatpush.bf16.msra.mxu0 0
        %689 = vmatpush.bf16.msra.mxu0 0
        %690 = vmatpush.bf16.msra.mxu0 0
        %691 = vmatpush.bf16.msra.mxu0 0
        %692 = vmatpush.bf16.msra.mxu0 0
        %693 = vmatpush.bf16.msra.mxu0 0
        %694 = vmatpush.bf16.msra.mxu0 %v638
        %695 = vmatmul.bf16.gmra.mxu0 %v647
        %v696 = vpop.f32.mrf.mxu0
        %v697 = vadd.f32 0.0, %v696
        %v698 = vpop.f32.mrf.mxu0
        %v699 = vadd.f32 0.0, %v698
        %700 = vmatmul.bf16.gmra.mxu0 %v650
        %v701 = vpop.f32.mrf.mxu0
        %v702 = vadd.f32 0.0, %v701
        %v703 = vpop.f32.mrf.mxu0
        %v704 = vadd.f32 0.0, %v703
        %705 = vmatmul.bf16.gmra.mxu0 %v653
        %v706 = vpop.f32.mrf.mxu0
        %v707 = vadd.f32 0.0, %v706
        %v708 = vpop.f32.mrf.mxu0
        %v709 = vadd.f32 0.0, %v708
        %710 = vmatmul.bf16.gmra.mxu0 %v656
        %v711 = vpop.f32.mrf.mxu0
        %v712 = vadd.f32 0.0, %v711
        %v713 = vpop.f32.mrf.mxu0
        %v714 = vadd.f32 0.0, %v713
        %715 = vdwg.mxu0
        %716 = vmatpush.bf16.msra.mxu0 0
        %717 = vmatpush.bf16.msra.mxu0 0
        %718 = vmatpush.bf16.msra.mxu0 0
        %719 = vmatpush.bf16.msra.mxu0 0
        %720 = vmatpush.bf16.msra.mxu0 0
        %721 = vmatpush.bf16.msra.mxu0 0
        %722 = vmatpush.bf16.msra.mxu0 0
        %723 = vmatpush.bf16.msra.mxu0 %v639
        %724 = vmatmul.bf16.gmra.mxu0 %v647
        %v725 = vpop.f32.mrf.mxu0
        %v726 = vadd.f32 0.0, %v725
        %v727 = vpop.f32.mrf.mxu0
        %v728 = vadd.f32 0.0, %v727
        %729 = vmatmul.bf16.gmra.mxu0 %v650
        %v730 = vpop.f32.mrf.mxu0
        %v731 = vadd.f32 0.0, %v730
        %v732 = vpop.f32.mrf.mxu0
        %v733 = vadd.f32 0.0, %v732
        %734 = vmatmul.bf16.gmra.mxu0 %v653
        %v735 = vpop.f32.mrf.mxu0
        %v736 = vadd.f32 0.0, %v735
        %v737 = vpop.f32.mrf.mxu0
        %v738 = vadd.f32 0.0, %v737
        %739 = vmatmul.bf16.gmra.mxu0 %v656
        %v740 = vpop.f32.mrf.mxu0
        %v741 = vadd.f32 0.0, %v740
        %v742 = vpop.f32.mrf.mxu0
        %v743 = vadd.f32 0.0, %v742
        %744 = vdwg.mxu0
        %745 = vmatpush.bf16.msra.mxu0 0
        %746 = vmatpush.bf16.msra.mxu0 0
        %747 = vmatpush.bf16.msra.mxu0 0
        %748 = vmatpush.bf16.msra.mxu0 0
        %749 = vmatpush.bf16.msra.mxu0 0
        %750 = vmatpush.bf16.msra.mxu0 0
        %751 = vmatpush.bf16.msra.mxu0 0
        %752 = vmatpush.bf16.msra.mxu0 %v640
        %753 = vmatmul.bf16.gmra.mxu0 %v647
        %v754 = vpop.f32.mrf.mxu0
        %v755 = vadd.f32 0.0, %v754
        %v756 = vpop.f32.mrf.mxu0
        %v757 = vadd.f32 0.0, %v756
        %758 = vmatmul.bf16.gmra.mxu0 %v650
        %v759 = vpop.f32.mrf.mxu0
        %v760 = vadd.f32 0.0, %v759
        %v761 = vpop.f32.mrf.mxu0
        %v762 = vadd.f32 0.0, %v761
        %763 = vmatmul.bf16.gmra.mxu0 %v653
        %v764 = vpop.f32.mrf.mxu0
        %v765 = vadd.f32 0.0, %v764
        %v766 = vpop.f32.mrf.mxu0
        %v767 = vadd.f32 0.0, %v766
        %768 = vmatmul.bf16.gmra.mxu0 %v656
        %v769 = vpop.f32.mrf.mxu0
        %v770 = vadd.f32 0.0, %v769
        %v771 = vpop.f32.mrf.mxu0
        %v772 = vadd.f32 0.0, %v771
        %773 = vdwg.mxu0
        %v782 = vunpack.c.l.b16 %v604
        %v783 = vunpack.c.l.b16 %v605
        %v784 = vunpack.c.l.b16 %v606
        %v785 = vunpack.c.l.b16 %v607
        %v786 = vunpack.c.l.b16 %v608
        %v787 = vunpack.c.l.b16 %v609
        %v788 = vunpack.c.l.b16 %v610
        %v789 = vunpack.c.l.b16 %v611
        %v790 = vpack.c.b16 %v783, %v782
        %v791 = vpack.c.b16 %v785, %v784
        %v792 = vpack.c.b16 %v787, %v786
        %v793 = vpack.c.b16 %v789, %v788
        %v798 = vunpack.c.l.b16 %v612
        %v799 = vunpack.c.h.b16 %v612
        %v800 = vunpack.c.l.b16 %v613
        %v801 = vunpack.c.h.b16 %v613
        %v802 = vunpack.c.l.b16 %v614
        %v803 = vunpack.c.h.b16 %v614
        %v804 = vunpack.c.l.b16 %v615
        %v805 = vunpack.c.h.b16 %v615
        %v806 = vpack.c.b16 %v802, %v798
        %v807 = vpack.c.b16 %v803, %v799
        %v808 = vpack.c.b16 %v804, %v800
        %v809 = vpack.c.b16 %v805, %v801
        %v815 = vsel %vm645, %v790, 0
        %v818 = vsel %vm645, %v791, 0
        %v821 = vsel %vm645, %v792, 0
        %v824 = vsel %vm645, %v793, 0
        %826 = vmatpush.bf16.msra.mxu0 0
        %827 = vmatpush.bf16.msra.mxu0 0
        %828 = vmatpush.bf16.msra.mxu0 0
        %829 = vmatpush.bf16.msra.mxu0 0
        %830 = vmatpush.bf16.msra.mxu0 0
        %831 = vmatpush.bf16.msra.mxu0 0
        %832 = vmatpush.bf16.msra.mxu0 0
        %833 = vmatpush.bf16.msra.mxu0 %v806
        %834 = vmatmul.bf16.gmra.mxu0 %v815
        %v835 = vpop.f32.mrf.mxu0
        %v836 = vadd.f32 %v668, %v835
        %v837 = vpop.f32.mrf.mxu0
        %v838 = vadd.f32 %v670, %v837
        %839 = vmatmul.bf16.gmra.mxu0 %v818
        %v840 = vpop.f32.mrf.mxu0
        %v841 = vadd.f32 %v673, %v840
        %v842 = vpop.f32.mrf.mxu0
        %v843 = vadd.f32 %v675, %v842
        %844 = vmatmul.bf16.gmra.mxu0 %v821
        %v845 = vpop.f32.mrf.mxu0
        %v846 = vadd.f32 %v678, %v845
        %v847 = vpop.f32.mrf.mxu0
        %v848 = vadd.f32 %v680, %v847
        %849 = vmatmul.bf16.gmra.mxu0 %v824
        %v850 = vpop.f32.mrf.mxu0
        %v851 = vadd.f32 %v683, %v850
        %v852 = vpop.f32.mrf.mxu0
        %v853 = vadd.f32 %v685, %v852
        %854 = vdwg.mxu0
        %855 = vmatpush.bf16.msra.mxu0 0
        %856 = vmatpush.bf16.msra.mxu0 0
        %857 = vmatpush.bf16.msra.mxu0 0
        %858 = vmatpush.bf16.msra.mxu0 0
        %859 = vmatpush.bf16.msra.mxu0 0
        %860 = vmatpush.bf16.msra.mxu0 0
        %861 = vmatpush.bf16.msra.mxu0 0
        %862 = vmatpush.bf16.msra.mxu0 %v807
        %863 = vmatmul.bf16.gmra.mxu0 %v815
        %v864 = vpop.f32.mrf.mxu0
        %v865 = vadd.f32 %v697, %v864
        %v866 = vpop.f32.mrf.mxu0
        %v867 = vadd.f32 %v699, %v866
        %868 = vmatmul.bf16.gmra.mxu0 %v818
        %v869 = vpop.f32.mrf.mxu0
        %v870 = vadd.f32 %v702, %v869
        %v871 = vpop.f32.mrf.mxu0
        %v872 = vadd.f32 %v704, %v871
        %873 = vmatmul.bf16.gmra.mxu0 %v821
        %v874 = vpop.f32.mrf.mxu0
        %v875 = vadd.f32 %v707, %v874
        %v876 = vpop.f32.mrf.mxu0
        %v877 = vadd.f32 %v709, %v876
        %878 = vmatmul.bf16.gmra.mxu0 %v824
        %v879 = vpop.f32.mrf.mxu0
        %v880 = vadd.f32 %v712, %v879
        %v881 = vpop.f32.mrf.mxu0
        %v882 = vadd.f32 %v714, %v881
        %883 = vdwg.mxu0
        %884 = vmatpush.bf16.msra.mxu0 0
        %885 = vmatpush.bf16.msra.mxu0 0
        %886 = vmatpush.bf16.msra.mxu0 0
        %887 = vmatpush.bf16.msra.mxu0 0
        %888 = vmatpush.bf16.msra.mxu0 0
        %889 = vmatpush.bf16.msra.mxu0 0
        %890 = vmatpush.bf16.msra.mxu0 0
        %891 = vmatpush.bf16.msra.mxu0 %v808
        %892 = vmatmul.bf16.gmra.mxu0 %v815
        %v893 = vpop.f32.mrf.mxu0
        %v894 = vadd.f32 %v726, %v893
        %v895 = vpop.f32.mrf.mxu0
        %v896 = vadd.f32 %v728, %v895
        %897 = vmatmul.bf16.gmra.mxu0 %v818
        %v898 = vpop.f32.mrf.mxu0
        %v899 = vadd.f32 %v731, %v898
        %v900 = vpop.f32.mrf.mxu0
        %v901 = vadd.f32 %v733, %v900
        %902 = vmatmul.bf16.gmra.mxu0 %v821
        %v903 = vpop.f32.mrf.mxu0
        %v904 = vadd.f32 %v736, %v903
        %v905 = vpop.f32.mrf.mxu0
        %v906 = vadd.f32 %v738, %v905
        %907 = vmatmul.bf16.gmra.mxu0 %v824
        %v908 = vpop.f32.mrf.mxu0
        %v909 = vadd.f32 %v741, %v908
        %v910 = vpop.f32.mrf.mxu0
        %v911 = vadd.f32 %v743, %v910
        %912 = vdwg.mxu0
        %913 = vmatpush.bf16.msra.mxu0 0
        %914 = vmatpush.bf16.msra.mxu0 0
        %915 = vmatpush.bf16.msra.mxu0 0
        %916 = vmatpush.bf16.msra.mxu0 0
        %917 = vmatpush.bf16.msra.mxu0 0
        %918 = vmatpush.bf16.msra.mxu0 0
        %919 = vmatpush.bf16.msra.mxu0 0
        %920 = vmatpush.bf16.msra.mxu0 %v809
        %921 = vmatmul.bf16.gmra.mxu0 %v815
        %v922 = vpop.f32.mrf.mxu0
        %v923 = vadd.f32 %v755, %v922
        %v924 = vpop.f32.mrf.mxu0
        %v925 = vadd.f32 %v757, %v924
        %926 = vmatmul.bf16.gmra.mxu0 %v818
        %v927 = vpop.f32.mrf.mxu0
        %v928 = vadd.f32 %v760, %v927
        %v929 = vpop.f32.mrf.mxu0
        %v930 = vadd.f32 %v762, %v929
        %931 = vmatmul.bf16.gmra.mxu0 %v821
        %v932 = vpop.f32.mrf.mxu0
        %v933 = vadd.f32 %v765, %v932
        %v934 = vpop.f32.mrf.mxu0
        %v935 = vadd.f32 %v767, %v934
        %936 = vmatmul.bf16.gmra.mxu0 %v824
        %v937 = vpop.f32.mrf.mxu0
        %v938 = vadd.f32 %v770, %v937
        %v939 = vpop.f32.mrf.mxu0
        %v940 = vadd.f32 %v772, %v939
        %941 = vdwg.mxu0
        %v942 = vrot.slane %v530, 1
        %v943 = vor.u32 %v527, %v942
        %v944 = vrot.slane %v537, 1
        %v945 = vor.u32 %v534, %v944
        %v946 = vrot.slane %v544, 1
        %v947 = vor.u32 %v541, %v946
        %v948 = vrot.slane %v551, 1
        %v949 = vor.u32 %v548, %v948
        %v950 = vrot.slane %v558, 1
        %v951 = vor.u32 %v555, %v950
        %v952 = vrot.slane %v565, 1
        %v953 = vor.u32 %v562, %v952
        %v954 = vrot.slane %v572, 1
        %v955 = vor.u32 %v569, %v954
        %v956 = vrot.slane %v579, 1
        %v957 = vor.u32 %v576, %v956
        %vm958 = vcmask 1042432
        %v961 = vsel %vm958, %v943, 0
        %v963 = vsel %vm958, %v945, 0
        %v965 = vsel %vm958, %v947, 0
        %v967 = vsel %vm958, %v949, 0
        %v969 = vsel %vm958, %v951, 0
        %v971 = vsel %vm958, %v953, 0
        %v973 = vsel %vm958, %v955, 0
        %v975 = vsel %vm958, %v957, 0
        %s976 = scalar_lea.vmem %s1, 64
        %v977 = vld [vmem:[%s976] sm:$0xff]
        %v978 = vld [vmem:[%s976 + $0x8] sm:$0xff]
        %v979 = vld [vmem:[%s976 + $0x10] sm:$0xff]
        %v980 = vld [vmem:[%s976 + $0x18] sm:$0xff]
        %v989 = vunpack.c.l.b16 %v961
        %v990 = vunpack.c.l.b16 %v963
        %v991 = vunpack.c.l.b16 %v965
        %v992 = vunpack.c.l.b16 %v967
        %v993 = vunpack.c.l.b16 %v969
        %v994 = vunpack.c.l.b16 %v971
        %v995 = vunpack.c.l.b16 %v973
        %v996 = vunpack.c.l.b16 %v975
        %v997 = vpack.c.b16 %v990, %v989
        %v998 = vpack.c.b16 %v992, %v991
        %v999 = vpack.c.b16 %v994, %v993
        %v1000 = vpack.c.b16 %v996, %v995
        %v1005 = vunpack.c.l.b16 %v977
        %v1006 = vunpack.c.h.b16 %v977
        %v1007 = vunpack.c.l.b16 %v978
        %v1008 = vunpack.c.h.b16 %v978
        %v1009 = vunpack.c.l.b16 %v979
        %v1010 = vunpack.c.h.b16 %v979
        %v1011 = vunpack.c.l.b16 %v980
        %v1012 = vunpack.c.h.b16 %v980
        %v1013 = vpack.c.b16 %v1009, %v1005
        %v1014 = vpack.c.b16 %v1010, %v1006
        %v1015 = vpack.c.b16 %v1011, %v1007
        %v1016 = vpack.c.b16 %v1012, %v1008
        %v1022 = vsel %vm645, %v997, 0
        %v1025 = vsel %vm645, %v998, 0
        %v1028 = vsel %vm645, %v999, 0
        %v1031 = vsel %vm645, %v1000, 0
        %1033 = vmatpush.bf16.msra.mxu0 0
        %1034 = vmatpush.bf16.msra.mxu0 0
        %1035 = vmatpush.bf16.msra.mxu0 0
        %1036 = vmatpush.bf16.msra.mxu0 0
        %1037 = vmatpush.bf16.msra.mxu0 0
        %1038 = vmatpush.bf16.msra.mxu0 0
        %1039 = vmatpush.bf16.msra.mxu0 0
        %1040 = vmatpush.bf16.msra.mxu0 %v1013
        %1041 = vmatmul.bf16.gmra.mxu0 %v1022
        %v1042 = vpop.f32.mrf.mxu0
        %v1043 = vadd.f32 0.0, %v1042
        %v1044 = vpop.f32.mrf.mxu0
        %v1045 = vadd.f32 0.0, %v1044
        %1046 = vmatmul.bf16.gmra.mxu0 %v1025
        %v1047 = vpop.f32.mrf.mxu0
        %v1048 = vadd.f32 0.0, %v1047
        %v1049 = vpop.f32.mrf.mxu0
        %v1050 = vadd.f32 0.0, %v1049
        %1051 = vmatmul.bf16.gmra.mxu0 %v1028
        %v1052 = vpop.f32.mrf.mxu0
        %v1053 = vadd.f32 0.0, %v1052
        %v1054 = vpop.f32.mrf.mxu0
        %v1055 = vadd.f32 0.0, %v1054
        %1056 = vmatmul.bf16.gmra.mxu0 %v1031
        %v1057 = vpop.f32.mrf.mxu0
        %v1058 = vadd.f32 0.0, %v1057
        %v1059 = vpop.f32.mrf.mxu0
        %v1060 = vadd.f32 0.0, %v1059
        %1061 = vdwg.mxu0
        %1062 = vmatpush.bf16.msra.mxu0 0
        %1063 = vmatpush.bf16.msra.mxu0 0
        %1064 = vmatpush.bf16.msra.mxu0 0
        %1065 = vmatpush.bf16.msra.mxu0 0
        %1066 = vmatpush.bf16.msra.mxu0 0
        %1067 = vmatpush.bf16.msra.mxu0 0
        %1068 = vmatpush.bf16.msra.mxu0 0
        %1069 = vmatpush.bf16.msra.mxu0 %v1014
        %1070 = vmatmul.bf16.gmra.mxu0 %v1022
        %v1071 = vpop.f32.mrf.mxu0
        %v1072 = vadd.f32 0.0, %v1071
        %v1073 = vpop.f32.mrf.mxu0
        %v1074 = vadd.f32 0.0, %v1073
        %1075 = vmatmul.bf16.gmra.mxu0 %v1025
        %v1076 = vpop.f32.mrf.mxu0
        %v1077 = vadd.f32 0.0, %v1076
        %v1078 = vpop.f32.mrf.mxu0
        %v1079 = vadd.f32 0.0, %v1078
        %1080 = vmatmul.bf16.gmra.mxu0 %v1028
        %v1081 = vpop.f32.mrf.mxu0
        %v1082 = vadd.f32 0.0, %v1081
        %v1083 = vpop.f32.mrf.mxu0
        %v1084 = vadd.f32 0.0, %v1083
        %1085 = vmatmul.bf16.gmra.mxu0 %v1031
        %v1086 = vpop.f32.mrf.mxu0
        %v1087 = vadd.f32 0.0, %v1086
        %v1088 = vpop.f32.mrf.mxu0
        %v1089 = vadd.f32 0.0, %v1088
        %1090 = vdwg.mxu0
        %1091 = vmatpush.bf16.msra.mxu0 0
        %1092 = vmatpush.bf16.msra.mxu0 0
        %1093 = vmatpush.bf16.msra.mxu0 0
        %1094 = vmatpush.bf16.msra.mxu0 0
        %1095 = vmatpush.bf16.msra.mxu0 0
        %1096 = vmatpush.bf16.msra.mxu0 0
        %1097 = vmatpush.bf16.msra.mxu0 0
        %1098 = vmatpush.bf16.msra.mxu0 %v1015
        %1099 = vmatmul.bf16.gmra.mxu0 %v1022
        %v1100 = vpop.f32.mrf.mxu0
        %v1101 = vadd.f32 0.0, %v1100
        %v1102 = vpop.f32.mrf.mxu0
        %v1103 = vadd.f32 0.0, %v1102
        %1104 = vmatmul.bf16.gmra.mxu0 %v1025
        %v1105 = vpop.f32.mrf.mxu0
        %v1106 = vadd.f32 0.0, %v1105
        %v1107 = vpop.f32.mrf.mxu0
        %v1108 = vadd.f32 0.0, %v1107
        %1109 = vmatmul.bf16.gmra.mxu0 %v1028
        %v1110 = vpop.f32.mrf.mxu0
        %v1111 = vadd.f32 0.0, %v1110
        %v1112 = vpop.f32.mrf.mxu0
        %v1113 = vadd.f32 0.0, %v1112
        %1114 = vmatmul.bf16.gmra.mxu0 %v1031
        %v1115 = vpop.f32.mrf.mxu0
        %v1116 = vadd.f32 0.0, %v1115
        %v1117 = vpop.f32.mrf.mxu0
        %v1118 = vadd.f32 0.0, %v1117
        %1119 = vdwg.mxu0
        %1120 = vmatpush.bf16.msra.mxu0 0
        %1121 = vmatpush.bf16.msra.mxu0 0
        %1122 = vmatpush.bf16.msra.mxu0 0
        %1123 = vmatpush.bf16.msra.mxu0 0
        %1124 = vmatpush.bf16.msra.mxu0 0
        %1125 = vmatpush.bf16.msra.mxu0 0
        %1126 = vmatpush.bf16.msra.mxu0 0
        %1127 = vmatpush.bf16.msra.mxu0 %v1016
        %1128 = vmatmul.bf16.gmra.mxu0 %v1022
        %v1129 = vpop.f32.mrf.mxu0
        %v1130 = vadd.f32 0.0, %v1129
        %v1131 = vpop.f32.mrf.mxu0
        %v1132 = vadd.f32 0.0, %v1131
        %1133 = vmatmul.bf16.gmra.mxu0 %v1025
        %v1134 = vpop.f32.mrf.mxu0
        %v1135 = vadd.f32 0.0, %v1134
        %v1136 = vpop.f32.mrf.mxu0
        %v1137 = vadd.f32 0.0, %v1136
        %1138 = vmatmul.bf16.gmra.mxu0 %v1028
        %v1139 = vpop.f32.mrf.mxu0
        %v1140 = vadd.f32 0.0, %v1139
        %v1141 = vpop.f32.mrf.mxu0
        %v1142 = vadd.f32 0.0, %v1141
        %1143 = vmatmul.bf16.gmra.mxu0 %v1031
        %v1144 = vpop.f32.mrf.mxu0
        %v1145 = vadd.f32 0.0, %v1144
        %v1146 = vpop.f32.mrf.mxu0
        %v1147 = vadd.f32 0.0, %v1146
        %1148 = vdwg.mxu0
        %v1149 = vadd.f32 %v836, %v1043
        %v1150 = vadd.f32 %v865, %v1072
        %v1151 = vadd.f32 %v894, %v1101
        %v1152 = vadd.f32 %v923, %v1130
        %v1153 = vadd.f32 %v838, %v1045
        %v1154 = vadd.f32 %v867, %v1074
        %v1155 = vadd.f32 %v896, %v1103
        %v1156 = vadd.f32 %v925, %v1132
        %v1157 = vadd.f32 %v841, %v1048
        %v1158 = vadd.f32 %v870, %v1077
        %v1159 = vadd.f32 %v899, %v1106
        %v1160 = vadd.f32 %v928, %v1135
        %v1161 = vadd.f32 %v843, %v1050
        %v1162 = vadd.f32 %v872, %v1079
        %v1163 = vadd.f32 %v901, %v1108
        %v1164 = vadd.f32 %v930, %v1137
        %v1165 = vadd.f32 %v846, %v1053
        %v1166 = vadd.f32 %v875, %v1082
        %v1167 = vadd.f32 %v904, %v1111
        %v1168 = vadd.f32 %v933, %v1140
        %v1169 = vadd.f32 %v848, %v1055
        %v1170 = vadd.f32 %v877, %v1084
        %v1171 = vadd.f32 %v906, %v1113
        %v1172 = vadd.f32 %v935, %v1142
        %v1173 = vadd.f32 %v851, %v1058
        %v1174 = vadd.f32 %v880, %v1087
        %v1175 = vadd.f32 %v909, %v1116
        %v1176 = vadd.f32 %v938, %v1145
        %v1177 = vadd.f32 %v853, %v1060
        %v1178 = vadd.f32 %v882, %v1089
        %v1179 = vadd.f32 %v911, %v1118
        %v1180 = vadd.f32 %v940, %v1147
        %v1181 = vld [vmem:[%s2] sm:$0xff]
        %v1182 = vld [vmem:[%s2 + $0x8] sm:$0xff]
        %v1183 = vld [vmem:[%s2 + $0x10] sm:$0xff]
        %v1184 = vld [vmem:[%s2 + $0x18] sm:$0xff]
        %v1185 = vadd.f32 %v1149, %v1181
        %v1186 = vadd.f32 %v1150, %v1182
        %v1187 = vadd.f32 %v1151, %v1183
        %v1188 = vadd.f32 %v1152, %v1184
        %v1189 = vadd.f32 %v1153, %v1181
        %v1190 = vadd.f32 %v1154, %v1182
        %v1191 = vadd.f32 %v1155, %v1183
        %v1192 = vadd.f32 %v1156, %v1184
        %v1193 = vadd.f32 %v1157, %v1181
        %v1194 = vadd.f32 %v1158, %v1182
        %v1195 = vadd.f32 %v1159, %v1183
        %v1196 = vadd.f32 %v1160, %v1184
        %v1197 = vadd.f32 %v1161, %v1181
        %v1198 = vadd.f32 %v1162, %v1182
        %v1199 = vadd.f32 %v1163, %v1183
        %v1200 = vadd.f32 %v1164, %v1184
        %v1201 = vadd.f32 %v1165, %v1181
        %v1202 = vadd.f32 %v1166, %v1182
        %v1203 = vadd.f32 %v1167, %v1183
        %v1204 = vadd.f32 %v1168, %v1184
        %v1205 = vadd.f32 %v1169, %v1181
        %v1206 = vadd.f32 %v1170, %v1182
        %v1207 = vadd.f32 %v1171, %v1183
        %v1208 = vadd.f32 %v1172, %v1184
        %v1209 = vadd.f32 %v1173, %v1181
        %v1210 = vadd.f32 %v1174, %v1182
        %v1211 = vadd.f32 %v1175, %v1183
        %v1212 = vadd.f32 %v1176, %v1184
        %v1213 = vadd.f32 %v1177, %v1181
        %v1214 = vadd.f32 %v1178, %v1182
        %v1215 = vadd.f32 %v1179, %v1183
        %v1216 = vadd.f32 %v1180, %v1184
        %v1217 = vmax.f32 %v1185, 0.0
        %v1218 = vmax.f32 %v1186, 0.0
        %v1219 = vmax.f32 %v1187, 0.0
        %v1220 = vmax.f32 %v1188, 0.0
        %v1221 = vmax.f32 %v1189, 0.0
        %v1222 = vmax.f32 %v1190, 0.0
        %v1223 = vmax.f32 %v1191, 0.0
        %v1224 = vmax.f32 %v1192, 0.0
        %v1225 = vmax.f32 %v1193, 0.0
        %v1226 = vmax.f32 %v1194, 0.0
        %v1227 = vmax.f32 %v1195, 0.0
        %v1228 = vmax.f32 %v1196, 0.0
        %v1229 = vmax.f32 %v1197, 0.0
        %v1230 = vmax.f32 %v1198, 0.0
        %v1231 = vmax.f32 %v1199, 0.0
        %v1232 = vmax.f32 %v1200, 0.0
        %v1233 = vmax.f32 %v1201, 0.0
        %v1234 = vmax.f32 %v1202, 0.0
        %v1235 = vmax.f32 %v1203, 0.0
        %v1236 = vmax.f32 %v1204, 0.0
        %v1237 = vmax.f32 %v1205, 0.0
        %v1238 = vmax.f32 %v1206, 0.0
        %v1239 = vmax.f32 %v1207, 0.0
        %v1240 = vmax.f32 %v1208, 0.0
        %v1241 = vmax.f32 %v1209, 0.0
        %v1242 = vmax.f32 %v1210, 0.0
        %v1243 = vmax.f32 %v1211, 0.0
        %v1244 = vmax.f32 %v1212, 0.0
        %v1245 = vmax.f32 %v1213, 0.0
        %v1246 = vmax.f32 %v1214, 0.0
        %v1247 = vmax.f32 %v1215, 0.0
        %v1248 = vmax.f32 %v1216, 0.0
        %1281 = vrot.lane.b32.xlu0 %v1217, 96
        %v1282 = vpop.permute.xlu0 %1281
        %1283 = vrot.lane.b32.xlu0 %v1218, 96
        %v1284 = vpop.permute.xlu0 %1283
        %1285 = vrot.lane.b32.xlu0 %v1219, 96
        %v1286 = vpop.permute.xlu0 %1285
        %1287 = vrot.lane.b32.xlu0 %v1220, 96
        %v1288 = vpop.permute.xlu0 %1287
        %1289 = vrot.lane.b32.xlu0 %v1221, 96
        %v1290 = vpop.permute.xlu0 %1289
        %1291 = vrot.lane.b32.xlu0 %v1222, 96
        %v1292 = vpop.permute.xlu0 %1291
        %1293 = vrot.lane.b32.xlu0 %v1223, 96
        %v1294 = vpop.permute.xlu0 %1293
        %1295 = vrot.lane.b32.xlu0 %v1224, 96
        %v1296 = vpop.permute.xlu0 %1295
        %1297 = vrot.lane.b32.xlu0 %v1225, 96
        %v1298 = vpop.permute.xlu0 %1297
        %1299 = vrot.lane.b32.xlu0 %v1226, 96
        %v1300 = vpop.permute.xlu0 %1299
        %1301 = vrot.lane.b32.xlu0 %v1227, 96
        %v1302 = vpop.permute.xlu0 %1301
        %1303 = vrot.lane.b32.xlu0 %v1228, 96
        %v1304 = vpop.permute.xlu0 %1303
        %1305 = vrot.lane.b32.xlu0 %v1229, 96
        %v1306 = vpop.permute.xlu0 %1305
        %1307 = vrot.lane.b32.xlu0 %v1230, 96
        %v1308 = vpop.permute.xlu0 %1307
        %1309 = vrot.lane.b32.xlu0 %v1231, 96
        %v1310 = vpop.permute.xlu0 %1309
        %1311 = vrot.lane.b32.xlu0 %v1232, 96
        %v1312 = vpop.permute.xlu0 %1311
        %1313 = vrot.lane.b32.xlu0 %v1233, 96
        %v1314 = vpop.permute.xlu0 %1313
        %1315 = vrot.lane.b32.xlu0 %v1234, 96
        %v1316 = vpop.permute.xlu0 %1315
        %1317 = vrot.lane.b32.xlu0 %v1235, 96
        %v1318 = vpop.permute.xlu0 %1317
        %1319 = vrot.lane.b32.xlu0 %v1236, 96
        %v1320 = vpop.permute.xlu0 %1319
        %1321 = vrot.lane.b32.xlu0 %v1237, 96
        %v1322 = vpop.permute.xlu0 %1321
        %1323 = vrot.lane.b32.xlu0 %v1238, 96
        %v1324 = vpop.permute.xlu0 %1323
        %1325 = vrot.lane.b32.xlu0 %v1239, 96
        %v1326 = vpop.permute.xlu0 %1325
        %1327 = vrot.lane.b32.xlu0 %v1240, 96
        %v1328 = vpop.permute.xlu0 %1327
        %1329 = vrot.lane.b32.xlu0 %v1241, 96
        %v1330 = vpop.permute.xlu0 %1329
        %1331 = vrot.lane.b32.xlu0 %v1242, 96
        %v1332 = vpop.permute.xlu0 %1331
        %1333 = vrot.lane.b32.xlu0 %v1243, 96
        %v1334 = vpop.permute.xlu0 %1333
        %1335 = vrot.lane.b32.xlu0 %v1244, 96
        %v1336 = vpop.permute.xlu0 %1335
        %1337 = vrot.lane.b32.xlu0 %v1245, 96
        %v1338 = vpop.permute.xlu0 %1337
        %1339 = vrot.lane.b32.xlu0 %v1246, 96
        %v1340 = vpop.permute.xlu0 %1339
        %1341 = vrot.lane.b32.xlu0 %v1247, 96
        %v1342 = vpop.permute.xlu0 %1341
        %1343 = vrot.lane.b32.xlu0 %v1248, 96
        %v1344 = vpop.permute.xlu0 %1343
        %vm1345 = vcmask 785408
        %v1346 = vsel %vm1345, %v1282, %v1284
        %v1347 = vsel %vm1345, %v1284, %v1286
        %v1348 = vsel %vm1345, %v1286, %v1288
        %v1349 = vsel %vm1345, %v1290, %v1292
        %v1350 = vsel %vm1345, %v1292, %v1294
        %v1351 = vsel %vm1345, %v1294, %v1296
        %v1352 = vsel %vm1345, %v1298, %v1300
        %v1353 = vsel %vm1345, %v1300, %v1302
        %v1354 = vsel %vm1345, %v1302, %v1304
        %v1355 = vsel %vm1345, %v1306, %v1308
        %v1356 = vsel %vm1345, %v1308, %v1310
        %v1357 = vsel %vm1345, %v1310, %v1312
        %v1358 = vsel %vm1345, %v1314, %v1316
        %v1359 = vsel %vm1345, %v1316, %v1318
        %v1360 = vsel %vm1345, %v1318, %v1320
        %v1361 = vsel %vm1345, %v1322, %v1324
        %v1362 = vsel %vm1345, %v1324, %v1326
        %v1363 = vsel %vm1345, %v1326, %v1328
        %v1364 = vsel %vm1345, %v1330, %v1332
        %v1365 = vsel %vm1345, %v1332, %v1334
        %v1366 = vsel %vm1345, %v1334, %v1336
        %v1367 = vsel %vm1345, %v1338, %v1340
        %v1368 = vsel %vm1345, %v1340, %v1342
        %v1369 = vsel %vm1345, %v1342, %v1344
        %v1402 = vmax.f32 %v1217, %v1346
        %v1403 = vmax.f32 %v1218, %v1347
        %v1404 = vmax.f32 %v1219, %v1348
        %v1405 = vmax.f32 %v1220, %v1288
        %v1406 = vmax.f32 %v1221, %v1349
        %v1407 = vmax.f32 %v1222, %v1350
        %v1408 = vmax.f32 %v1223, %v1351
        %v1409 = vmax.f32 %v1224, %v1296
        %v1410 = vmax.f32 %v1225, %v1352
        %v1411 = vmax.f32 %v1226, %v1353
        %v1412 = vmax.f32 %v1227, %v1354
        %v1413 = vmax.f32 %v1228, %v1304
        %v1414 = vmax.f32 %v1229, %v1355
        %v1415 = vmax.f32 %v1230, %v1356
        %v1416 = vmax.f32 %v1231, %v1357
        %v1417 = vmax.f32 %v1232, %v1312
        %v1418 = vmax.f32 %v1233, %v1358
        %v1419 = vmax.f32 %v1234, %v1359
        %v1420 = vmax.f32 %v1235, %v1360
        %v1421 = vmax.f32 %v1236, %v1320
        %v1422 = vmax.f32 %v1237, %v1361
        %v1423 = vmax.f32 %v1238, %v1362
        %v1424 = vmax.f32 %v1239, %v1363
        %v1425 = vmax.f32 %v1240, %v1328
        %v1426 = vmax.f32 %v1241, %v1364
        %v1427 = vmax.f32 %v1242, %v1365
        %v1428 = vmax.f32 %v1243, %v1366
        %v1429 = vmax.f32 %v1244, %v1336
        %v1430 = vmax.f32 %v1245, %v1367
        %v1431 = vmax.f32 %v1246, %v1368
        %v1432 = vmax.f32 %v1247, %v1369
        %v1433 = vmax.f32 %v1248, %v1344
        %v1434 = vpack.c.bf16 %v1403, %v1402
        %v1435 = vpack.c.bf16 %v1405, %v1404
        %v1436 = vpack.c.bf16 %v1407, %v1406
        %v1437 = vpack.c.bf16 %v1409, %v1408
        %v1438 = vpack.c.bf16 %v1411, %v1410
        %v1439 = vpack.c.bf16 %v1413, %v1412
        %v1440 = vpack.c.bf16 %v1415, %v1414
        %v1441 = vpack.c.bf16 %v1417, %v1416
        %v1442 = vpack.c.bf16 %v1419, %v1418
        %v1443 = vpack.c.bf16 %v1421, %v1420
        %v1444 = vpack.c.bf16 %v1423, %v1422
        %v1445 = vpack.c.bf16 %v1425, %v1424
        %v1446 = vpack.c.bf16 %v1427, %v1426
        %v1447 = vpack.c.bf16 %v1429, %v1428
        %v1448 = vpack.c.bf16 %v1431, %v1430
        %v1449 = vpack.c.bf16 %v1433, %v1432
        %v1466 = vunpack.c.l.b16 %v1434
        %v1467 = vunpack.c.h.b16 %v1434
        %v1468 = vunpack.c.l.b16 %v1435
        %v1469 = vunpack.c.h.b16 %v1435
        %v1470 = vunpack.c.l.b16 %v1436
        %v1471 = vunpack.c.h.b16 %v1436
        %v1472 = vunpack.c.l.b16 %v1437
        %v1473 = vunpack.c.h.b16 %v1437
        %v1474 = vunpack.c.l.b16 %v1438
        %v1475 = vunpack.c.h.b16 %v1438
        %v1476 = vunpack.c.l.b16 %v1439
        %v1477 = vunpack.c.h.b16 %v1439
        %v1478 = vunpack.c.l.b16 %v1440
        %v1479 = vunpack.c.h.b16 %v1440
        %v1480 = vunpack.c.l.b16 %v1441
        %v1481 = vunpack.c.h.b16 %v1441
        %v1482 = vunpack.c.l.b16 %v1442
        %v1483 = vunpack.c.h.b16 %v1442
        %v1484 = vunpack.c.l.b16 %v1443
        %v1485 = vunpack.c.h.b16 %v1443
        %v1486 = vunpack.c.l.b16 %v1444
        %v1487 = vunpack.c.h.b16 %v1444
        %v1488 = vunpack.c.l.b16 %v1445
        %v1489 = vunpack.c.h.b16 %v1445
        %v1490 = vunpack.c.l.b16 %v1446
        %v1491 = vunpack.c.h.b16 %v1446
        %v1492 = vunpack.c.l.b16 %v1447
        %v1493 = vunpack.c.h.b16 %v1447
        %v1494 = vunpack.c.l.b16 %v1448
        %v1495 = vunpack.c.h.b16 %v1448
        %v1496 = vunpack.c.l.b16 %v1449
        %v1497 = vunpack.c.h.b16 %v1449
        %v1498 = vpack.c.b16 %v1466, %v1466
        %v1499 = vpack.c.b16 %v1467, %v1467
        %v1500 = vpack.c.b16 %v1468, %v1468
        %v1501 = vpack.c.b16 %v1469, %v1469
        %v1502 = vpack.c.b16 %v1470, %v1470
        %v1503 = vpack.c.b16 %v1471, %v1471
        %v1504 = vpack.c.b16 %v1472, %v1472
        %v1505 = vpack.c.b16 %v1473, %v1473
        %v1506 = vpack.c.b16 %v1474, %v1474
        %v1507 = vpack.c.b16 %v1475, %v1475
        %v1508 = vpack.c.b16 %v1476, %v1476
        %v1509 = vpack.c.b16 %v1477, %v1477
        %v1510 = vpack.c.b16 %v1478, %v1478
        %v1511 = vpack.c.b16 %v1479, %v1479
        %v1512 = vpack.c.b16 %v1480, %v1480
        %v1513 = vpack.c.b16 %v1481, %v1481
        %v1514 = vpack.c.b16 %v1482, %v1482
        %v1515 = vpack.c.b16 %v1483, %v1483
        %v1516 = vpack.c.b16 %v1484, %v1484
        %v1517 = vpack.c.b16 %v1485, %v1485
        %v1518 = vpack.c.b16 %v1486, %v1486
        %v1519 = vpack.c.b16 %v1487, %v1487
        %v1520 = vpack.c.b16 %v1488, %v1488
        %v1521 = vpack.c.b16 %v1489, %v1489
        %v1522 = vpack.c.b16 %v1490, %v1490
        %v1523 = vpack.c.b16 %v1491, %v1491
        %v1524 = vpack.c.b16 %v1492, %v1492
        %v1525 = vpack.c.b16 %v1493, %v1493
        %v1526 = vpack.c.b16 %v1494, %v1494
        %v1527 = vpack.c.b16 %v1495, %v1495
        %v1528 = vpack.c.b16 %v1496, %v1496
        %v1529 = vpack.c.b16 %v1497, %v1497
        %v1531 = vshrl.u32 %v1498, 16
        %v1533 = vrot.slane %v1531, 7
        %v1534 = vshll.u32 %v1498, 16
        %v1536 = vor.u32 %v1533, %v1534
        %v1538 = vshrl.u32 %v1499, 16
        %v1540 = vrot.slane %v1538, 7
        %v1541 = vshll.u32 %v1499, 16
        %v1543 = vor.u32 %v1540, %v1541
        %v1545 = vshrl.u32 %v1500, 16
        %v1547 = vrot.slane %v1545, 7
        %v1548 = vshll.u32 %v1500, 16
        %v1550 = vor.u32 %v1547, %v1548
        %v1552 = vshrl.u32 %v1501, 16
        %v1554 = vrot.slane %v1552, 7
        %v1555 = vshll.u32 %v1501, 16
        %v1557 = vor.u32 %v1554, %v1555
        %v1559 = vshrl.u32 %v1502, 16
        %v1561 = vrot.slane %v1559, 7
        %v1562 = vshll.u32 %v1502, 16
        %v1564 = vor.u32 %v1561, %v1562
        %v1566 = vshrl.u32 %v1503, 16
        %v1568 = vrot.slane %v1566, 7
        %v1569 = vshll.u32 %v1503, 16
        %v1571 = vor.u32 %v1568, %v1569
        %v1573 = vshrl.u32 %v1504, 16
        %v1575 = vrot.slane %v1573, 7
        %v1576 = vshll.u32 %v1504, 16
        %v1578 = vor.u32 %v1575, %v1576
        %v1580 = vshrl.u32 %v1505, 16
        %v1582 = vrot.slane %v1580, 7
        %v1583 = vshll.u32 %v1505, 16
        %v1585 = vor.u32 %v1582, %v1583
        %v1587 = vshrl.u32 %v1506, 16
        %v1589 = vrot.slane %v1587, 7
        %v1590 = vshll.u32 %v1506, 16
        %v1592 = vor.u32 %v1589, %v1590
        %v1594 = vshrl.u32 %v1507, 16
        %v1596 = vrot.slane %v1594, 7
        %v1597 = vshll.u32 %v1507, 16
        %v1599 = vor.u32 %v1596, %v1597
        %v1601 = vshrl.u32 %v1508, 16
        %v1603 = vrot.slane %v1601, 7
        %v1604 = vshll.u32 %v1508, 16
        %v1606 = vor.u32 %v1603, %v1604
        %v1608 = vshrl.u32 %v1509, 16
        %v1610 = vrot.slane %v1608, 7
        %v1611 = vshll.u32 %v1509, 16
        %v1613 = vor.u32 %v1610, %v1611
        %v1615 = vshrl.u32 %v1510, 16
        %v1617 = vrot.slane %v1615, 7
        %v1618 = vshll.u32 %v1510, 16
        %v1620 = vor.u32 %v1617, %v1618
        %v1622 = vshrl.u32 %v1511, 16
        %v1624 = vrot.slane %v1622, 7
        %v1625 = vshll.u32 %v1511, 16
        %v1627 = vor.u32 %v1624, %v1625
        %v1629 = vshrl.u32 %v1512, 16
        %v1631 = vrot.slane %v1629, 7
        %v1632 = vshll.u32 %v1512, 16
        %v1634 = vor.u32 %v1631, %v1632
        %v1636 = vshrl.u32 %v1513, 16
        %v1638 = vrot.slane %v1636, 7
        %v1639 = vshll.u32 %v1513, 16
        %v1641 = vor.u32 %v1638, %v1639
        %v1643 = vshrl.u32 %v1514, 16
        %v1645 = vrot.slane %v1643, 7
        %v1646 = vshll.u32 %v1514, 16
        %v1648 = vor.u32 %v1645, %v1646
        %v1650 = vshrl.u32 %v1515, 16
        %v1652 = vrot.slane %v1650, 7
        %v1653 = vshll.u32 %v1515, 16
        %v1655 = vor.u32 %v1652, %v1653
        %v1657 = vshrl.u32 %v1516, 16
        %v1659 = vrot.slane %v1657, 7
        %v1660 = vshll.u32 %v1516, 16
        %v1662 = vor.u32 %v1659, %v1660
        %v1664 = vshrl.u32 %v1517, 16
        %v1666 = vrot.slane %v1664, 7
        %v1667 = vshll.u32 %v1517, 16
        %v1669 = vor.u32 %v1666, %v1667
        %v1671 = vshrl.u32 %v1518, 16
        %v1673 = vrot.slane %v1671, 7
        %v1674 = vshll.u32 %v1518, 16
        %v1676 = vor.u32 %v1673, %v1674
        %v1678 = vshrl.u32 %v1519, 16
        %v1680 = vrot.slane %v1678, 7
        %v1681 = vshll.u32 %v1519, 16
        %v1683 = vor.u32 %v1680, %v1681
        %v1685 = vshrl.u32 %v1520, 16
        %v1687 = vrot.slane %v1685, 7
        %v1688 = vshll.u32 %v1520, 16
        %v1690 = vor.u32 %v1687, %v1688
        %v1692 = vshrl.u32 %v1521, 16
        %v1694 = vrot.slane %v1692, 7
        %v1695 = vshll.u32 %v1521, 16
        %v1697 = vor.u32 %v1694, %v1695
        %v1699 = vshrl.u32 %v1522, 16
        %v1701 = vrot.slane %v1699, 7
        %v1702 = vshll.u32 %v1522, 16
        %v1704 = vor.u32 %v1701, %v1702
        %v1706 = vshrl.u32 %v1523, 16
        %v1708 = vrot.slane %v1706, 7
        %v1709 = vshll.u32 %v1523, 16
        %v1711 = vor.u32 %v1708, %v1709
        %v1713 = vshrl.u32 %v1524, 16
        %v1715 = vrot.slane %v1713, 7
        %v1716 = vshll.u32 %v1524, 16
        %v1718 = vor.u32 %v1715, %v1716
        %v1720 = vshrl.u32 %v1525, 16
        %v1722 = vrot.slane %v1720, 7
        %v1723 = vshll.u32 %v1525, 16
        %v1725 = vor.u32 %v1722, %v1723
        %v1727 = vshrl.u32 %v1526, 16
        %v1729 = vrot.slane %v1727, 7
        %v1730 = vshll.u32 %v1526, 16
        %v1732 = vor.u32 %v1729, %v1730
        %v1734 = vshrl.u32 %v1527, 16
        %v1736 = vrot.slane %v1734, 7
        %v1737 = vshll.u32 %v1527, 16
        %v1739 = vor.u32 %v1736, %v1737
        %v1741 = vshrl.u32 %v1528, 16
        %v1743 = vrot.slane %v1741, 7
        %v1744 = vshll.u32 %v1528, 16
        %v1746 = vor.u32 %v1743, %v1744
        %v1748 = vshrl.u32 %v1529, 16
        %v1750 = vrot.slane %v1748, 7
        %v1751 = vshll.u32 %v1529, 16
        %v1753 = vor.u32 %v1750, %v1751
        %v1786 = vsel %vm592, 0, %v1536
        %v1787 = vsel %vm592, 0, %v1543
        %v1788 = vsel %vm592, 0, %v1550
        %v1789 = vsel %vm592, 0, %v1557
        %v1790 = vsel %vm592, 0, %v1564
        %v1791 = vsel %vm592, 0, %v1571
        %v1792 = vsel %vm592, 0, %v1578
        %v1793 = vsel %vm592, 0, %v1585
        %v1794 = vsel %vm592, 0, %v1592
        %v1795 = vsel %vm592, 0, %v1599
        %v1796 = vsel %vm592, 0, %v1606
        %v1797 = vsel %vm592, 0, %v1613
        %v1798 = vsel %vm592, 0, %v1620
        %v1799 = vsel %vm592, 0, %v1627
        %v1800 = vsel %vm592, 0, %v1634
        %v1801 = vsel %vm592, 0, %v1641
        %v1802 = vsel %vm592, 0, %v1648
        %v1803 = vsel %vm592, 0, %v1655
        %v1804 = vsel %vm592, 0, %v1662
        %v1805 = vsel %vm592, 0, %v1669
        %v1806 = vsel %vm592, 0, %v1676
        %v1807 = vsel %vm592, 0, %v1683
        %v1808 = vsel %vm592, 0, %v1690
        %v1809 = vsel %vm592, 0, %v1697
        %v1810 = vsel %vm592, 0, %v1704
        %v1811 = vsel %vm592, 0, %v1711
        %v1812 = vsel %vm592, 0, %v1718
        %v1813 = vsel %vm592, 0, %v1725
        %v1814 = vsel %vm592, 0, %v1732
        %v1815 = vsel %vm592, 0, %v1739
        %v1816 = vsel %vm592, 0, %v1746
        %v1817 = vsel %vm592, 0, %v1753
        %v1818 = vsel %vm603, %v1786, 0
        %v1819 = vsel %vm603, %v1787, 0
        %v1820 = vsel %vm603, %v1788, 0
        %v1821 = vsel %vm603, %v1789, 0
        %v1822 = vsel %vm603, %v1790, 0
        %v1823 = vsel %vm603, %v1791, 0
        %v1824 = vsel %vm603, %v1792, 0
        %v1825 = vsel %vm603, %v1793, 0
        %v1826 = vsel %vm603, %v1794, 0
        %v1827 = vsel %vm603, %v1795, 0
        %v1828 = vsel %vm603, %v1796, 0
        %v1829 = vsel %vm603, %v1797, 0
        %v1830 = vsel %vm603, %v1798, 0
        %v1831 = vsel %vm603, %v1799, 0
        %v1832 = vsel %vm603, %v1800, 0
        %v1833 = vsel %vm603, %v1801, 0
        %v1834 = vsel %vm603, %v1802, 0
        %v1835 = vsel %vm603, %v1803, 0
        %v1836 = vsel %vm603, %v1804, 0
        %v1837 = vsel %vm603, %v1805, 0
        %v1838 = vsel %vm603, %v1806, 0
        %v1839 = vsel %vm603, %v1807, 0
        %v1840 = vsel %vm603, %v1808, 0
        %v1841 = vsel %vm603, %v1809, 0
        %v1842 = vsel %vm603, %v1810, 0
        %v1843 = vsel %vm603, %v1811, 0
        %v1844 = vsel %vm603, %v1812, 0
        %v1845 = vsel %vm603, %v1813, 0
        %v1846 = vsel %vm603, %v1814, 0
        %v1847 = vsel %vm603, %v1815, 0
        %v1848 = vsel %vm603, %v1816, 0
        %v1849 = vsel %vm603, %v1817, 0
        %v1882 = vunpack.c.l.b16 %v1818
        %v1883 = vunpack.c.l.b16 %v1819
        %v1884 = vunpack.c.l.b16 %v1820
        %v1885 = vunpack.c.l.b16 %v1821
        %v1886 = vunpack.c.l.b16 %v1822
        %v1887 = vunpack.c.l.b16 %v1823
        %v1888 = vunpack.c.l.b16 %v1824
        %v1889 = vunpack.c.l.b16 %v1825
        %v1890 = vunpack.c.l.b16 %v1826
        %v1891 = vunpack.c.l.b16 %v1827
        %v1892 = vunpack.c.l.b16 %v1828
        %v1893 = vunpack.c.l.b16 %v1829
        %v1894 = vunpack.c.l.b16 %v1830
        %v1895 = vunpack.c.l.b16 %v1831
        %v1896 = vunpack.c.l.b16 %v1832
        %v1897 = vunpack.c.l.b16 %v1833
        %v1898 = vunpack.c.l.b16 %v1834
        %v1899 = vunpack.c.l.b16 %v1835
        %v1900 = vunpack.c.l.b16 %v1836
        %v1901 = vunpack.c.l.b16 %v1837
        %v1902 = vunpack.c.l.b16 %v1838
        %v1903 = vunpack.c.l.b16 %v1839
        %v1904 = vunpack.c.l.b16 %v1840
        %v1905 = vunpack.c.l.b16 %v1841
        %v1906 = vunpack.c.l.b16 %v1842
        %v1907 = vunpack.c.l.b16 %v1843
        %v1908 = vunpack.c.l.b16 %v1844
        %v1909 = vunpack.c.l.b16 %v1845
        %v1910 = vunpack.c.l.b16 %v1846
        %v1911 = vunpack.c.l.b16 %v1847
        %v1912 = vunpack.c.l.b16 %v1848
        %v1913 = vunpack.c.l.b16 %v1849
        %v1914 = vld [vmem:[#allocation3] sm:$0xff]
        %v1915 = vld [vmem:[#allocation3 + $0x8] sm:$0xff]
        %v1916 = vld [vmem:[#allocation3 + $0x10] sm:$0xff]
        %v1917 = vld [vmem:[#allocation3 + $0x18] sm:$0xff]
        %v1918 = vld [vmem:[#allocation3 + $0x20] sm:$0xff]
        %v1919 = vld [vmem:[#allocation3 + $0x28] sm:$0xff]
        %v1920 = vld [vmem:[#allocation3 + $0x30] sm:$0xff]
        %v1921 = vld [vmem:[#allocation3 + $0x38] sm:$0xff]
        %v1922 = vld [vmem:[#allocation3 + $0x40] sm:$0xff]
        %v1923 = vld [vmem:[#allocation3 + $0x48] sm:$0xff]
        %v1924 = vld [vmem:[#allocation3 + $0x50] sm:$0xff]
        %v1925 = vld [vmem:[#allocation3 + $0x58] sm:$0xff]
        %v1926 = vld [vmem:[#allocation3 + $0x60] sm:$0xff]
        %v1927 = vld [vmem:[#allocation3 + $0x68] sm:$0xff]
        %v1928 = vld [vmem:[#allocation3 + $0x70] sm:$0xff]
        %v1929 = vld [vmem:[#allocation3 + $0x78] sm:$0xff]
        %v1930 = vld [vmem:[#allocation3 + $0x80] sm:$0xff]
        %v1931 = vld [vmem:[#allocation3 + $0x88] sm:$0xff]
        %v1932 = vld [vmem:[#allocation3 + $0x90] sm:$0xff]
        %v1933 = vld [vmem:[#allocation3 + $0x98] sm:$0xff]
        %v1934 = vld [vmem:[#allocation3 + $0xa0] sm:$0xff]
        %v1935 = vld [vmem:[#allocation3 + $0xa8] sm:$0xff]
        %v1936 = vld [vmem:[#allocation3 + $0xb0] sm:$0xff]
        %v1937 = vld [vmem:[#allocation3 + $0xb8] sm:$0xff]
        %v1938 = vld [vmem:[#allocation3 + $0xc0] sm:$0xff]
        %v1939 = vld [vmem:[#allocation3 + $0xc8] sm:$0xff]
        %v1940 = vld [vmem:[#allocation3 + $0xd0] sm:$0xff]
        %v1941 = vld [vmem:[#allocation3 + $0xd8] sm:$0xff]
        %v1942 = vld [vmem:[#allocation3 + $0xe0] sm:$0xff]
        %v1943 = vld [vmem:[#allocation3 + $0xe8] sm:$0xff]
        %v1944 = vld [vmem:[#allocation3 + $0xf0] sm:$0xff]
        %v1945 = vld [vmem:[#allocation3 + $0xf8] sm:$0xff]
        %v1946 = vld [vmem:[#allocation3 + $0x100] sm:$0xff]
        %v1947 = vld [vmem:[#allocation3 + $0x108] sm:$0xff]
        %v1948 = vld [vmem:[#allocation3 + $0x110] sm:$0xff]
        %v1949 = vld [vmem:[#allocation3 + $0x118] sm:$0xff]
        %v1950 = vld [vmem:[#allocation3 + $0x120] sm:$0xff]
        %v1951 = vld [vmem:[#allocation3 + $0x128] sm:$0xff]
        %v1952 = vld [vmem:[#allocation3 + $0x130] sm:$0xff]
        %v1953 = vld [vmem:[#allocation3 + $0x138] sm:$0xff]
        %v1954 = vld [vmem:[#allocation3 + $0x140] sm:$0xff]
        %v1955 = vld [vmem:[#allocation3 + $0x148] sm:$0xff]
        %v1956 = vld [vmem:[#allocation3 + $0x150] sm:$0xff]
        %v1957 = vld [vmem:[#allocation3 + $0x158] sm:$0xff]
        %v1958 = vld [vmem:[#allocation3 + $0x160] sm:$0xff]
        %v1959 = vld [vmem:[#allocation3 + $0x168] sm:$0xff]
        %v1960 = vld [vmem:[#allocation3 + $0x170] sm:$0xff]
        %v1961 = vld [vmem:[#allocation3 + $0x178] sm:$0xff]
        %v1962 = vld [vmem:[#allocation3 + $0x180] sm:$0xff]
        %v1963 = vld [vmem:[#allocation3 + $0x188] sm:$0xff]
        %v1964 = vld [vmem:[#allocation3 + $0x190] sm:$0xff]
        %v1965 = vld [vmem:[#allocation3 + $0x198] sm:$0xff]
        %v1966 = vld [vmem:[#allocation3 + $0x1a0] sm:$0xff]
        %v1967 = vld [vmem:[#allocation3 + $0x1a8] sm:$0xff]
        %v1968 = vld [vmem:[#allocation3 + $0x1b0] sm:$0xff]
        %v1969 = vld [vmem:[#allocation3 + $0x1b8] sm:$0xff]
        %v1970 = vld [vmem:[#allocation3 + $0x1c0] sm:$0xff]
        %v1971 = vld [vmem:[#allocation3 + $0x1c8] sm:$0xff]
        %v1972 = vld [vmem:[#allocation3 + $0x1d0] sm:$0xff]
        %v1973 = vld [vmem:[#allocation3 + $0x1d8] sm:$0xff]
        %s1974 = scalar_lea.vmem [#allocation3], 480
        %v1975 = vld [vmem:[%s1974] sm:$0xff]
        %v1976 = vld [vmem:[%s1974 + $0x8] sm:$0xff]
        %v1977 = vld [vmem:[%s1974 + $0x10] sm:$0xff]
        %v1978 = vld [vmem:[%s1974 + $0x18] sm:$0xff]
        %v1979 = vld [vmem:[%s1974 + $0x20] sm:$0xff]
        %v1980 = vld [vmem:[%s1974 + $0x28] sm:$0xff]
        %v1981 = vld [vmem:[%s1974 + $0x30] sm:$0xff]
        %v1982 = vld [vmem:[%s1974 + $0x38] sm:$0xff]
        %v1983 = vld [vmem:[%s1974 + $0x40] sm:$0xff]
        %v1984 = vld [vmem:[%s1974 + $0x48] sm:$0xff]
        %v1985 = vld [vmem:[%s1974 + $0x50] sm:$0xff]
        %v1986 = vld [vmem:[%s1974 + $0x58] sm:$0xff]
        %v1987 = vld [vmem:[%s1974 + $0x60] sm:$0xff]
        %v1988 = vld [vmem:[%s1974 + $0x68] sm:$0xff]
        %v1989 = vld [vmem:[%s1974 + $0x70] sm:$0xff]
        %v1990 = vld [vmem:[%s1974 + $0x78] sm:$0xff]
        %v1991 = vld [vmem:[%s1974 + $0x80] sm:$0xff]
        %v1992 = vld [vmem:[%s1974 + $0x88] sm:$0xff]
        %v1993 = vld [vmem:[%s1974 + $0x90] sm:$0xff]
        %v1994 = vld [vmem:[%s1974 + $0x98] sm:$0xff]
        %v1995 = vld [vmem:[%s1974 + $0xa0] sm:$0xff]
        %v1996 = vld [vmem:[%s1974 + $0xa8] sm:$0xff]
        %v1997 = vld [vmem:[%s1974 + $0xb0] sm:$0xff]
        %v1998 = vld [vmem:[%s1974 + $0xb8] sm:$0xff]
        %v1999 = vld [vmem:[%s1974 + $0xc0] sm:$0xff]
        %v2000 = vld [vmem:[%s1974 + $0xc8] sm:$0xff]
        %v2001 = vld [vmem:[%s1974 + $0xd0] sm:$0xff]
        %v2002 = vld [vmem:[%s1974 + $0xd8] sm:$0xff]
        %v2003 = vld [vmem:[%s1974 + $0xe0] sm:$0xff]
        %v2004 = vld [vmem:[%s1974 + $0xe8] sm:$0xff]
        %v2005 = vld [vmem:[%s1974 + $0xf0] sm:$0xff]
        %v2006 = vld [vmem:[%s1974 + $0xf8] sm:$0xff]
        %v2007 = vld [vmem:[%s1974 + $0x100] sm:$0xff]
        %v2008 = vld [vmem:[%s1974 + $0x108] sm:$0xff]
        %v2009 = vld [vmem:[%s1974 + $0x110] sm:$0xff]
        %v2010 = vld [vmem:[%s1974 + $0x118] sm:$0xff]
        %v2011 = vld [vmem:[%s1974 + $0x120] sm:$0xff]
        %v2012 = vld [vmem:[%s1974 + $0x128] sm:$0xff]
        %v2013 = vld [vmem:[%s1974 + $0x130] sm:$0xff]
        %v2014 = vld [vmem:[%s1974 + $0x138] sm:$0xff]
        %v2015 = vld [vmem:[%s1974 + $0x140] sm:$0xff]
        %v2016 = vld [vmem:[%s1974 + $0x148] sm:$0xff]
        %v2017 = vld [vmem:[%s1974 + $0x150] sm:$0xff]
        %v2018 = vld [vmem:[%s1974 + $0x158] sm:$0xff]
        %v2019 = vld [vmem:[%s1974 + $0x160] sm:$0xff]
        %v2020 = vld [vmem:[%s1974 + $0x168] sm:$0xff]
        %v2021 = vld [vmem:[%s1974 + $0x170] sm:$0xff]
        %v2022 = vld [vmem:[%s1974 + $0x178] sm:$0xff]
        %v2023 = vld [vmem:[%s1974 + $0x180] sm:$0xff]
        %v2024 = vld [vmem:[%s1974 + $0x188] sm:$0xff]
        %v2025 = vld [vmem:[%s1974 + $0x190] sm:$0xff]
        %v2026 = vld [vmem:[%s1974 + $0x198] sm:$0xff]
        %v2027 = vld [vmem:[%s1974 + $0x1a0] sm:$0xff]
        %v2028 = vld [vmem:[%s1974 + $0x1a8] sm:$0xff]
        %v2029 = vld [vmem:[%s1974 + $0x1b0] sm:$0xff]
        %v2030 = vld [vmem:[%s1974 + $0x1b8] sm:$0xff]
        %v2031 = vld [vmem:[%s1974 + $0x1c0] sm:$0xff]
        %v2032 = vld [vmem:[%s1974 + $0x1c8] sm:$0xff]
        %v2033 = vld [vmem:[%s1974 + $0x1d0] sm:$0xff]
        %v2034 = vld [vmem:[%s1974 + $0x1d8] sm:$0xff]
        %v2035 = vpack.c.b16 %v1470, %v1466
        %v2036 = vpack.c.b16 %v1471, %v1467
        %v2037 = vpack.c.b16 %v1472, %v1468
        %v2038 = vpack.c.b16 %v1473, %v1469
        %v2039 = vpack.c.b16 %v1478, %v1474
        %v2040 = vpack.c.b16 %v1479, %v1475
        %v2041 = vpack.c.b16 %v1480, %v1476
        %v2042 = vpack.c.b16 %v1481, %v1477
        %v2043 = vpack.c.b16 %v1486, %v1482
        %v2044 = vpack.c.b16 %v1487, %v1483
        %v2045 = vpack.c.b16 %v1488, %v1484
        %v2046 = vpack.c.b16 %v1489, %v1485
        %v2047 = vpack.c.b16 %v1494, %v1490
        %v2048 = vpack.c.b16 %v1495, %v1491
        %v2049 = vpack.c.b16 %v1496, %v1492
        %v2050 = vpack.c.b16 %v1497, %v1493
        %v2123 = vunpack.c.l.b16 %v1975
        %v2124 = vunpack.c.h.b16 %v1975
        %v2125 = vunpack.c.l.b16 %v1976
        %v2126 = vunpack.c.h.b16 %v1976
        %v2127 = vunpack.c.l.b16 %v1977
        %v2128 = vunpack.c.h.b16 %v1977
        %v2129 = vunpack.c.l.b16 %v1978
        %v2130 = vunpack.c.h.b16 %v1978
        %v2131 = vunpack.c.l.b16 %v1979
        %v2132 = vunpack.c.h.b16 %v1979
        %v2133 = vunpack.c.l.b16 %v1980
        %v2134 = vunpack.c.h.b16 %v1980
        %v2135 = vunpack.c.l.b16 %v1981
        %v2136 = vunpack.c.h.b16 %v1981
        %v2137 = vunpack.c.l.b16 %v1982
        %v2138 = vunpack.c.h.b16 %v1982
        %v2139 = vunpack.c.l.b16 %v1983
        %v2140 = vunpack.c.h.b16 %v1983
        %v2141 = vunpack.c.l.b16 %v1984
        %v2142 = vunpack.c.h.b16 %v1984
        %v2143 = vunpack.c.l.b16 %v1985
        %v2144 = vunpack.c.h.b16 %v1985
        %v2145 = vunpack.c.l.b16 %v1986
        %v2146 = vunpack.c.h.b16 %v1986
        %v2147 = vunpack.c.l.b16 %v1987
        %v2148 = vunpack.c.h.b16 %v1987
        %v2149 = vunpack.c.l.b16 %v1988
        %v2150 = vunpack.c.h.b16 %v1988
        %v2151 = vunpack.c.l.b16 %v1989
        %v2152 = vunpack.c.h.b16 %v1989
        %v2153 = vunpack.c.l.b16 %v1990
        %v2154 = vunpack.c.h.b16 %v1990
        %v2155 = vunpack.c.l.b16 %v1991
        %v2156 = vunpack.c.h.b16 %v1991
        %v2157 = vunpack.c.l.b16 %v1992
        %v2158 = vunpack.c.h.b16 %v1992
        %v2159 = vunpack.c.l.b16 %v1993
        %v2160 = vunpack.c.h.b16 %v1993
        %v2161 = vunpack.c.l.b16 %v1994
        %v2162 = vunpack.c.h.b16 %v1994
        %v2163 = vunpack.c.l.b16 %v1995
        %v2164 = vunpack.c.h.b16 %v1995
        %v2165 = vunpack.c.l.b16 %v1996
        %v2166 = vunpack.c.h.b16 %v1996
        %v2167 = vunpack.c.l.b16 %v1997
        %v2168 = vunpack.c.h.b16 %v1997
        %v2169 = vunpack.c.l.b16 %v1998
        %v2170 = vunpack.c.h.b16 %v1998
        %v2171 = vunpack.c.l.b16 %v1999
        %v2172 = vunpack.c.h.b16 %v1999
        %v2173 = vunpack.c.l.b16 %v2000
        %v2174 = vunpack.c.h.b16 %v2000
        %v2175 = vunpack.c.l.b16 %v2001
        %v2176 = vunpack.c.h.b16 %v2001
        %v2177 = vunpack.c.l.b16 %v2002
        %v2178 = vunpack.c.h.b16 %v2002
        %v2179 = vunpack.c.l.b16 %v2003
        %v2180 = vunpack.c.h.b16 %v2003
        %v2181 = vunpack.c.l.b16 %v2004
        %v2182 = vunpack.c.h.b16 %v2004
        %v2183 = vunpack.c.l.b16 %v2005
        %v2184 = vunpack.c.h.b16 %v2005
        %v2185 = vunpack.c.l.b16 %v2006
        %v2186 = vunpack.c.h.b16 %v2006
        %v2187 = vunpack.c.l.b16 %v2007
        %v2188 = vunpack.c.h.b16 %v2007
        %v2189 = vunpack.c.l.b16 %v2008
        %v2190 = vunpack.c.h.b16 %v2008
        %v2191 = vunpack.c.l.b16 %v2009
        %v2192 = vunpack.c.h.b16 %v2009
        %v2193 = vunpack.c.l.b16 %v2010
        %v2194 = vunpack.c.h.b16 %v2010
        %v2195 = vunpack.c.l.b16 %v2011
        %v2196 = vunpack.c.h.b16 %v2011
        %v2197 = vunpack.c.l.b16 %v2012
        %v2198 = vunpack.c.h.b16 %v2012
        %v2199 = vunpack.c.l.b16 %v2013
        %v2200 = vunpack.c.h.b16 %v2013
        %v2201 = vunpack.c.l.b16 %v2014
        %v2202 = vunpack.c.h.b16 %v2014
        %v2203 = vunpack.c.l.b16 %v2015
        %v2204 = vunpack.c.h.b16 %v2015
        %v2205 = vunpack.c.l.b16 %v2016
        %v2206 = vunpack.c.h.b16 %v2016
        %v2207 = vunpack.c.l.b16 %v2017
        %v2208 = vunpack.c.h.b16 %v2017
        %v2209 = vunpack.c.l.b16 %v2018
        %v2210 = vunpack.c.h.b16 %v2018
        %v2211 = vunpack.c.l.b16 %v2019
        %v2212 = vunpack.c.h.b16 %v2019
        %v2213 = vunpack.c.l.b16 %v2020
        %v2214 = vunpack.c.h.b16 %v2020
        %v2215 = vunpack.c.l.b16 %v2021
        %v2216 = vunpack.c.h.b16 %v2021
        %v2217 = vunpack.c.l.b16 %v2022
        %v2218 = vunpack.c.h.b16 %v2022
        %v2219 = vunpack.c.l.b16 %v2023
        %v2220 = vunpack.c.h.b16 %v2023
        %v2221 = vunpack.c.l.b16 %v2024
        %v2222 = vunpack.c.h.b16 %v2024
        %v2223 = vunpack.c.l.b16 %v2025
        %v2224 = vunpack.c.h.b16 %v2025
        %v2225 = vunpack.c.l.b16 %v2026
        %v2226 = vunpack.c.h.b16 %v2026
        %v2227 = vunpack.c.l.b16 %v2027
        %v2228 = vunpack.c.h.b16 %v2027
        %v2229 = vunpack.c.l.b16 %v2028
        %v2230 = vunpack.c.h.b16 %v2028
        %v2231 = vunpack.c.l.b16 %v2029
        %v2232 = vunpack.c.h.b16 %v2029
        %v2233 = vunpack.c.l.b16 %v2030
        %v2234 = vunpack.c.h.b16 %v2030
        %v2235 = vunpack.c.l.b16 %v2031
        %v2236 = vunpack.c.h.b16 %v2031
        %v2237 = vunpack.c.l.b16 %v2032
        %v2238 = vunpack.c.h.b16 %v2032
        %v2239 = vunpack.c.l.b16 %v2033
        %v2240 = vunpack.c.h.b16 %v2033
        %v2241 = vunpack.c.l.b16 %v2034
        %v2242 = vunpack.c.h.b16 %v2034
        %v2243 = vpack.c.b16 %v2125, %v2123
        %v2244 = vpack.c.b16 %v2126, %v2124
        %v2245 = vpack.c.b16 %v2129, %v2127
        %v2246 = vpack.c.b16 %v2130, %v2128
        %v2247 = vpack.c.b16 %v2133, %v2131
        %v2248 = vpack.c.b16 %v2134, %v2132
        %v2249 = vpack.c.b16 %v2137, %v2135
        %v2250 = vpack.c.b16 %v2138, %v2136
        %v2251 = vpack.c.b16 %v2141, %v2139
        %v2252 = vpack.c.b16 %v2142, %v2140
        %v2253 = vpack.c.b16 %v2145, %v2143
        %v2254 = vpack.c.b16 %v2146, %v2144
        %v2255 = vpack.c.b16 %v2149, %v2147
        %v2256 = vpack.c.b16 %v2150, %v2148
        %v2257 = vpack.c.b16 %v2153, %v2151
        %v2258 = vpack.c.b16 %v2154, %v2152
        %v2259 = vpack.c.b16 %v2157, %v2155
        %v2260 = vpack.c.b16 %v2158, %v2156
        %v2261 = vpack.c.b16 %v2161, %v2159
        %v2262 = vpack.c.b16 %v2162, %v2160
        %v2263 = vpack.c.b16 %v2165, %v2163
        %v2264 = vpack.c.b16 %v2166, %v2164
        %v2265 = vpack.c.b16 %v2169, %v2167
        %v2266 = vpack.c.b16 %v2170, %v2168
        %v2267 = vpack.c.b16 %v2173, %v2171
        %v2268 = vpack.c.b16 %v2174, %v2172
        %v2269 = vpack.c.b16 %v2177, %v2175
        %v2270 = vpack.c.b16 %v2178, %v2176
        %v2271 = vpack.c.b16 %v2181, %v2179
        %v2272 = vpack.c.b16 %v2182, %v2180
        %v2273 = vpack.c.b16 %v2185, %v2183
        %v2274 = vpack.c.b16 %v2186, %v2184
        %v2275 = vpack.c.b16 %v2189, %v2187
        %v2276 = vpack.c.b16 %v2190, %v2188
        %v2277 = vpack.c.b16 %v2193, %v2191
        %v2278 = vpack.c.b16 %v2194, %v2192
        %v2279 = vpack.c.b16 %v2197, %v2195
        %v2280 = vpack.c.b16 %v2198, %v2196
        %v2281 = vpack.c.b16 %v2201, %v2199
        %v2282 = vpack.c.b16 %v2202, %v2200
        %v2283 = vpack.c.b16 %v2205, %v2203
        %v2284 = vpack.c.b16 %v2206, %v2204
        %v2285 = vpack.c.b16 %v2209, %v2207
        %v2286 = vpack.c.b16 %v2210, %v2208
        %v2287 = vpack.c.b16 %v2213, %v2211
        %v2288 = vpack.c.b16 %v2214, %v2212
        %v2289 = vpack.c.b16 %v2217, %v2215
        %v2290 = vpack.c.b16 %v2218, %v2216
        %v2291 = vpack.c.b16 %v2221, %v2219
        %v2292 = vpack.c.b16 %v2222, %v2220
        %v2293 = vpack.c.b16 %v2225, %v2223
        %v2294 = vpack.c.b16 %v2226, %v2224
        %v2295 = vpack.c.b16 %v2229, %v2227
        %v2296 = vpack.c.b16 %v2230, %v2228
        %v2297 = vpack.c.b16 %v2233, %v2231
        %v2298 = vpack.c.b16 %v2234, %v2232
        %v2299 = vpack.c.b16 %v2237, %v2235
        %v2300 = vpack.c.b16 %v2238, %v2236
        %v2301 = vpack.c.b16 %v2241, %v2239
        %v2302 = vpack.c.b16 %v2242, %v2240
        %v2364 = vsel %vm1345, %v2038, 0
        %v2367 = vsel %vm1345, %v2042, 0
        %v2370 = vsel %vm1345, %v2046, 0
        %v2373 = vsel %vm1345, %v2050, 0
        %2375 = vmatpush.bf16.msra.mxu0 %v2257
        %2376 = vmatpush.bf16.msra.mxu0 %v2255
        %2377 = vmatpush.bf16.msra.mxu0 %v2253
        %2378 = vmatpush.bf16.msra.mxu0 %v2251
        %2379 = vmatpush.bf16.msra.mxu0 %v2249
        %2380 = vmatpush.bf16.msra.mxu0 %v2247
        %2381 = vmatpush.bf16.msra.mxu0 %v2245
        %2382 = vmatpush.bf16.msra.mxu0 %v2243
        %2383 = vmatmul.bf16.gmra.mxu0 %v2035
        %v2384 = vpop.f32.mrf.mxu0
        %v2385 = vadd.f32 0.0, %v2384
        %v2386 = vpop.f32.mrf.mxu0
        %v2387 = vadd.f32 0.0, %v2386
        %2388 = vmatmul.bf16.gmra.mxu0 %v2039
        %v2389 = vpop.f32.mrf.mxu0
        %v2390 = vadd.f32 0.0, %v2389
        %v2391 = vpop.f32.mrf.mxu0
        %v2392 = vadd.f32 0.0, %v2391
        %2393 = vmatmul.bf16.gmra.mxu0 %v2043
        %v2394 = vpop.f32.mrf.mxu0
        %v2395 = vadd.f32 0.0, %v2394
        %v2396 = vpop.f32.mrf.mxu0
        %v2397 = vadd.f32 0.0, %v2396
        %2398 = vmatmul.bf16.gmra.mxu0 %v2047
        %v2399 = vpop.f32.mrf.mxu0
        %v2400 = vadd.f32 0.0, %v2399
        %v2401 = vpop.f32.mrf.mxu0
        %v2402 = vadd.f32 0.0, %v2401
        %2403 = vdwg.mxu0
        %2404 = vmatpush.bf16.msra.mxu0 %v2273
        %2405 = vmatpush.bf16.msra.mxu0 %v2271
        %2406 = vmatpush.bf16.msra.mxu0 %v2269
        %2407 = vmatpush.bf16.msra.mxu0 %v2267
        %2408 = vmatpush.bf16.msra.mxu0 %v2265
        %2409 = vmatpush.bf16.msra.mxu0 %v2263
        %2410 = vmatpush.bf16.msra.mxu0 %v2261
        %2411 = vmatpush.bf16.msra.mxu0 %v2259
        %2412 = vmatmul.bf16.gmra.mxu0 %v2036
        %v2413 = vpop.f32.mrf.mxu0
        %v2414 = vadd.f32 %v2385, %v2413
        %v2415 = vpop.f32.mrf.mxu0
        %v2416 = vadd.f32 %v2387, %v2415
        %2417 = vmatmul.bf16.gmra.mxu0 %v2040
        %v2418 = vpop.f32.mrf.mxu0
        %v2419 = vadd.f32 %v2390, %v2418
        %v2420 = vpop.f32.mrf.mxu0
        %v2421 = vadd.f32 %v2392, %v2420
        %2422 = vmatmul.bf16.gmra.mxu0 %v2044
        %v2423 = vpop.f32.mrf.mxu0
        %v2424 = vadd.f32 %v2395, %v2423
        %v2425 = vpop.f32.mrf.mxu0
        %v2426 = vadd.f32 %v2397, %v2425
        %2427 = vmatmul.bf16.gmra.mxu0 %v2048
        %v2428 = vpop.f32.mrf.mxu0
        %v2429 = vadd.f32 %v2400, %v2428
        %v2430 = vpop.f32.mrf.mxu0
        %v2431 = vadd.f32 %v2402, %v2430
        %2432 = vdwg.mxu0
        %2433 = vmatpush.bf16.msra.mxu0 %v2289
        %2434 = vmatpush.bf16.msra.mxu0 %v2287
        %2435 = vmatpush.bf16.msra.mxu0 %v2285
        %2436 = vmatpush.bf16.msra.mxu0 %v2283
        %2437 = vmatpush.bf16.msra.mxu0 %v2281
        %2438 = vmatpush.bf16.msra.mxu0 %v2279
        %2439 = vmatpush.bf16.msra.mxu0 %v2277
        %2440 = vmatpush.bf16.msra.mxu0 %v2275
        %2441 = vmatmul.bf16.gmra.mxu0 %v2037
        %v2442 = vpop.f32.mrf.mxu0
        %v2443 = vadd.f32 %v2414, %v2442
        %v2444 = vpop.f32.mrf.mxu0
        %v2445 = vadd.f32 %v2416, %v2444
        %2446 = vmatmul.bf16.gmra.mxu0 %v2041
        %v2447 = vpop.f32.mrf.mxu0
        %v2448 = vadd.f32 %v2419, %v2447
        %v2449 = vpop.f32.mrf.mxu0
        %v2450 = vadd.f32 %v2421, %v2449
        %2451 = vmatmul.bf16.gmra.mxu0 %v2045
        %v2452 = vpop.f32.mrf.mxu0
        %v2453 = vadd.f32 %v2424, %v2452
        %v2454 = vpop.f32.mrf.mxu0
        %v2455 = vadd.f32 %v2426, %v2454
        %2456 = vmatmul.bf16.gmra.mxu0 %v2049
        %v2457 = vpop.f32.mrf.mxu0
        %v2458 = vadd.f32 %v2429, %v2457
        %v2459 = vpop.f32.mrf.mxu0
        %v2460 = vadd.f32 %v2431, %v2459
        %2461 = vdwg.mxu0
        %2462 = vmatpush.bf16.msra.mxu0 0
        %2463 = vmatpush.bf16.msra.mxu0 0
        %2464 = vmatpush.bf16.msra.mxu0 %v2301
        %2465 = vmatpush.bf16.msra.mxu0 %v2299
        %2466 = vmatpush.bf16.msra.mxu0 %v2297
        %2467 = vmatpush.bf16.msra.mxu0 %v2295
        %2468 = vmatpush.bf16.msra.mxu0 %v2293
        %2469 = vmatpush.bf16.msra.mxu0 %v2291
        %2470 = vmatmul.bf16.gmra.mxu0 %v2364
        %v2471 = vpop.f32.mrf.mxu0
        %v2472 = vadd.f32 %v2443, %v2471
        %v2473 = vpop.f32.mrf.mxu0
        %v2474 = vadd.f32 %v2445, %v2473
        %2475 = vmatmul.bf16.gmra.mxu0 %v2367
        %v2476 = vpop.f32.mrf.mxu0
        %v2477 = vadd.f32 %v2448, %v2476
        %v2478 = vpop.f32.mrf.mxu0
        %v2479 = vadd.f32 %v2450, %v2478
        %2480 = vmatmul.bf16.gmra.mxu0 %v2370
        %v2481 = vpop.f32.mrf.mxu0
        %v2482 = vadd.f32 %v2453, %v2481
        %v2483 = vpop.f32.mrf.mxu0
        %v2484 = vadd.f32 %v2455, %v2483
        %2485 = vmatmul.bf16.gmra.mxu0 %v2373
        %v2486 = vpop.f32.mrf.mxu0
        %v2487 = vadd.f32 %v2458, %v2486
        %v2488 = vpop.f32.mrf.mxu0
        %v2489 = vadd.f32 %v2460, %v2488
        %2490 = vdwg.mxu0
        %2491 = vmatpush.bf16.msra.mxu0 %v2258
        %2492 = vmatpush.bf16.msra.mxu0 %v2256
        %2493 = vmatpush.bf16.msra.mxu0 %v2254
        %2494 = vmatpush.bf16.msra.mxu0 %v2252
        %2495 = vmatpush.bf16.msra.mxu0 %v2250
        %2496 = vmatpush.bf16.msra.mxu0 %v2248
        %2497 = vmatpush.bf16.msra.mxu0 %v2246
        %2498 = vmatpush.bf16.msra.mxu0 %v2244
        %2499 = vmatmul.bf16.gmra.mxu0 %v2035
        %v2500 = vpop.f32.mrf.mxu0
        %v2501 = vadd.f32 0.0, %v2500
        %v2502 = vpop.f32.mrf.mxu0
        %v2503 = vadd.f32 0.0, %v2502
        %2504 = vmatmul.bf16.gmra.mxu0 %v2039
        %v2505 = vpop.f32.mrf.mxu0
        %v2506 = vadd.f32 0.0, %v2505
        %v2507 = vpop.f32.mrf.mxu0
        %v2508 = vadd.f32 0.0, %v2507
        %2509 = vmatmul.bf16.gmra.mxu0 %v2043
        %v2510 = vpop.f32.mrf.mxu0
        %v2511 = vadd.f32 0.0, %v2510
        %v2512 = vpop.f32.mrf.mxu0
        %v2513 = vadd.f32 0.0, %v2512
        %2514 = vmatmul.bf16.gmra.mxu0 %v2047
        %v2515 = vpop.f32.mrf.mxu0
        %v2516 = vadd.f32 0.0, %v2515
        %v2517 = vpop.f32.mrf.mxu0
        %v2518 = vadd.f32 0.0, %v2517
        %2519 = vdwg.mxu0
        %2520 = vmatpush.bf16.msra.mxu0 %v2274
        %2521 = vmatpush.bf16.msra.mxu0 %v2272
        %2522 = vmatpush.bf16.msra.mxu0 %v2270
        %2523 = vmatpush.bf16.msra.mxu0 %v2268
        %2524 = vmatpush.bf16.msra.mxu0 %v2266
        %2525 = vmatpush.bf16.msra.mxu0 %v2264
        %2526 = vmatpush.bf16.msra.mxu0 %v2262
        %2527 = vmatpush.bf16.msra.mxu0 %v2260
        %2528 = vmatmul.bf16.gmra.mxu0 %v2036
        %v2529 = vpop.f32.mrf.mxu0
        %v2530 = vadd.f32 %v2501, %v2529
        %v2531 = vpop.f32.mrf.mxu0
        %v2532 = vadd.f32 %v2503, %v2531
        %2533 = vmatmul.bf16.gmra.mxu0 %v2040
        %v2534 = vpop.f32.mrf.mxu0
        %v2535 = vadd.f32 %v2506, %v2534
        %v2536 = vpop.f32.mrf.mxu0
        %v2537 = vadd.f32 %v2508, %v2536
        %2538 = vmatmul.bf16.gmra.mxu0 %v2044
        %v2539 = vpop.f32.mrf.mxu0
        %v2540 = vadd.f32 %v2511, %v2539
        %v2541 = vpop.f32.mrf.mxu0
        %v2542 = vadd.f32 %v2513, %v2541
        %2543 = vmatmul.bf16.gmra.mxu0 %v2048
        %v2544 = vpop.f32.mrf.mxu0
        %v2545 = vadd.f32 %v2516, %v2544
        %v2546 = vpop.f32.mrf.mxu0
        %v2547 = vadd.f32 %v2518, %v2546
        %2548 = vdwg.mxu0
        %2549 = vmatpush.bf16.msra.mxu0 %v2290
        %2550 = vmatpush.bf16.msra.mxu0 %v2288
        %2551 = vmatpush.bf16.msra.mxu0 %v2286
        %2552 = vmatpush.bf16.msra.mxu0 %v2284
        %2553 = vmatpush.bf16.msra.mxu0 %v2282
        %2554 = vmatpush.bf16.msra.mxu0 %v2280
        %2555 = vmatpush.bf16.msra.mxu0 %v2278
        %2556 = vmatpush.bf16.msra.mxu0 %v2276
        %2557 = vmatmul.bf16.gmra.mxu0 %v2037
        %v2558 = vpop.f32.mrf.mxu0
        %v2559 = vadd.f32 %v2530, %v2558
        %v2560 = vpop.f32.mrf.mxu0
        %v2561 = vadd.f32 %v2532, %v2560
        %2562 = vmatmul.bf16.gmra.mxu0 %v2041
        %v2563 = vpop.f32.mrf.mxu0
        %v2564 = vadd.f32 %v2535, %v2563
        %v2565 = vpop.f32.mrf.mxu0
        %v2566 = vadd.f32 %v2537, %v2565
        %2567 = vmatmul.bf16.gmra.mxu0 %v2045
        %v2568 = vpop.f32.mrf.mxu0
        %v2569 = vadd.f32 %v2540, %v2568
        %v2570 = vpop.f32.mrf.mxu0
        %v2571 = vadd.f32 %v2542, %v2570
        %2572 = vmatmul.bf16.gmra.mxu0 %v2049
        %v2573 = vpop.f32.mrf.mxu0
        %v2574 = vadd.f32 %v2545, %v2573
        %v2575 = vpop.f32.mrf.mxu0
        %v2576 = vadd.f32 %v2547, %v2575
        %2577 = vdwg.mxu0
        %2578 = vmatpush.bf16.msra.mxu0 0
        %2579 = vmatpush.bf16.msra.mxu0 0
        %2580 = vmatpush.bf16.msra.mxu0 %v2302
        %2581 = vmatpush.bf16.msra.mxu0 %v2300
        %2582 = vmatpush.bf16.msra.mxu0 %v2298
        %2583 = vmatpush.bf16.msra.mxu0 %v2296
        %2584 = vmatpush.bf16.msra.mxu0 %v2294
        %2585 = vmatpush.bf16.msra.mxu0 %v2292
        %2586 = vmatmul.bf16.gmra.mxu0 %v2364
        %v2587 = vpop.f32.mrf.mxu0
        %v2588 = vadd.f32 %v2559, %v2587
        %v2589 = vpop.f32.mrf.mxu0
        %v2590 = vadd.f32 %v2561, %v2589
        %2591 = vmatmul.bf16.gmra.mxu0 %v2367
        %v2592 = vpop.f32.mrf.mxu0
        %v2593 = vadd.f32 %v2564, %v2592
        %v2594 = vpop.f32.mrf.mxu0
        %v2595 = vadd.f32 %v2566, %v2594
        %2596 = vmatmul.bf16.gmra.mxu0 %v2370
        %v2597 = vpop.f32.mrf.mxu0
        %v2598 = vadd.f32 %v2569, %v2597
        %v2599 = vpop.f32.mrf.mxu0
        %v2600 = vadd.f32 %v2571, %v2599
        %2601 = vmatmul.bf16.gmra.mxu0 %v2373
        %v2602 = vpop.f32.mrf.mxu0
        %v2603 = vadd.f32 %v2574, %v2602
        %v2604 = vpop.f32.mrf.mxu0
        %v2605 = vadd.f32 %v2576, %v2604
        %2606 = vdwg.mxu0
        %v2607 = vpack.c.b16 %v1886, %v1882
        %v2608 = vpack.c.b16 %v1887, %v1883
        %v2609 = vpack.c.b16 %v1888, %v1884
        %v2610 = vpack.c.b16 %v1889, %v1885
        %v2611 = vpack.c.b16 %v1894, %v1890
        %v2612 = vpack.c.b16 %v1895, %v1891
        %v2613 = vpack.c.b16 %v1896, %v1892
        %v2614 = vpack.c.b16 %v1897, %v1893
        %v2615 = vpack.c.b16 %v1902, %v1898
        %v2616 = vpack.c.b16 %v1903, %v1899
        %v2617 = vpack.c.b16 %v1904, %v1900
        %v2618 = vpack.c.b16 %v1905, %v1901
        %v2619 = vpack.c.b16 %v1910, %v1906
        %v2620 = vpack.c.b16 %v1911, %v1907
        %v2621 = vpack.c.b16 %v1912, %v1908
        %v2622 = vpack.c.b16 %v1913, %v1909
        %v2695 = vunpack.c.l.b16 %v1914
        %v2696 = vunpack.c.h.b16 %v1914
        %v2697 = vunpack.c.l.b16 %v1915
        %v2698 = vunpack.c.h.b16 %v1915
        %v2699 = vunpack.c.l.b16 %v1916
        %v2700 = vunpack.c.h.b16 %v1916
        %v2701 = vunpack.c.l.b16 %v1917
        %v2702 = vunpack.c.h.b16 %v1917
        %v2703 = vunpack.c.l.b16 %v1918
        %v2704 = vunpack.c.h.b16 %v1918
        %v2705 = vunpack.c.l.b16 %v1919
        %v2706 = vunpack.c.h.b16 %v1919
        %v2707 = vunpack.c.l.b16 %v1920
        %v2708 = vunpack.c.h.b16 %v1920
        %v2709 = vunpack.c.l.b16 %v1921
        %v2710 = vunpack.c.h.b16 %v1921
        %v2711 = vunpack.c.l.b16 %v1922
        %v2712 = vunpack.c.h.b16 %v1922
        %v2713 = vunpack.c.l.b16 %v1923
        %v2714 = vunpack.c.h.b16 %v1923
        %v2715 = vunpack.c.l.b16 %v1924
        %v2716 = vunpack.c.h.b16 %v1924
        %v2717 = vunpack.c.l.b16 %v1925
        %v2718 = vunpack.c.h.b16 %v1925
        %v2719 = vunpack.c.l.b16 %v1926
        %v2720 = vunpack.c.h.b16 %v1926
        %v2721 = vunpack.c.l.b16 %v1927
        %v2722 = vunpack.c.h.b16 %v1927
        %v2723 = vunpack.c.l.b16 %v1928
        %v2724 = vunpack.c.h.b16 %v1928
        %v2725 = vunpack.c.l.b16 %v1929
        %v2726 = vunpack.c.h.b16 %v1929
        %v2727 = vunpack.c.l.b16 %v1930
        %v2728 = vunpack.c.h.b16 %v1930
        %v2729 = vunpack.c.l.b16 %v1931
        %v2730 = vunpack.c.h.b16 %v1931
        %v2731 = vunpack.c.l.b16 %v1932
        %v2732 = vunpack.c.h.b16 %v1932
        %v2733 = vunpack.c.l.b16 %v1933
        %v2734 = vunpack.c.h.b16 %v1933
        %v2735 = vunpack.c.l.b16 %v1934
        %v2736 = vunpack.c.h.b16 %v1934
        %v2737 = vunpack.c.l.b16 %v1935
        %v2738 = vunpack.c.h.b16 %v1935
        %v2739 = vunpack.c.l.b16 %v1936
        %v2740 = vunpack.c.h.b16 %v1936
        %v2741 = vunpack.c.l.b16 %v1937
        %v2742 = vunpack.c.h.b16 %v1937
        %v2743 = vunpack.c.l.b16 %v1938
        %v2744 = vunpack.c.h.b16 %v1938
        %v2745 = vunpack.c.l.b16 %v1939
        %v2746 = vunpack.c.h.b16 %v1939
        %v2747 = vunpack.c.l.b16 %v1940
        %v2748 = vunpack.c.h.b16 %v1940
        %v2749 = vunpack.c.l.b16 %v1941
        %v2750 = vunpack.c.h.b16 %v1941
        %v2751 = vunpack.c.l.b16 %v1942
        %v2752 = vunpack.c.h.b16 %v1942
        %v2753 = vunpack.c.l.b16 %v1943
        %v2754 = vunpack.c.h.b16 %v1943
        %v2755 = vunpack.c.l.b16 %v1944
        %v2756 = vunpack.c.h.b16 %v1944
        %v2757 = vunpack.c.l.b16 %v1945
        %v2758 = vunpack.c.h.b16 %v1945
        %v2759 = vunpack.c.l.b16 %v1946
        %v2760 = vunpack.c.h.b16 %v1946
        %v2761 = vunpack.c.l.b16 %v1947
        %v2762 = vunpack.c.h.b16 %v1947
        %v2763 = vunpack.c.l.b16 %v1948
        %v2764 = vunpack.c.h.b16 %v1948
        %v2765 = vunpack.c.l.b16 %v1949
        %v2766 = vunpack.c.h.b16 %v1949
        %v2767 = vunpack.c.l.b16 %v1950
        %v2768 = vunpack.c.h.b16 %v1950
        %v2769 = vunpack.c.l.b16 %v1951
        %v2770 = vunpack.c.h.b16 %v1951
        %v2771 = vunpack.c.l.b16 %v1952
        %v2772 = vunpack.c.h.b16 %v1952
        %v2773 = vunpack.c.l.b16 %v1953
        %v2774 = vunpack.c.h.b16 %v1953
        %v2775 = vunpack.c.l.b16 %v1954
        %v2776 = vunpack.c.h.b16 %v1954
        %v2777 = vunpack.c.l.b16 %v1955
        %v2778 = vunpack.c.h.b16 %v1955
        %v2779 = vunpack.c.l.b16 %v1956
        %v2780 = vunpack.c.h.b16 %v1956
        %v2781 = vunpack.c.l.b16 %v1957
        %v2782 = vunpack.c.h.b16 %v1957
        %v2783 = vunpack.c.l.b16 %v1958
        %v2784 = vunpack.c.h.b16 %v1958
        %v2785 = vunpack.c.l.b16 %v1959
        %v2786 = vunpack.c.h.b16 %v1959
        %v2787 = vunpack.c.l.b16 %v1960
        %v2788 = vunpack.c.h.b16 %v1960
        %v2789 = vunpack.c.l.b16 %v1961
        %v2790 = vunpack.c.h.b16 %v1961
        %v2791 = vunpack.c.l.b16 %v1962
        %v2792 = vunpack.c.h.b16 %v1962
        %v2793 = vunpack.c.l.b16 %v1963
        %v2794 = vunpack.c.h.b16 %v1963
        %v2795 = vunpack.c.l.b16 %v1964
        %v2796 = vunpack.c.h.b16 %v1964
        %v2797 = vunpack.c.l.b16 %v1965
        %v2798 = vunpack.c.h.b16 %v1965
        %v2799 = vunpack.c.l.b16 %v1966
        %v2800 = vunpack.c.h.b16 %v1966
        %v2801 = vunpack.c.l.b16 %v1967
        %v2802 = vunpack.c.h.b16 %v1967
        %v2803 = vunpack.c.l.b16 %v1968
        %v2804 = vunpack.c.h.b16 %v1968
        %v2805 = vunpack.c.l.b16 %v1969
        %v2806 = vunpack.c.h.b16 %v1969
        %v2807 = vunpack.c.l.b16 %v1970
        %v2808 = vunpack.c.h.b16 %v1970
        %v2809 = vunpack.c.l.b16 %v1971
        %v2810 = vunpack.c.h.b16 %v1971
        %v2811 = vunpack.c.l.b16 %v1972
        %v2812 = vunpack.c.h.b16 %v1972
        %v2813 = vunpack.c.l.b16 %v1973
        %v2814 = vunpack.c.h.b16 %v1973
        %v2815 = vpack.c.b16 %v2697, %v2695
        %v2816 = vpack.c.b16 %v2698, %v2696
        %v2817 = vpack.c.b16 %v2701, %v2699
        %v2818 = vpack.c.b16 %v2702, %v2700
        %v2819 = vpack.c.b16 %v2705, %v2703
        %v2820 = vpack.c.b16 %v2706, %v2704
        %v2821 = vpack.c.b16 %v2709, %v2707
        %v2822 = vpack.c.b16 %v2710, %v2708
        %v2823 = vpack.c.b16 %v2713, %v2711
        %v2824 = vpack.c.b16 %v2714, %v2712
        %v2825 = vpack.c.b16 %v2717, %v2715
        %v2826 = vpack.c.b16 %v2718, %v2716
        %v2827 = vpack.c.b16 %v2721, %v2719
        %v2828 = vpack.c.b16 %v2722, %v2720
        %v2829 = vpack.c.b16 %v2725, %v2723
        %v2830 = vpack.c.b16 %v2726, %v2724
        %v2831 = vpack.c.b16 %v2729, %v2727
        %v2832 = vpack.c.b16 %v2730, %v2728
        %v2833 = vpack.c.b16 %v2733, %v2731
        %v2834 = vpack.c.b16 %v2734, %v2732
        %v2835 = vpack.c.b16 %v2737, %v2735
        %v2836 = vpack.c.b16 %v2738, %v2736
        %v2837 = vpack.c.b16 %v2741, %v2739
        %v2838 = vpack.c.b16 %v2742, %v2740
        %v2839 = vpack.c.b16 %v2745, %v2743
        %v2840 = vpack.c.b16 %v2746, %v2744
        %v2841 = vpack.c.b16 %v2749, %v2747
        %v2842 = vpack.c.b16 %v2750, %v2748
        %v2843 = vpack.c.b16 %v2753, %v2751
        %v2844 = vpack.c.b16 %v2754, %v2752
        %v2845 = vpack.c.b16 %v2757, %v2755
        %v2846 = vpack.c.b16 %v2758, %v2756
        %v2847 = vpack.c.b16 %v2761, %v2759
        %v2848 = vpack.c.b16 %v2762, %v2760
        %v2849 = vpack.c.b16 %v2765, %v2763
        %v2850 = vpack.c.b16 %v2766, %v2764
        %v2851 = vpack.c.b16 %v2769, %v2767
        %v2852 = vpack.c.b16 %v2770, %v2768
        %v2853 = vpack.c.b16 %v2773, %v2771
        %v2854 = vpack.c.b16 %v2774, %v2772
        %v2855 = vpack.c.b16 %v2777, %v2775
        %v2856 = vpack.c.b16 %v2778, %v2776
        %v2857 = vpack.c.b16 %v2781, %v2779
        %v2858 = vpack.c.b16 %v2782, %v2780
        %v2859 = vpack.c.b16 %v2785, %v2783
        %v2860 = vpack.c.b16 %v2786, %v2784
        %v2861 = vpack.c.b16 %v2789, %v2787
        %v2862 = vpack.c.b16 %v2790, %v2788
        %v2863 = vpack.c.b16 %v2793, %v2791
        %v2864 = vpack.c.b16 %v2794, %v2792
        %v2865 = vpack.c.b16 %v2797, %v2795
        %v2866 = vpack.c.b16 %v2798, %v2796
        %v2867 = vpack.c.b16 %v2801, %v2799
        %v2868 = vpack.c.b16 %v2802, %v2800
        %v2869 = vpack.c.b16 %v2805, %v2803
        %v2870 = vpack.c.b16 %v2806, %v2804
        %v2871 = vpack.c.b16 %v2809, %v2807
        %v2872 = vpack.c.b16 %v2810, %v2808
        %v2873 = vpack.c.b16 %v2813, %v2811
        %v2874 = vpack.c.b16 %v2814, %v2812
        %v2936 = vsel %vm1345, %v2610, 0
        %v2939 = vsel %vm1345, %v2614, 0
        %v2942 = vsel %vm1345, %v2618, 0
        %v2945 = vsel %vm1345, %v2622, 0
        %2947 = vmatpush.bf16.msra.mxu0 %v2829
        %2948 = vmatpush.bf16.msra.mxu0 %v2827
        %2949 = vmatpush.bf16.msra.mxu0 %v2825
        %2950 = vmatpush.bf16.msra.mxu0 %v2823
        %2951 = vmatpush.bf16.msra.mxu0 %v2821
        %2952 = vmatpush.bf16.msra.mxu0 %v2819
        %2953 = vmatpush.bf16.msra.mxu0 %v2817
        %2954 = vmatpush.bf16.msra.mxu0 %v2815
        %2955 = vmatmul.bf16.gmra.mxu0 %v2607
        %v2956 = vpop.f32.mrf.mxu0
        %v2957 = vadd.f32 %v2472, %v2956
        %v2958 = vpop.f32.mrf.mxu0
        %v2959 = vadd.f32 %v2474, %v2958
        %2960 = vmatmul.bf16.gmra.mxu0 %v2611
        %v2961 = vpop.f32.mrf.mxu0
        %v2962 = vadd.f32 %v2477, %v2961
        %v2963 = vpop.f32.mrf.mxu0
        %v2964 = vadd.f32 %v2479, %v2963
        %2965 = vmatmul.bf16.gmra.mxu0 %v2615
        %v2966 = vpop.f32.mrf.mxu0
        %v2967 = vadd.f32 %v2482, %v2966
        %v2968 = vpop.f32.mrf.mxu0
        %v2969 = vadd.f32 %v2484, %v2968
        %2970 = vmatmul.bf16.gmra.mxu0 %v2619
        %v2971 = vpop.f32.mrf.mxu0
        %v2972 = vadd.f32 %v2487, %v2971
        %v2973 = vpop.f32.mrf.mxu0
        %v2974 = vadd.f32 %v2489, %v2973
        %2975 = vdwg.mxu0
        %2976 = vmatpush.bf16.msra.mxu0 %v2845
        %2977 = vmatpush.bf16.msra.mxu0 %v2843
        %2978 = vmatpush.bf16.msra.mxu0 %v2841
        %2979 = vmatpush.bf16.msra.mxu0 %v2839
        %2980 = vmatpush.bf16.msra.mxu0 %v2837
        %2981 = vmatpush.bf16.msra.mxu0 %v2835
        %2982 = vmatpush.bf16.msra.mxu0 %v2833
        %2983 = vmatpush.bf16.msra.mxu0 %v2831
        %2984 = vmatmul.bf16.gmra.mxu0 %v2608
        %v2985 = vpop.f32.mrf.mxu0
        %v2986 = vadd.f32 %v2957, %v2985
        %v2987 = vpop.f32.mrf.mxu0
        %v2988 = vadd.f32 %v2959, %v2987
        %2989 = vmatmul.bf16.gmra.mxu0 %v2612
        %v2990 = vpop.f32.mrf.mxu0
        %v2991 = vadd.f32 %v2962, %v2990
        %v2992 = vpop.f32.mrf.mxu0
        %v2993 = vadd.f32 %v2964, %v2992
        %2994 = vmatmul.bf16.gmra.mxu0 %v2616
        %v2995 = vpop.f32.mrf.mxu0
        %v2996 = vadd.f32 %v2967, %v2995
        %v2997 = vpop.f32.mrf.mxu0
        %v2998 = vadd.f32 %v2969, %v2997
        %2999 = vmatmul.bf16.gmra.mxu0 %v2620
        %v3000 = vpop.f32.mrf.mxu0
        %v3001 = vadd.f32 %v2972, %v3000
        %v3002 = vpop.f32.mrf.mxu0
        %v3003 = vadd.f32 %v2974, %v3002
        %3004 = vdwg.mxu0
        %3005 = vmatpush.bf16.msra.mxu0 %v2861
        %3006 = vmatpush.bf16.msra.mxu0 %v2859
        %3007 = vmatpush.bf16.msra.mxu0 %v2857
        %3008 = vmatpush.bf16.msra.mxu0 %v2855
        %3009 = vmatpush.bf16.msra.mxu0 %v2853
        %3010 = vmatpush.bf16.msra.mxu0 %v2851
        %3011 = vmatpush.bf16.msra.mxu0 %v2849
        %3012 = vmatpush.bf16.msra.mxu0 %v2847
        %3013 = vmatmul.bf16.gmra.mxu0 %v2609
        %v3014 = vpop.f32.mrf.mxu0
        %v3015 = vadd.f32 %v2986, %v3014
        %v3016 = vpop.f32.mrf.mxu0
        %v3017 = vadd.f32 %v2988, %v3016
        %3018 = vmatmul.bf16.gmra.mxu0 %v2613
        %v3019 = vpop.f32.mrf.mxu0
        %v3020 = vadd.f32 %v2991, %v3019
        %v3021 = vpop.f32.mrf.mxu0
        %v3022 = vadd.f32 %v2993, %v3021
        %3023 = vmatmul.bf16.gmra.mxu0 %v2617
        %v3024 = vpop.f32.mrf.mxu0
        %v3025 = vadd.f32 %v2996, %v3024
        %v3026 = vpop.f32.mrf.mxu0
        %v3027 = vadd.f32 %v2998, %v3026
        %3028 = vmatmul.bf16.gmra.mxu0 %v2621
        %v3029 = vpop.f32.mrf.mxu0
        %v3030 = vadd.f32 %v3001, %v3029
        %v3031 = vpop.f32.mrf.mxu0
        %v3032 = vadd.f32 %v3003, %v3031
        %3033 = vdwg.mxu0
        %3034 = vmatpush.bf16.msra.mxu0 0
        %3035 = vmatpush.bf16.msra.mxu0 0
        %3036 = vmatpush.bf16.msra.mxu0 %v2873
        %3037 = vmatpush.bf16.msra.mxu0 %v2871
        %3038 = vmatpush.bf16.msra.mxu0 %v2869
        %3039 = vmatpush.bf16.msra.mxu0 %v2867
        %3040 = vmatpush.bf16.msra.mxu0 %v2865
        %3041 = vmatpush.bf16.msra.mxu0 %v2863
        %3042 = vmatmul.bf16.gmra.mxu0 %v2936
        %v3043 = vpop.f32.mrf.mxu0
        %v3044 = vadd.f32 %v3015, %v3043
        %v3045 = vpop.f32.mrf.mxu0
        %v3046 = vadd.f32 %v3017, %v3045
        %3047 = vmatmul.bf16.gmra.mxu0 %v2939
        %v3048 = vpop.f32.mrf.mxu0
        %v3049 = vadd.f32 %v3020, %v3048
        %v3050 = vpop.f32.mrf.mxu0
        %v3051 = vadd.f32 %v3022, %v3050
        %3052 = vmatmul.bf16.gmra.mxu0 %v2942
        %v3053 = vpop.f32.mrf.mxu0
        %v3054 = vadd.f32 %v3025, %v3053
        %v3055 = vpop.f32.mrf.mxu0
        %v3056 = vadd.f32 %v3027, %v3055
        %3057 = vmatmul.bf16.gmra.mxu0 %v2945
        %v3058 = vpop.f32.mrf.mxu0
        %v3059 = vadd.f32 %v3030, %v3058
        %v3060 = vpop.f32.mrf.mxu0
        %v3061 = vadd.f32 %v3032, %v3060
        %3062 = vdwg.mxu0
        %3063 = vmatpush.bf16.msra.mxu0 %v2830
        %3064 = vmatpush.bf16.msra.mxu0 %v2828
        %3065 = vmatpush.bf16.msra.mxu0 %v2826
        %3066 = vmatpush.bf16.msra.mxu0 %v2824
        %3067 = vmatpush.bf16.msra.mxu0 %v2822
        %3068 = vmatpush.bf16.msra.mxu0 %v2820
        %3069 = vmatpush.bf16.msra.mxu0 %v2818
        %3070 = vmatpush.bf16.msra.mxu0 %v2816
        %3071 = vmatmul.bf16.gmra.mxu0 %v2607
        %v3072 = vpop.f32.mrf.mxu0
        %v3073 = vadd.f32 %v2588, %v3072
        %v3074 = vpop.f32.mrf.mxu0
        %v3075 = vadd.f32 %v2590, %v3074
        %3076 = vmatmul.bf16.gmra.mxu0 %v2611
        %v3077 = vpop.f32.mrf.mxu0
        %v3078 = vadd.f32 %v2593, %v3077
        %v3079 = vpop.f32.mrf.mxu0
        %v3080 = vadd.f32 %v2595, %v3079
        %3081 = vmatmul.bf16.gmra.mxu0 %v2615
        %v3082 = vpop.f32.mrf.mxu0
        %v3083 = vadd.f32 %v2598, %v3082
        %v3084 = vpop.f32.mrf.mxu0
        %v3085 = vadd.f32 %v2600, %v3084
        %3086 = vmatmul.bf16.gmra.mxu0 %v2619
        %v3087 = vpop.f32.mrf.mxu0
        %v3088 = vadd.f32 %v2603, %v3087
        %v3089 = vpop.f32.mrf.mxu0
        %v3090 = vadd.f32 %v2605, %v3089
        %3091 = vdwg.mxu0
        %3092 = vmatpush.bf16.msra.mxu0 %v2846
        %3093 = vmatpush.bf16.msra.mxu0 %v2844
        %3094 = vmatpush.bf16.msra.mxu0 %v2842
        %3095 = vmatpush.bf16.msra.mxu0 %v2840
        %3096 = vmatpush.bf16.msra.mxu0 %v2838
        %3097 = vmatpush.bf16.msra.mxu0 %v2836
        %3098 = vmatpush.bf16.msra.mxu0 %v2834
        %3099 = vmatpush.bf16.msra.mxu0 %v2832
        %3100 = vmatmul.bf16.gmra.mxu0 %v2608
        %v3101 = vpop.f32.mrf.mxu0
        %v3102 = vadd.f32 %v3073, %v3101
        %v3103 = vpop.f32.mrf.mxu0
        %v3104 = vadd.f32 %v3075, %v3103
        %3105 = vmatmul.bf16.gmra.mxu0 %v2612
        %v3106 = vpop.f32.mrf.mxu0
        %v3107 = vadd.f32 %v3078, %v3106
        %v3108 = vpop.f32.mrf.mxu0
        %v3109 = vadd.f32 %v3080, %v3108
        %3110 = vmatmul.bf16.gmra.mxu0 %v2616
        %v3111 = vpop.f32.mrf.mxu0
        %v3112 = vadd.f32 %v3083, %v3111
        %v3113 = vpop.f32.mrf.mxu0
        %v3114 = vadd.f32 %v3085, %v3113
        %3115 = vmatmul.bf16.gmra.mxu0 %v2620
        %v3116 = vpop.f32.mrf.mxu0
        %v3117 = vadd.f32 %v3088, %v3116
        %v3118 = vpop.f32.mrf.mxu0
        %v3119 = vadd.f32 %v3090, %v3118
        %3120 = vdwg.mxu0
        %3121 = vmatpush.bf16.msra.mxu0 %v2862
        %3122 = vmatpush.bf16.msra.mxu0 %v2860
        %3123 = vmatpush.bf16.msra.mxu0 %v2858
        %3124 = vmatpush.bf16.msra.mxu0 %v2856
        %3125 = vmatpush.bf16.msra.mxu0 %v2854
        %3126 = vmatpush.bf16.msra.mxu0 %v2852
        %3127 = vmatpush.bf16.msra.mxu0 %v2850
        %3128 = vmatpush.bf16.msra.mxu0 %v2848
        %3129 = vmatmul.bf16.gmra.mxu0 %v2609
        %v3130 = vpop.f32.mrf.mxu0
        %v3131 = vadd.f32 %v3102, %v3130
        %v3132 = vpop.f32.mrf.mxu0
        %v3133 = vadd.f32 %v3104, %v3132
        %3134 = vmatmul.bf16.gmra.mxu0 %v2613
        %v3135 = vpop.f32.mrf.mxu0
        %v3136 = vadd.f32 %v3107, %v3135
        %v3137 = vpop.f32.mrf.mxu0
        %v3138 = vadd.f32 %v3109, %v3137
        %3139 = vmatmul.bf16.gmra.mxu0 %v2617
        %v3140 = vpop.f32.mrf.mxu0
        %v3141 = vadd.f32 %v3112, %v3140
        %v3142 = vpop.f32.mrf.mxu0
        %v3143 = vadd.f32 %v3114, %v3142
        %3144 = vmatmul.bf16.gmra.mxu0 %v2621
        %v3145 = vpop.f32.mrf.mxu0
        %v3146 = vadd.f32 %v3117, %v3145
        %v3147 = vpop.f32.mrf.mxu0
        %v3148 = vadd.f32 %v3119, %v3147
        %3149 = vdwg.mxu0
        %3150 = vmatpush.bf16.msra.mxu0 0
        %3151 = vmatpush.bf16.msra.mxu0 0
        %3152 = vmatpush.bf16.msra.mxu0 %v2874
        %3153 = vmatpush.bf16.msra.mxu0 %v2872
        %3154 = vmatpush.bf16.msra.mxu0 %v2870
        %3155 = vmatpush.bf16.msra.mxu0 %v2868
        %3156 = vmatpush.bf16.msra.mxu0 %v2866
        %3157 = vmatpush.bf16.msra.mxu0 %v2864
        %3158 = vmatmul.bf16.gmra.mxu0 %v2936
        %v3159 = vpop.f32.mrf.mxu0
        %v3160 = vadd.f32 %v3131, %v3159
        %v3161 = vpop.f32.mrf.mxu0
        %v3162 = vadd.f32 %v3133, %v3161
        %3163 = vmatmul.bf16.gmra.mxu0 %v2939
        %v3164 = vpop.f32.mrf.mxu0
        %v3165 = vadd.f32 %v3136, %v3164
        %v3166 = vpop.f32.mrf.mxu0
        %v3167 = vadd.f32 %v3138, %v3166
        %3168 = vmatmul.bf16.gmra.mxu0 %v2942
        %v3169 = vpop.f32.mrf.mxu0
        %v3170 = vadd.f32 %v3141, %v3169
        %v3171 = vpop.f32.mrf.mxu0
        %v3172 = vadd.f32 %v3143, %v3171
        %3173 = vmatmul.bf16.gmra.mxu0 %v2945
        %v3174 = vpop.f32.mrf.mxu0
        %v3175 = vadd.f32 %v3146, %v3174
        %v3176 = vpop.f32.mrf.mxu0
        %v3177 = vadd.f32 %v3148, %v3176
        %3178 = vdwg.mxu0
        %v3179 = vrot.slane %v1534, 1
        %v3180 = vor.u32 %v1531, %v3179
        %v3181 = vrot.slane %v1541, 1
        %v3182 = vor.u32 %v1538, %v3181
        %v3183 = vrot.slane %v1548, 1
        %v3184 = vor.u32 %v1545, %v3183
        %v3185 = vrot.slane %v1555, 1
        %v3186 = vor.u32 %v1552, %v3185
        %v3187 = vrot.slane %v1562, 1
        %v3188 = vor.u32 %v1559, %v3187
        %v3189 = vrot.slane %v1569, 1
        %v3190 = vor.u32 %v1566, %v3189
        %v3191 = vrot.slane %v1576, 1
        %v3192 = vor.u32 %v1573, %v3191
        %v3193 = vrot.slane %v1583, 1
        %v3194 = vor.u32 %v1580, %v3193
        %v3195 = vrot.slane %v1590, 1
        %v3196 = vor.u32 %v1587, %v3195
        %v3197 = vrot.slane %v1597, 1
        %v3198 = vor.u32 %v1594, %v3197
        %v3199 = vrot.slane %v1604, 1
        %v3200 = vor.u32 %v1601, %v3199
        %v3201 = vrot.slane %v1611, 1
        %v3202 = vor.u32 %v1608, %v3201
        %v3203 = vrot.slane %v1618, 1
        %v3204 = vor.u32 %v1615, %v3203
        %v3205 = vrot.slane %v1625, 1
        %v3206 = vor.u32 %v1622, %v3205
        %v3207 = vrot.slane %v1632, 1
        %v3208 = vor.u32 %v1629, %v3207
        %v3209 = vrot.slane %v1639, 1
        %v3210 = vor.u32 %v1636, %v3209
        %v3211 = vrot.slane %v1646, 1
        %v3212 = vor.u32 %v1643, %v3211
        %v3213 = vrot.slane %v1653, 1
        %v3214 = vor.u32 %v1650, %v3213
        %v3215 = vrot.slane %v1660, 1
        %v3216 = vor.u32 %v1657, %v3215
        %v3217 = vrot.slane %v1667, 1
        %v3218 = vor.u32 %v1664, %v3217
        %v3219 = vrot.slane %v1674, 1
        %v3220 = vor.u32 %v1671, %v3219
        %v3221 = vrot.slane %v1681, 1
        %v3222 = vor.u32 %v1678, %v3221
        %v3223 = vrot.slane %v1688, 1
        %v3224 = vor.u32 %v1685, %v3223
        %v3225 = vrot.slane %v1695, 1
        %v3226 = vor.u32 %v1692, %v3225
        %v3227 = vrot.slane %v1702, 1
        %v3228 = vor.u32 %v1699, %v3227
        %v3229 = vrot.slane %v1709, 1
        %v3230 = vor.u32 %v1706, %v3229
        %v3231 = vrot.slane %v1716, 1
        %v3232 = vor.u32 %v1713, %v3231
        %v3233 = vrot.slane %v1723, 1
        %v3234 = vor.u32 %v1720, %v3233
        %v3235 = vrot.slane %v1730, 1
        %v3236 = vor.u32 %v1727, %v3235
        %v3237 = vrot.slane %v1737, 1
        %v3238 = vor.u32 %v1734, %v3237
        %v3239 = vrot.slane %v1744, 1
        %v3240 = vor.u32 %v1741, %v3239
        %v3241 = vrot.slane %v1751, 1
        %v3242 = vor.u32 %v1748, %v3241
        %v3244 = vsel %vm958, %v3180, 0
        %v3246 = vsel %vm958, %v3182, 0
        %v3248 = vsel %vm958, %v3184, 0
        %v3250 = vsel %vm958, %v3186, 0
        %v3252 = vsel %vm958, %v3188, 0
        %v3254 = vsel %vm958, %v3190, 0
        %v3256 = vsel %vm958, %v3192, 0
        %v3258 = vsel %vm958, %v3194, 0
        %v3260 = vsel %vm958, %v3196, 0
        %v3262 = vsel %vm958, %v3198, 0
        %v3264 = vsel %vm958, %v3200, 0
        %v3266 = vsel %vm958, %v3202, 0
        %v3268 = vsel %vm958, %v3204, 0
        %v3270 = vsel %vm958, %v3206, 0
        %v3272 = vsel %vm958, %v3208, 0
        %v3274 = vsel %vm958, %v3210, 0
        %v3276 = vsel %vm958, %v3212, 0
        %v3278 = vsel %vm958, %v3214, 0
        %v3280 = vsel %vm958, %v3216, 0
        %v3282 = vsel %vm958, %v3218, 0
        %v3284 = vsel %vm958, %v3220, 0
        %v3286 = vsel %vm958, %v3222, 0
        %v3288 = vsel %vm958, %v3224, 0
        %v3290 = vsel %vm958, %v3226, 0
        %v3292 = vsel %vm958, %v3228, 0
        %v3294 = vsel %vm958, %v3230, 0
        %v3296 = vsel %vm958, %v3232, 0
        %v3298 = vsel %vm958, %v3234, 0
        %v3300 = vsel %vm958, %v3236, 0
        %v3302 = vsel %vm958, %v3238, 0
        %v3304 = vsel %vm958, %v3240, 0
        %v3306 = vsel %vm958, %v3242, 0
        %v3339 = vunpack.c.l.b16 %v3244
        %v3340 = vunpack.c.l.b16 %v3246
        %v3341 = vunpack.c.l.b16 %v3248
        %v3342 = vunpack.c.l.b16 %v3250
        %v3343 = vunpack.c.l.b16 %v3252
        %v3344 = vunpack.c.l.b16 %v3254
        %v3345 = vunpack.c.l.b16 %v3256
        %v3346 = vunpack.c.l.b16 %v3258
        %v3347 = vunpack.c.l.b16 %v3260
        %v3348 = vunpack.c.l.b16 %v3262
        %v3349 = vunpack.c.l.b16 %v3264
        %v3350 = vunpack.c.l.b16 %v3266
        %v3351 = vunpack.c.l.b16 %v3268
        %v3352 = vunpack.c.l.b16 %v3270
        %v3353 = vunpack.c.l.b16 %v3272
        %v3354 = vunpack.c.l.b16 %v3274
        %v3355 = vunpack.c.l.b16 %v3276
        %v3356 = vunpack.c.l.b16 %v3278
        %v3357 = vunpack.c.l.b16 %v3280
        %v3358 = vunpack.c.l.b16 %v3282
        %v3359 = vunpack.c.l.b16 %v3284
        %v3360 = vunpack.c.l.b16 %v3286
        %v3361 = vunpack.c.l.b16 %v3288
        %v3362 = vunpack.c.l.b16 %v3290
        %v3363 = vunpack.c.l.b16 %v3292
        %v3364 = vunpack.c.l.b16 %v3294
        %v3365 = vunpack.c.l.b16 %v3296
        %v3366 = vunpack.c.l.b16 %v3298
        %v3367 = vunpack.c.l.b16 %v3300
        %v3368 = vunpack.c.l.b16 %v3302
        %v3369 = vunpack.c.l.b16 %v3304
        %v3370 = vunpack.c.l.b16 %v3306
        %s3371 = scalar_lea.vmem [#allocation3], 960
        %v3372 = vld [vmem:[%s3371] sm:$0xff]
        %v3373 = vld [vmem:[%s3371 + $0x8] sm:$0xff]
        %v3374 = vld [vmem:[%s3371 + $0x10] sm:$0xff]
        %v3375 = vld [vmem:[%s3371 + $0x18] sm:$0xff]
        %v3376 = vld [vmem:[%s3371 + $0x20] sm:$0xff]
        %v3377 = vld [vmem:[%s3371 + $0x28] sm:$0xff]
        %v3378 = vld [vmem:[%s3371 + $0x30] sm:$0xff]
        %v3379 = vld [vmem:[%s3371 + $0x38] sm:$0xff]
        %v3380 = vld [vmem:[%s3371 + $0x40] sm:$0xff]
        %v3381 = vld [vmem:[%s3371 + $0x48] sm:$0xff]
        %v3382 = vld [vmem:[%s3371 + $0x50] sm:$0xff]
        %v3383 = vld [vmem:[%s3371 + $0x58] sm:$0xff]
        %v3384 = vld [vmem:[%s3371 + $0x60] sm:$0xff]
        %v3385 = vld [vmem:[%s3371 + $0x68] sm:$0xff]
        %v3386 = vld [vmem:[%s3371 + $0x70] sm:$0xff]
        %v3387 = vld [vmem:[%s3371 + $0x78] sm:$0xff]
        %v3388 = vld [vmem:[%s3371 + $0x80] sm:$0xff]
        %v3389 = vld [vmem:[%s3371 + $0x88] sm:$0xff]
        %v3390 = vld [vmem:[%s3371 + $0x90] sm:$0xff]
        %v3391 = vld [vmem:[%s3371 + $0x98] sm:$0xff]
        %v3392 = vld [vmem:[%s3371 + $0xa0] sm:$0xff]
        %v3393 = vld [vmem:[%s3371 + $0xa8] sm:$0xff]
        %v3394 = vld [vmem:[%s3371 + $0xb0] sm:$0xff]
        %v3395 = vld [vmem:[%s3371 + $0xb8] sm:$0xff]
        %v3396 = vld [vmem:[%s3371 + $0xc0] sm:$0xff]
        %v3397 = vld [vmem:[%s3371 + $0xc8] sm:$0xff]
        %v3398 = vld [vmem:[%s3371 + $0xd0] sm:$0xff]
        %v3399 = vld [vmem:[%s3371 + $0xd8] sm:$0xff]
        %v3400 = vld [vmem:[%s3371 + $0xe0] sm:$0xff]
        %v3401 = vld [vmem:[%s3371 + $0xe8] sm:$0xff]
        %v3402 = vld [vmem:[%s3371 + $0xf0] sm:$0xff]
        %v3403 = vld [vmem:[%s3371 + $0xf8] sm:$0xff]
        %v3404 = vld [vmem:[%s3371 + $0x100] sm:$0xff]
        %v3405 = vld [vmem:[%s3371 + $0x108] sm:$0xff]
        %v3406 = vld [vmem:[%s3371 + $0x110] sm:$0xff]
        %v3407 = vld [vmem:[%s3371 + $0x118] sm:$0xff]
        %v3408 = vld [vmem:[%s3371 + $0x120] sm:$0xff]
        %v3409 = vld [vmem:[%s3371 + $0x128] sm:$0xff]
        %v3410 = vld [vmem:[%s3371 + $0x130] sm:$0xff]
        %v3411 = vld [vmem:[%s3371 + $0x138] sm:$0xff]
        %v3412 = vld [vmem:[%s3371 + $0x140] sm:$0xff]
        %v3413 = vld [vmem:[%s3371 + $0x148] sm:$0xff]
        %v3414 = vld [vmem:[%s3371 + $0x150] sm:$0xff]
        %v3415 = vld [vmem:[%s3371 + $0x158] sm:$0xff]
        %v3416 = vld [vmem:[%s3371 + $0x160] sm:$0xff]
        %v3417 = vld [vmem:[%s3371 + $0x168] sm:$0xff]
        %v3418 = vld [vmem:[%s3371 + $0x170] sm:$0xff]
        %v3419 = vld [vmem:[%s3371 + $0x178] sm:$0xff]
        %v3420 = vld [vmem:[%s3371 + $0x180] sm:$0xff]
        %v3421 = vld [vmem:[%s3371 + $0x188] sm:$0xff]
        %v3422 = vld [vmem:[%s3371 + $0x190] sm:$0xff]
        %v3423 = vld [vmem:[%s3371 + $0x198] sm:$0xff]
        %v3424 = vld [vmem:[%s3371 + $0x1a0] sm:$0xff]
        %v3425 = vld [vmem:[%s3371 + $0x1a8] sm:$0xff]
        %v3426 = vld [vmem:[%s3371 + $0x1b0] sm:$0xff]
        %v3427 = vld [vmem:[%s3371 + $0x1b8] sm:$0xff]
        %v3428 = vld [vmem:[%s3371 + $0x1c0] sm:$0xff]
        %v3429 = vld [vmem:[%s3371 + $0x1c8] sm:$0xff]
        %v3430 = vld [vmem:[%s3371 + $0x1d0] sm:$0xff]
        %v3431 = vld [vmem:[%s3371 + $0x1d8] sm:$0xff]
        %v3432 = vpack.c.b16 %v3343, %v3339
        %v3433 = vpack.c.b16 %v3344, %v3340
        %v3434 = vpack.c.b16 %v3345, %v3341
        %v3435 = vpack.c.b16 %v3346, %v3342
        %v3436 = vpack.c.b16 %v3351, %v3347
        %v3437 = vpack.c.b16 %v3352, %v3348
        %v3438 = vpack.c.b16 %v3353, %v3349
        %v3439 = vpack.c.b16 %v3354, %v3350
        %v3440 = vpack.c.b16 %v3359, %v3355
        %v3441 = vpack.c.b16 %v3360, %v3356
        %v3442 = vpack.c.b16 %v3361, %v3357
        %v3443 = vpack.c.b16 %v3362, %v3358
        %v3444 = vpack.c.b16 %v3367, %v3363
        %v3445 = vpack.c.b16 %v3368, %v3364
        %v3446 = vpack.c.b16 %v3369, %v3365
        %v3447 = vpack.c.b16 %v3370, %v3366
        %v3520 = vunpack.c.l.b16 %v3372
        %v3521 = vunpack.c.h.b16 %v3372
        %v3522 = vunpack.c.l.b16 %v3373
        %v3523 = vunpack.c.h.b16 %v3373
        %v3524 = vunpack.c.l.b16 %v3374
        %v3525 = vunpack.c.h.b16 %v3374
        %v3526 = vunpack.c.l.b16 %v3375
        %v3527 = vunpack.c.h.b16 %v3375
        %v3528 = vunpack.c.l.b16 %v3376
        %v3529 = vunpack.c.h.b16 %v3376
        %v3530 = vunpack.c.l.b16 %v3377
        %v3531 = vunpack.c.h.b16 %v3377
        %v3532 = vunpack.c.l.b16 %v3378
        %v3533 = vunpack.c.h.b16 %v3378
        %v3534 = vunpack.c.l.b16 %v3379
        %v3535 = vunpack.c.h.b16 %v3379
        %v3536 = vunpack.c.l.b16 %v3380
        %v3537 = vunpack.c.h.b16 %v3380
        %v3538 = vunpack.c.l.b16 %v3381
        %v3539 = vunpack.c.h.b16 %v3381
        %v3540 = vunpack.c.l.b16 %v3382
        %v3541 = vunpack.c.h.b16 %v3382
        %v3542 = vunpack.c.l.b16 %v3383
        %v3543 = vunpack.c.h.b16 %v3383
        %v3544 = vunpack.c.l.b16 %v3384
        %v3545 = vunpack.c.h.b16 %v3384
        %v3546 = vunpack.c.l.b16 %v3385
        %v3547 = vunpack.c.h.b16 %v3385
        %v3548 = vunpack.c.l.b16 %v3386
        %v3549 = vunpack.c.h.b16 %v3386
        %v3550 = vunpack.c.l.b16 %v3387
        %v3551 = vunpack.c.h.b16 %v3387
        %v3552 = vunpack.c.l.b16 %v3388
        %v3553 = vunpack.c.h.b16 %v3388
        %v3554 = vunpack.c.l.b16 %v3389
        %v3555 = vunpack.c.h.b16 %v3389
        %v3556 = vunpack.c.l.b16 %v3390
        %v3557 = vunpack.c.h.b16 %v3390
        %v3558 = vunpack.c.l.b16 %v3391
        %v3559 = vunpack.c.h.b16 %v3391
        %v3560 = vunpack.c.l.b16 %v3392
        %v3561 = vunpack.c.h.b16 %v3392
        %v3562 = vunpack.c.l.b16 %v3393
        %v3563 = vunpack.c.h.b16 %v3393
        %v3564 = vunpack.c.l.b16 %v3394
        %v3565 = vunpack.c.h.b16 %v3394
        %v3566 = vunpack.c.l.b16 %v3395
        %v3567 = vunpack.c.h.b16 %v3395
        %v3568 = vunpack.c.l.b16 %v3396
        %v3569 = vunpack.c.h.b16 %v3396
        %v3570 = vunpack.c.l.b16 %v3397
        %v3571 = vunpack.c.h.b16 %v3397
        %v3572 = vunpack.c.l.b16 %v3398
        %v3573 = vunpack.c.h.b16 %v3398
        %v3574 = vunpack.c.l.b16 %v3399
        %v3575 = vunpack.c.h.b16 %v3399
        %v3576 = vunpack.c.l.b16 %v3400
        %v3577 = vunpack.c.h.b16 %v3400
        %v3578 = vunpack.c.l.b16 %v3401
        %v3579 = vunpack.c.h.b16 %v3401
        %v3580 = vunpack.c.l.b16 %v3402
        %v3581 = vunpack.c.h.b16 %v3402
        %v3582 = vunpack.c.l.b16 %v3403
        %v3583 = vunpack.c.h.b16 %v3403
        %v3584 = vunpack.c.l.b16 %v3404
        %v3585 = vunpack.c.h.b16 %v3404
        %v3586 = vunpack.c.l.b16 %v3405
        %v3587 = vunpack.c.h.b16 %v3405
        %v3588 = vunpack.c.l.b16 %v3406
        %v3589 = vunpack.c.h.b16 %v3406
        %v3590 = vunpack.c.l.b16 %v3407
        %v3591 = vunpack.c.h.b16 %v3407
        %v3592 = vunpack.c.l.b16 %v3408
        %v3593 = vunpack.c.h.b16 %v3408
        %v3594 = vunpack.c.l.b16 %v3409
        %v3595 = vunpack.c.h.b16 %v3409
        %v3596 = vunpack.c.l.b16 %v3410
        %v3597 = vunpack.c.h.b16 %v3410
        %v3598 = vunpack.c.l.b16 %v3411
        %v3599 = vunpack.c.h.b16 %v3411
        %v3600 = vunpack.c.l.b16 %v3412
        %v3601 = vunpack.c.h.b16 %v3412
        %v3602 = vunpack.c.l.b16 %v3413
        %v3603 = vunpack.c.h.b16 %v3413
        %v3604 = vunpack.c.l.b16 %v3414
        %v3605 = vunpack.c.h.b16 %v3414
        %v3606 = vunpack.c.l.b16 %v3415
        %v3607 = vunpack.c.h.b16 %v3415
        %v3608 = vunpack.c.l.b16 %v3416
        %v3609 = vunpack.c.h.b16 %v3416
        %v3610 = vunpack.c.l.b16 %v3417
        %v3611 = vunpack.c.h.b16 %v3417
        %v3612 = vunpack.c.l.b16 %v3418
        %v3613 = vunpack.c.h.b16 %v3418
        %v3614 = vunpack.c.l.b16 %v3419
        %v3615 = vunpack.c.h.b16 %v3419
        %v3616 = vunpack.c.l.b16 %v3420
        %v3617 = vunpack.c.h.b16 %v3420
        %v3618 = vunpack.c.l.b16 %v3421
        %v3619 = vunpack.c.h.b16 %v3421
        %v3620 = vunpack.c.l.b16 %v3422
        %v3621 = vunpack.c.h.b16 %v3422
        %v3622 = vunpack.c.l.b16 %v3423
        %v3623 = vunpack.c.h.b16 %v3423
        %v3624 = vunpack.c.l.b16 %v3424
        %v3625 = vunpack.c.h.b16 %v3424
        %v3626 = vunpack.c.l.b16 %v3425
        %v3627 = vunpack.c.h.b16 %v3425
        %v3628 = vunpack.c.l.b16 %v3426
        %v3629 = vunpack.c.h.b16 %v3426
        %v3630 = vunpack.c.l.b16 %v3427
        %v3631 = vunpack.c.h.b16 %v3427
        %v3632 = vunpack.c.l.b16 %v3428
        %v3633 = vunpack.c.h.b16 %v3428
        %v3634 = vunpack.c.l.b16 %v3429
        %v3635 = vunpack.c.h.b16 %v3429
        %v3636 = vunpack.c.l.b16 %v3430
        %v3637 = vunpack.c.h.b16 %v3430
        %v3638 = vunpack.c.l.b16 %v3431
        %v3639 = vunpack.c.h.b16 %v3431
        %v3640 = vpack.c.b16 %v3522, %v3520
        %v3641 = vpack.c.b16 %v3523, %v3521
        %v3642 = vpack.c.b16 %v3526, %v3524
        %v3643 = vpack.c.b16 %v3527, %v3525
        %v3644 = vpack.c.b16 %v3530, %v3528
        %v3645 = vpack.c.b16 %v3531, %v3529
        %v3646 = vpack.c.b16 %v3534, %v3532
        %v3647 = vpack.c.b16 %v3535, %v3533
        %v3648 = vpack.c.b16 %v3538, %v3536
        %v3649 = vpack.c.b16 %v3539, %v3537
        %v3650 = vpack.c.b16 %v3542, %v3540
        %v3651 = vpack.c.b16 %v3543, %v3541
        %v3652 = vpack.c.b16 %v3546, %v3544
        %v3653 = vpack.c.b16 %v3547, %v3545
        %v3654 = vpack.c.b16 %v3550, %v3548
        %v3655 = vpack.c.b16 %v3551, %v3549
        %v3656 = vpack.c.b16 %v3554, %v3552
        %v3657 = vpack.c.b16 %v3555, %v3553
        %v3658 = vpack.c.b16 %v3558, %v3556
        %v3659 = vpack.c.b16 %v3559, %v3557
        %v3660 = vpack.c.b16 %v3562, %v3560
        %v3661 = vpack.c.b16 %v3563, %v3561
        %v3662 = vpack.c.b16 %v3566, %v3564
        %v3663 = vpack.c.b16 %v3567, %v3565
        %v3664 = vpack.c.b16 %v3570, %v3568
        %v3665 = vpack.c.b16 %v3571, %v3569
        %v3666 = vpack.c.b16 %v3574, %v3572
        %v3667 = vpack.c.b16 %v3575, %v3573
        %v3668 = vpack.c.b16 %v3578, %v3576
        %v3669 = vpack.c.b16 %v3579, %v3577
        %v3670 = vpack.c.b16 %v3582, %v3580
        %v3671 = vpack.c.b16 %v3583, %v3581
        %v3672 = vpack.c.b16 %v3586, %v3584
        %v3673 = vpack.c.b16 %v3587, %v3585
        %v3674 = vpack.c.b16 %v3590, %v3588
        %v3675 = vpack.c.b16 %v3591, %v3589
        %v3676 = vpack.c.b16 %v3594, %v3592
        %v3677 = vpack.c.b16 %v3595, %v3593
        %v3678 = vpack.c.b16 %v3598, %v3596
        %v3679 = vpack.c.b16 %v3599, %v3597
        %v3680 = vpack.c.b16 %v3602, %v3600
        %v3681 = vpack.c.b16 %v3603, %v3601
        %v3682 = vpack.c.b16 %v3606, %v3604
        %v3683 = vpack.c.b16 %v3607, %v3605
        %v3684 = vpack.c.b16 %v3610, %v3608
        %v3685 = vpack.c.b16 %v3611, %v3609
        %v3686 = vpack.c.b16 %v3614, %v3612
        %v3687 = vpack.c.b16 %v3615, %v3613
        %v3688 = vpack.c.b16 %v3618, %v3616
        %v3689 = vpack.c.b16 %v3619, %v3617
        %v3690 = vpack.c.b16 %v3622, %v3620
        %v3691 = vpack.c.b16 %v3623, %v3621
        %v3692 = vpack.c.b16 %v3626, %v3624
        %v3693 = vpack.c.b16 %v3627, %v3625
        %v3694 = vpack.c.b16 %v3630, %v3628
        %v3695 = vpack.c.b16 %v3631, %v3629
        %v3696 = vpack.c.b16 %v3634, %v3632
        %v3697 = vpack.c.b16 %v3635, %v3633
        %v3698 = vpack.c.b16 %v3638, %v3636
        %v3699 = vpack.c.b16 %v3639, %v3637
        %v3761 = vsel %vm1345, %v3435, 0
        %v3764 = vsel %vm1345, %v3439, 0
        %v3767 = vsel %vm1345, %v3443, 0
        %v3770 = vsel %vm1345, %v3447, 0
        %3772 = vmatpush.bf16.msra.mxu0 %v3654
        %3773 = vmatpush.bf16.msra.mxu0 %v3652
        %3774 = vmatpush.bf16.msra.mxu0 %v3650
        %3775 = vmatpush.bf16.msra.mxu0 %v3648
        %3776 = vmatpush.bf16.msra.mxu0 %v3646
        %3777 = vmatpush.bf16.msra.mxu0 %v3644
        %3778 = vmatpush.bf16.msra.mxu0 %v3642
        %3779 = vmatpush.bf16.msra.mxu0 %v3640
        %3780 = vmatmul.bf16.gmra.mxu0 %v3432
        %v3781 = vpop.f32.mrf.mxu0
        %v3782 = vadd.f32 0.0, %v3781
        %v3783 = vpop.f32.mrf.mxu0
        %v3784 = vadd.f32 0.0, %v3783
        %3785 = vmatmul.bf16.gmra.mxu0 %v3436
        %v3786 = vpop.f32.mrf.mxu0
        %v3787 = vadd.f32 0.0, %v3786
        %v3788 = vpop.f32.mrf.mxu0
        %v3789 = vadd.f32 0.0, %v3788
        %3790 = vmatmul.bf16.gmra.mxu0 %v3440
        %v3791 = vpop.f32.mrf.mxu0
        %v3792 = vadd.f32 0.0, %v3791
        %v3793 = vpop.f32.mrf.mxu0
        %v3794 = vadd.f32 0.0, %v3793
        %3795 = vmatmul.bf16.gmra.mxu0 %v3444
        %v3796 = vpop.f32.mrf.mxu0
        %v3797 = vadd.f32 0.0, %v3796
        %v3798 = vpop.f32.mrf.mxu0
        %v3799 = vadd.f32 0.0, %v3798
        %3800 = vdwg.mxu0
        %3801 = vmatpush.bf16.msra.mxu0 %v3670
        %3802 = vmatpush.bf16.msra.mxu0 %v3668
        %3803 = vmatpush.bf16.msra.mxu0 %v3666
        %3804 = vmatpush.bf16.msra.mxu0 %v3664
        %3805 = vmatpush.bf16.msra.mxu0 %v3662
        %3806 = vmatpush.bf16.msra.mxu0 %v3660
        %3807 = vmatpush.bf16.msra.mxu0 %v3658
        %3808 = vmatpush.bf16.msra.mxu0 %v3656
        %3809 = vmatmul.bf16.gmra.mxu0 %v3433
        %v3810 = vpop.f32.mrf.mxu0
        %v3811 = vadd.f32 %v3782, %v3810
        %v3812 = vpop.f32.mrf.mxu0
        %v3813 = vadd.f32 %v3784, %v3812
        %3814 = vmatmul.bf16.gmra.mxu0 %v3437
        %v3815 = vpop.f32.mrf.mxu0
        %v3816 = vadd.f32 %v3787, %v3815
        %v3817 = vpop.f32.mrf.mxu0
        %v3818 = vadd.f32 %v3789, %v3817
        %3819 = vmatmul.bf16.gmra.mxu0 %v3441
        %v3820 = vpop.f32.mrf.mxu0
        %v3821 = vadd.f32 %v3792, %v3820
        %v3822 = vpop.f32.mrf.mxu0
        %v3823 = vadd.f32 %v3794, %v3822
        %3824 = vmatmul.bf16.gmra.mxu0 %v3445
        %v3825 = vpop.f32.mrf.mxu0
        %v3826 = vadd.f32 %v3797, %v3825
        %v3827 = vpop.f32.mrf.mxu0
        %v3828 = vadd.f32 %v3799, %v3827
        %3829 = vdwg.mxu0
        %3830 = vmatpush.bf16.msra.mxu0 %v3686
        %3831 = vmatpush.bf16.msra.mxu0 %v3684
        %3832 = vmatpush.bf16.msra.mxu0 %v3682
        %3833 = vmatpush.bf16.msra.mxu0 %v3680
        %3834 = vmatpush.bf16.msra.mxu0 %v3678
        %3835 = vmatpush.bf16.msra.mxu0 %v3676
        %3836 = vmatpush.bf16.msra.mxu0 %v3674
        %3837 = vmatpush.bf16.msra.mxu0 %v3672
        %3838 = vmatmul.bf16.gmra.mxu0 %v3434
        %v3839 = vpop.f32.mrf.mxu0
        %v3840 = vadd.f32 %v3811, %v3839
        %v3841 = vpop.f32.mrf.mxu0
        %v3842 = vadd.f32 %v3813, %v3841
        %3843 = vmatmul.bf16.gmra.mxu0 %v3438
        %v3844 = vpop.f32.mrf.mxu0
        %v3845 = vadd.f32 %v3816, %v3844
        %v3846 = vpop.f32.mrf.mxu0
        %v3847 = vadd.f32 %v3818, %v3846
        %3848 = vmatmul.bf16.gmra.mxu0 %v3442
        %v3849 = vpop.f32.mrf.mxu0
        %v3850 = vadd.f32 %v3821, %v3849
        %v3851 = vpop.f32.mrf.mxu0
        %v3852 = vadd.f32 %v3823, %v3851
        %3853 = vmatmul.bf16.gmra.mxu0 %v3446
        %v3854 = vpop.f32.mrf.mxu0
        %v3855 = vadd.f32 %v3826, %v3854
        %v3856 = vpop.f32.mrf.mxu0
        %v3857 = vadd.f32 %v3828, %v3856
        %3858 = vdwg.mxu0
        %3859 = vmatpush.bf16.msra.mxu0 0
        %3860 = vmatpush.bf16.msra.mxu0 0
        %3861 = vmatpush.bf16.msra.mxu0 %v3698
        %3862 = vmatpush.bf16.msra.mxu0 %v3696
        %3863 = vmatpush.bf16.msra.mxu0 %v3694
        %3864 = vmatpush.bf16.msra.mxu0 %v3692
        %3865 = vmatpush.bf16.msra.mxu0 %v3690
        %3866 = vmatpush.bf16.msra.mxu0 %v3688
        %3867 = vmatmul.bf16.gmra.mxu0 %v3761
        %v3868 = vpop.f32.mrf.mxu0
        %v3869 = vadd.f32 %v3840, %v3868
        %v3870 = vpop.f32.mrf.mxu0
        %v3871 = vadd.f32 %v3842, %v3870
        %3872 = vmatmul.bf16.gmra.mxu0 %v3764
        %v3873 = vpop.f32.mrf.mxu0
        %v3874 = vadd.f32 %v3845, %v3873
        %v3875 = vpop.f32.mrf.mxu0
        %v3876 = vadd.f32 %v3847, %v3875
        %3877 = vmatmul.bf16.gmra.mxu0 %v3767
        %v3878 = vpop.f32.mrf.mxu0
        %v3879 = vadd.f32 %v3850, %v3878
        %v3880 = vpop.f32.mrf.mxu0
        %v3881 = vadd.f32 %v3852, %v3880
        %3882 = vmatmul.bf16.gmra.mxu0 %v3770
        %v3883 = vpop.f32.mrf.mxu0
        %v3884 = vadd.f32 %v3855, %v3883
        %v3885 = vpop.f32.mrf.mxu0
        %v3886 = vadd.f32 %v3857, %v3885
        %3887 = vdwg.mxu0
        %3888 = vmatpush.bf16.msra.mxu0 %v3655
        %3889 = vmatpush.bf16.msra.mxu0 %v3653
        %3890 = vmatpush.bf16.msra.mxu0 %v3651
        %3891 = vmatpush.bf16.msra.mxu0 %v3649
        %3892 = vmatpush.bf16.msra.mxu0 %v3647
        %3893 = vmatpush.bf16.msra.mxu0 %v3645
        %3894 = vmatpush.bf16.msra.mxu0 %v3643
        %3895 = vmatpush.bf16.msra.mxu0 %v3641
        %3896 = vmatmul.bf16.gmra.mxu0 %v3432
        %v3897 = vpop.f32.mrf.mxu0
        %v3898 = vadd.f32 0.0, %v3897
        %v3899 = vpop.f32.mrf.mxu0
        %v3900 = vadd.f32 0.0, %v3899
        %3901 = vmatmul.bf16.gmra.mxu0 %v3436
        %v3902 = vpop.f32.mrf.mxu0
        %v3903 = vadd.f32 0.0, %v3902
        %v3904 = vpop.f32.mrf.mxu0
        %v3905 = vadd.f32 0.0, %v3904
        %3906 = vmatmul.bf16.gmra.mxu0 %v3440
        %v3907 = vpop.f32.mrf.mxu0
        %v3908 = vadd.f32 0.0, %v3907
        %v3909 = vpop.f32.mrf.mxu0
        %v3910 = vadd.f32 0.0, %v3909
        %3911 = vmatmul.bf16.gmra.mxu0 %v3444
        %v3912 = vpop.f32.mrf.mxu0
        %v3913 = vadd.f32 0.0, %v3912
        %v3914 = vpop.f32.mrf.mxu0
        %v3915 = vadd.f32 0.0, %v3914
        %3916 = vdwg.mxu0
        %3917 = vmatpush.bf16.msra.mxu0 %v3671
        %3918 = vmatpush.bf16.msra.mxu0 %v3669
        %3919 = vmatpush.bf16.msra.mxu0 %v3667
        %3920 = vmatpush.bf16.msra.mxu0 %v3665
        %3921 = vmatpush.bf16.msra.mxu0 %v3663
        %3922 = vmatpush.bf16.msra.mxu0 %v3661
        %3923 = vmatpush.bf16.msra.mxu0 %v3659
        %3924 = vmatpush.bf16.msra.mxu0 %v3657
        %3925 = vmatmul.bf16.gmra.mxu0 %v3433
        %v3926 = vpop.f32.mrf.mxu0
        %v3927 = vadd.f32 %v3898, %v3926
        %v3928 = vpop.f32.mrf.mxu0
        %v3929 = vadd.f32 %v3900, %v3928
        %3930 = vmatmul.bf16.gmra.mxu0 %v3437
        %v3931 = vpop.f32.mrf.mxu0
        %v3932 = vadd.f32 %v3903, %v3931
        %v3933 = vpop.f32.mrf.mxu0
        %v3934 = vadd.f32 %v3905, %v3933
        %3935 = vmatmul.bf16.gmra.mxu0 %v3441
        %v3936 = vpop.f32.mrf.mxu0
        %v3937 = vadd.f32 %v3908, %v3936
        %v3938 = vpop.f32.mrf.mxu0
        %v3939 = vadd.f32 %v3910, %v3938
        %3940 = vmatmul.bf16.gmra.mxu0 %v3445
        %v3941 = vpop.f32.mrf.mxu0
        %v3942 = vadd.f32 %v3913, %v3941
        %v3943 = vpop.f32.mrf.mxu0
        %v3944 = vadd.f32 %v3915, %v3943
        %3945 = vdwg.mxu0
        %3946 = vmatpush.bf16.msra.mxu0 %v3687
        %3947 = vmatpush.bf16.msra.mxu0 %v3685
        %3948 = vmatpush.bf16.msra.mxu0 %v3683
        %3949 = vmatpush.bf16.msra.mxu0 %v3681
        %3950 = vmatpush.bf16.msra.mxu0 %v3679
        %3951 = vmatpush.bf16.msra.mxu0 %v3677
        %3952 = vmatpush.bf16.msra.mxu0 %v3675
        %3953 = vmatpush.bf16.msra.mxu0 %v3673
        %3954 = vmatmul.bf16.gmra.mxu0 %v3434
        %v3955 = vpop.f32.mrf.mxu0
        %v3956 = vadd.f32 %v3927, %v3955
        %v3957 = vpop.f32.mrf.mxu0
        %v3958 = vadd.f32 %v3929, %v3957
        %3959 = vmatmul.bf16.gmra.mxu0 %v3438
        %v3960 = vpop.f32.mrf.mxu0
        %v3961 = vadd.f32 %v3932, %v3960
        %v3962 = vpop.f32.mrf.mxu0
        %v3963 = vadd.f32 %v3934, %v3962
        %3964 = vmatmul.bf16.gmra.mxu0 %v3442
        %v3965 = vpop.f32.mrf.mxu0
        %v3966 = vadd.f32 %v3937, %v3965
        %v3967 = vpop.f32.mrf.mxu0
        %v3968 = vadd.f32 %v3939, %v3967
        %3969 = vmatmul.bf16.gmra.mxu0 %v3446
        %v3970 = vpop.f32.mrf.mxu0
        %v3971 = vadd.f32 %v3942, %v3970
        %v3972 = vpop.f32.mrf.mxu0
        %v3973 = vadd.f32 %v3944, %v3972
        %3974 = vdwg.mxu0
        %3975 = vmatpush.bf16.msra.mxu0 0
        %3976 = vmatpush.bf16.msra.mxu0 0
        %3977 = vmatpush.bf16.msra.mxu0 %v3699
        %3978 = vmatpush.bf16.msra.mxu0 %v3697
        %3979 = vmatpush.bf16.msra.mxu0 %v3695
        %3980 = vmatpush.bf16.msra.mxu0 %v3693
        %3981 = vmatpush.bf16.msra.mxu0 %v3691
        %3982 = vmatpush.bf16.msra.mxu0 %v3689
        %3983 = vmatmul.bf16.gmra.mxu0 %v3761
        %v3984 = vpop.f32.mrf.mxu0
        %v3985 = vadd.f32 %v3956, %v3984
        %v3986 = vpop.f32.mrf.mxu0
        %v3987 = vadd.f32 %v3958, %v3986
        %3988 = vmatmul.bf16.gmra.mxu0 %v3764
        %v3989 = vpop.f32.mrf.mxu0
        %v3990 = vadd.f32 %v3961, %v3989
        %v3991 = vpop.f32.mrf.mxu0
        %v3992 = vadd.f32 %v3963, %v3991
        %3993 = vmatmul.bf16.gmra.mxu0 %v3767
        %v3994 = vpop.f32.mrf.mxu0
        %v3995 = vadd.f32 %v3966, %v3994
        %v3996 = vpop.f32.mrf.mxu0
        %v3997 = vadd.f32 %v3968, %v3996
        %3998 = vmatmul.bf16.gmra.mxu0 %v3770
        %v3999 = vpop.f32.mrf.mxu0
        %v4000 = vadd.f32 %v3971, %v3999
        %v4001 = vpop.f32.mrf.mxu0
        %v4002 = vadd.f32 %v3973, %v4001
        %4003 = vdwg.mxu0
        %v4004 = vadd.f32 %v3044, %v3869
        %v4005 = vadd.f32 %v3160, %v3985
        %v4006 = vadd.f32 %v3046, %v3871
        %v4007 = vadd.f32 %v3162, %v3987
        %v4008 = vadd.f32 %v3049, %v3874
        %v4009 = vadd.f32 %v3165, %v3990
        %v4010 = vadd.f32 %v3051, %v3876
        %v4011 = vadd.f32 %v3167, %v3992
        %v4012 = vadd.f32 %v3054, %v3879
        %v4013 = vadd.f32 %v3170, %v3995
        %v4014 = vadd.f32 %v3056, %v3881
        %v4015 = vadd.f32 %v3172, %v3997
        %v4016 = vadd.f32 %v3059, %v3884
        %v4017 = vadd.f32 %v3175, %v4000
        %v4018 = vadd.f32 %v3061, %v3886
        %v4019 = vadd.f32 %v3177, %v4002
        %v4020 = vld [vmem:[%s4] sm:$0xff]
        %v4021 = vld [vmem:[%s4 + $0x8] sm:$0xff]
        %v4022 = vadd.f32 %v4004, %v4020
        %v4023 = vadd.f32 %v4005, %v4021
        %v4024 = vadd.f32 %v4006, %v4020
        %v4025 = vadd.f32 %v4007, %v4021
        %v4026 = vadd.f32 %v4008, %v4020
        %v4027 = vadd.f32 %v4009, %v4021
        %v4028 = vadd.f32 %v4010, %v4020
        %v4029 = vadd.f32 %v4011, %v4021
        %v4030 = vadd.f32 %v4012, %v4020
        %v4031 = vadd.f32 %v4013, %v4021
        %v4032 = vadd.f32 %v4014, %v4020
        %v4033 = vadd.f32 %v4015, %v4021
        %v4034 = vadd.f32 %v4016, %v4020
        %v4035 = vadd.f32 %v4017, %v4021
        %v4036 = vadd.f32 %v4018, %v4020
        %v4037 = vadd.f32 %v4019, %v4021
        %v4038 = vmax.f32 %v4022, 0.0
        %v4039 = vmax.f32 %v4023, 0.0
        %v4040 = vmax.f32 %v4024, 0.0
        %v4041 = vmax.f32 %v4025, 0.0
        %v4042 = vmax.f32 %v4026, 0.0
        %v4043 = vmax.f32 %v4027, 0.0
        %v4044 = vmax.f32 %v4028, 0.0
        %v4045 = vmax.f32 %v4029, 0.0
        %v4046 = vmax.f32 %v4030, 0.0
        %v4047 = vmax.f32 %v4031, 0.0
        %v4048 = vmax.f32 %v4032, 0.0
        %v4049 = vmax.f32 %v4033, 0.0
        %v4050 = vmax.f32 %v4034, 0.0
        %v4051 = vmax.f32 %v4035, 0.0
        %v4052 = vmax.f32 %v4036, 0.0
        %v4053 = vmax.f32 %v4037, 0.0
        %4070 = vrot.lane.b32.xlu0 %v4038, 96
        %v4071 = vpop.permute.xlu0 %4070
        %4072 = vrot.lane.b32.xlu0 %v4039, 96
        %v4073 = vpop.permute.xlu0 %4072
        %4074 = vrot.lane.b32.xlu0 %v4040, 96
        %v4075 = vpop.permute.xlu0 %4074
        %4076 = vrot.lane.b32.xlu0 %v4041, 96
        %v4077 = vpop.permute.xlu0 %4076
        %4078 = vrot.lane.b32.xlu0 %v4042, 96
        %v4079 = vpop.permute.xlu0 %4078
        %4080 = vrot.lane.b32.xlu0 %v4043, 96
        %v4081 = vpop.permute.xlu0 %4080
        %4082 = vrot.lane.b32.xlu0 %v4044, 96
        %v4083 = vpop.permute.xlu0 %4082
        %4084 = vrot.lane.b32.xlu0 %v4045, 96
        %v4085 = vpop.permute.xlu0 %4084
        %4086 = vrot.lane.b32.xlu0 %v4046, 96
        %v4087 = vpop.permute.xlu0 %4086
        %4088 = vrot.lane.b32.xlu0 %v4047, 96
        %v4089 = vpop.permute.xlu0 %4088
        %4090 = vrot.lane.b32.xlu0 %v4048, 96
        %v4091 = vpop.permute.xlu0 %4090
        %4092 = vrot.lane.b32.xlu0 %v4049, 96
        %v4093 = vpop.permute.xlu0 %4092
        %4094 = vrot.lane.b32.xlu0 %v4050, 96
        %v4095 = vpop.permute.xlu0 %4094
        %4096 = vrot.lane.b32.xlu0 %v4051, 96
        %v4097 = vpop.permute.xlu0 %4096
        %4098 = vrot.lane.b32.xlu0 %v4052, 96
        %v4099 = vpop.permute.xlu0 %4098
        %4100 = vrot.lane.b32.xlu0 %v4053, 96
        %v4101 = vpop.permute.xlu0 %4100
        %v4102 = vsel %vm1345, %v4071, %v4073
        %v4103 = vsel %vm1345, %v4075, %v4077
        %v4104 = vsel %vm1345, %v4079, %v4081
        %v4105 = vsel %vm1345, %v4083, %v4085
        %v4106 = vsel %vm1345, %v4087, %v4089
        %v4107 = vsel %vm1345, %v4091, %v4093
        %v4108 = vsel %vm1345, %v4095, %v4097
        %v4109 = vsel %vm1345, %v4099, %v4101
        %v4126 = vmax.f32 %v4038, %v4102
        %v4127 = vmax.f32 %v4039, %v4073
        %v4128 = vmax.f32 %v4040, %v4103
        %v4129 = vmax.f32 %v4041, %v4077
        %v4130 = vmax.f32 %v4042, %v4104
        %v4131 = vmax.f32 %v4043, %v4081
        %v4132 = vmax.f32 %v4044, %v4105
        %v4133 = vmax.f32 %v4045, %v4085
        %v4134 = vmax.f32 %v4046, %v4106
        %v4135 = vmax.f32 %v4047, %v4089
        %v4136 = vmax.f32 %v4048, %v4107
        %v4137 = vmax.f32 %v4049, %v4093
        %v4138 = vmax.f32 %v4050, %v4108
        %v4139 = vmax.f32 %v4051, %v4097
        %v4140 = vmax.f32 %v4052, %v4109
        %v4141 = vmax.f32 %v4053, %v4101
        %v4142 = vpack.c.bf16 %v4127, %v4126
        %v4143 = vpack.c.bf16 %v4129, %v4128
        %v4144 = vpack.c.bf16 %v4131, %v4130
        %v4145 = vpack.c.bf16 %v4133, %v4132
        %v4146 = vpack.c.bf16 %v4135, %v4134
        %v4147 = vpack.c.bf16 %v4137, %v4136
        %v4148 = vpack.c.bf16 %v4139, %v4138
        %v4149 = vpack.c.bf16 %v4141, %v4140
        %v4158 = vunpack.c.l.b16 %v4142
        %v4159 = vunpack.c.h.b16 %v4142
        %v4160 = vunpack.c.l.b16 %v4143
        %v4161 = vunpack.c.h.b16 %v4143
        %v4162 = vunpack.c.l.b16 %v4144
        %v4163 = vunpack.c.h.b16 %v4144
        %v4164 = vunpack.c.l.b16 %v4145
        %v4165 = vunpack.c.h.b16 %v4145
        %v4166 = vunpack.c.l.b16 %v4146
        %v4167 = vunpack.c.h.b16 %v4146
        %v4168 = vunpack.c.l.b16 %v4147
        %v4169 = vunpack.c.h.b16 %v4147
        %v4170 = vunpack.c.l.b16 %v4148
        %v4171 = vunpack.c.h.b16 %v4148
        %v4172 = vunpack.c.l.b16 %v4149
        %v4173 = vunpack.c.h.b16 %v4149
        %v4174 = vpack.c.b16 %v4158, %v4158
        %v4175 = vpack.c.b16 %v4159, %v4159
        %v4176 = vpack.c.b16 %v4160, %v4160
        %v4177 = vpack.c.b16 %v4161, %v4161
        %v4178 = vpack.c.b16 %v4162, %v4162
        %v4179 = vpack.c.b16 %v4163, %v4163
        %v4180 = vpack.c.b16 %v4164, %v4164
        %v4181 = vpack.c.b16 %v4165, %v4165
        %v4182 = vpack.c.b16 %v4166, %v4166
        %v4183 = vpack.c.b16 %v4167, %v4167
        %v4184 = vpack.c.b16 %v4168, %v4168
        %v4185 = vpack.c.b16 %v4169, %v4169
        %v4186 = vpack.c.b16 %v4170, %v4170
        %v4187 = vpack.c.b16 %v4171, %v4171
        %v4188 = vpack.c.b16 %v4172, %v4172
        %v4189 = vpack.c.b16 %v4173, %v4173
        %v4191 = vshrl.u32 %v4174, 16
        %v4193 = vrot.slane %v4191, 7
        %v4194 = vshll.u32 %v4174, 16
        %v4196 = vor.u32 %v4193, %v4194
        %v4198 = vshrl.u32 %v4175, 16
        %v4200 = vrot.slane %v4198, 7
        %v4201 = vshll.u32 %v4175, 16
        %v4203 = vor.u32 %v4200, %v4201
        %v4205 = vshrl.u32 %v4176, 16
        %v4207 = vrot.slane %v4205, 7
        %v4208 = vshll.u32 %v4176, 16
        %v4210 = vor.u32 %v4207, %v4208
        %v4212 = vshrl.u32 %v4177, 16
        %v4214 = vrot.slane %v4212, 7
        %v4215 = vshll.u32 %v4177, 16
        %v4217 = vor.u32 %v4214, %v4215
        %v4219 = vshrl.u32 %v4178, 16
        %v4221 = vrot.slane %v4219, 7
        %v4222 = vshll.u32 %v4178, 16
        %v4224 = vor.u32 %v4221, %v4222
        %v4226 = vshrl.u32 %v4179, 16
        %v4228 = vrot.slane %v4226, 7
        %v4229 = vshll.u32 %v4179, 16
        %v4231 = vor.u32 %v4228, %v4229
        %v4233 = vshrl.u32 %v4180, 16
        %v4235 = vrot.slane %v4233, 7
        %v4236 = vshll.u32 %v4180, 16
        %v4238 = vor.u32 %v4235, %v4236
        %v4240 = vshrl.u32 %v4181, 16
        %v4242 = vrot.slane %v4240, 7
        %v4243 = vshll.u32 %v4181, 16
        %v4245 = vor.u32 %v4242, %v4243
        %v4247 = vshrl.u32 %v4182, 16
        %v4249 = vrot.slane %v4247, 7
        %v4250 = vshll.u32 %v4182, 16
        %v4252 = vor.u32 %v4249, %v4250
        %v4254 = vshrl.u32 %v4183, 16
        %v4256 = vrot.slane %v4254, 7
        %v4257 = vshll.u32 %v4183, 16
        %v4259 = vor.u32 %v4256, %v4257
        %v4261 = vshrl.u32 %v4184, 16
        %v4263 = vrot.slane %v4261, 7
        %v4264 = vshll.u32 %v4184, 16
        %v4266 = vor.u32 %v4263, %v4264
        %v4268 = vshrl.u32 %v4185, 16
        %v4270 = vrot.slane %v4268, 7
        %v4271 = vshll.u32 %v4185, 16
        %v4273 = vor.u32 %v4270, %v4271
        %v4275 = vshrl.u32 %v4186, 16
        %v4277 = vrot.slane %v4275, 7
        %v4278 = vshll.u32 %v4186, 16
        %v4280 = vor.u32 %v4277, %v4278
        %v4282 = vshrl.u32 %v4187, 16
        %v4284 = vrot.slane %v4282, 7
        %v4285 = vshll.u32 %v4187, 16
        %v4287 = vor.u32 %v4284, %v4285
        %v4289 = vshrl.u32 %v4188, 16
        %v4291 = vrot.slane %v4289, 7
        %v4292 = vshll.u32 %v4188, 16
        %v4294 = vor.u32 %v4291, %v4292
        %v4296 = vshrl.u32 %v4189, 16
        %v4298 = vrot.slane %v4296, 7
        %v4299 = vshll.u32 %v4189, 16
        %v4301 = vor.u32 %v4298, %v4299
        %v4318 = vsel %vm592, 0, %v4196
        %v4319 = vsel %vm592, 0, %v4203
        %v4320 = vsel %vm592, 0, %v4210
        %v4321 = vsel %vm592, 0, %v4217
        %v4322 = vsel %vm592, 0, %v4224
        %v4323 = vsel %vm592, 0, %v4231
        %v4324 = vsel %vm592, 0, %v4238
        %v4325 = vsel %vm592, 0, %v4245
        %v4326 = vsel %vm592, 0, %v4252
        %v4327 = vsel %vm592, 0, %v4259
        %v4328 = vsel %vm592, 0, %v4266
        %v4329 = vsel %vm592, 0, %v4273
        %v4330 = vsel %vm592, 0, %v4280
        %v4331 = vsel %vm592, 0, %v4287
        %v4332 = vsel %vm592, 0, %v4294
        %v4333 = vsel %vm592, 0, %v4301
        %v4334 = vsel %vm603, %v4318, 0
        %v4335 = vsel %vm603, %v4319, 0
        %v4336 = vsel %vm603, %v4320, 0
        %v4337 = vsel %vm603, %v4321, 0
        %v4338 = vsel %vm603, %v4322, 0
        %v4339 = vsel %vm603, %v4323, 0
        %v4340 = vsel %vm603, %v4324, 0
        %v4341 = vsel %vm603, %v4325, 0
        %v4342 = vsel %vm603, %v4326, 0
        %v4343 = vsel %vm603, %v4327, 0
        %v4344 = vsel %vm603, %v4328, 0
        %v4345 = vsel %vm603, %v4329, 0
        %v4346 = vsel %vm603, %v4330, 0
        %v4347 = vsel %vm603, %v4331, 0
        %v4348 = vsel %vm603, %v4332, 0
        %v4349 = vsel %vm603, %v4333, 0
        %v4366 = vunpack.c.l.b16 %v4334
        %v4367 = vunpack.c.l.b16 %v4335
        %v4368 = vunpack.c.l.b16 %v4336
        %v4369 = vunpack.c.l.b16 %v4337
        %v4370 = vunpack.c.l.b16 %v4338
        %v4371 = vunpack.c.l.b16 %v4339
        %v4372 = vunpack.c.l.b16 %v4340
        %v4373 = vunpack.c.l.b16 %v4341
        %v4374 = vunpack.c.l.b16 %v4342
        %v4375 = vunpack.c.l.b16 %v4343
        %v4376 = vunpack.c.l.b16 %v4344
        %v4377 = vunpack.c.l.b16 %v4345
        %v4378 = vunpack.c.l.b16 %v4346
        %v4379 = vunpack.c.l.b16 %v4347
        %v4380 = vunpack.c.l.b16 %v4348
        %v4381 = vunpack.c.l.b16 %v4349
        %v4382 = vld [vmem:[#allocation5] sm:$0xff]
        %v4383 = vld [vmem:[#allocation5 + $0x8] sm:$0xff]
        %v4384 = vld [vmem:[#allocation5 + $0x10] sm:$0xff]
        %v4385 = vld [vmem:[#allocation5 + $0x18] sm:$0xff]
        %v4386 = vld [vmem:[#allocation5 + $0x20] sm:$0xff]
        %v4387 = vld [vmem:[#allocation5 + $0x28] sm:$0xff]
        %v4388 = vld [vmem:[#allocation5 + $0x30] sm:$0xff]
        %v4389 = vld [vmem:[#allocation5 + $0x38] sm:$0xff]
        %v4390 = vld [vmem:[#allocation5 + $0x40] sm:$0xff]
        %v4391 = vld [vmem:[#allocation5 + $0x48] sm:$0xff]
        %v4392 = vld [vmem:[#allocation5 + $0x50] sm:$0xff]
        %v4393 = vld [vmem:[#allocation5 + $0x58] sm:$0xff]
        %v4394 = vld [vmem:[#allocation5 + $0x60] sm:$0xff]
        %v4395 = vld [vmem:[#allocation5 + $0x68] sm:$0xff]
        %v4396 = vld [vmem:[#allocation5 + $0x70] sm:$0xff]
        %v4397 = vld [vmem:[#allocation5 + $0x78] sm:$0xff]
        %v4398 = vld [vmem:[#allocation5 + $0x80] sm:$0xff]
        %v4399 = vld [vmem:[#allocation5 + $0x88] sm:$0xff]
        %v4400 = vld [vmem:[#allocation5 + $0x90] sm:$0xff]
        %v4401 = vld [vmem:[#allocation5 + $0x98] sm:$0xff]
        %v4402 = vld [vmem:[#allocation5 + $0xa0] sm:$0xff]
        %v4403 = vld [vmem:[#allocation5 + $0xa8] sm:$0xff]
        %v4404 = vld [vmem:[#allocation5 + $0xb0] sm:$0xff]
        %v4405 = vld [vmem:[#allocation5 + $0xb8] sm:$0xff]
        %v4406 = vld [vmem:[#allocation5 + $0xc0] sm:$0xff]
        %v4407 = vld [vmem:[#allocation5 + $0xc8] sm:$0xff]
        %v4408 = vld [vmem:[#allocation5 + $0xd0] sm:$0xff]
        %v4409 = vld [vmem:[#allocation5 + $0xd8] sm:$0xff]
        %s4410 = scalar_lea.vmem [#allocation5], 224
        %v4411 = vld [vmem:[%s4410] sm:$0xff]
        %v4412 = vld [vmem:[%s4410 + $0x8] sm:$0xff]
        %v4413 = vld [vmem:[%s4410 + $0x10] sm:$0xff]
        %v4414 = vld [vmem:[%s4410 + $0x18] sm:$0xff]
        %v4415 = vld [vmem:[%s4410 + $0x20] sm:$0xff]
        %v4416 = vld [vmem:[%s4410 + $0x28] sm:$0xff]
        %v4417 = vld [vmem:[%s4410 + $0x30] sm:$0xff]
        %v4418 = vld [vmem:[%s4410 + $0x38] sm:$0xff]
        %v4419 = vld [vmem:[%s4410 + $0x40] sm:$0xff]
        %v4420 = vld [vmem:[%s4410 + $0x48] sm:$0xff]
        %v4421 = vld [vmem:[%s4410 + $0x50] sm:$0xff]
        %v4422 = vld [vmem:[%s4410 + $0x58] sm:$0xff]
        %v4423 = vld [vmem:[%s4410 + $0x60] sm:$0xff]
        %v4424 = vld [vmem:[%s4410 + $0x68] sm:$0xff]
        %v4425 = vld [vmem:[%s4410 + $0x70] sm:$0xff]
        %v4426 = vld [vmem:[%s4410 + $0x78] sm:$0xff]
        %v4427 = vld [vmem:[%s4410 + $0x80] sm:$0xff]
        %v4428 = vld [vmem:[%s4410 + $0x88] sm:$0xff]
        %v4429 = vld [vmem:[%s4410 + $0x90] sm:$0xff]
        %v4430 = vld [vmem:[%s4410 + $0x98] sm:$0xff]
        %v4431 = vld [vmem:[%s4410 + $0xa0] sm:$0xff]
        %v4432 = vld [vmem:[%s4410 + $0xa8] sm:$0xff]
        %v4433 = vld [vmem:[%s4410 + $0xb0] sm:$0xff]
        %v4434 = vld [vmem:[%s4410 + $0xb8] sm:$0xff]
        %v4435 = vld [vmem:[%s4410 + $0xc0] sm:$0xff]
        %v4436 = vld [vmem:[%s4410 + $0xc8] sm:$0xff]
        %v4437 = vld [vmem:[%s4410 + $0xd0] sm:$0xff]
        %v4438 = vld [vmem:[%s4410 + $0xd8] sm:$0xff]
        %v4439 = vpack.c.b16 %v4160, %v4158
        %v4440 = vpack.c.b16 %v4161, %v4159
        %v4441 = vpack.c.b16 %v4164, %v4162
        %v4442 = vpack.c.b16 %v4165, %v4163
        %v4443 = vpack.c.b16 %v4168, %v4166
        %v4444 = vpack.c.b16 %v4169, %v4167
        %v4445 = vpack.c.b16 %v4172, %v4170
        %v4446 = vpack.c.b16 %v4173, %v4171
        %v4479 = vunpack.c.l.b16 %v4411
        %v4480 = vunpack.c.h.b16 %v4411
        %v4481 = vunpack.c.l.b16 %v4412
        %v4482 = vunpack.c.h.b16 %v4412
        %v4483 = vunpack.c.l.b16 %v4413
        %v4484 = vunpack.c.h.b16 %v4413
        %v4485 = vunpack.c.l.b16 %v4414
        %v4486 = vunpack.c.h.b16 %v4414
        %v4487 = vunpack.c.l.b16 %v4415
        %v4488 = vunpack.c.h.b16 %v4415
        %v4489 = vunpack.c.l.b16 %v4416
        %v4490 = vunpack.c.h.b16 %v4416
        %v4491 = vunpack.c.l.b16 %v4417
        %v4492 = vunpack.c.h.b16 %v4417
        %v4493 = vunpack.c.l.b16 %v4418
        %v4494 = vunpack.c.h.b16 %v4418
        %v4495 = vunpack.c.l.b16 %v4419
        %v4496 = vunpack.c.h.b16 %v4419
        %v4497 = vunpack.c.l.b16 %v4420
        %v4498 = vunpack.c.h.b16 %v4420
        %v4499 = vunpack.c.l.b16 %v4421
        %v4500 = vunpack.c.h.b16 %v4421
        %v4501 = vunpack.c.l.b16 %v4422
        %v4502 = vunpack.c.h.b16 %v4422
        %v4503 = vunpack.c.l.b16 %v4423
        %v4504 = vunpack.c.h.b16 %v4423
        %v4505 = vunpack.c.l.b16 %v4424
        %v4506 = vunpack.c.h.b16 %v4424
        %v4507 = vunpack.c.l.b16 %v4425
        %v4508 = vunpack.c.h.b16 %v4425
        %v4509 = vunpack.c.l.b16 %v4426
        %v4510 = vunpack.c.h.b16 %v4426
        %v4511 = vunpack.c.l.b16 %v4427
        %v4512 = vunpack.c.h.b16 %v4427
        %v4513 = vunpack.c.l.b16 %v4428
        %v4514 = vunpack.c.h.b16 %v4428
        %v4515 = vunpack.c.l.b16 %v4429
        %v4516 = vunpack.c.h.b16 %v4429
        %v4517 = vunpack.c.l.b16 %v4430
        %v4518 = vunpack.c.h.b16 %v4430
        %v4519 = vunpack.c.l.b16 %v4431
        %v4520 = vunpack.c.h.b16 %v4431
        %v4521 = vunpack.c.l.b16 %v4432
        %v4522 = vunpack.c.h.b16 %v4432
        %v4523 = vunpack.c.l.b16 %v4433
        %v4524 = vunpack.c.h.b16 %v4433
        %v4525 = vunpack.c.l.b16 %v4434
        %v4526 = vunpack.c.h.b16 %v4434
        %v4527 = vunpack.c.l.b16 %v4435
        %v4528 = vunpack.c.h.b16 %v4435
        %v4529 = vunpack.c.l.b16 %v4436
        %v4530 = vunpack.c.h.b16 %v4436
        %v4531 = vunpack.c.l.b16 %v4437
        %v4532 = vunpack.c.h.b16 %v4437
        %v4533 = vunpack.c.l.b16 %v4438
        %v4534 = vunpack.c.h.b16 %v4438
        %v4535 = vpack.c.b16 %v4481, %v4479
        %v4536 = vpack.c.b16 %v4482, %v4480
        %v4537 = vpack.c.b16 %v4485, %v4483
        %v4538 = vpack.c.b16 %v4486, %v4484
        %v4539 = vpack.c.b16 %v4489, %v4487
        %v4540 = vpack.c.b16 %v4490, %v4488
        %v4541 = vpack.c.b16 %v4493, %v4491
        %v4542 = vpack.c.b16 %v4494, %v4492
        %v4543 = vpack.c.b16 %v4497, %v4495
        %v4544 = vpack.c.b16 %v4498, %v4496
        %v4545 = vpack.c.b16 %v4501, %v4499
        %v4546 = vpack.c.b16 %v4502, %v4500
        %v4547 = vpack.c.b16 %v4505, %v4503
        %v4548 = vpack.c.b16 %v4506, %v4504
        %v4549 = vpack.c.b16 %v4509, %v4507
        %v4550 = vpack.c.b16 %v4510, %v4508
        %v4551 = vpack.c.b16 %v4513, %v4511
        %v4552 = vpack.c.b16 %v4514, %v4512
        %v4553 = vpack.c.b16 %v4517, %v4515
        %v4554 = vpack.c.b16 %v4518, %v4516
        %v4555 = vpack.c.b16 %v4521, %v4519
        %v4556 = vpack.c.b16 %v4522, %v4520
        %v4557 = vpack.c.b16 %v4525, %v4523
        %v4558 = vpack.c.b16 %v4526, %v4524
        %v4559 = vpack.c.b16 %v4529, %v4527
        %v4560 = vpack.c.b16 %v4530, %v4528
        %v4561 = vpack.c.b16 %v4533, %v4531
        %v4562 = vpack.c.b16 %v4534, %v4532
        %v4592 = vsel %vm1345, %v4440, 0
        %v4595 = vsel %vm1345, %v4442, 0
        %v4598 = vsel %vm1345, %v4444, 0
        %v4601 = vsel %vm1345, %v4446, 0
        %4603 = vmatpush.bf16.msra.mxu0 %v4549
        %4604 = vmatpush.bf16.msra.mxu0 %v4547
        %4605 = vmatpush.bf16.msra.mxu0 %v4545
        %4606 = vmatpush.bf16.msra.mxu0 %v4543
        %4607 = vmatpush.bf16.msra.mxu0 %v4541
        %4608 = vmatpush.bf16.msra.mxu0 %v4539
        %4609 = vmatpush.bf16.msra.mxu0 %v4537
        %4610 = vmatpush.bf16.msra.mxu0 %v4535
        %4611 = vmatmul.bf16.gmra.mxu0 %v4439
        %v4612 = vpop.f32.mrf.mxu0
        %v4613 = vadd.f32 0.0, %v4612
        %v4614 = vpop.f32.mrf.mxu0
        %v4615 = vadd.f32 0.0, %v4614
        %4616 = vmatmul.bf16.gmra.mxu0 %v4441
        %v4617 = vpop.f32.mrf.mxu0
        %v4618 = vadd.f32 0.0, %v4617
        %v4619 = vpop.f32.mrf.mxu0
        %v4620 = vadd.f32 0.0, %v4619
        %4621 = vmatmul.bf16.gmra.mxu0 %v4443
        %v4622 = vpop.f32.mrf.mxu0
        %v4623 = vadd.f32 0.0, %v4622
        %v4624 = vpop.f32.mrf.mxu0
        %v4625 = vadd.f32 0.0, %v4624
        %4626 = vmatmul.bf16.gmra.mxu0 %v4445
        %v4627 = vpop.f32.mrf.mxu0
        %v4628 = vadd.f32 0.0, %v4627
        %v4629 = vpop.f32.mrf.mxu0
        %v4630 = vadd.f32 0.0, %v4629
        %4631 = vdwg.mxu0
        %4632 = vmatpush.bf16.msra.mxu0 0
        %4633 = vmatpush.bf16.msra.mxu0 0
        %4634 = vmatpush.bf16.msra.mxu0 %v4561
        %4635 = vmatpush.bf16.msra.mxu0 %v4559
        %4636 = vmatpush.bf16.msra.mxu0 %v4557
        %4637 = vmatpush.bf16.msra.mxu0 %v4555
        %4638 = vmatpush.bf16.msra.mxu0 %v4553
        %4639 = vmatpush.bf16.msra.mxu0 %v4551
        %4640 = vmatmul.bf16.gmra.mxu0 %v4592
        %v4641 = vpop.f32.mrf.mxu0
        %v4642 = vadd.f32 %v4613, %v4641
        %v4643 = vpop.f32.mrf.mxu0
        %v4644 = vadd.f32 %v4615, %v4643
        %4645 = vmatmul.bf16.gmra.mxu0 %v4595
        %v4646 = vpop.f32.mrf.mxu0
        %v4647 = vadd.f32 %v4618, %v4646
        %v4648 = vpop.f32.mrf.mxu0
        %v4649 = vadd.f32 %v4620, %v4648
        %4650 = vmatmul.bf16.gmra.mxu0 %v4598
        %v4651 = vpop.f32.mrf.mxu0
        %v4652 = vadd.f32 %v4623, %v4651
        %v4653 = vpop.f32.mrf.mxu0
        %v4654 = vadd.f32 %v4625, %v4653
        %4655 = vmatmul.bf16.gmra.mxu0 %v4601
        %v4656 = vpop.f32.mrf.mxu0
        %v4657 = vadd.f32 %v4628, %v4656
        %v4658 = vpop.f32.mrf.mxu0
        %v4659 = vadd.f32 %v4630, %v4658
        %4660 = vdwg.mxu0
        %4661 = vmatpush.bf16.msra.mxu0 %v4550
        %4662 = vmatpush.bf16.msra.mxu0 %v4548
        %4663 = vmatpush.bf16.msra.mxu0 %v4546
        %4664 = vmatpush.bf16.msra.mxu0 %v4544
        %4665 = vmatpush.bf16.msra.mxu0 %v4542
        %4666 = vmatpush.bf16.msra.mxu0 %v4540
        %4667 = vmatpush.bf16.msra.mxu0 %v4538
        %4668 = vmatpush.bf16.msra.mxu0 %v4536
        %4669 = vmatmul.bf16.gmra.mxu0 %v4439
        %v4670 = vpop.f32.mrf.mxu0
        %v4671 = vadd.f32 0.0, %v4670
        %v4672 = vpop.f32.mrf.mxu0
        %v4673 = vadd.f32 0.0, %v4672
        %4674 = vmatmul.bf16.gmra.mxu0 %v4441
        %v4675 = vpop.f32.mrf.mxu0
        %v4676 = vadd.f32 0.0, %v4675
        %v4677 = vpop.f32.mrf.mxu0
        %v4678 = vadd.f32 0.0, %v4677
        %4679 = vmatmul.bf16.gmra.mxu0 %v4443
        %v4680 = vpop.f32.mrf.mxu0
        %v4681 = vadd.f32 0.0, %v4680
        %v4682 = vpop.f32.mrf.mxu0
        %v4683 = vadd.f32 0.0, %v4682
        %4684 = vmatmul.bf16.gmra.mxu0 %v4445
        %v4685 = vpop.f32.mrf.mxu0
        %v4686 = vadd.f32 0.0, %v4685
        %v4687 = vpop.f32.mrf.mxu0
        %v4688 = vadd.f32 0.0, %v4687
        %4689 = vdwg.mxu0
        %4690 = vmatpush.bf16.msra.mxu0 0
        %4691 = vmatpush.bf16.msra.mxu0 0
        %4692 = vmatpush.bf16.msra.mxu0 %v4562
        %4693 = vmatpush.bf16.msra.mxu0 %v4560
        %4694 = vmatpush.bf16.msra.mxu0 %v4558
        %4695 = vmatpush.bf16.msra.mxu0 %v4556
        %4696 = vmatpush.bf16.msra.mxu0 %v4554
        %4697 = vmatpush.bf16.msra.mxu0 %v4552
        %4698 = vmatmul.bf16.gmra.mxu0 %v4592
        %v4699 = vpop.f32.mrf.mxu0
        %v4700 = vadd.f32 %v4671, %v4699
        %v4701 = vpop.f32.mrf.mxu0
        %v4702 = vadd.f32 %v4673, %v4701
        %4703 = vmatmul.bf16.gmra.mxu0 %v4595
        %v4704 = vpop.f32.mrf.mxu0
        %v4705 = vadd.f32 %v4676, %v4704
        %v4706 = vpop.f32.mrf.mxu0
        %v4707 = vadd.f32 %v4678, %v4706
        %4708 = vmatmul.bf16.gmra.mxu0 %v4598
        %v4709 = vpop.f32.mrf.mxu0
        %v4710 = vadd.f32 %v4681, %v4709
        %v4711 = vpop.f32.mrf.mxu0
        %v4712 = vadd.f32 %v4683, %v4711
        %4713 = vmatmul.bf16.gmra.mxu0 %v4601
        %v4714 = vpop.f32.mrf.mxu0
        %v4715 = vadd.f32 %v4686, %v4714
        %v4716 = vpop.f32.mrf.mxu0
        %v4717 = vadd.f32 %v4688, %v4716
        %4718 = vdwg.mxu0
        %v4719 = vpack.c.b16 %v4368, %v4366
        %v4720 = vpack.c.b16 %v4369, %v4367
        %v4721 = vpack.c.b16 %v4372, %v4370
        %v4722 = vpack.c.b16 %v4373, %v4371
        %v4723 = vpack.c.b16 %v4376, %v4374
        %v4724 = vpack.c.b16 %v4377, %v4375
        %v4725 = vpack.c.b16 %v4380, %v4378
        %v4726 = vpack.c.b16 %v4381, %v4379
        %v4759 = vunpack.c.l.b16 %v4382
        %v4760 = vunpack.c.h.b16 %v4382
        %v4761 = vunpack.c.l.b16 %v4383
        %v4762 = vunpack.c.h.b16 %v4383
        %v4763 = vunpack.c.l.b16 %v4384
        %v4764 = vunpack.c.h.b16 %v4384
        %v4765 = vunpack.c.l.b16 %v4385
        %v4766 = vunpack.c.h.b16 %v4385
        %v4767 = vunpack.c.l.b16 %v4386
        %v4768 = vunpack.c.h.b16 %v4386
        %v4769 = vunpack.c.l.b16 %v4387
        %v4770 = vunpack.c.h.b16 %v4387
        %v4771 = vunpack.c.l.b16 %v4388
        %v4772 = vunpack.c.h.b16 %v4388
        %v4773 = vunpack.c.l.b16 %v4389
        %v4774 = vunpack.c.h.b16 %v4389
        %v4775 = vunpack.c.l.b16 %v4390
        %v4776 = vunpack.c.h.b16 %v4390
        %v4777 = vunpack.c.l.b16 %v4391
        %v4778 = vunpack.c.h.b16 %v4391
        %v4779 = vunpack.c.l.b16 %v4392
        %v4780 = vunpack.c.h.b16 %v4392
        %v4781 = vunpack.c.l.b16 %v4393
        %v4782 = vunpack.c.h.b16 %v4393
        %v4783 = vunpack.c.l.b16 %v4394
        %v4784 = vunpack.c.h.b16 %v4394
        %v4785 = vunpack.c.l.b16 %v4395
        %v4786 = vunpack.c.h.b16 %v4395
        %v4787 = vunpack.c.l.b16 %v4396
        %v4788 = vunpack.c.h.b16 %v4396
        %v4789 = vunpack.c.l.b16 %v4397
        %v4790 = vunpack.c.h.b16 %v4397
        %v4791 = vunpack.c.l.b16 %v4398
        %v4792 = vunpack.c.h.b16 %v4398
        %v4793 = vunpack.c.l.b16 %v4399
        %v4794 = vunpack.c.h.b16 %v4399
        %v4795 = vunpack.c.l.b16 %v4400
        %v4796 = vunpack.c.h.b16 %v4400
        %v4797 = vunpack.c.l.b16 %v4401
        %v4798 = vunpack.c.h.b16 %v4401
        %v4799 = vunpack.c.l.b16 %v4402
        %v4800 = vunpack.c.h.b16 %v4402
        %v4801 = vunpack.c.l.b16 %v4403
        %v4802 = vunpack.c.h.b16 %v4403
        %v4803 = vunpack.c.l.b16 %v4404
        %v4804 = vunpack.c.h.b16 %v4404
        %v4805 = vunpack.c.l.b16 %v4405
        %v4806 = vunpack.c.h.b16 %v4405
        %v4807 = vunpack.c.l.b16 %v4406
        %v4808 = vunpack.c.h.b16 %v4406
        %v4809 = vunpack.c.l.b16 %v4407
        %v4810 = vunpack.c.h.b16 %v4407
        %v4811 = vunpack.c.l.b16 %v4408
        %v4812 = vunpack.c.h.b16 %v4408
        %v4813 = vunpack.c.l.b16 %v4409
        %v4814 = vunpack.c.h.b16 %v4409
        %v4815 = vpack.c.b16 %v4761, %v4759
        %v4816 = vpack.c.b16 %v4762, %v4760
        %v4817 = vpack.c.b16 %v4765, %v4763
        %v4818 = vpack.c.b16 %v4766, %v4764
        %v4819 = vpack.c.b16 %v4769, %v4767
        %v4820 = vpack.c.b16 %v4770, %v4768
        %v4821 = vpack.c.b16 %v4773, %v4771
        %v4822 = vpack.c.b16 %v4774, %v4772
        %v4823 = vpack.c.b16 %v4777, %v4775
        %v4824 = vpack.c.b16 %v4778, %v4776
        %v4825 = vpack.c.b16 %v4781, %v4779
        %v4826 = vpack.c.b16 %v4782, %v4780
        %v4827 = vpack.c.b16 %v4785, %v4783
        %v4828 = vpack.c.b16 %v4786, %v4784
        %v4829 = vpack.c.b16 %v4789, %v4787
        %v4830 = vpack.c.b16 %v4790, %v4788
        %v4831 = vpack.c.b16 %v4793, %v4791
        %v4832 = vpack.c.b16 %v4794, %v4792
        %v4833 = vpack.c.b16 %v4797, %v4795
        %v4834 = vpack.c.b16 %v4798, %v4796
        %v4835 = vpack.c.b16 %v4801, %v4799
        %v4836 = vpack.c.b16 %v4802, %v4800
        %v4837 = vpack.c.b16 %v4805, %v4803
        %v4838 = vpack.c.b16 %v4806, %v4804
        %v4839 = vpack.c.b16 %v4809, %v4807
        %v4840 = vpack.c.b16 %v4810, %v4808
        %v4841 = vpack.c.b16 %v4813, %v4811
        %v4842 = vpack.c.b16 %v4814, %v4812
        %v4872 = vsel %vm1345, %v4720, 0
        %v4875 = vsel %vm1345, %v4722, 0
        %v4878 = vsel %vm1345, %v4724, 0
        %v4881 = vsel %vm1345, %v4726, 0
        %4883 = vmatpush.bf16.msra.mxu0 %v4829
        %4884 = vmatpush.bf16.msra.mxu0 %v4827
        %4885 = vmatpush.bf16.msra.mxu0 %v4825
        %4886 = vmatpush.bf16.msra.mxu0 %v4823
        %4887 = vmatpush.bf16.msra.mxu0 %v4821
        %4888 = vmatpush.bf16.msra.mxu0 %v4819
        %4889 = vmatpush.bf16.msra.mxu0 %v4817
        %4890 = vmatpush.bf16.msra.mxu0 %v4815
        %4891 = vmatmul.bf16.gmra.mxu0 %v4719
        %v4892 = vpop.f32.mrf.mxu0
        %v4893 = vadd.f32 %v4642, %v4892
        %v4894 = vpop.f32.mrf.mxu0
        %v4895 = vadd.f32 %v4644, %v4894
        %4896 = vmatmul.bf16.gmra.mxu0 %v4721
        %v4897 = vpop.f32.mrf.mxu0
        %v4898 = vadd.f32 %v4647, %v4897
        %v4899 = vpop.f32.mrf.mxu0
        %v4900 = vadd.f32 %v4649, %v4899
        %4901 = vmatmul.bf16.gmra.mxu0 %v4723
        %v4902 = vpop.f32.mrf.mxu0
        %v4903 = vadd.f32 %v4652, %v4902
        %v4904 = vpop.f32.mrf.mxu0
        %v4905 = vadd.f32 %v4654, %v4904
        %4906 = vmatmul.bf16.gmra.mxu0 %v4725
        %v4907 = vpop.f32.mrf.mxu0
        %v4908 = vadd.f32 %v4657, %v4907
        %v4909 = vpop.f32.mrf.mxu0
        %v4910 = vadd.f32 %v4659, %v4909
        %4911 = vdwg.mxu0
        %4912 = vmatpush.bf16.msra.mxu0 0
        %4913 = vmatpush.bf16.msra.mxu0 0
        %4914 = vmatpush.bf16.msra.mxu0 %v4841
        %4915 = vmatpush.bf16.msra.mxu0 %v4839
        %4916 = vmatpush.bf16.msra.mxu0 %v4837
        %4917 = vmatpush.bf16.msra.mxu0 %v4835
        %4918 = vmatpush.bf16.msra.mxu0 %v4833
        %4919 = vmatpush.bf16.msra.mxu0 %v4831
        %4920 = vmatmul.bf16.gmra.mxu0 %v4872
        %v4921 = vpop.f32.mrf.mxu0
        %v4922 = vadd.f32 %v4893, %v4921
        %v4923 = vpop.f32.mrf.mxu0
        %v4924 = vadd.f32 %v4895, %v4923
        %4925 = vmatmul.bf16.gmra.mxu0 %v4875
        %v4926 = vpop.f32.mrf.mxu0
        %v4927 = vadd.f32 %v4898, %v4926
        %v4928 = vpop.f32.mrf.mxu0
        %v4929 = vadd.f32 %v4900, %v4928
        %4930 = vmatmul.bf16.gmra.mxu0 %v4878
        %v4931 = vpop.f32.mrf.mxu0
        %v4932 = vadd.f32 %v4903, %v4931
        %v4933 = vpop.f32.mrf.mxu0
        %v4934 = vadd.f32 %v4905, %v4933
        %4935 = vmatmul.bf16.gmra.mxu0 %v4881
        %v4936 = vpop.f32.mrf.mxu0
        %v4937 = vadd.f32 %v4908, %v4936
        %v4938 = vpop.f32.mrf.mxu0
        %v4939 = vadd.f32 %v4910, %v4938
        %4940 = vdwg.mxu0
        %4941 = vmatpush.bf16.msra.mxu0 %v4830
        %4942 = vmatpush.bf16.msra.mxu0 %v4828
        %4943 = vmatpush.bf16.msra.mxu0 %v4826
        %4944 = vmatpush.bf16.msra.mxu0 %v4824
        %4945 = vmatpush.bf16.msra.mxu0 %v4822
        %4946 = vmatpush.bf16.msra.mxu0 %v4820
        %4947 = vmatpush.bf16.msra.mxu0 %v4818
        %4948 = vmatpush.bf16.msra.mxu0 %v4816
        %4949 = vmatmul.bf16.gmra.mxu0 %v4719
        %v4950 = vpop.f32.mrf.mxu0
        %v4951 = vadd.f32 %v4700, %v4950
        %v4952 = vpop.f32.mrf.mxu0
        %v4953 = vadd.f32 %v4702, %v4952
        %4954 = vmatmul.bf16.gmra.mxu0 %v4721
        %v4955 = vpop.f32.mrf.mxu0
        %v4956 = vadd.f32 %v4705, %v4955
        %v4957 = vpop.f32.mrf.mxu0
        %v4958 = vadd.f32 %v4707, %v4957
        %4959 = vmatmul.bf16.gmra.mxu0 %v4723
        %v4960 = vpop.f32.mrf.mxu0
        %v4961 = vadd.f32 %v4710, %v4960
        %v4962 = vpop.f32.mrf.mxu0
        %v4963 = vadd.f32 %v4712, %v4962
        %4964 = vmatmul.bf16.gmra.mxu0 %v4725
        %v4965 = vpop.f32.mrf.mxu0
        %v4966 = vadd.f32 %v4715, %v4965
        %v4967 = vpop.f32.mrf.mxu0
        %v4968 = vadd.f32 %v4717, %v4967
        %4969 = vdwg.mxu0
        %4970 = vmatpush.bf16.msra.mxu0 0
        %4971 = vmatpush.bf16.msra.mxu0 0
        %4972 = vmatpush.bf16.msra.mxu0 %v4842
        %4973 = vmatpush.bf16.msra.mxu0 %v4840
        %4974 = vmatpush.bf16.msra.mxu0 %v4838
        %4975 = vmatpush.bf16.msra.mxu0 %v4836
        %4976 = vmatpush.bf16.msra.mxu0 %v4834
        %4977 = vmatpush.bf16.msra.mxu0 %v4832
        %4978 = vmatmul.bf16.gmra.mxu0 %v4872
        %v4979 = vpop.f32.mrf.mxu0
        %v4980 = vadd.f32 %v4951, %v4979
        %v4981 = vpop.f32.mrf.mxu0
        %v4982 = vadd.f32 %v4953, %v4981
        %4983 = vmatmul.bf16.gmra.mxu0 %v4875
        %v4984 = vpop.f32.mrf.mxu0
        %v4985 = vadd.f32 %v4956, %v4984
        %v4986 = vpop.f32.mrf.mxu0
        %v4987 = vadd.f32 %v4958, %v4986
        %4988 = vmatmul.bf16.gmra.mxu0 %v4878
        %v4989 = vpop.f32.mrf.mxu0
        %v4990 = vadd.f32 %v4961, %v4989
        %v4991 = vpop.f32.mrf.mxu0
        %v4992 = vadd.f32 %v4963, %v4991
        %4993 = vmatmul.bf16.gmra.mxu0 %v4881
        %v4994 = vpop.f32.mrf.mxu0
        %v4995 = vadd.f32 %v4966, %v4994
        %v4996 = vpop.f32.mrf.mxu0
        %v4997 = vadd.f32 %v4968, %v4996
        %4998 = vdwg.mxu0
        %v4999 = vrot.slane %v4194, 1
        %v5000 = vor.u32 %v4191, %v4999
        %v5001 = vrot.slane %v4201, 1
        %v5002 = vor.u32 %v4198, %v5001
        %v5003 = vrot.slane %v4208, 1
        %v5004 = vor.u32 %v4205, %v5003
        %v5005 = vrot.slane %v4215, 1
        %v5006 = vor.u32 %v4212, %v5005
        %v5007 = vrot.slane %v4222, 1
        %v5008 = vor.u32 %v4219, %v5007
        %v5009 = vrot.slane %v4229, 1
        %v5010 = vor.u32 %v4226, %v5009
        %v5011 = vrot.slane %v4236, 1
        %v5012 = vor.u32 %v4233, %v5011
        %v5013 = vrot.slane %v4243, 1
        %v5014 = vor.u32 %v4240, %v5013
        %v5015 = vrot.slane %v4250, 1
        %v5016 = vor.u32 %v4247, %v5015
        %v5017 = vrot.slane %v4257, 1
        %v5018 = vor.u32 %v4254, %v5017
        %v5019 = vrot.slane %v4264, 1
        %v5020 = vor.u32 %v4261, %v5019
        %v5021 = vrot.slane %v4271, 1
        %v5022 = vor.u32 %v4268, %v5021
        %v5023 = vrot.slane %v4278, 1
        %v5024 = vor.u32 %v4275, %v5023
        %v5025 = vrot.slane %v4285, 1
        %v5026 = vor.u32 %v4282, %v5025
        %v5027 = vrot.slane %v4292, 1
        %v5028 = vor.u32 %v4289, %v5027
        %v5029 = vrot.slane %v4299, 1
        %v5030 = vor.u32 %v4296, %v5029
        %v5032 = vsel %vm958, %v5000, 0
        %v5034 = vsel %vm958, %v5002, 0
        %v5036 = vsel %vm958, %v5004, 0
        %v5038 = vsel %vm958, %v5006, 0
        %v5040 = vsel %vm958, %v5008, 0
        %v5042 = vsel %vm958, %v5010, 0
        %v5044 = vsel %vm958, %v5012, 0
        %v5046 = vsel %vm958, %v5014, 0
        %v5048 = vsel %vm958, %v5016, 0
        %v5050 = vsel %vm958, %v5018, 0
        %v5052 = vsel %vm958, %v5020, 0
        %v5054 = vsel %vm958, %v5022, 0
        %v5056 = vsel %vm958, %v5024, 0
        %v5058 = vsel %vm958, %v5026, 0
        %v5060 = vsel %vm958, %v5028, 0
        %v5062 = vsel %vm958, %v5030, 0
        %v5079 = vunpack.c.l.b16 %v5032
        %v5080 = vunpack.c.l.b16 %v5034
        %v5081 = vunpack.c.l.b16 %v5036
        %v5082 = vunpack.c.l.b16 %v5038
        %v5083 = vunpack.c.l.b16 %v5040
        %v5084 = vunpack.c.l.b16 %v5042
        %v5085 = vunpack.c.l.b16 %v5044
        %v5086 = vunpack.c.l.b16 %v5046
        %v5087 = vunpack.c.l.b16 %v5048
        %v5088 = vunpack.c.l.b16 %v5050
        %v5089 = vunpack.c.l.b16 %v5052
        %v5090 = vunpack.c.l.b16 %v5054
        %v5091 = vunpack.c.l.b16 %v5056
        %v5092 = vunpack.c.l.b16 %v5058
        %v5093 = vunpack.c.l.b16 %v5060
        %v5094 = vunpack.c.l.b16 %v5062
        %s5095 = scalar_lea.vmem [#allocation5], 448
        %v5096 = vld [vmem:[%s5095] sm:$0xff]
        %v5097 = vld [vmem:[%s5095 + $0x8] sm:$0xff]
        %v5098 = vld [vmem:[%s5095 + $0x10] sm:$0xff]
        %v5099 = vld [vmem:[%s5095 + $0x18] sm:$0xff]
        %v5100 = vld [vmem:[%s5095 + $0x20] sm:$0xff]
        %v5101 = vld [vmem:[%s5095 + $0x28] sm:$0xff]
        %v5102 = vld [vmem:[%s5095 + $0x30] sm:$0xff]
        %v5103 = vld [vmem:[%s5095 + $0x38] sm:$0xff]
        %v5104 = vld [vmem:[%s5095 + $0x40] sm:$0xff]
        %v5105 = vld [vmem:[%s5095 + $0x48] sm:$0xff]
        %v5106 = vld [vmem:[%s5095 + $0x50] sm:$0xff]
        %v5107 = vld [vmem:[%s5095 + $0x58] sm:$0xff]
        %v5108 = vld [vmem:[%s5095 + $0x60] sm:$0xff]
        %v5109 = vld [vmem:[%s5095 + $0x68] sm:$0xff]
        %v5110 = vld [vmem:[%s5095 + $0x70] sm:$0xff]
        %v5111 = vld [vmem:[%s5095 + $0x78] sm:$0xff]
        %v5112 = vld [vmem:[%s5095 + $0x80] sm:$0xff]
        %v5113 = vld [vmem:[%s5095 + $0x88] sm:$0xff]
        %v5114 = vld [vmem:[%s5095 + $0x90] sm:$0xff]
        %v5115 = vld [vmem:[%s5095 + $0x98] sm:$0xff]
        %v5116 = vld [vmem:[%s5095 + $0xa0] sm:$0xff]
        %v5117 = vld [vmem:[%s5095 + $0xa8] sm:$0xff]
        %v5118 = vld [vmem:[%s5095 + $0xb0] sm:$0xff]
        %v5119 = vld [vmem:[%s5095 + $0xb8] sm:$0xff]
        %v5120 = vld [vmem:[%s5095 + $0xc0] sm:$0xff]
        %v5121 = vld [vmem:[%s5095 + $0xc8] sm:$0xff]
        %v5122 = vld [vmem:[%s5095 + $0xd0] sm:$0xff]
        %v5123 = vld [vmem:[%s5095 + $0xd8] sm:$0xff]
        %v5124 = vpack.c.b16 %v5081, %v5079
        %v5125 = vpack.c.b16 %v5082, %v5080
        %v5126 = vpack.c.b16 %v5085, %v5083
        %v5127 = vpack.c.b16 %v5086, %v5084
        %v5128 = vpack.c.b16 %v5089, %v5087
        %v5129 = vpack.c.b16 %v5090, %v5088
        %v5130 = vpack.c.b16 %v5093, %v5091
        %v5131 = vpack.c.b16 %v5094, %v5092
        %v5164 = vunpack.c.l.b16 %v5096
        %v5165 = vunpack.c.h.b16 %v5096
        %v5166 = vunpack.c.l.b16 %v5097
        %v5167 = vunpack.c.h.b16 %v5097
        %v5168 = vunpack.c.l.b16 %v5098
        %v5169 = vunpack.c.h.b16 %v5098
        %v5170 = vunpack.c.l.b16 %v5099
        %v5171 = vunpack.c.h.b16 %v5099
        %v5172 = vunpack.c.l.b16 %v5100
        %v5173 = vunpack.c.h.b16 %v5100
        %v5174 = vunpack.c.l.b16 %v5101
        %v5175 = vunpack.c.h.b16 %v5101
        %v5176 = vunpack.c.l.b16 %v5102
        %v5177 = vunpack.c.h.b16 %v5102
        %v5178 = vunpack.c.l.b16 %v5103
        %v5179 = vunpack.c.h.b16 %v5103
        %v5180 = vunpack.c.l.b16 %v5104
        %v5181 = vunpack.c.h.b16 %v5104
        %v5182 = vunpack.c.l.b16 %v5105
        %v5183 = vunpack.c.h.b16 %v5105
        %v5184 = vunpack.c.l.b16 %v5106
        %v5185 = vunpack.c.h.b16 %v5106
        %v5186 = vunpack.c.l.b16 %v5107
        %v5187 = vunpack.c.h.b16 %v5107
        %v5188 = vunpack.c.l.b16 %v5108
        %v5189 = vunpack.c.h.b16 %v5108
        %v5190 = vunpack.c.l.b16 %v5109
        %v5191 = vunpack.c.h.b16 %v5109
        %v5192 = vunpack.c.l.b16 %v5110
        %v5193 = vunpack.c.h.b16 %v5110
        %v5194 = vunpack.c.l.b16 %v5111
        %v5195 = vunpack.c.h.b16 %v5111
        %v5196 = vunpack.c.l.b16 %v5112
        %v5197 = vunpack.c.h.b16 %v5112
        %v5198 = vunpack.c.l.b16 %v5113
        %v5199 = vunpack.c.h.b16 %v5113
        %v5200 = vunpack.c.l.b16 %v5114
        %v5201 = vunpack.c.h.b16 %v5114
        %v5202 = vunpack.c.l.b16 %v5115
        %v5203 = vunpack.c.h.b16 %v5115
        %v5204 = vunpack.c.l.b16 %v5116
        %v5205 = vunpack.c.h.b16 %v5116
        %v5206 = vunpack.c.l.b16 %v5117
        %v5207 = vunpack.c.h.b16 %v5117
        %v5208 = vunpack.c.l.b16 %v5118
        %v5209 = vunpack.c.h.b16 %v5118
        %v5210 = vunpack.c.l.b16 %v5119
        %v5211 = vunpack.c.h.b16 %v5119
        %v5212 = vunpack.c.l.b16 %v5120
        %v5213 = vunpack.c.h.b16 %v5120
        %v5214 = vunpack.c.l.b16 %v5121
        %v5215 = vunpack.c.h.b16 %v5121
        %v5216 = vunpack.c.l.b16 %v5122
        %v5217 = vunpack.c.h.b16 %v5122
        %v5218 = vunpack.c.l.b16 %v5123
        %v5219 = vunpack.c.h.b16 %v5123
        %v5220 = vpack.c.b16 %v5166, %v5164
        %v5221 = vpack.c.b16 %v5167, %v5165
        %v5222 = vpack.c.b16 %v5170, %v5168
        %v5223 = vpack.c.b16 %v5171, %v5169
        %v5224 = vpack.c.b16 %v5174, %v5172
        %v5225 = vpack.c.b16 %v5175, %v5173
        %v5226 = vpack.c.b16 %v5178, %v5176
        %v5227 = vpack.c.b16 %v5179, %v5177
        %v5228 = vpack.c.b16 %v5182, %v5180
        %v5229 = vpack.c.b16 %v5183, %v5181
        %v5230 = vpack.c.b16 %v5186, %v5184
        %v5231 = vpack.c.b16 %v5187, %v5185
        %v5232 = vpack.c.b16 %v5190, %v5188
        %v5233 = vpack.c.b16 %v5191, %v5189
        %v5234 = vpack.c.b16 %v5194, %v5192
        %v5235 = vpack.c.b16 %v5195, %v5193
        %v5236 = vpack.c.b16 %v5198, %v5196
        %v5237 = vpack.c.b16 %v5199, %v5197
        %v5238 = vpack.c.b16 %v5202, %v5200
        %v5239 = vpack.c.b16 %v5203, %v5201
        %v5240 = vpack.c.b16 %v5206, %v5204
        %v5241 = vpack.c.b16 %v5207, %v5205
        %v5242 = vpack.c.b16 %v5210, %v5208
        %v5243 = vpack.c.b16 %v5211, %v5209
        %v5244 = vpack.c.b16 %v5214, %v5212
        %v5245 = vpack.c.b16 %v5215, %v5213
        %v5246 = vpack.c.b16 %v5218, %v5216
        %v5247 = vpack.c.b16 %v5219, %v5217
        %v5277 = vsel %vm1345, %v5125, 0
        %v5280 = vsel %vm1345, %v5127, 0
        %v5283 = vsel %vm1345, %v5129, 0
        %v5286 = vsel %vm1345, %v5131, 0
        %5288 = vmatpush.bf16.msra.mxu0 %v5234
        %5289 = vmatpush.bf16.msra.mxu0 %v5232
        %5290 = vmatpush.bf16.msra.mxu0 %v5230
        %5291 = vmatpush.bf16.msra.mxu0 %v5228
        %5292 = vmatpush.bf16.msra.mxu0 %v5226
        %5293 = vmatpush.bf16.msra.mxu0 %v5224
        %5294 = vmatpush.bf16.msra.mxu0 %v5222
        %5295 = vmatpush.bf16.msra.mxu0 %v5220
        %5296 = vmatmul.bf16.gmra.mxu0 %v5124
        %v5297 = vpop.f32.mrf.mxu0
        %v5298 = vadd.f32 0.0, %v5297
        %v5299 = vpop.f32.mrf.mxu0
        %v5300 = vadd.f32 0.0, %v5299
        %5301 = vmatmul.bf16.gmra.mxu0 %v5126
        %v5302 = vpop.f32.mrf.mxu0
        %v5303 = vadd.f32 0.0, %v5302
        %v5304 = vpop.f32.mrf.mxu0
        %v5305 = vadd.f32 0.0, %v5304
        %5306 = vmatmul.bf16.gmra.mxu0 %v5128
        %v5307 = vpop.f32.mrf.mxu0
        %v5308 = vadd.f32 0.0, %v5307
        %v5309 = vpop.f32.mrf.mxu0
        %v5310 = vadd.f32 0.0, %v5309
        %5311 = vmatmul.bf16.gmra.mxu0 %v5130
        %v5312 = vpop.f32.mrf.mxu0
        %v5313 = vadd.f32 0.0, %v5312
        %v5314 = vpop.f32.mrf.mxu0
        %v5315 = vadd.f32 0.0, %v5314
        %5316 = vdwg.mxu0
        %5317 = vmatpush.bf16.msra.mxu0 0
        %5318 = vmatpush.bf16.msra.mxu0 0
        %5319 = vmatpush.bf16.msra.mxu0 %v5246
        %5320 = vmatpush.bf16.msra.mxu0 %v5244
        %5321 = vmatpush.bf16.msra.mxu0 %v5242
        %5322 = vmatpush.bf16.msra.mxu0 %v5240
        %5323 = vmatpush.bf16.msra.mxu0 %v5238
        %5324 = vmatpush.bf16.msra.mxu0 %v5236
        %5325 = vmatmul.bf16.gmra.mxu0 %v5277
        %v5326 = vpop.f32.mrf.mxu0
        %v5327 = vadd.f32 %v5298, %v5326
        %v5328 = vpop.f32.mrf.mxu0
        %v5329 = vadd.f32 %v5300, %v5328
        %5330 = vmatmul.bf16.gmra.mxu0 %v5280
        %v5331 = vpop.f32.mrf.mxu0
        %v5332 = vadd.f32 %v5303, %v5331
        %v5333 = vpop.f32.mrf.mxu0
        %v5334 = vadd.f32 %v5305, %v5333
        %5335 = vmatmul.bf16.gmra.mxu0 %v5283
        %v5336 = vpop.f32.mrf.mxu0
        %v5337 = vadd.f32 %v5308, %v5336
        %v5338 = vpop.f32.mrf.mxu0
        %v5339 = vadd.f32 %v5310, %v5338
        %5340 = vmatmul.bf16.gmra.mxu0 %v5286
        %v5341 = vpop.f32.mrf.mxu0
        %v5342 = vadd.f32 %v5313, %v5341
        %v5343 = vpop.f32.mrf.mxu0
        %v5344 = vadd.f32 %v5315, %v5343
        %5345 = vdwg.mxu0
        %5346 = vmatpush.bf16.msra.mxu0 %v5235
        %5347 = vmatpush.bf16.msra.mxu0 %v5233
        %5348 = vmatpush.bf16.msra.mxu0 %v5231
        %5349 = vmatpush.bf16.msra.mxu0 %v5229
        %5350 = vmatpush.bf16.msra.mxu0 %v5227
        %5351 = vmatpush.bf16.msra.mxu0 %v5225
        %5352 = vmatpush.bf16.msra.mxu0 %v5223
        %5353 = vmatpush.bf16.msra.mxu0 %v5221
        %5354 = vmatmul.bf16.gmra.mxu0 %v5124
        %v5355 = vpop.f32.mrf.mxu0
        %v5356 = vadd.f32 0.0, %v5355
        %v5357 = vpop.f32.mrf.mxu0
        %v5358 = vadd.f32 0.0, %v5357
        %5359 = vmatmul.bf16.gmra.mxu0 %v5126
        %v5360 = vpop.f32.mrf.mxu0
        %v5361 = vadd.f32 0.0, %v5360
        %v5362 = vpop.f32.mrf.mxu0
        %v5363 = vadd.f32 0.0, %v5362
        %5364 = vmatmul.bf16.gmra.mxu0 %v5128
        %v5365 = vpop.f32.mrf.mxu0
        %v5366 = vadd.f32 0.0, %v5365
        %v5367 = vpop.f32.mrf.mxu0
        %v5368 = vadd.f32 0.0, %v5367
        %5369 = vmatmul.bf16.gmra.mxu0 %v5130
        %v5370 = vpop.f32.mrf.mxu0
        %v5371 = vadd.f32 0.0, %v5370
        %v5372 = vpop.f32.mrf.mxu0
        %v5373 = vadd.f32 0.0, %v5372
        %5374 = vdwg.mxu0
        %5375 = vmatpush.bf16.msra.mxu0 0
        %5376 = vmatpush.bf16.msra.mxu0 0
        %5377 = vmatpush.bf16.msra.mxu0 %v5247
        %5378 = vmatpush.bf16.msra.mxu0 %v5245
        %5379 = vmatpush.bf16.msra.mxu0 %v5243
        %5380 = vmatpush.bf16.msra.mxu0 %v5241
        %5381 = vmatpush.bf16.msra.mxu0 %v5239
        %5382 = vmatpush.bf16.msra.mxu0 %v5237
        %5383 = vmatmul.bf16.gmra.mxu0 %v5277
        %v5384 = vpop.f32.mrf.mxu0
        %v5385 = vadd.f32 %v5356, %v5384
        %v5386 = vpop.f32.mrf.mxu0
        %v5387 = vadd.f32 %v5358, %v5386
        %5388 = vmatmul.bf16.gmra.mxu0 %v5280
        %v5389 = vpop.f32.mrf.mxu0
        %v5390 = vadd.f32 %v5361, %v5389
        %v5391 = vpop.f32.mrf.mxu0
        %v5392 = vadd.f32 %v5363, %v5391
        %5393 = vmatmul.bf16.gmra.mxu0 %v5283
        %v5394 = vpop.f32.mrf.mxu0
        %v5395 = vadd.f32 %v5366, %v5394
        %v5396 = vpop.f32.mrf.mxu0
        %v5397 = vadd.f32 %v5368, %v5396
        %5398 = vmatmul.bf16.gmra.mxu0 %v5286
        %v5399 = vpop.f32.mrf.mxu0
        %v5400 = vadd.f32 %v5371, %v5399
        %v5401 = vpop.f32.mrf.mxu0
        %v5402 = vadd.f32 %v5373, %v5401
        %5403 = vdwg.mxu0
        %v5404 = vadd.f32 %v4922, %v5327
        %v5405 = vadd.f32 %v4980, %v5385
        %v5406 = vadd.f32 %v4924, %v5329
        %v5407 = vadd.f32 %v4982, %v5387
        %v5408 = vadd.f32 %v4927, %v5332
        %v5409 = vadd.f32 %v4985, %v5390
        %v5410 = vadd.f32 %v4929, %v5334
        %v5411 = vadd.f32 %v4987, %v5392
        %v5412 = vadd.f32 %v4932, %v5337
        %v5413 = vadd.f32 %v4990, %v5395
        %v5414 = vadd.f32 %v4934, %v5339
        %v5415 = vadd.f32 %v4992, %v5397
        %v5416 = vadd.f32 %v4937, %v5342
        %v5417 = vadd.f32 %v4995, %v5400
        %v5418 = vadd.f32 %v4939, %v5344
        %v5419 = vadd.f32 %v4997, %v5402
        %v5420 = vld [vmem:[%s6] sm:$0xff]
        %v5421 = vld [vmem:[%s6 + $0x8] sm:$0xff]
        %v5422 = vadd.f32 %v5404, %v5420
        %v5423 = vadd.f32 %v5405, %v5421
        %v5424 = vadd.f32 %v5406, %v5420
        %v5425 = vadd.f32 %v5407, %v5421
        %v5426 = vadd.f32 %v5408, %v5420
        %v5427 = vadd.f32 %v5409, %v5421
        %v5428 = vadd.f32 %v5410, %v5420
        %v5429 = vadd.f32 %v5411, %v5421
        %v5430 = vadd.f32 %v5412, %v5420
        %v5431 = vadd.f32 %v5413, %v5421
        %v5432 = vadd.f32 %v5414, %v5420
        %v5433 = vadd.f32 %v5415, %v5421
        %v5434 = vadd.f32 %v5416, %v5420
        %v5435 = vadd.f32 %v5417, %v5421
        %v5436 = vadd.f32 %v5418, %v5420
        %v5437 = vadd.f32 %v5419, %v5421
        %v5438 = vmax.f32 %v5422, 0.0
        %v5439 = vmax.f32 %v5423, 0.0
        %v5440 = vmax.f32 %v5424, 0.0
        %v5441 = vmax.f32 %v5425, 0.0
        %v5442 = vmax.f32 %v5426, 0.0
        %v5443 = vmax.f32 %v5427, 0.0
        %v5444 = vmax.f32 %v5428, 0.0
        %v5445 = vmax.f32 %v5429, 0.0
        %v5446 = vmax.f32 %v5430, 0.0
        %v5447 = vmax.f32 %v5431, 0.0
        %v5448 = vmax.f32 %v5432, 0.0
        %v5449 = vmax.f32 %v5433, 0.0
        %v5450 = vmax.f32 %v5434, 0.0
        %v5451 = vmax.f32 %v5435, 0.0
        %v5452 = vmax.f32 %v5436, 0.0
        %v5453 = vmax.f32 %v5437, 0.0
        %5470 = vrot.lane.b32.xlu0 %v5438, 64
        %v5471 = vpop.permute.xlu0 %5470
        %5472 = vrot.lane.b32.xlu0 %v5439, 64
        %v5473 = vpop.permute.xlu0 %5472
        %5474 = vrot.lane.b32.xlu0 %v5440, 64
        %v5475 = vpop.permute.xlu0 %5474
        %5476 = vrot.lane.b32.xlu0 %v5441, 64
        %v5477 = vpop.permute.xlu0 %5476
        %5478 = vrot.lane.b32.xlu0 %v5442, 64
        %v5479 = vpop.permute.xlu0 %5478
        %5480 = vrot.lane.b32.xlu0 %v5443, 64
        %v5481 = vpop.permute.xlu0 %5480
        %5482 = vrot.lane.b32.xlu0 %v5444, 64
        %v5483 = vpop.permute.xlu0 %5482
        %5484 = vrot.lane.b32.xlu0 %v5445, 64
        %v5485 = vpop.permute.xlu0 %5484
        %5486 = vrot.lane.b32.xlu0 %v5446, 64
        %v5487 = vpop.permute.xlu0 %5486
        %5488 = vrot.lane.b32.xlu0 %v5447, 64
        %v5489 = vpop.permute.xlu0 %5488
        %5490 = vrot.lane.b32.xlu0 %v5448, 64
        %v5491 = vpop.permute.xlu0 %5490
        %5492 = vrot.lane.b32.xlu0 %v5449, 64
        %v5493 = vpop.permute.xlu0 %5492
        %5494 = vrot.lane.b32.xlu0 %v5450, 64
        %v5495 = vpop.permute.xlu0 %5494
        %5496 = vrot.lane.b32.xlu0 %v5451, 64
        %v5497 = vpop.permute.xlu0 %5496
        %5498 = vrot.lane.b32.xlu0 %v5452, 64
        %v5499 = vpop.permute.xlu0 %5498
        %5500 = vrot.lane.b32.xlu0 %v5453, 64
        %v5501 = vpop.permute.xlu0 %5500
        %vm5502 = vcmask 523264
        %v5503 = vsel %vm5502, %v5471, %v5473
        %v5504 = vsel %vm5502, %v5475, %v5477
        %v5505 = vsel %vm5502, %v5479, %v5481
        %v5506 = vsel %vm5502, %v5483, %v5485
        %v5507 = vsel %vm5502, %v5487, %v5489
        %v5508 = vsel %vm5502, %v5491, %v5493
        %v5509 = vsel %vm5502, %v5495, %v5497
        %v5510 = vsel %vm5502, %v5499, %v5501
        %v5527 = vmax.f32 %v5438, %v5503
        %v5528 = vmax.f32 %v5439, %v5473
        %v5529 = vmax.f32 %v5440, %v5504
        %v5530 = vmax.f32 %v5441, %v5477
        %v5531 = vmax.f32 %v5442, %v5505
        %v5532 = vmax.f32 %v5443, %v5481
        %v5533 = vmax.f32 %v5444, %v5506
        %v5534 = vmax.f32 %v5445, %v5485
        %v5535 = vmax.f32 %v5446, %v5507
        %v5536 = vmax.f32 %v5447, %v5489
        %v5537 = vmax.f32 %v5448, %v5508
        %v5538 = vmax.f32 %v5449, %v5493
        %v5539 = vmax.f32 %v5450, %v5509
        %v5540 = vmax.f32 %v5451, %v5497
        %v5541 = vmax.f32 %v5452, %v5510
        %v5542 = vmax.f32 %v5453, %v5501
        %v5543 = vpack.c.bf16 %v5528, %v5527
        %v5544 = vpack.c.bf16 %v5530, %v5529
        %v5545 = vpack.c.bf16 %v5532, %v5531
        %v5546 = vpack.c.bf16 %v5534, %v5533
        %v5547 = vpack.c.bf16 %v5536, %v5535
        %v5548 = vpack.c.bf16 %v5538, %v5537
        %v5549 = vpack.c.bf16 %v5540, %v5539
        %v5550 = vpack.c.bf16 %v5542, %v5541
        %v5559 = vunpack.c.l.b16 %v5543
        %v5560 = vunpack.c.h.b16 %v5543
        %v5561 = vunpack.c.l.b16 %v5544
        %v5562 = vunpack.c.h.b16 %v5544
        %v5563 = vunpack.c.l.b16 %v5545
        %v5564 = vunpack.c.h.b16 %v5545
        %v5565 = vunpack.c.l.b16 %v5546
        %v5566 = vunpack.c.h.b16 %v5546
        %v5567 = vunpack.c.l.b16 %v5547
        %v5568 = vunpack.c.h.b16 %v5547
        %v5569 = vunpack.c.l.b16 %v5548
        %v5570 = vunpack.c.h.b16 %v5548
        %v5571 = vunpack.c.l.b16 %v5549
        %v5572 = vunpack.c.h.b16 %v5549
        %v5573 = vunpack.c.l.b16 %v5550
        %v5574 = vunpack.c.h.b16 %v5550
        %v5575 = vpack.c.b16 %v5559, %v5559
        %v5576 = vpack.c.b16 %v5560, %v5560
        %v5577 = vpack.c.b16 %v5561, %v5561
        %v5578 = vpack.c.b16 %v5562, %v5562
        %v5579 = vpack.c.b16 %v5563, %v5563
        %v5580 = vpack.c.b16 %v5564, %v5564
        %v5581 = vpack.c.b16 %v5565, %v5565
        %v5582 = vpack.c.b16 %v5566, %v5566
        %v5583 = vpack.c.b16 %v5567, %v5567
        %v5584 = vpack.c.b16 %v5568, %v5568
        %v5585 = vpack.c.b16 %v5569, %v5569
        %v5586 = vpack.c.b16 %v5570, %v5570
        %v5587 = vpack.c.b16 %v5571, %v5571
        %v5588 = vpack.c.b16 %v5572, %v5572
        %v5589 = vpack.c.b16 %v5573, %v5573
        %v5590 = vpack.c.b16 %v5574, %v5574
        %v5591 = vrot.slane %v5575, 7
        %v5592 = vrot.slane %v5576, 7
        %v5593 = vrot.slane %v5577, 7
        %v5594 = vrot.slane %v5578, 7
        %v5595 = vrot.slane %v5579, 7
        %v5596 = vrot.slane %v5580, 7
        %v5597 = vrot.slane %v5581, 7
        %v5598 = vrot.slane %v5582, 7
        %v5599 = vrot.slane %v5583, 7
        %v5600 = vrot.slane %v5584, 7
        %v5601 = vrot.slane %v5585, 7
        %v5602 = vrot.slane %v5586, 7
        %v5603 = vrot.slane %v5587, 7
        %v5604 = vrot.slane %v5588, 7
        %v5605 = vrot.slane %v5589, 7
        %v5606 = vrot.slane %v5590, 7
        %vm5607 = vcmask 1040384
        %v5609 = vsel %vm5607, 0, %v5591
        %v5612 = vsel %vm5607, 0, %v5592
        %v5615 = vsel %vm5607, 0, %v5593
        %v5618 = vsel %vm5607, 0, %v5594
        %v5621 = vsel %vm5607, 0, %v5595
        %v5624 = vsel %vm5607, 0, %v5596
        %v5627 = vsel %vm5607, 0, %v5597
        %v5630 = vsel %vm5607, 0, %v5598
        %v5633 = vsel %vm5607, 0, %v5599
        %v5636 = vsel %vm5607, 0, %v5600
        %v5639 = vsel %vm5607, 0, %v5601
        %v5642 = vsel %vm5607, 0, %v5602
        %v5645 = vsel %vm5607, 0, %v5603
        %v5648 = vsel %vm5607, 0, %v5604
        %v5651 = vsel %vm5607, 0, %v5605
        %v5654 = vsel %vm5607, 0, %v5606
        %v5656 = vsel %vm603, %v5609, 0
        %v5657 = vsel %vm603, %v5612, 0
        %v5658 = vsel %vm603, %v5615, 0
        %v5659 = vsel %vm603, %v5618, 0
        %v5660 = vsel %vm603, %v5621, 0
        %v5661 = vsel %vm603, %v5624, 0
        %v5662 = vsel %vm603, %v5627, 0
        %v5663 = vsel %vm603, %v5630, 0
        %v5664 = vsel %vm603, %v5633, 0
        %v5665 = vsel %vm603, %v5636, 0
        %v5666 = vsel %vm603, %v5639, 0
        %v5667 = vsel %vm603, %v5642, 0
        %v5668 = vsel %vm603, %v5645, 0
        %v5669 = vsel %vm603, %v5648, 0
        %v5670 = vsel %vm603, %v5651, 0
        %v5671 = vsel %vm603, %v5654, 0
        %v5688 = vunpack.c.l.b16 %v5656
        %v5689 = vunpack.c.l.b16 %v5657
        %v5690 = vunpack.c.l.b16 %v5658
        %v5691 = vunpack.c.l.b16 %v5659
        %v5692 = vunpack.c.l.b16 %v5660
        %v5693 = vunpack.c.l.b16 %v5661
        %v5694 = vunpack.c.l.b16 %v5662
        %v5695 = vunpack.c.l.b16 %v5663
        %v5696 = vunpack.c.l.b16 %v5664
        %v5697 = vunpack.c.l.b16 %v5665
        %v5698 = vunpack.c.l.b16 %v5666
        %v5699 = vunpack.c.l.b16 %v5667
        %v5700 = vunpack.c.l.b16 %v5668
        %v5701 = vunpack.c.l.b16 %v5669
        %v5702 = vunpack.c.l.b16 %v5670
        %v5703 = vunpack.c.l.b16 %v5671
        %v5704 = vld [vmem:[%s7] sm:$0xf]
        %v5705 = vld [vmem:[%s7 + $0x4] sm:$0xf]
        %v5706 = vld [vmem:[%s7 + $0x8] sm:$0xf]
        %v5707 = vld [vmem:[%s7 + $0xc] sm:$0xf]
        %v5708 = vld [vmem:[%s7 + $0x10] sm:$0xf]
        %v5709 = vld [vmem:[%s7 + $0x14] sm:$0xf]
        %v5710 = vld [vmem:[%s7 + $0x18] sm:$0xf]
        %v5711 = vld [vmem:[%s7 + $0x1c] sm:$0xf]
        %v5712 = vld [vmem:[%s7 + $0x20] sm:$0xf]
        %v5713 = vld [vmem:[%s7 + $0x24] sm:$0xf]
        %v5714 = vld [vmem:[%s7 + $0x28] sm:$0xf]
        %v5715 = vld [vmem:[%s7 + $0x2c] sm:$0xf]
        %v5716 = vld [vmem:[%s7 + $0x30] sm:$0xf]
        %v5717 = vld [vmem:[%s7 + $0x34] sm:$0xf]
        %v5718 = vld [vmem:[%s7 + $0x38] sm:$0xf]
        %v5719 = vld [vmem:[%s7 + $0x3c] sm:$0xf]
        %v5720 = vld [vmem:[%s7 + $0x40] sm:$0xf]
        %v5721 = vld [vmem:[%s7 + $0x44] sm:$0xf]
        %v5722 = vld [vmem:[%s7 + $0x48] sm:$0xf]
        %v5723 = vld [vmem:[%s7 + $0x4c] sm:$0xf]
        %v5724 = vld [vmem:[%s7 + $0x50] sm:$0xf]
        %v5725 = vld [vmem:[%s7 + $0x54] sm:$0xf]
        %v5726 = vld [vmem:[%s7 + $0x58] sm:$0xf]
        %v5727 = vld [vmem:[%s7 + $0x5c] sm:$0xf]
        %v5729 = vshrl.u32 %v5575, 16
        %v5731 = vrot.slane %v5729, 7
        %v5732 = vshll.u32 %v5575, 16
        %v5734 = vor.u32 %v5731, %v5732
        %v5736 = vshrl.u32 %v5576, 16
        %v5738 = vrot.slane %v5736, 7
        %v5739 = vshll.u32 %v5576, 16
        %v5741 = vor.u32 %v5738, %v5739
        %v5743 = vshrl.u32 %v5577, 16
        %v5745 = vrot.slane %v5743, 7
        %v5746 = vshll.u32 %v5577, 16
        %v5748 = vor.u32 %v5745, %v5746
        %v5750 = vshrl.u32 %v5578, 16
        %v5752 = vrot.slane %v5750, 7
        %v5753 = vshll.u32 %v5578, 16
        %v5755 = vor.u32 %v5752, %v5753
        %v5757 = vshrl.u32 %v5579, 16
        %v5759 = vrot.slane %v5757, 7
        %v5760 = vshll.u32 %v5579, 16
        %v5762 = vor.u32 %v5759, %v5760
        %v5764 = vshrl.u32 %v5580, 16
        %v5766 = vrot.slane %v5764, 7
        %v5767 = vshll.u32 %v5580, 16
        %v5769 = vor.u32 %v5766, %v5767
        %v5771 = vshrl.u32 %v5581, 16
        %v5773 = vrot.slane %v5771, 7
        %v5774 = vshll.u32 %v5581, 16
        %v5776 = vor.u32 %v5773, %v5774
        %v5778 = vshrl.u32 %v5582, 16
        %v5780 = vrot.slane %v5778, 7
        %v5781 = vshll.u32 %v5582, 16
        %v5783 = vor.u32 %v5780, %v5781
        %v5785 = vshrl.u32 %v5583, 16
        %v5787 = vrot.slane %v5785, 7
        %v5788 = vshll.u32 %v5583, 16
        %v5790 = vor.u32 %v5787, %v5788
        %v5792 = vshrl.u32 %v5584, 16
        %v5794 = vrot.slane %v5792, 7
        %v5795 = vshll.u32 %v5584, 16
        %v5797 = vor.u32 %v5794, %v5795
        %v5799 = vshrl.u32 %v5585, 16
        %v5801 = vrot.slane %v5799, 7
        %v5802 = vshll.u32 %v5585, 16
        %v5804 = vor.u32 %v5801, %v5802
        %v5806 = vshrl.u32 %v5586, 16
        %v5808 = vrot.slane %v5806, 7
        %v5809 = vshll.u32 %v5586, 16
        %v5811 = vor.u32 %v5808, %v5809
        %v5813 = vshrl.u32 %v5587, 16
        %v5815 = vrot.slane %v5813, 7
        %v5816 = vshll.u32 %v5587, 16
        %v5818 = vor.u32 %v5815, %v5816
        %v5820 = vshrl.u32 %v5588, 16
        %v5822 = vrot.slane %v5820, 7
        %v5823 = vshll.u32 %v5588, 16
        %v5825 = vor.u32 %v5822, %v5823
        %v5827 = vshrl.u32 %v5589, 16
        %v5829 = vrot.slane %v5827, 7
        %v5830 = vshll.u32 %v5589, 16
        %v5832 = vor.u32 %v5829, %v5830
        %v5834 = vshrl.u32 %v5590, 16
        %v5836 = vrot.slane %v5834, 7
        %v5837 = vshll.u32 %v5590, 16
        %v5839 = vor.u32 %v5836, %v5837
        %v5856 = vsel %vm592, 0, %v5734
        %v5857 = vsel %vm592, 0, %v5741
        %v5858 = vsel %vm592, 0, %v5748
        %v5859 = vsel %vm592, 0, %v5755
        %v5860 = vsel %vm592, 0, %v5762
        %v5861 = vsel %vm592, 0, %v5769
        %v5862 = vsel %vm592, 0, %v5776
        %v5863 = vsel %vm592, 0, %v5783
        %v5864 = vsel %vm592, 0, %v5790
        %v5865 = vsel %vm592, 0, %v5797
        %v5866 = vsel %vm592, 0, %v5804
        %v5867 = vsel %vm592, 0, %v5811
        %v5868 = vsel %vm592, 0, %v5818
        %v5869 = vsel %vm592, 0, %v5825
        %v5870 = vsel %vm592, 0, %v5832
        %v5871 = vsel %vm592, 0, %v5839
        %v5872 = vsel %vm603, %v5856, 0
        %v5873 = vsel %vm603, %v5857, 0
        %v5874 = vsel %vm603, %v5858, 0
        %v5875 = vsel %vm603, %v5859, 0
        %v5876 = vsel %vm603, %v5860, 0
        %v5877 = vsel %vm603, %v5861, 0
        %v5878 = vsel %vm603, %v5862, 0
        %v5879 = vsel %vm603, %v5863, 0
        %v5880 = vsel %vm603, %v5864, 0
        %v5881 = vsel %vm603, %v5865, 0
        %v5882 = vsel %vm603, %v5866, 0
        %v5883 = vsel %vm603, %v5867, 0
        %v5884 = vsel %vm603, %v5868, 0
        %v5885 = vsel %vm603, %v5869, 0
        %v5886 = vsel %vm603, %v5870, 0
        %v5887 = vsel %vm603, %v5871, 0
        %v5904 = vunpack.c.l.b16 %v5872
        %v5905 = vunpack.c.l.b16 %v5873
        %v5906 = vunpack.c.l.b16 %v5874
        %v5907 = vunpack.c.l.b16 %v5875
        %v5908 = vunpack.c.l.b16 %v5876
        %v5909 = vunpack.c.l.b16 %v5877
        %v5910 = vunpack.c.l.b16 %v5878
        %v5911 = vunpack.c.l.b16 %v5879
        %v5912 = vunpack.c.l.b16 %v5880
        %v5913 = vunpack.c.l.b16 %v5881
        %v5914 = vunpack.c.l.b16 %v5882
        %v5915 = vunpack.c.l.b16 %v5883
        %v5916 = vunpack.c.l.b16 %v5884
        %v5917 = vunpack.c.l.b16 %v5885
        %v5918 = vunpack.c.l.b16 %v5886
        %v5919 = vunpack.c.l.b16 %v5887
        %s5920 = scalar_lea.vmem %s7, 96
        %v5921 = vld [vmem:[%s5920] sm:$0xf]
        %v5922 = vld [vmem:[%s5920 + $0x4] sm:$0xf]
        %v5923 = vld [vmem:[%s5920 + $0x8] sm:$0xf]
        %v5924 = vld [vmem:[%s5920 + $0xc] sm:$0xf]
        %v5925 = vld [vmem:[%s5920 + $0x10] sm:$0xf]
        %v5926 = vld [vmem:[%s5920 + $0x14] sm:$0xf]
        %v5927 = vld [vmem:[%s5920 + $0x18] sm:$0xf]
        %v5928 = vld [vmem:[%s5920 + $0x1c] sm:$0xf]
        %v5929 = vld [vmem:[%s5920 + $0x20] sm:$0xf]
        %v5930 = vld [vmem:[%s5920 + $0x24] sm:$0xf]
        %v5931 = vld [vmem:[%s5920 + $0x28] sm:$0xf]
        %v5932 = vld [vmem:[%s5920 + $0x2c] sm:$0xf]
        %v5933 = vld [vmem:[%s5920 + $0x30] sm:$0xf]
        %v5934 = vld [vmem:[%s5920 + $0x34] sm:$0xf]
        %v5935 = vld [vmem:[%s5920 + $0x38] sm:$0xf]
        %v5936 = vld [vmem:[%s5920 + $0x3c] sm:$0xf]
        %v5937 = vld [vmem:[%s5920 + $0x40] sm:$0xf]
        %v5938 = vld [vmem:[%s5920 + $0x44] sm:$0xf]
        %v5939 = vld [vmem:[%s5920 + $0x48] sm:$0xf]
        %v5940 = vld [vmem:[%s5920 + $0x4c] sm:$0xf]
        %v5941 = vld [vmem:[%s5920 + $0x50] sm:$0xf]
        %v5942 = vld [vmem:[%s5920 + $0x54] sm:$0xf]
        %v5943 = vld [vmem:[%s5920 + $0x58] sm:$0xf]
        %v5944 = vld [vmem:[%s5920 + $0x5c] sm:$0xf]
        %v5945 = vpack.c.b16 %v5906, %v5904
        %v5946 = vpack.c.b16 %v5907, %v5905
        %v5947 = vpack.c.b16 %v5910, %v5908
        %v5948 = vpack.c.b16 %v5911, %v5909
        %v5949 = vpack.c.b16 %v5914, %v5912
        %v5950 = vpack.c.b16 %v5915, %v5913
        %v5951 = vpack.c.b16 %v5918, %v5916
        %v5952 = vpack.c.b16 %v5919, %v5917
        %v5981 = vunpack.c.l.b16 %v5921
        %v5982 = vunpack.c.l.b16 %v5922
        %v5983 = vunpack.c.l.b16 %v5923
        %v5984 = vunpack.c.l.b16 %v5924
        %v5985 = vunpack.c.l.b16 %v5925
        %v5986 = vunpack.c.l.b16 %v5926
        %v5987 = vunpack.c.l.b16 %v5927
        %v5988 = vunpack.c.l.b16 %v5928
        %v5989 = vunpack.c.l.b16 %v5929
        %v5990 = vunpack.c.l.b16 %v5930
        %v5991 = vunpack.c.l.b16 %v5931
        %v5992 = vunpack.c.l.b16 %v5932
        %v5993 = vunpack.c.l.b16 %v5933
        %v5994 = vunpack.c.l.b16 %v5934
        %v5995 = vunpack.c.l.b16 %v5935
        %v5996 = vunpack.c.l.b16 %v5936
        %v5997 = vunpack.c.l.b16 %v5937
        %v5998 = vunpack.c.l.b16 %v5938
        %v5999 = vunpack.c.l.b16 %v5939
        %v6000 = vunpack.c.l.b16 %v5940
        %v6001 = vunpack.c.l.b16 %v5941
        %v6002 = vunpack.c.l.b16 %v5942
        %v6003 = vunpack.c.l.b16 %v5943
        %v6004 = vunpack.c.l.b16 %v5944
        %v6005 = vpack.c.b16 %v5982, %v5981
        %v6006 = vpack.c.b16 %v5984, %v5983
        %v6007 = vpack.c.b16 %v5986, %v5985
        %v6008 = vpack.c.b16 %v5988, %v5987
        %v6009 = vpack.c.b16 %v5990, %v5989
        %v6010 = vpack.c.b16 %v5992, %v5991
        %v6011 = vpack.c.b16 %v5994, %v5993
        %v6012 = vpack.c.b16 %v5996, %v5995
        %v6013 = vpack.c.b16 %v5998, %v5997
        %v6014 = vpack.c.b16 %v6000, %v5999
        %v6015 = vpack.c.b16 %v6002, %v6001
        %v6016 = vpack.c.b16 %v6004, %v6003
        %v6030 = vsel %vm5502, %v5946, 0
        %v6033 = vsel %vm5502, %v5948, 0
        %v6036 = vsel %vm5502, %v5950, 0
        %v6039 = vsel %vm5502, %v5952, 0
        %6041 = vmatpush.bf16.msra.mxu0 %v6012
        %6042 = vmatpush.bf16.msra.mxu0 %v6011
        %6043 = vmatpush.bf16.msra.mxu0 %v6010
        %6044 = vmatpush.bf16.msra.mxu0 %v6009
        %6045 = vmatpush.bf16.msra.mxu0 %v6008
        %6046 = vmatpush.bf16.msra.mxu0 %v6007
        %6047 = vmatpush.bf16.msra.mxu0 %v6006
        %6048 = vmatpush.bf16.msra.mxu0 %v6005
        %6049 = vmatmul.bf16.gmra.mxu0 %v5945
        %v6050 = vpop.f32.mrf.mxu0
        %v6051 = vadd.f32 0.0, %v6050
        %v6052 = vpop.f32.mrf.mxu0
        %v6053 = vadd.f32 0.0, %v6052
        %6054 = vmatmul.bf16.gmra.mxu0 %v5947
        %v6055 = vpop.f32.mrf.mxu0
        %v6056 = vadd.f32 0.0, %v6055
        %v6057 = vpop.f32.mrf.mxu0
        %v6058 = vadd.f32 0.0, %v6057
        %6059 = vmatmul.bf16.gmra.mxu0 %v5949
        %v6060 = vpop.f32.mrf.mxu0
        %v6061 = vadd.f32 0.0, %v6060
        %v6062 = vpop.f32.mrf.mxu0
        %v6063 = vadd.f32 0.0, %v6062
        %6064 = vmatmul.bf16.gmra.mxu0 %v5951
        %v6065 = vpop.f32.mrf.mxu0
        %v6066 = vadd.f32 0.0, %v6065
        %v6067 = vpop.f32.mrf.mxu0
        %v6068 = vadd.f32 0.0, %v6067
        %6069 = vdwg.mxu0
        %6070 = vmatpush.bf16.msra.mxu0 0
        %6071 = vmatpush.bf16.msra.mxu0 0
        %6072 = vmatpush.bf16.msra.mxu0 0
        %6073 = vmatpush.bf16.msra.mxu0 0
        %6074 = vmatpush.bf16.msra.mxu0 %v6016
        %6075 = vmatpush.bf16.msra.mxu0 %v6015
        %6076 = vmatpush.bf16.msra.mxu0 %v6014
        %6077 = vmatpush.bf16.msra.mxu0 %v6013
        %6078 = vmatmul.bf16.gmra.mxu0 %v6030
        %v6079 = vpop.f32.mrf.mxu0
        %v6080 = vadd.f32 %v6051, %v6079
        %v6081 = vpop.f32.mrf.mxu0
        %v6082 = vadd.f32 %v6053, %v6081
        %6083 = vmatmul.bf16.gmra.mxu0 %v6033
        %v6084 = vpop.f32.mrf.mxu0
        %v6085 = vadd.f32 %v6056, %v6084
        %v6086 = vpop.f32.mrf.mxu0
        %v6087 = vadd.f32 %v6058, %v6086
        %6088 = vmatmul.bf16.gmra.mxu0 %v6036
        %v6089 = vpop.f32.mrf.mxu0
        %v6090 = vadd.f32 %v6061, %v6089
        %v6091 = vpop.f32.mrf.mxu0
        %v6092 = vadd.f32 %v6063, %v6091
        %6093 = vmatmul.bf16.gmra.mxu0 %v6039
        %v6094 = vpop.f32.mrf.mxu0
        %v6095 = vadd.f32 %v6066, %v6094
        %v6096 = vpop.f32.mrf.mxu0
        %v6097 = vadd.f32 %v6068, %v6096
        %6098 = vdwg.mxu0
        %v6099 = vpack.c.b16 %v5690, %v5688
        %v6100 = vpack.c.b16 %v5691, %v5689
        %v6101 = vpack.c.b16 %v5694, %v5692
        %v6102 = vpack.c.b16 %v5695, %v5693
        %v6103 = vpack.c.b16 %v5698, %v5696
        %v6104 = vpack.c.b16 %v5699, %v5697
        %v6105 = vpack.c.b16 %v5702, %v5700
        %v6106 = vpack.c.b16 %v5703, %v5701
        %v6135 = vunpack.c.l.b16 %v5704
        %v6136 = vunpack.c.l.b16 %v5705
        %v6137 = vunpack.c.l.b16 %v5706
        %v6138 = vunpack.c.l.b16 %v5707
        %v6139 = vunpack.c.l.b16 %v5708
        %v6140 = vunpack.c.l.b16 %v5709
        %v6141 = vunpack.c.l.b16 %v5710
        %v6142 = vunpack.c.l.b16 %v5711
        %v6143 = vunpack.c.l.b16 %v5712
        %v6144 = vunpack.c.l.b16 %v5713
        %v6145 = vunpack.c.l.b16 %v5714
        %v6146 = vunpack.c.l.b16 %v5715
        %v6147 = vunpack.c.l.b16 %v5716
        %v6148 = vunpack.c.l.b16 %v5717
        %v6149 = vunpack.c.l.b16 %v5718
        %v6150 = vunpack.c.l.b16 %v5719
        %v6151 = vunpack.c.l.b16 %v5720
        %v6152 = vunpack.c.l.b16 %v5721
        %v6153 = vunpack.c.l.b16 %v5722
        %v6154 = vunpack.c.l.b16 %v5723
        %v6155 = vunpack.c.l.b16 %v5724
        %v6156 = vunpack.c.l.b16 %v5725
        %v6157 = vunpack.c.l.b16 %v5726
        %v6158 = vunpack.c.l.b16 %v5727
        %v6159 = vpack.c.b16 %v6136, %v6135
        %v6160 = vpack.c.b16 %v6138, %v6137
        %v6161 = vpack.c.b16 %v6140, %v6139
        %v6162 = vpack.c.b16 %v6142, %v6141
        %v6163 = vpack.c.b16 %v6144, %v6143
        %v6164 = vpack.c.b16 %v6146, %v6145
        %v6165 = vpack.c.b16 %v6148, %v6147
        %v6166 = vpack.c.b16 %v6150, %v6149
        %v6167 = vpack.c.b16 %v6152, %v6151
        %v6168 = vpack.c.b16 %v6154, %v6153
        %v6169 = vpack.c.b16 %v6156, %v6155
        %v6170 = vpack.c.b16 %v6158, %v6157
        %v6184 = vsel %vm5502, %v6100, 0
        %v6187 = vsel %vm5502, %v6102, 0
        %v6190 = vsel %vm5502, %v6104, 0
        %v6193 = vsel %vm5502, %v6106, 0
        %6195 = vmatpush.bf16.msra.mxu0 %v6166
        %6196 = vmatpush.bf16.msra.mxu0 %v6165
        %6197 = vmatpush.bf16.msra.mxu0 %v6164
        %6198 = vmatpush.bf16.msra.mxu0 %v6163
        %6199 = vmatpush.bf16.msra.mxu0 %v6162
        %6200 = vmatpush.bf16.msra.mxu0 %v6161
        %6201 = vmatpush.bf16.msra.mxu0 %v6160
        %6202 = vmatpush.bf16.msra.mxu0 %v6159
        %6203 = vmatmul.bf16.gmra.mxu0 %v6099
        %v6204 = vpop.f32.mrf.mxu0
        %v6205 = vadd.f32 %v6080, %v6204
        %v6206 = vpop.f32.mrf.mxu0
        %v6207 = vadd.f32 %v6082, %v6206
        %6208 = vmatmul.bf16.gmra.mxu0 %v6101
        %v6209 = vpop.f32.mrf.mxu0
        %v6210 = vadd.f32 %v6085, %v6209
        %v6211 = vpop.f32.mrf.mxu0
        %v6212 = vadd.f32 %v6087, %v6211
        %6213 = vmatmul.bf16.gmra.mxu0 %v6103
        %v6214 = vpop.f32.mrf.mxu0
        %v6215 = vadd.f32 %v6090, %v6214
        %v6216 = vpop.f32.mrf.mxu0
        %v6217 = vadd.f32 %v6092, %v6216
        %6218 = vmatmul.bf16.gmra.mxu0 %v6105
        %v6219 = vpop.f32.mrf.mxu0
        %v6220 = vadd.f32 %v6095, %v6219
        %v6221 = vpop.f32.mrf.mxu0
        %v6222 = vadd.f32 %v6097, %v6221
        %6223 = vdwg.mxu0
        %6224 = vmatpush.bf16.msra.mxu0 0
        %6225 = vmatpush.bf16.msra.mxu0 0
        %6226 = vmatpush.bf16.msra.mxu0 0
        %6227 = vmatpush.bf16.msra.mxu0 0
        %6228 = vmatpush.bf16.msra.mxu0 %v6170
        %6229 = vmatpush.bf16.msra.mxu0 %v6169
        %6230 = vmatpush.bf16.msra.mxu0 %v6168
        %6231 = vmatpush.bf16.msra.mxu0 %v6167
        %6232 = vmatmul.bf16.gmra.mxu0 %v6184
        %v6233 = vpop.f32.mrf.mxu0
        %v6234 = vadd.f32 %v6205, %v6233
        %v6235 = vpop.f32.mrf.mxu0
        %v6236 = vadd.f32 %v6207, %v6235
        %6237 = vmatmul.bf16.gmra.mxu0 %v6187
        %v6238 = vpop.f32.mrf.mxu0
        %v6239 = vadd.f32 %v6210, %v6238
        %v6240 = vpop.f32.mrf.mxu0
        %v6241 = vadd.f32 %v6212, %v6240
        %6242 = vmatmul.bf16.gmra.mxu0 %v6190
        %v6243 = vpop.f32.mrf.mxu0
        %v6244 = vadd.f32 %v6215, %v6243
        %v6245 = vpop.f32.mrf.mxu0
        %v6246 = vadd.f32 %v6217, %v6245
        %6247 = vmatmul.bf16.gmra.mxu0 %v6193
        %v6248 = vpop.f32.mrf.mxu0
        %v6249 = vadd.f32 %v6220, %v6248
        %v6250 = vpop.f32.mrf.mxu0
        %v6251 = vadd.f32 %v6222, %v6250
        %6252 = vdwg.mxu0
        %s6253 = scalar_lea.vmem %s7, 192
        %v6254 = vld [vmem:[%s6253] sm:$0xf]
        %v6255 = vld [vmem:[%s6253 + $0x4] sm:$0xf]
        %v6256 = vld [vmem:[%s6253 + $0x8] sm:$0xf]
        %v6257 = vld [vmem:[%s6253 + $0xc] sm:$0xf]
        %v6258 = vld [vmem:[%s6253 + $0x10] sm:$0xf]
        %v6259 = vld [vmem:[%s6253 + $0x14] sm:$0xf]
        %v6260 = vld [vmem:[%s6253 + $0x18] sm:$0xf]
        %v6261 = vld [vmem:[%s6253 + $0x1c] sm:$0xf]
        %v6262 = vld [vmem:[%s6253 + $0x20] sm:$0xf]
        %v6263 = vld [vmem:[%s6253 + $0x24] sm:$0xf]
        %v6264 = vld [vmem:[%s6253 + $0x28] sm:$0xf]
        %v6265 = vld [vmem:[%s6253 + $0x2c] sm:$0xf]
        %v6266 = vld [vmem:[%s6253 + $0x30] sm:$0xf]
        %v6267 = vld [vmem:[%s6253 + $0x34] sm:$0xf]
        %v6268 = vld [vmem:[%s6253 + $0x38] sm:$0xf]
        %v6269 = vld [vmem:[%s6253 + $0x3c] sm:$0xf]
        %v6270 = vld [vmem:[%s6253 + $0x40] sm:$0xf]
        %v6271 = vld [vmem:[%s6253 + $0x44] sm:$0xf]
        %v6272 = vld [vmem:[%s6253 + $0x48] sm:$0xf]
        %v6273 = vld [vmem:[%s6253 + $0x4c] sm:$0xf]
        %v6274 = vld [vmem:[%s6253 + $0x50] sm:$0xf]
        %v6275 = vld [vmem:[%s6253 + $0x54] sm:$0xf]
        %v6276 = vld [vmem:[%s6253 + $0x58] sm:$0xf]
        %v6277 = vld [vmem:[%s6253 + $0x5c] sm:$0xf]
        %v6278 = vpack.c.b16 %v5561, %v5559
        %v6279 = vpack.c.b16 %v5562, %v5560
        %v6280 = vpack.c.b16 %v5565, %v5563
        %v6281 = vpack.c.b16 %v5566, %v5564
        %v6282 = vpack.c.b16 %v5569, %v5567
        %v6283 = vpack.c.b16 %v5570, %v5568
        %v6284 = vpack.c.b16 %v5573, %v5571
        %v6285 = vpack.c.b16 %v5574, %v5572
        %v6314 = vunpack.c.l.b16 %v6254
        %v6315 = vunpack.c.l.b16 %v6255
        %v6316 = vunpack.c.l.b16 %v6256
        %v6317 = vunpack.c.l.b16 %v6257
        %v6318 = vunpack.c.l.b16 %v6258
        %v6319 = vunpack.c.l.b16 %v6259
        %v6320 = vunpack.c.l.b16 %v6260
        %v6321 = vunpack.c.l.b16 %v6261
        %v6322 = vunpack.c.l.b16 %v6262
        %v6323 = vunpack.c.l.b16 %v6263
        %v6324 = vunpack.c.l.b16 %v6264
        %v6325 = vunpack.c.l.b16 %v6265
        %v6326 = vunpack.c.l.b16 %v6266
        %v6327 = vunpack.c.l.b16 %v6267
        %v6328 = vunpack.c.l.b16 %v6268
        %v6329 = vunpack.c.l.b16 %v6269
        %v6330 = vunpack.c.l.b16 %v6270
        %v6331 = vunpack.c.l.b16 %v6271
        %v6332 = vunpack.c.l.b16 %v6272
        %v6333 = vunpack.c.l.b16 %v6273
        %v6334 = vunpack.c.l.b16 %v6274
        %v6335 = vunpack.c.l.b16 %v6275
        %v6336 = vunpack.c.l.b16 %v6276
        %v6337 = vunpack.c.l.b16 %v6277
        %v6338 = vpack.c.b16 %v6315, %v6314
        %v6339 = vpack.c.b16 %v6317, %v6316
        %v6340 = vpack.c.b16 %v6319, %v6318
        %v6341 = vpack.c.b16 %v6321, %v6320
        %v6342 = vpack.c.b16 %v6323, %v6322
        %v6343 = vpack.c.b16 %v6325, %v6324
        %v6344 = vpack.c.b16 %v6327, %v6326
        %v6345 = vpack.c.b16 %v6329, %v6328
        %v6346 = vpack.c.b16 %v6331, %v6330
        %v6347 = vpack.c.b16 %v6333, %v6332
        %v6348 = vpack.c.b16 %v6335, %v6334
        %v6349 = vpack.c.b16 %v6337, %v6336
        %v6363 = vsel %vm5502, %v6279, 0
        %v6366 = vsel %vm5502, %v6281, 0
        %v6369 = vsel %vm5502, %v6283, 0
        %v6372 = vsel %vm5502, %v6285, 0
        %6374 = vmatpush.bf16.msra.mxu0 %v6345
        %6375 = vmatpush.bf16.msra.mxu0 %v6344
        %6376 = vmatpush.bf16.msra.mxu0 %v6343
        %6377 = vmatpush.bf16.msra.mxu0 %v6342
        %6378 = vmatpush.bf16.msra.mxu0 %v6341
        %6379 = vmatpush.bf16.msra.mxu0 %v6340
        %6380 = vmatpush.bf16.msra.mxu0 %v6339
        %6381 = vmatpush.bf16.msra.mxu0 %v6338
        %6382 = vmatmul.bf16.gmra.mxu0 %v6278
        %v6383 = vpop.f32.mrf.mxu0
        %v6384 = vadd.f32 0.0, %v6383
        %v6385 = vpop.f32.mrf.mxu0
        %v6386 = vadd.f32 0.0, %v6385
        %6387 = vmatmul.bf16.gmra.mxu0 %v6280
        %v6388 = vpop.f32.mrf.mxu0
        %v6389 = vadd.f32 0.0, %v6388
        %v6390 = vpop.f32.mrf.mxu0
        %v6391 = vadd.f32 0.0, %v6390
        %6392 = vmatmul.bf16.gmra.mxu0 %v6282
        %v6393 = vpop.f32.mrf.mxu0
        %v6394 = vadd.f32 0.0, %v6393
        %v6395 = vpop.f32.mrf.mxu0
        %v6396 = vadd.f32 0.0, %v6395
        %6397 = vmatmul.bf16.gmra.mxu0 %v6284
        %v6398 = vpop.f32.mrf.mxu0
        %v6399 = vadd.f32 0.0, %v6398
        %v6400 = vpop.f32.mrf.mxu0
        %v6401 = vadd.f32 0.0, %v6400
        %6402 = vdwg.mxu0
        %6403 = vmatpush.bf16.msra.mxu0 0
        %6404 = vmatpush.bf16.msra.mxu0 0
        %6405 = vmatpush.bf16.msra.mxu0 0
        %6406 = vmatpush.bf16.msra.mxu0 0
        %6407 = vmatpush.bf16.msra.mxu0 %v6349
        %6408 = vmatpush.bf16.msra.mxu0 %v6348
        %6409 = vmatpush.bf16.msra.mxu0 %v6347
        %6410 = vmatpush.bf16.msra.mxu0 %v6346
        %6411 = vmatmul.bf16.gmra.mxu0 %v6363
        %v6412 = vpop.f32.mrf.mxu0
        %v6413 = vadd.f32 %v6384, %v6412
        %v6414 = vpop.f32.mrf.mxu0
        %v6415 = vadd.f32 %v6386, %v6414
        %6416 = vmatmul.bf16.gmra.mxu0 %v6366
        %v6417 = vpop.f32.mrf.mxu0
        %v6418 = vadd.f32 %v6389, %v6417
        %v6419 = vpop.f32.mrf.mxu0
        %v6420 = vadd.f32 %v6391, %v6419
        %6421 = vmatmul.bf16.gmra.mxu0 %v6369
        %v6422 = vpop.f32.mrf.mxu0
        %v6423 = vadd.f32 %v6394, %v6422
        %v6424 = vpop.f32.mrf.mxu0
        %v6425 = vadd.f32 %v6396, %v6424
        %6426 = vmatmul.bf16.gmra.mxu0 %v6372
        %v6427 = vpop.f32.mrf.mxu0
        %v6428 = vadd.f32 %v6399, %v6427
        %v6429 = vpop.f32.mrf.mxu0
        %v6430 = vadd.f32 %v6401, %v6429
        %6431 = vdwg.mxu0
        %v6432 = vadd.f32 %v6234, %v6413
        %v6433 = vadd.f32 %v6236, %v6415
        %v6434 = vadd.f32 %v6239, %v6418
        %v6435 = vadd.f32 %v6241, %v6420
        %v6436 = vadd.f32 %v6244, %v6423
        %v6437 = vadd.f32 %v6246, %v6425
        %v6438 = vadd.f32 %v6249, %v6428
        %v6439 = vadd.f32 %v6251, %v6430
        %v6440 = vrot.slane %v5732, 1
        %v6441 = vor.u32 %v5729, %v6440
        %v6442 = vrot.slane %v5739, 1
        %v6443 = vor.u32 %v5736, %v6442
        %v6444 = vrot.slane %v5746, 1
        %v6445 = vor.u32 %v5743, %v6444
        %v6446 = vrot.slane %v5753, 1
        %v6447 = vor.u32 %v5750, %v6446
        %v6448 = vrot.slane %v5760, 1
        %v6449 = vor.u32 %v5757, %v6448
        %v6450 = vrot.slane %v5767, 1
        %v6451 = vor.u32 %v5764, %v6450
        %v6452 = vrot.slane %v5774, 1
        %v6453 = vor.u32 %v5771, %v6452
        %v6454 = vrot.slane %v5781, 1
        %v6455 = vor.u32 %v5778, %v6454
        %v6456 = vrot.slane %v5788, 1
        %v6457 = vor.u32 %v5785, %v6456
        %v6458 = vrot.slane %v5795, 1
        %v6459 = vor.u32 %v5792, %v6458
        %v6460 = vrot.slane %v5802, 1
        %v6461 = vor.u32 %v5799, %v6460
        %v6462 = vrot.slane %v5809, 1
        %v6463 = vor.u32 %v5806, %v6462
        %v6464 = vrot.slane %v5816, 1
        %v6465 = vor.u32 %v5813, %v6464
        %v6466 = vrot.slane %v5823, 1
        %v6467 = vor.u32 %v5820, %v6466
        %v6468 = vrot.slane %v5830, 1
        %v6469 = vor.u32 %v5827, %v6468
        %v6470 = vrot.slane %v5837, 1
        %v6471 = vor.u32 %v5834, %v6470
        %v6473 = vsel %vm958, %v6441, 0
        %v6475 = vsel %vm958, %v6443, 0
        %v6477 = vsel %vm958, %v6445, 0
        %v6479 = vsel %vm958, %v6447, 0
        %v6481 = vsel %vm958, %v6449, 0
        %v6483 = vsel %vm958, %v6451, 0
        %v6485 = vsel %vm958, %v6453, 0
        %v6487 = vsel %vm958, %v6455, 0
        %v6489 = vsel %vm958, %v6457, 0
        %v6491 = vsel %vm958, %v6459, 0
        %v6493 = vsel %vm958, %v6461, 0
        %v6495 = vsel %vm958, %v6463, 0
        %v6497 = vsel %vm958, %v6465, 0
        %v6499 = vsel %vm958, %v6467, 0
        %v6501 = vsel %vm958, %v6469, 0
        %v6503 = vsel %vm958, %v6471, 0
        %v6520 = vunpack.c.l.b16 %v6473
        %v6521 = vunpack.c.l.b16 %v6475
        %v6522 = vunpack.c.l.b16 %v6477
        %v6523 = vunpack.c.l.b16 %v6479
        %v6524 = vunpack.c.l.b16 %v6481
        %v6525 = vunpack.c.l.b16 %v6483
        %v6526 = vunpack.c.l.b16 %v6485
        %v6527 = vunpack.c.l.b16 %v6487
        %v6528 = vunpack.c.l.b16 %v6489
        %v6529 = vunpack.c.l.b16 %v6491
        %v6530 = vunpack.c.l.b16 %v6493
        %v6531 = vunpack.c.l.b16 %v6495
        %v6532 = vunpack.c.l.b16 %v6497
        %v6533 = vunpack.c.l.b16 %v6499
        %v6534 = vunpack.c.l.b16 %v6501
        %v6535 = vunpack.c.l.b16 %v6503
        %s6536 = scalar_lea.vmem %s7, 288
        %v6537 = vld [vmem:[%s6536] sm:$0xf]
        %v6538 = vld [vmem:[%s6536 + $0x4] sm:$0xf]
        %v6539 = vld [vmem:[%s6536 + $0x8] sm:$0xf]
        %v6540 = vld [vmem:[%s6536 + $0xc] sm:$0xf]
        %v6541 = vld [vmem:[%s6536 + $0x10] sm:$0xf]
        %v6542 = vld [vmem:[%s6536 + $0x14] sm:$0xf]
        %v6543 = vld [vmem:[%s6536 + $0x18] sm:$0xf]
        %v6544 = vld [vmem:[%s6536 + $0x1c] sm:$0xf]
        %v6545 = vld [vmem:[%s6536 + $0x20] sm:$0xf]
        %v6546 = vld [vmem:[%s6536 + $0x24] sm:$0xf]
        %v6547 = vld [vmem:[%s6536 + $0x28] sm:$0xf]
        %v6548 = vld [vmem:[%s6536 + $0x2c] sm:$0xf]
        %v6549 = vld [vmem:[%s6536 + $0x30] sm:$0xf]
        %v6550 = vld [vmem:[%s6536 + $0x34] sm:$0xf]
        %v6551 = vld [vmem:[%s6536 + $0x38] sm:$0xf]
        %v6552 = vld [vmem:[%s6536 + $0x3c] sm:$0xf]
        %v6553 = vld [vmem:[%s6536 + $0x40] sm:$0xf]
        %v6554 = vld [vmem:[%s6536 + $0x44] sm:$0xf]
        %v6555 = vld [vmem:[%s6536 + $0x48] sm:$0xf]
        %v6556 = vld [vmem:[%s6536 + $0x4c] sm:$0xf]
        %v6557 = vld [vmem:[%s6536 + $0x50] sm:$0xf]
        %v6558 = vld [vmem:[%s6536 + $0x54] sm:$0xf]
        %v6559 = vld [vmem:[%s6536 + $0x58] sm:$0xf]
        %v6560 = vld [vmem:[%s6536 + $0x5c] sm:$0xf]
        %v6561 = vpack.c.b16 %v6522, %v6520
        %v6562 = vpack.c.b16 %v6523, %v6521
        %v6563 = vpack.c.b16 %v6526, %v6524
        %v6564 = vpack.c.b16 %v6527, %v6525
        %v6565 = vpack.c.b16 %v6530, %v6528
        %v6566 = vpack.c.b16 %v6531, %v6529
        %v6567 = vpack.c.b16 %v6534, %v6532
        %v6568 = vpack.c.b16 %v6535, %v6533
        %v6597 = vunpack.c.l.b16 %v6537
        %v6598 = vunpack.c.l.b16 %v6538
        %v6599 = vunpack.c.l.b16 %v6539
        %v6600 = vunpack.c.l.b16 %v6540
        %v6601 = vunpack.c.l.b16 %v6541
        %v6602 = vunpack.c.l.b16 %v6542
        %v6603 = vunpack.c.l.b16 %v6543
        %v6604 = vunpack.c.l.b16 %v6544
        %v6605 = vunpack.c.l.b16 %v6545
        %v6606 = vunpack.c.l.b16 %v6546
        %v6607 = vunpack.c.l.b16 %v6547
        %v6608 = vunpack.c.l.b16 %v6548
        %v6609 = vunpack.c.l.b16 %v6549
        %v6610 = vunpack.c.l.b16 %v6550
        %v6611 = vunpack.c.l.b16 %v6551
        %v6612 = vunpack.c.l.b16 %v6552
        %v6613 = vunpack.c.l.b16 %v6553
        %v6614 = vunpack.c.l.b16 %v6554
        %v6615 = vunpack.c.l.b16 %v6555
        %v6616 = vunpack.c.l.b16 %v6556
        %v6617 = vunpack.c.l.b16 %v6557
        %v6618 = vunpack.c.l.b16 %v6558
        %v6619 = vunpack.c.l.b16 %v6559
        %v6620 = vunpack.c.l.b16 %v6560
        %v6621 = vpack.c.b16 %v6598, %v6597
        %v6622 = vpack.c.b16 %v6600, %v6599
        %v6623 = vpack.c.b16 %v6602, %v6601
        %v6624 = vpack.c.b16 %v6604, %v6603
        %v6625 = vpack.c.b16 %v6606, %v6605
        %v6626 = vpack.c.b16 %v6608, %v6607
        %v6627 = vpack.c.b16 %v6610, %v6609
        %v6628 = vpack.c.b16 %v6612, %v6611
        %v6629 = vpack.c.b16 %v6614, %v6613
        %v6630 = vpack.c.b16 %v6616, %v6615
        %v6631 = vpack.c.b16 %v6618, %v6617
        %v6632 = vpack.c.b16 %v6620, %v6619
        %v6646 = vsel %vm5502, %v6562, 0
        %v6649 = vsel %vm5502, %v6564, 0
        %v6652 = vsel %vm5502, %v6566, 0
        %v6655 = vsel %vm5502, %v6568, 0
        %6657 = vmatpush.bf16.msra.mxu0 %v6628
        %6658 = vmatpush.bf16.msra.mxu0 %v6627
        %6659 = vmatpush.bf16.msra.mxu0 %v6626
        %6660 = vmatpush.bf16.msra.mxu0 %v6625
        %6661 = vmatpush.bf16.msra.mxu0 %v6624
        %6662 = vmatpush.bf16.msra.mxu0 %v6623
        %6663 = vmatpush.bf16.msra.mxu0 %v6622
        %6664 = vmatpush.bf16.msra.mxu0 %v6621
        %6665 = vmatmul.bf16.gmra.mxu0 %v6561
        %v6666 = vpop.f32.mrf.mxu0
        %v6667 = vadd.f32 0.0, %v6666
        %v6668 = vpop.f32.mrf.mxu0
        %v6669 = vadd.f32 0.0, %v6668
        %6670 = vmatmul.bf16.gmra.mxu0 %v6563
        %v6671 = vpop.f32.mrf.mxu0
        %v6672 = vadd.f32 0.0, %v6671
        %v6673 = vpop.f32.mrf.mxu0
        %v6674 = vadd.f32 0.0, %v6673
        %6675 = vmatmul.bf16.gmra.mxu0 %v6565
        %v6676 = vpop.f32.mrf.mxu0
        %v6677 = vadd.f32 0.0, %v6676
        %v6678 = vpop.f32.mrf.mxu0
        %v6679 = vadd.f32 0.0, %v6678
        %6680 = vmatmul.bf16.gmra.mxu0 %v6567
        %v6681 = vpop.f32.mrf.mxu0
        %v6682 = vadd.f32 0.0, %v6681
        %v6683 = vpop.f32.mrf.mxu0
        %v6684 = vadd.f32 0.0, %v6683
        %6685 = vdwg.mxu0
        %6686 = vmatpush.bf16.msra.mxu0 0
        %6687 = vmatpush.bf16.msra.mxu0 0
        %6688 = vmatpush.bf16.msra.mxu0 0
        %6689 = vmatpush.bf16.msra.mxu0 0
        %6690 = vmatpush.bf16.msra.mxu0 %v6632
        %6691 = vmatpush.bf16.msra.mxu0 %v6631
        %6692 = vmatpush.bf16.msra.mxu0 %v6630
        %6693 = vmatpush.bf16.msra.mxu0 %v6629
        %6694 = vmatmul.bf16.gmra.mxu0 %v6646
        %v6695 = vpop.f32.mrf.mxu0
        %v6696 = vadd.f32 %v6667, %v6695
        %v6697 = vpop.f32.mrf.mxu0
        %v6698 = vadd.f32 %v6669, %v6697
        %6699 = vmatmul.bf16.gmra.mxu0 %v6649
        %v6700 = vpop.f32.mrf.mxu0
        %v6701 = vadd.f32 %v6672, %v6700
        %v6702 = vpop.f32.mrf.mxu0
        %v6703 = vadd.f32 %v6674, %v6702
        %6704 = vmatmul.bf16.gmra.mxu0 %v6652
        %v6705 = vpop.f32.mrf.mxu0
        %v6706 = vadd.f32 %v6677, %v6705
        %v6707 = vpop.f32.mrf.mxu0
        %v6708 = vadd.f32 %v6679, %v6707
        %6709 = vmatmul.bf16.gmra.mxu0 %v6655
        %v6710 = vpop.f32.mrf.mxu0
        %v6711 = vadd.f32 %v6682, %v6710
        %v6712 = vpop.f32.mrf.mxu0
        %v6713 = vadd.f32 %v6684, %v6712
        %6714 = vdwg.mxu0
        %v6715 = vadd.f32 %v6432, %v6696
        %v6716 = vadd.f32 %v6433, %v6698
        %v6717 = vadd.f32 %v6434, %v6701
        %v6718 = vadd.f32 %v6435, %v6703
        %v6719 = vadd.f32 %v6436, %v6706
        %v6720 = vadd.f32 %v6437, %v6708
        %v6721 = vadd.f32 %v6438, %v6711
        %v6722 = vadd.f32 %v6439, %v6713
        %v6723 = vrot.slane %v5575, 1
        %v6724 = vrot.slane %v5576, 1
        %v6725 = vrot.slane %v5577, 1
        %v6726 = vrot.slane %v5578, 1
        %v6727 = vrot.slane %v5579, 1
        %v6728 = vrot.slane %v5580, 1
        %v6729 = vrot.slane %v5581, 1
        %v6730 = vrot.slane %v5582, 1
        %v6731 = vrot.slane %v5583, 1
        %v6732 = vrot.slane %v5584, 1
        %v6733 = vrot.slane %v5585, 1
        %v6734 = vrot.slane %v5586, 1
        %v6735 = vrot.slane %v5587, 1
        %v6736 = vrot.slane %v5588, 1
        %v6737 = vrot.slane %v5589, 1
        %v6738 = vrot.slane %v5590, 1
        %vm6755 = vcmask 1042432
        %vm6756 = vsmask.f32 2304
        %vm6757 = vmand %vm6755, %vm6756
        %v6758 = vsel %vm6757, %v6723, 0
        %v6759 = vsel %vm6757, %v6724, 0
        %v6760 = vsel %vm6757, %v6725, 0
        %v6761 = vsel %vm6757, %v6726, 0
        %v6762 = vsel %vm6757, %v6727, 0
        %v6763 = vsel %vm6757, %v6728, 0
        %v6764 = vsel %vm6757, %v6729, 0
        %v6765 = vsel %vm6757, %v6730, 0
        %v6766 = vsel %vm6757, %v6731, 0
        %v6767 = vsel %vm6757, %v6732, 0
        %v6768 = vsel %vm6757, %v6733, 0
        %v6769 = vsel %vm6757, %v6734, 0
        %v6770 = vsel %vm6757, %v6735, 0
        %v6771 = vsel %vm6757, %v6736, 0
        %v6772 = vsel %vm6757, %v6737, 0
        %v6773 = vsel %vm6757, %v6738, 0
        %v6790 = vunpack.c.l.b16 %v6758
        %v6791 = vunpack.c.l.b16 %v6759
        %v6792 = vunpack.c.l.b16 %v6760
        %v6793 = vunpack.c.l.b16 %v6761
        %v6794 = vunpack.c.l.b16 %v6762
        %v6795 = vunpack.c.l.b16 %v6763
        %v6796 = vunpack.c.l.b16 %v6764
        %v6797 = vunpack.c.l.b16 %v6765
        %v6798 = vunpack.c.l.b16 %v6766
        %v6799 = vunpack.c.l.b16 %v6767
        %v6800 = vunpack.c.l.b16 %v6768
        %v6801 = vunpack.c.l.b16 %v6769
        %v6802 = vunpack.c.l.b16 %v6770
        %v6803 = vunpack.c.l.b16 %v6771
        %v6804 = vunpack.c.l.b16 %v6772
        %v6805 = vunpack.c.l.b16 %v6773
        %s6806 = scalar_lea.vmem %s7, 384
        %v6807 = vld [vmem:[%s6806] sm:$0xf]
        %v6808 = vld [vmem:[%s6806 + $0x4] sm:$0xf]
        %v6809 = vld [vmem:[%s6806 + $0x8] sm:$0xf]
        %v6810 = vld [vmem:[%s6806 + $0xc] sm:$0xf]
        %v6811 = vld [vmem:[%s6806 + $0x10] sm:$0xf]
        %v6812 = vld [vmem:[%s6806 + $0x14] sm:$0xf]
        %v6813 = vld [vmem:[%s6806 + $0x18] sm:$0xf]
        %v6814 = vld [vmem:[%s6806 + $0x1c] sm:$0xf]
        %v6815 = vld [vmem:[%s6806 + $0x20] sm:$0xf]
        %v6816 = vld [vmem:[%s6806 + $0x24] sm:$0xf]
        %v6817 = vld [vmem:[%s6806 + $0x28] sm:$0xf]
        %v6818 = vld [vmem:[%s6806 + $0x2c] sm:$0xf]
        %v6819 = vld [vmem:[%s6806 + $0x30] sm:$0xf]
        %v6820 = vld [vmem:[%s6806 + $0x34] sm:$0xf]
        %v6821 = vld [vmem:[%s6806 + $0x38] sm:$0xf]
        %v6822 = vld [vmem:[%s6806 + $0x3c] sm:$0xf]
        %v6823 = vld [vmem:[%s6806 + $0x40] sm:$0xf]
        %v6824 = vld [vmem:[%s6806 + $0x44] sm:$0xf]
        %v6825 = vld [vmem:[%s6806 + $0x48] sm:$0xf]
        %v6826 = vld [vmem:[%s6806 + $0x4c] sm:$0xf]
        %v6827 = vld [vmem:[%s6806 + $0x50] sm:$0xf]
        %v6828 = vld [vmem:[%s6806 + $0x54] sm:$0xf]
        %v6829 = vld [vmem:[%s6806 + $0x58] sm:$0xf]
        %v6830 = vld [vmem:[%s6806 + $0x5c] sm:$0xf]
        %v6831 = vpack.c.b16 %v6792, %v6790
        %v6832 = vpack.c.b16 %v6793, %v6791
        %v6833 = vpack.c.b16 %v6796, %v6794
        %v6834 = vpack.c.b16 %v6797, %v6795
        %v6835 = vpack.c.b16 %v6800, %v6798
        %v6836 = vpack.c.b16 %v6801, %v6799
        %v6837 = vpack.c.b16 %v6804, %v6802
        %v6838 = vpack.c.b16 %v6805, %v6803
        %v6867 = vunpack.c.l.b16 %v6807
        %v6868 = vunpack.c.l.b16 %v6808
        %v6869 = vunpack.c.l.b16 %v6809
        %v6870 = vunpack.c.l.b16 %v6810
        %v6871 = vunpack.c.l.b16 %v6811
        %v6872 = vunpack.c.l.b16 %v6812
        %v6873 = vunpack.c.l.b16 %v6813
        %v6874 = vunpack.c.l.b16 %v6814
        %v6875 = vunpack.c.l.b16 %v6815
        %v6876 = vunpack.c.l.b16 %v6816
        %v6877 = vunpack.c.l.b16 %v6817
        %v6878 = vunpack.c.l.b16 %v6818
        %v6879 = vunpack.c.l.b16 %v6819
        %v6880 = vunpack.c.l.b16 %v6820
        %v6881 = vunpack.c.l.b16 %v6821
        %v6882 = vunpack.c.l.b16 %v6822
        %v6883 = vunpack.c.l.b16 %v6823
        %v6884 = vunpack.c.l.b16 %v6824
        %v6885 = vunpack.c.l.b16 %v6825
        %v6886 = vunpack.c.l.b16 %v6826
        %v6887 = vunpack.c.l.b16 %v6827
        %v6888 = vunpack.c.l.b16 %v6828
        %v6889 = vunpack.c.l.b16 %v6829
        %v6890 = vunpack.c.l.b16 %v6830
        %v6891 = vpack.c.b16 %v6868, %v6867
        %v6892 = vpack.c.b16 %v6870, %v6869
        %v6893 = vpack.c.b16 %v6872, %v6871
        %v6894 = vpack.c.b16 %v6874, %v6873
        %v6895 = vpack.c.b16 %v6876, %v6875
        %v6896 = vpack.c.b16 %v6878, %v6877
        %v6897 = vpack.c.b16 %v6880, %v6879
        %v6898 = vpack.c.b16 %v6882, %v6881
        %v6899 = vpack.c.b16 %v6884, %v6883
        %v6900 = vpack.c.b16 %v6886, %v6885
        %v6901 = vpack.c.b16 %v6888, %v6887
        %v6902 = vpack.c.b16 %v6890, %v6889
        %v6916 = vsel %vm5502, %v6832, 0
        %v6919 = vsel %vm5502, %v6834, 0
        %v6922 = vsel %vm5502, %v6836, 0
        %v6925 = vsel %vm5502, %v6838, 0
        %6927 = vmatpush.bf16.msra.mxu0 %v6898
        %6928 = vmatpush.bf16.msra.mxu0 %v6897
        %6929 = vmatpush.bf16.msra.mxu0 %v6896
        %6930 = vmatpush.bf16.msra.mxu0 %v6895
        %6931 = vmatpush.bf16.msra.mxu0 %v6894
        %6932 = vmatpush.bf16.msra.mxu0 %v6893
        %6933 = vmatpush.bf16.msra.mxu0 %v6892
        %6934 = vmatpush.bf16.msra.mxu0 %v6891
        %6935 = vmatmul.bf16.gmra.mxu0 %v6831
        %v6936 = vpop.f32.mrf.mxu0
        %v6937 = vadd.f32 0.0, %v6936
        %v6938 = vpop.f32.mrf.mxu0
        %v6939 = vadd.f32 0.0, %v6938
        %6940 = vmatmul.bf16.gmra.mxu0 %v6833
        %v6941 = vpop.f32.mrf.mxu0
        %v6942 = vadd.f32 0.0, %v6941
        %v6943 = vpop.f32.mrf.mxu0
        %v6944 = vadd.f32 0.0, %v6943
        %6945 = vmatmul.bf16.gmra.mxu0 %v6835
        %v6946 = vpop.f32.mrf.mxu0
        %v6947 = vadd.f32 0.0, %v6946
        %v6948 = vpop.f32.mrf.mxu0
        %v6949 = vadd.f32 0.0, %v6948
        %6950 = vmatmul.bf16.gmra.mxu0 %v6837
        %v6951 = vpop.f32.mrf.mxu0
        %v6952 = vadd.f32 0.0, %v6951
        %v6953 = vpop.f32.mrf.mxu0
        %v6954 = vadd.f32 0.0, %v6953
        %6955 = vdwg.mxu0
        %6956 = vmatpush.bf16.msra.mxu0 0
        %6957 = vmatpush.bf16.msra.mxu0 0
        %6958 = vmatpush.bf16.msra.mxu0 0
        %6959 = vmatpush.bf16.msra.mxu0 0
        %6960 = vmatpush.bf16.msra.mxu0 %v6902
        %6961 = vmatpush.bf16.msra.mxu0 %v6901
        %6962 = vmatpush.bf16.msra.mxu0 %v6900
        %6963 = vmatpush.bf16.msra.mxu0 %v6899
        %6964 = vmatmul.bf16.gmra.mxu0 %v6916
        %v6965 = vpop.f32.mrf.mxu0
        %v6966 = vadd.f32 %v6937, %v6965
        %v6967 = vpop.f32.mrf.mxu0
        %v6968 = vadd.f32 %v6939, %v6967
        %6969 = vmatmul.bf16.gmra.mxu0 %v6919
        %v6970 = vpop.f32.mrf.mxu0
        %v6971 = vadd.f32 %v6942, %v6970
        %v6972 = vpop.f32.mrf.mxu0
        %v6973 = vadd.f32 %v6944, %v6972
        %6974 = vmatmul.bf16.gmra.mxu0 %v6922
        %v6975 = vpop.f32.mrf.mxu0
        %v6976 = vadd.f32 %v6947, %v6975
        %v6977 = vpop.f32.mrf.mxu0
        %v6978 = vadd.f32 %v6949, %v6977
        %6979 = vmatmul.bf16.gmra.mxu0 %v6925
        %v6980 = vpop.f32.mrf.mxu0
        %v6981 = vadd.f32 %v6952, %v6980
        %v6982 = vpop.f32.mrf.mxu0
        %v6983 = vadd.f32 %v6954, %v6982
        %6984 = vdwg.mxu0
        %v6985 = vadd.f32 %v6715, %v6966
        %v6986 = vadd.f32 %v6716, %v6968
        %v6987 = vadd.f32 %v6717, %v6971
        %v6988 = vadd.f32 %v6718, %v6973
        %v6989 = vadd.f32 %v6719, %v6976
        %v6990 = vadd.f32 %v6720, %v6978
        %v6991 = vadd.f32 %v6721, %v6981
        %v6992 = vadd.f32 %v6722, %v6983
        %v6993 = vld [vmem:[%s8] sm:$0xff]
        %v6994 = vadd.f32 %v6985, %v6993
        %v6995 = vadd.f32 %v6986, %v6993
        %v6996 = vadd.f32 %v6987, %v6993
        %v6997 = vadd.f32 %v6988, %v6993
        %v6998 = vadd.f32 %v6989, %v6993
        %v6999 = vadd.f32 %v6990, %v6993
        %v7000 = vadd.f32 %v6991, %v6993
        %v7001 = vadd.f32 %v6992, %v6993
        %v7002 = vmax.f32 %v6994, 0.0
        %v7003 = vmax.f32 %v6995, 0.0
        %v7004 = vmax.f32 %v6996, 0.0
        %v7005 = vmax.f32 %v6997, 0.0
        %v7006 = vmax.f32 %v6998, 0.0
        %v7007 = vmax.f32 %v6999, 0.0
        %v7008 = vmax.f32 %v7000, 0.0
        %v7009 = vmax.f32 %v7001, 0.0
        %7018 = vrot.lane.b32.xlu0 %v7002, 64
        %v7019 = vpop.permute.xlu0 %7018
        %7020 = vrot.lane.b32.xlu0 %v7003, 64
        %v7021 = vpop.permute.xlu0 %7020
        %7022 = vrot.lane.b32.xlu0 %v7004, 64
        %v7023 = vpop.permute.xlu0 %7022
        %7024 = vrot.lane.b32.xlu0 %v7005, 64
        %v7025 = vpop.permute.xlu0 %7024
        %7026 = vrot.lane.b32.xlu0 %v7006, 64
        %v7027 = vpop.permute.xlu0 %7026
        %7028 = vrot.lane.b32.xlu0 %v7007, 64
        %v7029 = vpop.permute.xlu0 %7028
        %7030 = vrot.lane.b32.xlu0 %v7008, 64
        %v7031 = vpop.permute.xlu0 %7030
        %7032 = vrot.lane.b32.xlu0 %v7009, 64
        %v7033 = vpop.permute.xlu0 %7032
        %v7042 = vmax.f32 %v7002, %v7019
        %v7043 = vmax.f32 %v7003, %v7021
        %v7044 = vmax.f32 %v7004, %v7023
        %v7045 = vmax.f32 %v7005, %v7025
        %v7046 = vmax.f32 %v7006, %v7027
        %v7047 = vmax.f32 %v7007, %v7029
        %v7048 = vmax.f32 %v7008, %v7031
        %v7049 = vmax.f32 %v7009, %v7033
        %v7050 = vpack.c.bf16 %v7042, %v7042
        %v7051 = vpack.c.bf16 %v7043, %v7043
        %v7052 = vpack.c.bf16 %v7044, %v7044
        %v7053 = vpack.c.bf16 %v7045, %v7045
        %v7054 = vpack.c.bf16 %v7046, %v7046
        %v7055 = vpack.c.bf16 %v7047, %v7047
        %v7056 = vpack.c.bf16 %v7048, %v7048
        %v7057 = vpack.c.bf16 %v7049, %v7049
        %v7058 = vrot.slane %v7054, 4
        %vm7059 = vcmask 1047556
        %v7060 = vsel %vm7059, %v7058, %v7050
        %v7062 = vunpack.c.l.s4 1983009808
        %v7063 = vunpack.c.0.s8 %v7062
        %v7064 = vperm.slane %v7060, %v7063
        %v7065 = vrot.slane %v7056, 4
        %v7066 = vsel %vm7059, %v7065, %v7052
        %v7068 = vunpack.c.l.s4 1983009808
        %v7069 = vunpack.c.0.s8 %v7068
        %v7070 = vperm.slane %v7066, %v7069
        %v7071 = vrot.slane %v7070, 4
        %v7072 = vsel %vm7059, %v7071, %v7064
        %v7073 = vrot.slane %v7064, 4
        %v7074 = vsel %vm7059, %v7070, %v7073
        %v7076 = vunpack.c.l.s4 1934713408
        %v7077 = vunpack.c.0.s8 %v7076
        %v7078 = vperm.slane %v7072, %v7077
        %v7080 = vunpack.c.l.s4 1934713408
        %v7081 = vunpack.c.0.s8 %v7080
        %v7082 = vperm.slane %v7074, %v7081
        %v7083 = vrot.slane %v7078, 4
        %v7084 = vsel %vm7059, 0, %v7083
        %v7085 = vrot.slane %v7082, 4
        %v7086 = vsel %vm7059, 0, %v7085
        %v7087 = vrot.slane %v7055, 4
        %v7088 = vsel %vm7059, %v7087, %v7051
        %v7090 = vunpack.c.l.s4 1983009808
        %v7091 = vunpack.c.0.s8 %v7090
        %v7092 = vperm.slane %v7088, %v7091
        %v7093 = vrot.slane %v7057, 4
        %v7094 = vsel %vm7059, %v7093, %v7053
        %v7096 = vunpack.c.l.s4 1983009808
        %v7097 = vunpack.c.0.s8 %v7096
        %v7098 = vperm.slane %v7094, %v7097
        %v7099 = vrot.slane %v7098, 4
        %v7100 = vsel %vm7059, %v7099, %v7092
        %v7101 = vrot.slane %v7092, 4
        %v7102 = vsel %vm7059, %v7098, %v7101
        %v7104 = vunpack.c.l.s4 1934713408
        %v7105 = vunpack.c.0.s8 %v7104
        %v7106 = vperm.slane %v7100, %v7105
        %v7108 = vunpack.c.l.s4 1934713408
        %v7109 = vunpack.c.0.s8 %v7108
        %v7110 = vperm.slane %v7102, %v7109
        %v7111 = vrot.slane %v7106, 4
        %v7112 = vsel %vm7059, 0, %v7111
        %v7113 = vrot.slane %v7110, 4
        %v7114 = vsel %vm7059, 0, %v7113
        %v7117 = vpack.i.b16 %v7106, %v7078
        %v7118 = vshrl.u32 %v7078, 16
        %v7119 = vshrl.u32 %v7106, 16
        %v7120 = vpack.i.b16 %v7119, %v7118
        %v7123 = vpack.i.b16 %v7112, %v7084
        %v7124 = vshrl.u32 %v7084, 16
        %v7125 = vshrl.u32 %v7112, 16
        %v7126 = vpack.i.b16 %v7125, %v7124
        %v7129 = vpack.i.b16 %v7110, %v7082
        %v7130 = vshrl.u32 %v7082, 16
        %v7131 = vshrl.u32 %v7110, 16
        %v7132 = vpack.i.b16 %v7131, %v7130
        %v7135 = vpack.i.b16 %v7114, %v7086
        %v7136 = vshrl.u32 %v7086, 16
        %v7137 = vshrl.u32 %v7114, 16
        %v7138 = vpack.i.b16 %v7137, %v7136
        %v7139 = vunpack.c.l.b16 %v7120
        %v7140 = vpack.c.b16 %v7139, %v7139
        %7141 = vrot.lane.b32.xlu0 %v7140, 64
        %v7142 = vpop.permute.xlu0 %7141
        %v7143 = vunpack.c.l.b16 %v7126
        %v7144 = vpack.c.b16 %v7143, %v7143
        %7145 = vrot.lane.b32.xlu0 %v7144, 64
        %v7146 = vpop.permute.xlu0 %7145
        %v7147 = vunpack.c.l.b16 %v7132
        %v7148 = vpack.c.b16 %v7147, %v7147
        %7149 = vrot.lane.b32.xlu0 %v7148, 64
        %v7150 = vpop.permute.xlu0 %7149
        %v7151 = vunpack.c.l.b16 %v7138
        %v7152 = vpack.c.b16 %v7151, %v7151
        %7153 = vrot.lane.b32.xlu0 %v7152, 64
        %v7154 = vpop.permute.xlu0 %7153
        %v7157 = vsel %vm5502, %v7117, %v7142
        %v7161 = vsel %vm5502, %v7123, %v7146
        %v7165 = vsel %vm5502, %v7129, %v7150
        %v7169 = vsel %vm5502, %v7135, %v7154
        %v7171 = vld [vmem:[#allocation7] sm:$0xff]
        %v7172 = vld [vmem:[#allocation7 + $0x8] sm:$0xff]
        %v7173 = vld [vmem:[#allocation7 + $0x10] sm:$0xff]
        %v7174 = vld [vmem:[#allocation7 + $0x18] sm:$0xff]
        %v7175 = vld [vmem:[#allocation7 + $0x20] sm:$0xff]
        %v7176 = vld [vmem:[#allocation7 + $0x28] sm:$0xff]
        %v7177 = vld [vmem:[#allocation7 + $0x30] sm:$0xff]
        %v7178 = vld [vmem:[#allocation7 + $0x38] sm:$0xff]
        %v7179 = vld [vmem:[#allocation7 + $0x40] sm:$0xff]
        %v7180 = vld [vmem:[#allocation7 + $0x48] sm:$0xff]
        %v7181 = vld [vmem:[#allocation7 + $0x50] sm:$0xff]
        %v7182 = vld [vmem:[#allocation7 + $0x58] sm:$0xff]
        %v7183 = vld [vmem:[#allocation7 + $0x60] sm:$0xff]
        %v7184 = vld [vmem:[#allocation7 + $0x68] sm:$0xff]
        %v7185 = vld [vmem:[#allocation7 + $0x70] sm:$0xff]
        %v7186 = vld [vmem:[#allocation7 + $0x78] sm:$0xff]
        %v7187 = vld [vmem:[#allocation7 + $0x80] sm:$0xff]
        %v7188 = vld [vmem:[#allocation7 + $0x88] sm:$0xff]
        %v7189 = vld [vmem:[#allocation7 + $0x90] sm:$0xff]
        %v7190 = vld [vmem:[#allocation7 + $0x98] sm:$0xff]
        %v7191 = vld [vmem:[#allocation7 + $0xa0] sm:$0xff]
        %v7192 = vld [vmem:[#allocation7 + $0xa8] sm:$0xff]
        %v7193 = vld [vmem:[#allocation7 + $0xb0] sm:$0xff]
        %v7194 = vld [vmem:[#allocation7 + $0xb8] sm:$0xff]
        %v7195 = vld [vmem:[#allocation7 + $0xc0] sm:$0xff]
        %v7196 = vld [vmem:[#allocation7 + $0xc8] sm:$0xff]
        %v7197 = vld [vmem:[#allocation7 + $0xd0] sm:$0xff]
        %v7198 = vld [vmem:[#allocation7 + $0xd8] sm:$0xff]
        %v7199 = vld [vmem:[#allocation7 + $0xe0] sm:$0xff]
        %v7200 = vld [vmem:[#allocation7 + $0xe8] sm:$0xff]
        %v7201 = vld [vmem:[#allocation7 + $0xf0] sm:$0xff]
        %v7202 = vld [vmem:[#allocation7 + $0xf8] sm:$0xff]
        %v7203 = vld [vmem:[#allocation7 + $0x100] sm:$0xff]
        %v7204 = vld [vmem:[#allocation7 + $0x108] sm:$0xff]
        %v7205 = vld [vmem:[#allocation7 + $0x110] sm:$0xff]
        %v7206 = vld [vmem:[#allocation7 + $0x118] sm:$0xff]
        %v7207 = vld [vmem:[#allocation7 + $0x120] sm:$0xff]
        %v7208 = vld [vmem:[#allocation7 + $0x128] sm:$0xff]
        %v7209 = vld [vmem:[#allocation7 + $0x130] sm:$0xff]
        %v7210 = vld [vmem:[#allocation7 + $0x138] sm:$0xff]
        %v7211 = vld [vmem:[#allocation7 + $0x140] sm:$0xff]
        %v7212 = vld [vmem:[#allocation7 + $0x148] sm:$0xff]
        %v7213 = vld [vmem:[#allocation7 + $0x150] sm:$0xff]
        %v7214 = vld [vmem:[#allocation7 + $0x158] sm:$0xff]
        %v7215 = vld [vmem:[#allocation7 + $0x160] sm:$0xff]
        %v7216 = vld [vmem:[#allocation7 + $0x168] sm:$0xff]
        %v7217 = vld [vmem:[#allocation7 + $0x170] sm:$0xff]
        %v7218 = vld [vmem:[#allocation7 + $0x178] sm:$0xff]
        %v7219 = vld [vmem:[#allocation7 + $0x180] sm:$0xff]
        %v7220 = vld [vmem:[#allocation7 + $0x188] sm:$0xff]
        %v7221 = vld [vmem:[#allocation7 + $0x190] sm:$0xff]
        %v7222 = vld [vmem:[#allocation7 + $0x198] sm:$0xff]
        %v7223 = vld [vmem:[#allocation7 + $0x1a0] sm:$0xff]
        %v7224 = vld [vmem:[#allocation7 + $0x1a8] sm:$0xff]
        %v7225 = vld [vmem:[#allocation7 + $0x1b0] sm:$0xff]
        %v7226 = vld [vmem:[#allocation7 + $0x1b8] sm:$0xff]
        %v7227 = vld [vmem:[#allocation7 + $0x1c0] sm:$0xff]
        %v7228 = vld [vmem:[#allocation7 + $0x1c8] sm:$0xff]
        %v7229 = vld [vmem:[#allocation7 + $0x1d0] sm:$0xff]
        %v7230 = vld [vmem:[#allocation7 + $0x1d8] sm:$0xff]
        %v7231 = vld [vmem:[#allocation7 + $0x1e0] sm:$0xff]
        %v7232 = vld [vmem:[#allocation7 + $0x1e8] sm:$0xff]
        %v7233 = vld [vmem:[#allocation7 + $0x1f0] sm:$0xff]
        %v7234 = vld [vmem:[#allocation7 + $0x1f8] sm:$0xff]
        %v7235 = vld [vmem:[#allocation7 + $0x200] sm:$0xff]
        %v7236 = vld [vmem:[#allocation7 + $0x208] sm:$0xff]
        %v7237 = vld [vmem:[#allocation7 + $0x210] sm:$0xff]
        %v7238 = vld [vmem:[#allocation7 + $0x218] sm:$0xff]
        %v7239 = vld [vmem:[#allocation7 + $0x220] sm:$0xff]
        %v7240 = vld [vmem:[#allocation7 + $0x228] sm:$0xff]
        %v7241 = vld [vmem:[#allocation7 + $0x230] sm:$0xff]
        %v7242 = vld [vmem:[#allocation7 + $0x238] sm:$0xff]
        %v7243 = vld [vmem:[#allocation7 + $0x240] sm:$0xff]
        %v7244 = vld [vmem:[#allocation7 + $0x248] sm:$0xff]
        %v7245 = vld [vmem:[#allocation7 + $0x250] sm:$0xff]
        %v7246 = vld [vmem:[#allocation7 + $0x258] sm:$0xff]
        %v7247 = vld [vmem:[#allocation7 + $0x260] sm:$0xff]
        %v7248 = vld [vmem:[#allocation7 + $0x268] sm:$0xff]
        %v7249 = vld [vmem:[#allocation7 + $0x270] sm:$0xff]
        %v7250 = vld [vmem:[#allocation7 + $0x278] sm:$0xff]
        %v7251 = vld [vmem:[#allocation7 + $0x280] sm:$0xff]
        %v7252 = vld [vmem:[#allocation7 + $0x288] sm:$0xff]
        %v7253 = vld [vmem:[#allocation7 + $0x290] sm:$0xff]
        %v7254 = vld [vmem:[#allocation7 + $0x298] sm:$0xff]
        %v7255 = vld [vmem:[#allocation7 + $0x2a0] sm:$0xff]
        %v7256 = vld [vmem:[#allocation7 + $0x2a8] sm:$0xff]
        %v7257 = vld [vmem:[#allocation7 + $0x2b0] sm:$0xff]
        %v7258 = vld [vmem:[#allocation7 + $0x2b8] sm:$0xff]
        %v7259 = vld [vmem:[#allocation7 + $0x2c0] sm:$0xff]
        %v7260 = vld [vmem:[#allocation7 + $0x2c8] sm:$0xff]
        %v7261 = vld [vmem:[#allocation7 + $0x2d0] sm:$0xff]
        %v7262 = vld [vmem:[#allocation7 + $0x2d8] sm:$0xff]
        %v7263 = vld [vmem:[#allocation7 + $0x2e0] sm:$0xff]
        %v7264 = vld [vmem:[#allocation7 + $0x2e8] sm:$0xff]
        %v7265 = vld [vmem:[#allocation7 + $0x2f0] sm:$0xff]
        %v7266 = vld [vmem:[#allocation7 + $0x2f8] sm:$0xff]
        %v7267 = vld [vmem:[#allocation7 + $0x300] sm:$0xff]
        %v7268 = vld [vmem:[#allocation7 + $0x308] sm:$0xff]
        %v7269 = vld [vmem:[#allocation7 + $0x310] sm:$0xff]
        %v7270 = vld [vmem:[#allocation7 + $0x318] sm:$0xff]
        %v7271 = vld [vmem:[#allocation7 + $0x320] sm:$0xff]
        %v7272 = vld [vmem:[#allocation7 + $0x328] sm:$0xff]
        %v7273 = vld [vmem:[#allocation7 + $0x330] sm:$0xff]
        %v7274 = vld [vmem:[#allocation7 + $0x338] sm:$0xff]
        %v7275 = vld [vmem:[#allocation7 + $0x340] sm:$0xff]
        %v7276 = vld [vmem:[#allocation7 + $0x348] sm:$0xff]
        %v7277 = vld [vmem:[#allocation7 + $0x350] sm:$0xff]
        %v7278 = vld [vmem:[#allocation7 + $0x358] sm:$0xff]
        %v7279 = vld [vmem:[#allocation7 + $0x360] sm:$0xff]
        %v7280 = vld [vmem:[#allocation7 + $0x368] sm:$0xff]
        %v7281 = vld [vmem:[#allocation7 + $0x370] sm:$0xff]
        %v7282 = vld [vmem:[#allocation7 + $0x378] sm:$0xff]
        %v7283 = vld [vmem:[#allocation7 + $0x380] sm:$0xff]
        %v7284 = vld [vmem:[#allocation7 + $0x388] sm:$0xff]
        %v7285 = vld [vmem:[#allocation7 + $0x390] sm:$0xff]
        %v7286 = vld [vmem:[#allocation7 + $0x398] sm:$0xff]
        %v7287 = vld [vmem:[#allocation7 + $0x3a0] sm:$0xff]
        %v7288 = vld [vmem:[#allocation7 + $0x3a8] sm:$0xff]
        %v7289 = vld [vmem:[#allocation7 + $0x3b0] sm:$0xff]
        %v7290 = vld [vmem:[#allocation7 + $0x3b8] sm:$0xff]
        %v7291 = vld [vmem:[#allocation7 + $0x3c0] sm:$0xff]
        %v7292 = vld [vmem:[#allocation7 + $0x3c8] sm:$0xff]
        %v7293 = vld [vmem:[#allocation7 + $0x3d0] sm:$0xff]
        %v7294 = vld [vmem:[#allocation7 + $0x3d8] sm:$0xff]
        %v7295 = vld [vmem:[#allocation7 + $0x3e0] sm:$0xff]
        %v7296 = vld [vmem:[#allocation7 + $0x3e8] sm:$0xff]
        %v7297 = vld [vmem:[#allocation7 + $0x3f0] sm:$0xff]
        %v7298 = vld [vmem:[#allocation7 + $0x3f8] sm:$0xff]
        %v7299 = vld [vmem:[#allocation7 + $0x400] sm:$0xff]
        %v7300 = vld [vmem:[#allocation7 + $0x408] sm:$0xff]
        %v7301 = vld [vmem:[#allocation7 + $0x410] sm:$0xff]
        %v7302 = vld [vmem:[#allocation7 + $0x418] sm:$0xff]
        %v7303 = vld [vmem:[#allocation7 + $0x420] sm:$0xff]
        %v7304 = vld [vmem:[#allocation7 + $0x428] sm:$0xff]
        %v7305 = vld [vmem:[#allocation7 + $0x430] sm:$0xff]
        %v7306 = vld [vmem:[#allocation7 + $0x438] sm:$0xff]
        %v7307 = vld [vmem:[#allocation7 + $0x440] sm:$0xff]
        %v7308 = vld [vmem:[#allocation7 + $0x448] sm:$0xff]
        %v7309 = vld [vmem:[#allocation7 + $0x450] sm:$0xff]
        %v7310 = vld [vmem:[#allocation7 + $0x458] sm:$0xff]
        %v7311 = vld [vmem:[#allocation7 + $0x460] sm:$0xff]
        %v7312 = vld [vmem:[#allocation7 + $0x468] sm:$0xff]
        %v7313 = vld [vmem:[#allocation7 + $0x470] sm:$0xff]
        %v7314 = vld [vmem:[#allocation7 + $0x478] sm:$0xff]
        %v7315 = vld [vmem:[#allocation7 + $0x480] sm:$0xff]
        %v7316 = vld [vmem:[#allocation7 + $0x488] sm:$0xff]
        %v7317 = vld [vmem:[#allocation7 + $0x490] sm:$0xff]
        %v7318 = vld [vmem:[#allocation7 + $0x498] sm:$0xff]
        %v7319 = vld [vmem:[#allocation7 + $0x4a0] sm:$0xff]
        %v7320 = vld [vmem:[#allocation7 + $0x4a8] sm:$0xff]
        %v7321 = vld [vmem:[#allocation7 + $0x4b0] sm:$0xff]
        %v7322 = vld [vmem:[#allocation7 + $0x4b8] sm:$0xff]
        %v7323 = vld [vmem:[#allocation7 + $0x4c0] sm:$0xff]
        %v7324 = vld [vmem:[#allocation7 + $0x4c8] sm:$0xff]
        %v7325 = vld [vmem:[#allocation7 + $0x4d0] sm:$0xff]
        %v7326 = vld [vmem:[#allocation7 + $0x4d8] sm:$0xff]
        %v7327 = vld [vmem:[#allocation7 + $0x4e0] sm:$0xff]
        %v7328 = vld [vmem:[#allocation7 + $0x4e8] sm:$0xff]
        %v7329 = vld [vmem:[#allocation7 + $0x4f0] sm:$0xff]
        %v7330 = vld [vmem:[#allocation7 + $0x4f8] sm:$0xff]
        %v7331 = vld [vmem:[#allocation7 + $0x500] sm:$0xff]
        %v7332 = vld [vmem:[#allocation7 + $0x508] sm:$0xff]
        %v7333 = vld [vmem:[#allocation7 + $0x510] sm:$0xff]
        %v7334 = vld [vmem:[#allocation7 + $0x518] sm:$0xff]
        %v7335 = vld [vmem:[#allocation7 + $0x520] sm:$0xff]
        %v7336 = vld [vmem:[#allocation7 + $0x528] sm:$0xff]
        %v7337 = vld [vmem:[#allocation7 + $0x530] sm:$0xff]
        %v7338 = vld [vmem:[#allocation7 + $0x538] sm:$0xff]
        %v7339 = vld [vmem:[#allocation7 + $0x540] sm:$0xff]
        %v7340 = vld [vmem:[#allocation7 + $0x548] sm:$0xff]
        %v7341 = vld [vmem:[#allocation7 + $0x550] sm:$0xff]
        %v7342 = vld [vmem:[#allocation7 + $0x558] sm:$0xff]
        %v7343 = vld [vmem:[#allocation7 + $0x560] sm:$0xff]
        %v7344 = vld [vmem:[#allocation7 + $0x568] sm:$0xff]
        %v7345 = vld [vmem:[#allocation7 + $0x570] sm:$0xff]
        %v7346 = vld [vmem:[#allocation7 + $0x578] sm:$0xff]
        %v7347 = vld [vmem:[#allocation7 + $0x580] sm:$0xff]
        %v7348 = vld [vmem:[#allocation7 + $0x588] sm:$0xff]
        %v7349 = vld [vmem:[#allocation7 + $0x590] sm:$0xff]
        %v7350 = vld [vmem:[#allocation7 + $0x598] sm:$0xff]
        %v7351 = vld [vmem:[#allocation7 + $0x5a0] sm:$0xff]
        %v7352 = vld [vmem:[#allocation7 + $0x5a8] sm:$0xff]
        %v7353 = vld [vmem:[#allocation7 + $0x5b0] sm:$0xff]
        %v7354 = vld [vmem:[#allocation7 + $0x5b8] sm:$0xff]
        %v7355 = vld [vmem:[#allocation7 + $0x5c0] sm:$0xff]
        %v7356 = vld [vmem:[#allocation7 + $0x5c8] sm:$0xff]
        %v7357 = vld [vmem:[#allocation7 + $0x5d0] sm:$0xff]
        %v7358 = vld [vmem:[#allocation7 + $0x5d8] sm:$0xff]
        %v7359 = vld [vmem:[#allocation7 + $0x5e0] sm:$0xff]
        %v7360 = vld [vmem:[#allocation7 + $0x5e8] sm:$0xff]
        %v7361 = vld [vmem:[#allocation7 + $0x5f0] sm:$0xff]
        %v7362 = vld [vmem:[#allocation7 + $0x5f8] sm:$0xff]
        %v7363 = vld [vmem:[#allocation7 + $0x600] sm:$0xff]
        %v7364 = vld [vmem:[#allocation7 + $0x608] sm:$0xff]
        %v7365 = vld [vmem:[#allocation7 + $0x610] sm:$0xff]
        %v7366 = vld [vmem:[#allocation7 + $0x618] sm:$0xff]
        %v7367 = vld [vmem:[#allocation7 + $0x620] sm:$0xff]
        %v7368 = vld [vmem:[#allocation7 + $0x628] sm:$0xff]
        %v7369 = vld [vmem:[#allocation7 + $0x630] sm:$0xff]
        %v7370 = vld [vmem:[#allocation7 + $0x638] sm:$0xff]
        %v7371 = vld [vmem:[#allocation7 + $0x640] sm:$0xff]
        %v7372 = vld [vmem:[#allocation7 + $0x648] sm:$0xff]
        %v7373 = vld [vmem:[#allocation7 + $0x650] sm:$0xff]
        %v7374 = vld [vmem:[#allocation7 + $0x658] sm:$0xff]
        %v7375 = vld [vmem:[#allocation7 + $0x660] sm:$0xff]
        %v7376 = vld [vmem:[#allocation7 + $0x668] sm:$0xff]
        %v7377 = vld [vmem:[#allocation7 + $0x670] sm:$0xff]
        %v7378 = vld [vmem:[#allocation7 + $0x678] sm:$0xff]
        %v7379 = vld [vmem:[#allocation7 + $0x680] sm:$0xff]
        %v7380 = vld [vmem:[#allocation7 + $0x688] sm:$0xff]
        %v7381 = vld [vmem:[#allocation7 + $0x690] sm:$0xff]
        %v7382 = vld [vmem:[#allocation7 + $0x698] sm:$0xff]
        %v7383 = vld [vmem:[#allocation7 + $0x6a0] sm:$0xff]
        %v7384 = vld [vmem:[#allocation7 + $0x6a8] sm:$0xff]
        %v7385 = vld [vmem:[#allocation7 + $0x6b0] sm:$0xff]
        %v7386 = vld [vmem:[#allocation7 + $0x6b8] sm:$0xff]
        %v7387 = vld [vmem:[#allocation7 + $0x6c0] sm:$0xff]
        %v7388 = vld [vmem:[#allocation7 + $0x6c8] sm:$0xff]
        %v7389 = vld [vmem:[#allocation7 + $0x6d0] sm:$0xff]
        %v7390 = vld [vmem:[#allocation7 + $0x6d8] sm:$0xff]
        %v7391 = vld [vmem:[#allocation7 + $0x6e0] sm:$0xff]
        %v7392 = vld [vmem:[#allocation7 + $0x6e8] sm:$0xff]
        %v7393 = vld [vmem:[#allocation7 + $0x6f0] sm:$0xff]
        %v7394 = vld [vmem:[#allocation7 + $0x6f8] sm:$0xff]
        %v7395 = vld [vmem:[#allocation7 + $0x700] sm:$0xff]
        %v7396 = vld [vmem:[#allocation7 + $0x708] sm:$0xff]
        %v7397 = vld [vmem:[#allocation7 + $0x710] sm:$0xff]
        %v7398 = vld [vmem:[#allocation7 + $0x718] sm:$0xff]
        %v7399 = vld [vmem:[#allocation7 + $0x720] sm:$0xff]
        %v7400 = vld [vmem:[#allocation7 + $0x728] sm:$0xff]
        %v7401 = vld [vmem:[#allocation7 + $0x730] sm:$0xff]
        %v7402 = vld [vmem:[#allocation7 + $0x738] sm:$0xff]
        %v7403 = vld [vmem:[#allocation7 + $0x740] sm:$0xff]
        %v7404 = vld [vmem:[#allocation7 + $0x748] sm:$0xff]
        %v7405 = vld [vmem:[#allocation7 + $0x750] sm:$0xff]
        %v7406 = vld [vmem:[#allocation7 + $0x758] sm:$0xff]
        %v7407 = vld [vmem:[#allocation7 + $0x760] sm:$0xff]
        %v7408 = vld [vmem:[#allocation7 + $0x768] sm:$0xff]
        %v7409 = vld [vmem:[#allocation7 + $0x770] sm:$0xff]
        %v7410 = vld [vmem:[#allocation7 + $0x778] sm:$0xff]
        %v7411 = vld [vmem:[#allocation7 + $0x780] sm:$0xff]
        %v7412 = vld [vmem:[#allocation7 + $0x788] sm:$0xff]
        %v7413 = vld [vmem:[#allocation7 + $0x790] sm:$0xff]
        %v7414 = vld [vmem:[#allocation7 + $0x798] sm:$0xff]
        %v7415 = vld [vmem:[#allocation7 + $0x7a0] sm:$0xff]
        %v7416 = vld [vmem:[#allocation7 + $0x7a8] sm:$0xff]
        %v7417 = vld [vmem:[#allocation7 + $0x7b0] sm:$0xff]
        %v7418 = vld [vmem:[#allocation7 + $0x7b8] sm:$0xff]
        %v7419 = vld [vmem:[#allocation7 + $0x7c0] sm:$0xff]
        %v7420 = vld [vmem:[#allocation7 + $0x7c8] sm:$0xff]
        %v7421 = vld [vmem:[#allocation7 + $0x7d0] sm:$0xff]
        %v7422 = vld [vmem:[#allocation7 + $0x7d8] sm:$0xff]
        %v7423 = vld [vmem:[#allocation7 + $0x7e0] sm:$0xff]
        %v7424 = vld [vmem:[#allocation7 + $0x7e8] sm:$0xff]
        %v7425 = vld [vmem:[#allocation7 + $0x7f0] sm:$0xff]
        %v7426 = vld [vmem:[#allocation7 + $0x7f8] sm:$0xff]
        %v7427 = vld [vmem:[%s10] sm:$0xff]
        %v7429 = vperm.slane %v7427, 0
        %v7430 = vperm.slane %v7427, 1
        %v7431 = vperm.slane %v7427, 2
        %v7432 = vperm.slane %v7427, 3
        %v7433 = vperm.slane %v7427, 4
        %v7434 = vperm.slane %v7427, 5
        %v7435 = vperm.slane %v7427, 6
        %v7436 = vperm.slane %v7427, 7
        %v7701 = vunpack.c.l.b16 %v7171
        %v7702 = vunpack.c.h.b16 %v7171
        %v7703 = vunpack.c.l.b16 %v7172
        %v7704 = vunpack.c.h.b16 %v7172
        %v7705 = vunpack.c.l.b16 %v7173
        %v7706 = vunpack.c.h.b16 %v7173
        %v7707 = vunpack.c.l.b16 %v7174
        %v7708 = vunpack.c.h.b16 %v7174
        %v7709 = vunpack.c.l.b16 %v7175
        %v7710 = vunpack.c.h.b16 %v7175
        %v7711 = vunpack.c.l.b16 %v7176
        %v7712 = vunpack.c.h.b16 %v7176
        %v7713 = vunpack.c.l.b16 %v7177
        %v7714 = vunpack.c.h.b16 %v7177
        %v7715 = vunpack.c.l.b16 %v7178
        %v7716 = vunpack.c.h.b16 %v7178
        %v7717 = vunpack.c.l.b16 %v7179
        %v7718 = vunpack.c.h.b16 %v7179
        %v7719 = vunpack.c.l.b16 %v7180
        %v7720 = vunpack.c.h.b16 %v7180
        %v7721 = vunpack.c.l.b16 %v7181
        %v7722 = vunpack.c.h.b16 %v7181
        %v7723 = vunpack.c.l.b16 %v7182
        %v7724 = vunpack.c.h.b16 %v7182
        %v7725 = vunpack.c.l.b16 %v7183
        %v7726 = vunpack.c.h.b16 %v7183
        %v7727 = vunpack.c.l.b16 %v7184
        %v7728 = vunpack.c.h.b16 %v7184
        %v7729 = vunpack.c.l.b16 %v7185
        %v7730 = vunpack.c.h.b16 %v7185
        %v7731 = vunpack.c.l.b16 %v7186
        %v7732 = vunpack.c.h.b16 %v7186
        %v7733 = vunpack.c.l.b16 %v7187
        %v7734 = vunpack.c.h.b16 %v7187
        %v7735 = vunpack.c.l.b16 %v7188
        %v7736 = vunpack.c.h.b16 %v7188
        %v7737 = vunpack.c.l.b16 %v7189
        %v7738 = vunpack.c.h.b16 %v7189
        %v7739 = vunpack.c.l.b16 %v7190
        %v7740 = vunpack.c.h.b16 %v7190
        %v7741 = vunpack.c.l.b16 %v7191
        %v7742 = vunpack.c.h.b16 %v7191
        %v7743 = vunpack.c.l.b16 %v7192
        %v7744 = vunpack.c.h.b16 %v7192
        %v7745 = vunpack.c.l.b16 %v7193
        %v7746 = vunpack.c.h.b16 %v7193
        %v7747 = vunpack.c.l.b16 %v7194
        %v7748 = vunpack.c.h.b16 %v7194
        %v7749 = vunpack.c.l.b16 %v7195
        %v7750 = vunpack.c.h.b16 %v7195
        %v7751 = vunpack.c.l.b16 %v7196
        %v7752 = vunpack.c.h.b16 %v7196
        %v7753 = vunpack.c.l.b16 %v7197
        %v7754 = vunpack.c.h.b16 %v7197
        %v7755 = vunpack.c.l.b16 %v7198
        %v7756 = vunpack.c.h.b16 %v7198
        %v7757 = vunpack.c.l.b16 %v7199
        %v7758 = vunpack.c.h.b16 %v7199
        %v7759 = vunpack.c.l.b16 %v7200
        %v7760 = vunpack.c.h.b16 %v7200
        %v7761 = vunpack.c.l.b16 %v7201
        %v7762 = vunpack.c.h.b16 %v7201
        %v7763 = vunpack.c.l.b16 %v7202
        %v7764 = vunpack.c.h.b16 %v7202
        %v7765 = vunpack.c.l.b16 %v7203
        %v7766 = vunpack.c.h.b16 %v7203
        %v7767 = vunpack.c.l.b16 %v7204
        %v7768 = vunpack.c.h.b16 %v7204
        %v7769 = vunpack.c.l.b16 %v7205
        %v7770 = vunpack.c.h.b16 %v7205
        %v7771 = vunpack.c.l.b16 %v7206
        %v7772 = vunpack.c.h.b16 %v7206
        %v7773 = vunpack.c.l.b16 %v7207
        %v7774 = vunpack.c.h.b16 %v7207
        %v7775 = vunpack.c.l.b16 %v7208
        %v7776 = vunpack.c.h.b16 %v7208
        %v7777 = vunpack.c.l.b16 %v7209
        %v7778 = vunpack.c.h.b16 %v7209
        %v7779 = vunpack.c.l.b16 %v7210
        %v7780 = vunpack.c.h.b16 %v7210
        %v7781 = vunpack.c.l.b16 %v7211
        %v7782 = vunpack.c.h.b16 %v7211
        %v7783 = vunpack.c.l.b16 %v7212
        %v7784 = vunpack.c.h.b16 %v7212
        %v7785 = vunpack.c.l.b16 %v7213
        %v7786 = vunpack.c.h.b16 %v7213
        %v7787 = vunpack.c.l.b16 %v7214
        %v7788 = vunpack.c.h.b16 %v7214
        %v7789 = vunpack.c.l.b16 %v7215
        %v7790 = vunpack.c.h.b16 %v7215
        %v7791 = vunpack.c.l.b16 %v7216
        %v7792 = vunpack.c.h.b16 %v7216
        %v7793 = vunpack.c.l.b16 %v7217
        %v7794 = vunpack.c.h.b16 %v7217
        %v7795 = vunpack.c.l.b16 %v7218
        %v7796 = vunpack.c.h.b16 %v7218
        %v7797 = vunpack.c.l.b16 %v7219
        %v7798 = vunpack.c.h.b16 %v7219
        %v7799 = vunpack.c.l.b16 %v7220
        %v7800 = vunpack.c.h.b16 %v7220
        %v7801 = vunpack.c.l.b16 %v7221
        %v7802 = vunpack.c.h.b16 %v7221
        %v7803 = vunpack.c.l.b16 %v7222
        %v7804 = vunpack.c.h.b16 %v7222
        %v7805 = vunpack.c.l.b16 %v7223
        %v7806 = vunpack.c.h.b16 %v7223
        %v7807 = vunpack.c.l.b16 %v7224
        %v7808 = vunpack.c.h.b16 %v7224
        %v7809 = vunpack.c.l.b16 %v7225
        %v7810 = vunpack.c.h.b16 %v7225
        %v7811 = vunpack.c.l.b16 %v7226
        %v7812 = vunpack.c.h.b16 %v7226
        %v7813 = vunpack.c.l.b16 %v7227
        %v7814 = vunpack.c.h.b16 %v7227
        %v7815 = vunpack.c.l.b16 %v7228
        %v7816 = vunpack.c.h.b16 %v7228
        %v7817 = vunpack.c.l.b16 %v7229
        %v7818 = vunpack.c.h.b16 %v7229
        %v7819 = vunpack.c.l.b16 %v7230
        %v7820 = vunpack.c.h.b16 %v7230
        %v7821 = vunpack.c.l.b16 %v7231
        %v7822 = vunpack.c.h.b16 %v7231
        %v7823 = vunpack.c.l.b16 %v7232
        %v7824 = vunpack.c.h.b16 %v7232
        %v7825 = vunpack.c.l.b16 %v7233
        %v7826 = vunpack.c.h.b16 %v7233
        %v7827 = vunpack.c.l.b16 %v7234
        %v7828 = vunpack.c.h.b16 %v7234
        %v7829 = vunpack.c.l.b16 %v7235
        %v7830 = vunpack.c.h.b16 %v7235
        %v7831 = vunpack.c.l.b16 %v7236
        %v7832 = vunpack.c.h.b16 %v7236
        %v7833 = vunpack.c.l.b16 %v7237
        %v7834 = vunpack.c.h.b16 %v7237
        %v7835 = vunpack.c.l.b16 %v7238
        %v7836 = vunpack.c.h.b16 %v7238
        %v7837 = vunpack.c.l.b16 %v7239
        %v7838 = vunpack.c.h.b16 %v7239
        %v7839 = vunpack.c.l.b16 %v7240
        %v7840 = vunpack.c.h.b16 %v7240
        %v7841 = vunpack.c.l.b16 %v7241
        %v7842 = vunpack.c.h.b16 %v7241
        %v7843 = vunpack.c.l.b16 %v7242
        %v7844 = vunpack.c.h.b16 %v7242
        %v7845 = vunpack.c.l.b16 %v7243
        %v7846 = vunpack.c.h.b16 %v7243
        %v7847 = vunpack.c.l.b16 %v7244
        %v7848 = vunpack.c.h.b16 %v7244
        %v7849 = vunpack.c.l.b16 %v7245
        %v7850 = vunpack.c.h.b16 %v7245
        %v7851 = vunpack.c.l.b16 %v7246
        %v7852 = vunpack.c.h.b16 %v7246
        %v7853 = vunpack.c.l.b16 %v7247
        %v7854 = vunpack.c.h.b16 %v7247
        %v7855 = vunpack.c.l.b16 %v7248
        %v7856 = vunpack.c.h.b16 %v7248
        %v7857 = vunpack.c.l.b16 %v7249
        %v7858 = vunpack.c.h.b16 %v7249
        %v7859 = vunpack.c.l.b16 %v7250
        %v7860 = vunpack.c.h.b16 %v7250
        %v7861 = vunpack.c.l.b16 %v7251
        %v7862 = vunpack.c.h.b16 %v7251
        %v7863 = vunpack.c.l.b16 %v7252
        %v7864 = vunpack.c.h.b16 %v7252
        %v7865 = vunpack.c.l.b16 %v7253
        %v7866 = vunpack.c.h.b16 %v7253
        %v7867 = vunpack.c.l.b16 %v7254
        %v7868 = vunpack.c.h.b16 %v7254
        %v7869 = vunpack.c.l.b16 %v7255
        %v7870 = vunpack.c.h.b16 %v7255
        %v7871 = vunpack.c.l.b16 %v7256
        %v7872 = vunpack.c.h.b16 %v7256
        %v7873 = vunpack.c.l.b16 %v7257
        %v7874 = vunpack.c.h.b16 %v7257
        %v7875 = vunpack.c.l.b16 %v7258
        %v7876 = vunpack.c.h.b16 %v7258
        %v7877 = vunpack.c.l.b16 %v7259
        %v7878 = vunpack.c.h.b16 %v7259
        %v7879 = vunpack.c.l.b16 %v7260
        %v7880 = vunpack.c.h.b16 %v7260
        %v7881 = vunpack.c.l.b16 %v7261
        %v7882 = vunpack.c.h.b16 %v7261
        %v7883 = vunpack.c.l.b16 %v7262
        %v7884 = vunpack.c.h.b16 %v7262
        %v7885 = vunpack.c.l.b16 %v7263
        %v7886 = vunpack.c.h.b16 %v7263
        %v7887 = vunpack.c.l.b16 %v7264
        %v7888 = vunpack.c.h.b16 %v7264
        %v7889 = vunpack.c.l.b16 %v7265
        %v7890 = vunpack.c.h.b16 %v7265
        %v7891 = vunpack.c.l.b16 %v7266
        %v7892 = vunpack.c.h.b16 %v7266
        %v7893 = vunpack.c.l.b16 %v7267
        %v7894 = vunpack.c.h.b16 %v7267
        %v7895 = vunpack.c.l.b16 %v7268
        %v7896 = vunpack.c.h.b16 %v7268
        %v7897 = vunpack.c.l.b16 %v7269
        %v7898 = vunpack.c.h.b16 %v7269
        %v7899 = vunpack.c.l.b16 %v7270
        %v7900 = vunpack.c.h.b16 %v7270
        %v7901 = vunpack.c.l.b16 %v7271
        %v7902 = vunpack.c.h.b16 %v7271
        %v7903 = vunpack.c.l.b16 %v7272
        %v7904 = vunpack.c.h.b16 %v7272
        %v7905 = vunpack.c.l.b16 %v7273
        %v7906 = vunpack.c.h.b16 %v7273
        %v7907 = vunpack.c.l.b16 %v7274
        %v7908 = vunpack.c.h.b16 %v7274
        %v7909 = vunpack.c.l.b16 %v7275
        %v7910 = vunpack.c.h.b16 %v7275
        %v7911 = vunpack.c.l.b16 %v7276
        %v7912 = vunpack.c.h.b16 %v7276
        %v7913 = vunpack.c.l.b16 %v7277
        %v7914 = vunpack.c.h.b16 %v7277
        %v7915 = vunpack.c.l.b16 %v7278
        %v7916 = vunpack.c.h.b16 %v7278
        %v7917 = vunpack.c.l.b16 %v7279
        %v7918 = vunpack.c.h.b16 %v7279
        %v7919 = vunpack.c.l.b16 %v7280
        %v7920 = vunpack.c.h.b16 %v7280
        %v7921 = vunpack.c.l.b16 %v7281
        %v7922 = vunpack.c.h.b16 %v7281
        %v7923 = vunpack.c.l.b16 %v7282
        %v7924 = vunpack.c.h.b16 %v7282
        %v7925 = vunpack.c.l.b16 %v7283
        %v7926 = vunpack.c.h.b16 %v7283
        %v7927 = vunpack.c.l.b16 %v7284
        %v7928 = vunpack.c.h.b16 %v7284
        %v7929 = vunpack.c.l.b16 %v7285
        %v7930 = vunpack.c.h.b16 %v7285
        %v7931 = vunpack.c.l.b16 %v7286
        %v7932 = vunpack.c.h.b16 %v7286
        %v7933 = vunpack.c.l.b16 %v7287
        %v7934 = vunpack.c.h.b16 %v7287
        %v7935 = vunpack.c.l.b16 %v7288
        %v7936 = vunpack.c.h.b16 %v7288
        %v7937 = vunpack.c.l.b16 %v7289
        %v7938 = vunpack.c.h.b16 %v7289
        %v7939 = vunpack.c.l.b16 %v7290
        %v7940 = vunpack.c.h.b16 %v7290
        %v7941 = vunpack.c.l.b16 %v7291
        %v7942 = vunpack.c.h.b16 %v7291
        %v7943 = vunpack.c.l.b16 %v7292
        %v7944 = vunpack.c.h.b16 %v7292
        %v7945 = vunpack.c.l.b16 %v7293
        %v7946 = vunpack.c.h.b16 %v7293
        %v7947 = vunpack.c.l.b16 %v7294
        %v7948 = vunpack.c.h.b16 %v7294
        %v7949 = vunpack.c.l.b16 %v7295
        %v7950 = vunpack.c.h.b16 %v7295
        %v7951 = vunpack.c.l.b16 %v7296
        %v7952 = vunpack.c.h.b16 %v7296
        %v7953 = vunpack.c.l.b16 %v7297
        %v7954 = vunpack.c.h.b16 %v7297
        %v7955 = vunpack.c.l.b16 %v7298
        %v7956 = vunpack.c.h.b16 %v7298
        %v7957 = vunpack.c.l.b16 %v7299
        %v7958 = vunpack.c.h.b16 %v7299
        %v7959 = vunpack.c.l.b16 %v7300
        %v7960 = vunpack.c.h.b16 %v7300
        %v7961 = vunpack.c.l.b16 %v7301
        %v7962 = vunpack.c.h.b16 %v7301
        %v7963 = vunpack.c.l.b16 %v7302
        %v7964 = vunpack.c.h.b16 %v7302
        %v7965 = vunpack.c.l.b16 %v7303
        %v7966 = vunpack.c.h.b16 %v7303
        %v7967 = vunpack.c.l.b16 %v7304
        %v7968 = vunpack.c.h.b16 %v7304
        %v7969 = vunpack.c.l.b16 %v7305
        %v7970 = vunpack.c.h.b16 %v7305
        %v7971 = vunpack.c.l.b16 %v7306
        %v7972 = vunpack.c.h.b16 %v7306
        %v7973 = vunpack.c.l.b16 %v7307
        %v7974 = vunpack.c.h.b16 %v7307
        %v7975 = vunpack.c.l.b16 %v7308
        %v7976 = vunpack.c.h.b16 %v7308
        %v7977 = vunpack.c.l.b16 %v7309
        %v7978 = vunpack.c.h.b16 %v7309
        %v7979 = vunpack.c.l.b16 %v7310
        %v7980 = vunpack.c.h.b16 %v7310
        %v7981 = vunpack.c.l.b16 %v7311
        %v7982 = vunpack.c.h.b16 %v7311
        %v7983 = vunpack.c.l.b16 %v7312
        %v7984 = vunpack.c.h.b16 %v7312
        %v7985 = vunpack.c.l.b16 %v7313
        %v7986 = vunpack.c.h.b16 %v7313
        %v7987 = vunpack.c.l.b16 %v7314
        %v7988 = vunpack.c.h.b16 %v7314
        %v7989 = vunpack.c.l.b16 %v7315
        %v7990 = vunpack.c.h.b16 %v7315
        %v7991 = vunpack.c.l.b16 %v7316
        %v7992 = vunpack.c.h.b16 %v7316
        %v7993 = vunpack.c.l.b16 %v7317
        %v7994 = vunpack.c.h.b16 %v7317
        %v7995 = vunpack.c.l.b16 %v7318
        %v7996 = vunpack.c.h.b16 %v7318
        %v7997 = vunpack.c.l.b16 %v7319
        %v7998 = vunpack.c.h.b16 %v7319
        %v7999 = vunpack.c.l.b16 %v7320
        %v8000 = vunpack.c.h.b16 %v7320
        %v8001 = vunpack.c.l.b16 %v7321
        %v8002 = vunpack.c.h.b16 %v7321
        %v8003 = vunpack.c.l.b16 %v7322
        %v8004 = vunpack.c.h.b16 %v7322
        %v8005 = vunpack.c.l.b16 %v7323
        %v8006 = vunpack.c.h.b16 %v7323
        %v8007 = vunpack.c.l.b16 %v7324
        %v8008 = vunpack.c.h.b16 %v7324
        %v8009 = vunpack.c.l.b16 %v7325
        %v8010 = vunpack.c.h.b16 %v7325
        %v8011 = vunpack.c.l.b16 %v7326
        %v8012 = vunpack.c.h.b16 %v7326
        %v8013 = vunpack.c.l.b16 %v7327
        %v8014 = vunpack.c.h.b16 %v7327
        %v8015 = vunpack.c.l.b16 %v7328
        %v8016 = vunpack.c.h.b16 %v7328
        %v8017 = vunpack.c.l.b16 %v7329
        %v8018 = vunpack.c.h.b16 %v7329
        %v8019 = vunpack.c.l.b16 %v7330
        %v8020 = vunpack.c.h.b16 %v7330
        %v8021 = vunpack.c.l.b16 %v7331
        %v8022 = vunpack.c.h.b16 %v7331
        %v8023 = vunpack.c.l.b16 %v7332
        %v8024 = vunpack.c.h.b16 %v7332
        %v8025 = vunpack.c.l.b16 %v7333
        %v8026 = vunpack.c.h.b16 %v7333
        %v8027 = vunpack.c.l.b16 %v7334
        %v8028 = vunpack.c.h.b16 %v7334
        %v8029 = vunpack.c.l.b16 %v7335
        %v8030 = vunpack.c.h.b16 %v7335
        %v8031 = vunpack.c.l.b16 %v7336
        %v8032 = vunpack.c.h.b16 %v7336
        %v8033 = vunpack.c.l.b16 %v7337
        %v8034 = vunpack.c.h.b16 %v7337
        %v8035 = vunpack.c.l.b16 %v7338
        %v8036 = vunpack.c.h.b16 %v7338
        %v8037 = vunpack.c.l.b16 %v7339
        %v8038 = vunpack.c.h.b16 %v7339
        %v8039 = vunpack.c.l.b16 %v7340
        %v8040 = vunpack.c.h.b16 %v7340
        %v8041 = vunpack.c.l.b16 %v7341
        %v8042 = vunpack.c.h.b16 %v7341
        %v8043 = vunpack.c.l.b16 %v7342
        %v8044 = vunpack.c.h.b16 %v7342
        %v8045 = vunpack.c.l.b16 %v7343
        %v8046 = vunpack.c.h.b16 %v7343
        %v8047 = vunpack.c.l.b16 %v7344
        %v8048 = vunpack.c.h.b16 %v7344
        %v8049 = vunpack.c.l.b16 %v7345
        %v8050 = vunpack.c.h.b16 %v7345
        %v8051 = vunpack.c.l.b16 %v7346
        %v8052 = vunpack.c.h.b16 %v7346
        %v8053 = vunpack.c.l.b16 %v7347
        %v8054 = vunpack.c.h.b16 %v7347
        %v8055 = vunpack.c.l.b16 %v7348
        %v8056 = vunpack.c.h.b16 %v7348
        %v8057 = vunpack.c.l.b16 %v7349
        %v8058 = vunpack.c.h.b16 %v7349
        %v8059 = vunpack.c.l.b16 %v7350
        %v8060 = vunpack.c.h.b16 %v7350
        %v8061 = vunpack.c.l.b16 %v7351
        %v8062 = vunpack.c.h.b16 %v7351
        %v8063 = vunpack.c.l.b16 %v7352
        %v8064 = vunpack.c.h.b16 %v7352
        %v8065 = vunpack.c.l.b16 %v7353
        %v8066 = vunpack.c.h.b16 %v7353
        %v8067 = vunpack.c.l.b16 %v7354
        %v8068 = vunpack.c.h.b16 %v7354
        %v8069 = vunpack.c.l.b16 %v7355
        %v8070 = vunpack.c.h.b16 %v7355
        %v8071 = vunpack.c.l.b16 %v7356
        %v8072 = vunpack.c.h.b16 %v7356
        %v8073 = vunpack.c.l.b16 %v7357
        %v8074 = vunpack.c.h.b16 %v7357
        %v8075 = vunpack.c.l.b16 %v7358
        %v8076 = vunpack.c.h.b16 %v7358
        %v8077 = vunpack.c.l.b16 %v7359
        %v8078 = vunpack.c.h.b16 %v7359
        %v8079 = vunpack.c.l.b16 %v7360
        %v8080 = vunpack.c.h.b16 %v7360
        %v8081 = vunpack.c.l.b16 %v7361
        %v8082 = vunpack.c.h.b16 %v7361
        %v8083 = vunpack.c.l.b16 %v7362
        %v8084 = vunpack.c.h.b16 %v7362
        %v8085 = vunpack.c.l.b16 %v7363
        %v8086 = vunpack.c.h.b16 %v7363
        %v8087 = vunpack.c.l.b16 %v7364
        %v8088 = vunpack.c.h.b16 %v7364
        %v8089 = vunpack.c.l.b16 %v7365
        %v8090 = vunpack.c.h.b16 %v7365
        %v8091 = vunpack.c.l.b16 %v7366
        %v8092 = vunpack.c.h.b16 %v7366
        %v8093 = vunpack.c.l.b16 %v7367
        %v8094 = vunpack.c.h.b16 %v7367
        %v8095 = vunpack.c.l.b16 %v7368
        %v8096 = vunpack.c.h.b16 %v7368
        %v8097 = vunpack.c.l.b16 %v7369
        %v8098 = vunpack.c.h.b16 %v7369
        %v8099 = vunpack.c.l.b16 %v7370
        %v8100 = vunpack.c.h.b16 %v7370
        %v8101 = vunpack.c.l.b16 %v7371
        %v8102 = vunpack.c.h.b16 %v7371
        %v8103 = vunpack.c.l.b16 %v7372
        %v8104 = vunpack.c.h.b16 %v7372
        %v8105 = vunpack.c.l.b16 %v7373
        %v8106 = vunpack.c.h.b16 %v7373
        %v8107 = vunpack.c.l.b16 %v7374
        %v8108 = vunpack.c.h.b16 %v7374
        %v8109 = vunpack.c.l.b16 %v7375
        %v8110 = vunpack.c.h.b16 %v7375
        %v8111 = vunpack.c.l.b16 %v7376
        %v8112 = vunpack.c.h.b16 %v7376
        %v8113 = vunpack.c.l.b16 %v7377
        %v8114 = vunpack.c.h.b16 %v7377
        %v8115 = vunpack.c.l.b16 %v7378
        %v8116 = vunpack.c.h.b16 %v7378
        %v8117 = vunpack.c.l.b16 %v7379
        %v8118 = vunpack.c.h.b16 %v7379
        %v8119 = vunpack.c.l.b16 %v7380
        %v8120 = vunpack.c.h.b16 %v7380
        %v8121 = vunpack.c.l.b16 %v7381
        %v8122 = vunpack.c.h.b16 %v7381
        %v8123 = vunpack.c.l.b16 %v7382
        %v8124 = vunpack.c.h.b16 %v7382
        %v8125 = vunpack.c.l.b16 %v7383
        %v8126 = vunpack.c.h.b16 %v7383
        %v8127 = vunpack.c.l.b16 %v7384
        %v8128 = vunpack.c.h.b16 %v7384
        %v8129 = vunpack.c.l.b16 %v7385
        %v8130 = vunpack.c.h.b16 %v7385
        %v8131 = vunpack.c.l.b16 %v7386
        %v8132 = vunpack.c.h.b16 %v7386
        %v8133 = vunpack.c.l.b16 %v7387
        %v8134 = vunpack.c.h.b16 %v7387
        %v8135 = vunpack.c.l.b16 %v7388
        %v8136 = vunpack.c.h.b16 %v7388
        %v8137 = vunpack.c.l.b16 %v7389
        %v8138 = vunpack.c.h.b16 %v7389
        %v8139 = vunpack.c.l.b16 %v7390
        %v8140 = vunpack.c.h.b16 %v7390
        %v8141 = vunpack.c.l.b16 %v7391
        %v8142 = vunpack.c.h.b16 %v7391
        %v8143 = vunpack.c.l.b16 %v7392
        %v8144 = vunpack.c.h.b16 %v7392
        %v8145 = vunpack.c.l.b16 %v7393
        %v8146 = vunpack.c.h.b16 %v7393
        %v8147 = vunpack.c.l.b16 %v7394
        %v8148 = vunpack.c.h.b16 %v7394
        %v8149 = vunpack.c.l.b16 %v7395
        %v8150 = vunpack.c.h.b16 %v7395
        %v8151 = vunpack.c.l.b16 %v7396
        %v8152 = vunpack.c.h.b16 %v7396
        %v8153 = vunpack.c.l.b16 %v7397
        %v8154 = vunpack.c.h.b16 %v7397
        %v8155 = vunpack.c.l.b16 %v7398
        %v8156 = vunpack.c.h.b16 %v7398
        %v8157 = vunpack.c.l.b16 %v7399
        %v8158 = vunpack.c.h.b16 %v7399
        %v8159 = vunpack.c.l.b16 %v7400
        %v8160 = vunpack.c.h.b16 %v7400
        %v8161 = vunpack.c.l.b16 %v7401
        %v8162 = vunpack.c.h.b16 %v7401
        %v8163 = vunpack.c.l.b16 %v7402
        %v8164 = vunpack.c.h.b16 %v7402
        %v8165 = vunpack.c.l.b16 %v7403
        %v8166 = vunpack.c.h.b16 %v7403
        %v8167 = vunpack.c.l.b16 %v7404
        %v8168 = vunpack.c.h.b16 %v7404
        %v8169 = vunpack.c.l.b16 %v7405
        %v8170 = vunpack.c.h.b16 %v7405
        %v8171 = vunpack.c.l.b16 %v7406
        %v8172 = vunpack.c.h.b16 %v7406
        %v8173 = vunpack.c.l.b16 %v7407
        %v8174 = vunpack.c.h.b16 %v7407
        %v8175 = vunpack.c.l.b16 %v7408
        %v8176 = vunpack.c.h.b16 %v7408
        %v8177 = vunpack.c.l.b16 %v7409
        %v8178 = vunpack.c.h.b16 %v7409
        %v8179 = vunpack.c.l.b16 %v7410
        %v8180 = vunpack.c.h.b16 %v7410
        %v8181 = vunpack.c.l.b16 %v7411
        %v8182 = vunpack.c.h.b16 %v7411
        %v8183 = vunpack.c.l.b16 %v7412
        %v8184 = vunpack.c.h.b16 %v7412
        %v8185 = vunpack.c.l.b16 %v7413
        %v8186 = vunpack.c.h.b16 %v7413
        %v8187 = vunpack.c.l.b16 %v7414
        %v8188 = vunpack.c.h.b16 %v7414
        %v8189 = vunpack.c.l.b16 %v7415
        %v8190 = vunpack.c.h.b16 %v7415
        %v8191 = vunpack.c.l.b16 %v7416
        %v8192 = vunpack.c.h.b16 %v7416
        %v8193 = vunpack.c.l.b16 %v7417
        %v8194 = vunpack.c.h.b16 %v7417
        %v8195 = vunpack.c.l.b16 %v7418
        %v8196 = vunpack.c.h.b16 %v7418
        %v8197 = vunpack.c.l.b16 %v7419
        %v8198 = vunpack.c.h.b16 %v7419
        %v8199 = vunpack.c.l.b16 %v7420
        %v8200 = vunpack.c.h.b16 %v7420
        %v8201 = vunpack.c.l.b16 %v7421
        %v8202 = vunpack.c.h.b16 %v7421
        %v8203 = vunpack.c.l.b16 %v7422
        %v8204 = vunpack.c.h.b16 %v7422
        %v8205 = vunpack.c.l.b16 %v7423
        %v8206 = vunpack.c.h.b16 %v7423
        %v8207 = vunpack.c.l.b16 %v7424
        %v8208 = vunpack.c.h.b16 %v7424
        %v8209 = vunpack.c.l.b16 %v7425
        %v8210 = vunpack.c.h.b16 %v7425
        %v8211 = vunpack.c.l.b16 %v7426
        %v8212 = vunpack.c.h.b16 %v7426
        %v8213 = vpack.c.b16 %v7709, %v7701
        %v8214 = vpack.c.b16 %v7710, %v7702
        %v8215 = vpack.c.b16 %v7711, %v7703
        %v8216 = vpack.c.b16 %v7712, %v7704
        %v8217 = vpack.c.b16 %v7713, %v7705
        %v8218 = vpack.c.b16 %v7714, %v7706
        %v8219 = vpack.c.b16 %v7715, %v7707
        %v8220 = vpack.c.b16 %v7716, %v7708
        %v8221 = vpack.c.b16 %v7725, %v7717
        %v8222 = vpack.c.b16 %v7726, %v7718
        %v8223 = vpack.c.b16 %v7727, %v7719
        %v8224 = vpack.c.b16 %v7728, %v7720
        %v8225 = vpack.c.b16 %v7729, %v7721
        %v8226 = vpack.c.b16 %v7730, %v7722
        %v8227 = vpack.c.b16 %v7731, %v7723
        %v8228 = vpack.c.b16 %v7732, %v7724
        %v8229 = vpack.c.b16 %v7741, %v7733
        %v8230 = vpack.c.b16 %v7742, %v7734
        %v8231 = vpack.c.b16 %v7743, %v7735
        %v8232 = vpack.c.b16 %v7744, %v7736
        %v8233 = vpack.c.b16 %v7745, %v7737
        %v8234 = vpack.c.b16 %v7746, %v7738
        %v8235 = vpack.c.b16 %v7747, %v7739
        %v8236 = vpack.c.b16 %v7748, %v7740
        %v8237 = vpack.c.b16 %v7757, %v7749
        %v8238 = vpack.c.b16 %v7758, %v7750
        %v8239 = vpack.c.b16 %v7759, %v7751
        %v8240 = vpack.c.b16 %v7760, %v7752
        %v8241 = vpack.c.b16 %v7761, %v7753
        %v8242 = vpack.c.b16 %v7762, %v7754
        %v8243 = vpack.c.b16 %v7763, %v7755
        %v8244 = vpack.c.b16 %v7764, %v7756
        %v8245 = vpack.c.b16 %v7773, %v7765
        %v8246 = vpack.c.b16 %v7774, %v7766
        %v8247 = vpack.c.b16 %v7775, %v7767
        %v8248 = vpack.c.b16 %v7776, %v7768
        %v8249 = vpack.c.b16 %v7777, %v7769
        %v8250 = vpack.c.b16 %v7778, %v7770
        %v8251 = vpack.c.b16 %v7779, %v7771
        %v8252 = vpack.c.b16 %v7780, %v7772
        %v8253 = vpack.c.b16 %v7789, %v7781
        %v8254 = vpack.c.b16 %v7790, %v7782
        %v8255 = vpack.c.b16 %v7791, %v7783
        %v8256 = vpack.c.b16 %v7792, %v7784
        %v8257 = vpack.c.b16 %v7793, %v7785
        %v8258 = vpack.c.b16 %v7794, %v7786
        %v8259 = vpack.c.b16 %v7795, %v7787
        %v8260 = vpack.c.b16 %v7796, %v7788
        %v8261 = vpack.c.b16 %v7805, %v7797
        %v8262 = vpack.c.b16 %v7806, %v7798
        %v8263 = vpack.c.b16 %v7807, %v7799
        %v8264 = vpack.c.b16 %v7808, %v7800
        %v8265 = vpack.c.b16 %v7809, %v7801
        %v8266 = vpack.c.b16 %v7810, %v7802
        %v8267 = vpack.c.b16 %v7811, %v7803
        %v8268 = vpack.c.b16 %v7812, %v7804
        %v8269 = vpack.c.b16 %v7821, %v7813
        %v8270 = vpack.c.b16 %v7822, %v7814
        %v8271 = vpack.c.b16 %v7823, %v7815
        %v8272 = vpack.c.b16 %v7824, %v7816
        %v8273 = vpack.c.b16 %v7825, %v7817
        %v8274 = vpack.c.b16 %v7826, %v7818
        %v8275 = vpack.c.b16 %v7827, %v7819
        %v8276 = vpack.c.b16 %v7828, %v7820
        %v8277 = vpack.c.b16 %v7837, %v7829
        %v8278 = vpack.c.b16 %v7838, %v7830
        %v8279 = vpack.c.b16 %v7839, %v7831
        %v8280 = vpack.c.b16 %v7840, %v7832
        %v8281 = vpack.c.b16 %v7841, %v7833
        %v8282 = vpack.c.b16 %v7842, %v7834
        %v8283 = vpack.c.b16 %v7843, %v7835
        %v8284 = vpack.c.b16 %v7844, %v7836
        %v8285 = vpack.c.b16 %v7853, %v7845
        %v8286 = vpack.c.b16 %v7854, %v7846
        %v8287 = vpack.c.b16 %v7855, %v7847
        %v8288 = vpack.c.b16 %v7856, %v7848
        %v8289 = vpack.c.b16 %v7857, %v7849
        %v8290 = vpack.c.b16 %v7858, %v7850
        %v8291 = vpack.c.b16 %v7859, %v7851
        %v8292 = vpack.c.b16 %v7860, %v7852
        %v8293 = vpack.c.b16 %v7869, %v7861
        %v8294 = vpack.c.b16 %v7870, %v7862
        %v8295 = vpack.c.b16 %v7871, %v7863
        %v8296 = vpack.c.b16 %v7872, %v7864
        %v8297 = vpack.c.b16 %v7873, %v7865
        %v8298 = vpack.c.b16 %v7874, %v7866
        %v8299 = vpack.c.b16 %v7875, %v7867
        %v8300 = vpack.c.b16 %v7876, %v7868
        %v8301 = vpack.c.b16 %v7885, %v7877
        %v8302 = vpack.c.b16 %v7886, %v7878
        %v8303 = vpack.c.b16 %v7887, %v7879
        %v8304 = vpack.c.b16 %v7888, %v7880
        %v8305 = vpack.c.b16 %v7889, %v7881
        %v8306 = vpack.c.b16 %v7890, %v7882
        %v8307 = vpack.c.b16 %v7891, %v7883
        %v8308 = vpack.c.b16 %v7892, %v7884
        %v8309 = vpack.c.b16 %v7901, %v7893
        %v8310 = vpack.c.b16 %v7902, %v7894
        %v8311 = vpack.c.b16 %v7903, %v7895
        %v8312 = vpack.c.b16 %v7904, %v7896
        %v8313 = vpack.c.b16 %v7905, %v7897
        %v8314 = vpack.c.b16 %v7906, %v7898
        %v8315 = vpack.c.b16 %v7907, %v7899
        %v8316 = vpack.c.b16 %v7908, %v7900
        %v8317 = vpack.c.b16 %v7917, %v7909
        %v8318 = vpack.c.b16 %v7918, %v7910
        %v8319 = vpack.c.b16 %v7919, %v7911
        %v8320 = vpack.c.b16 %v7920, %v7912
        %v8321 = vpack.c.b16 %v7921, %v7913
        %v8322 = vpack.c.b16 %v7922, %v7914
        %v8323 = vpack.c.b16 %v7923, %v7915
        %v8324 = vpack.c.b16 %v7924, %v7916
        %v8325 = vpack.c.b16 %v7933, %v7925
        %v8326 = vpack.c.b16 %v7934, %v7926
        %v8327 = vpack.c.b16 %v7935, %v7927
        %v8328 = vpack.c.b16 %v7936, %v7928
        %v8329 = vpack.c.b16 %v7937, %v7929
        %v8330 = vpack.c.b16 %v7938, %v7930
        %v8331 = vpack.c.b16 %v7939, %v7931
        %v8332 = vpack.c.b16 %v7940, %v7932
        %v8333 = vpack.c.b16 %v7949, %v7941
        %v8334 = vpack.c.b16 %v7950, %v7942
        %v8335 = vpack.c.b16 %v7951, %v7943
        %v8336 = vpack.c.b16 %v7952, %v7944
        %v8337 = vpack.c.b16 %v7953, %v7945
        %v8338 = vpack.c.b16 %v7954, %v7946
        %v8339 = vpack.c.b16 %v7955, %v7947
        %v8340 = vpack.c.b16 %v7956, %v7948
        %v8341 = vpack.c.b16 %v7965, %v7957
        %v8342 = vpack.c.b16 %v7966, %v7958
        %v8343 = vpack.c.b16 %v7967, %v7959
        %v8344 = vpack.c.b16 %v7968, %v7960
        %v8345 = vpack.c.b16 %v7969, %v7961
        %v8346 = vpack.c.b16 %v7970, %v7962
        %v8347 = vpack.c.b16 %v7971, %v7963
        %v8348 = vpack.c.b16 %v7972, %v7964
        %v8349 = vpack.c.b16 %v7981, %v7973
        %v8350 = vpack.c.b16 %v7982, %v7974
        %v8351 = vpack.c.b16 %v7983, %v7975
        %v8352 = vpack.c.b16 %v7984, %v7976
        %v8353 = vpack.c.b16 %v7985, %v7977
        %v8354 = vpack.c.b16 %v7986, %v7978
        %v8355 = vpack.c.b16 %v7987, %v7979
        %v8356 = vpack.c.b16 %v7988, %v7980
        %v8357 = vpack.c.b16 %v7997, %v7989
        %v8358 = vpack.c.b16 %v7998, %v7990
        %v8359 = vpack.c.b16 %v7999, %v7991
        %v8360 = vpack.c.b16 %v8000, %v7992
        %v8361 = vpack.c.b16 %v8001, %v7993
        %v8362 = vpack.c.b16 %v8002, %v7994
        %v8363 = vpack.c.b16 %v8003, %v7995
        %v8364 = vpack.c.b16 %v8004, %v7996
        %v8365 = vpack.c.b16 %v8013, %v8005
        %v8366 = vpack.c.b16 %v8014, %v8006
        %v8367 = vpack.c.b16 %v8015, %v8007
        %v8368 = vpack.c.b16 %v8016, %v8008
        %v8369 = vpack.c.b16 %v8017, %v8009
        %v8370 = vpack.c.b16 %v8018, %v8010
        %v8371 = vpack.c.b16 %v8019, %v8011
        %v8372 = vpack.c.b16 %v8020, %v8012
        %v8373 = vpack.c.b16 %v8029, %v8021
        %v8374 = vpack.c.b16 %v8030, %v8022
        %v8375 = vpack.c.b16 %v8031, %v8023
        %v8376 = vpack.c.b16 %v8032, %v8024
        %v8377 = vpack.c.b16 %v8033, %v8025
        %v8378 = vpack.c.b16 %v8034, %v8026
        %v8379 = vpack.c.b16 %v8035, %v8027
        %v8380 = vpack.c.b16 %v8036, %v8028
        %v8381 = vpack.c.b16 %v8045, %v8037
        %v8382 = vpack.c.b16 %v8046, %v8038
        %v8383 = vpack.c.b16 %v8047, %v8039
        %v8384 = vpack.c.b16 %v8048, %v8040
        %v8385 = vpack.c.b16 %v8049, %v8041
        %v8386 = vpack.c.b16 %v8050, %v8042
        %v8387 = vpack.c.b16 %v8051, %v8043
        %v8388 = vpack.c.b16 %v8052, %v8044
        %v8389 = vpack.c.b16 %v8061, %v8053
        %v8390 = vpack.c.b16 %v8062, %v8054
        %v8391 = vpack.c.b16 %v8063, %v8055
        %v8392 = vpack.c.b16 %v8064, %v8056
        %v8393 = vpack.c.b16 %v8065, %v8057
        %v8394 = vpack.c.b16 %v8066, %v8058
        %v8395 = vpack.c.b16 %v8067, %v8059
        %v8396 = vpack.c.b16 %v8068, %v8060
        %v8397 = vpack.c.b16 %v8077, %v8069
        %v8398 = vpack.c.b16 %v8078, %v8070
        %v8399 = vpack.c.b16 %v8079, %v8071
        %v8400 = vpack.c.b16 %v8080, %v8072
        %v8401 = vpack.c.b16 %v8081, %v8073
        %v8402 = vpack.c.b16 %v8082, %v8074
        %v8403 = vpack.c.b16 %v8083, %v8075
        %v8404 = vpack.c.b16 %v8084, %v8076
        %v8405 = vpack.c.b16 %v8093, %v8085
        %v8406 = vpack.c.b16 %v8094, %v8086
        %v8407 = vpack.c.b16 %v8095, %v8087
        %v8408 = vpack.c.b16 %v8096, %v8088
        %v8409 = vpack.c.b16 %v8097, %v8089
        %v8410 = vpack.c.b16 %v8098, %v8090
        %v8411 = vpack.c.b16 %v8099, %v8091
        %v8412 = vpack.c.b16 %v8100, %v8092
        %v8413 = vpack.c.b16 %v8109, %v8101
        %v8414 = vpack.c.b16 %v8110, %v8102
        %v8415 = vpack.c.b16 %v8111, %v8103
        %v8416 = vpack.c.b16 %v8112, %v8104
        %v8417 = vpack.c.b16 %v8113, %v8105
        %v8418 = vpack.c.b16 %v8114, %v8106
        %v8419 = vpack.c.b16 %v8115, %v8107
        %v8420 = vpack.c.b16 %v8116, %v8108
        %v8421 = vpack.c.b16 %v8125, %v8117
        %v8422 = vpack.c.b16 %v8126, %v8118
        %v8423 = vpack.c.b16 %v8127, %v8119
        %v8424 = vpack.c.b16 %v8128, %v8120
        %v8425 = vpack.c.b16 %v8129, %v8121
        %v8426 = vpack.c.b16 %v8130, %v8122
        %v8427 = vpack.c.b16 %v8131, %v8123
        %v8428 = vpack.c.b16 %v8132, %v8124
        %v8429 = vpack.c.b16 %v8141, %v8133
        %v8430 = vpack.c.b16 %v8142, %v8134
        %v8431 = vpack.c.b16 %v8143, %v8135
        %v8432 = vpack.c.b16 %v8144, %v8136
        %v8433 = vpack.c.b16 %v8145, %v8137
        %v8434 = vpack.c.b16 %v8146, %v8138
        %v8435 = vpack.c.b16 %v8147, %v8139
        %v8436 = vpack.c.b16 %v8148, %v8140
        %v8437 = vpack.c.b16 %v8157, %v8149
        %v8438 = vpack.c.b16 %v8158, %v8150
        %v8439 = vpack.c.b16 %v8159, %v8151
        %v8440 = vpack.c.b16 %v8160, %v8152
        %v8441 = vpack.c.b16 %v8161, %v8153
        %v8442 = vpack.c.b16 %v8162, %v8154
        %v8443 = vpack.c.b16 %v8163, %v8155
        %v8444 = vpack.c.b16 %v8164, %v8156
        %v8445 = vpack.c.b16 %v8173, %v8165
        %v8446 = vpack.c.b16 %v8174, %v8166
        %v8447 = vpack.c.b16 %v8175, %v8167
        %v8448 = vpack.c.b16 %v8176, %v8168
        %v8449 = vpack.c.b16 %v8177, %v8169
        %v8450 = vpack.c.b16 %v8178, %v8170
        %v8451 = vpack.c.b16 %v8179, %v8171
        %v8452 = vpack.c.b16 %v8180, %v8172
        %v8453 = vpack.c.b16 %v8189, %v8181
        %v8454 = vpack.c.b16 %v8190, %v8182
        %v8455 = vpack.c.b16 %v8191, %v8183
        %v8456 = vpack.c.b16 %v8192, %v8184
        %v8457 = vpack.c.b16 %v8193, %v8185
        %v8458 = vpack.c.b16 %v8194, %v8186
        %v8459 = vpack.c.b16 %v8195, %v8187
        %v8460 = vpack.c.b16 %v8196, %v8188
        %v8461 = vpack.c.b16 %v8205, %v8197
        %v8462 = vpack.c.b16 %v8206, %v8198
        %v8463 = vpack.c.b16 %v8207, %v8199
        %v8464 = vpack.c.b16 %v8208, %v8200
        %v8465 = vpack.c.b16 %v8209, %v8201
        %v8466 = vpack.c.b16 %v8210, %v8202
        %v8467 = vpack.c.b16 %v8211, %v8203
        %v8468 = vpack.c.b16 %v8212, %v8204
        %8725 = vmatpush.bf16.msra.mxu0 %v8269
        %8726 = vmatpush.bf16.msra.mxu0 %v8261
        %8727 = vmatpush.bf16.msra.mxu0 %v8253
        %8728 = vmatpush.bf16.msra.mxu0 %v8245
        %8729 = vmatpush.bf16.msra.mxu0 %v8237
        %8730 = vmatpush.bf16.msra.mxu0 %v8229
        %8731 = vmatpush.bf16.msra.mxu0 %v8221
        %8732 = vmatpush.bf16.msra.mxu0 %v8213
        %8733 = vmatmul.bf16.gmra.mxu0 %v7157
        %v8734 = vpop.f32.mrf.mxu0
        %v8735 = vadd.f32 %v7429, %v8734
        %v8736 = vpop.f32.mrf.mxu0
        %8737 = vdwg.mxu0
        %8738 = vmatpush.bf16.msra.mxu0 %v8333
        %8739 = vmatpush.bf16.msra.mxu0 %v8325
        %8740 = vmatpush.bf16.msra.mxu0 %v8317
        %8741 = vmatpush.bf16.msra.mxu0 %v8309
        %8742 = vmatpush.bf16.msra.mxu0 %v8301
        %8743 = vmatpush.bf16.msra.mxu0 %v8293
        %8744 = vmatpush.bf16.msra.mxu0 %v8285
        %8745 = vmatpush.bf16.msra.mxu0 %v8277
        %8746 = vmatmul.bf16.gmra.mxu0 %v7161
        %v8747 = vpop.f32.mrf.mxu0
        %v8748 = vadd.f32 %v8735, %v8747
        %v8749 = vpop.f32.mrf.mxu0
        %8750 = vdwg.mxu0
        %8751 = vmatpush.bf16.msra.mxu0 %v8397
        %8752 = vmatpush.bf16.msra.mxu0 %v8389
        %8753 = vmatpush.bf16.msra.mxu0 %v8381
        %8754 = vmatpush.bf16.msra.mxu0 %v8373
        %8755 = vmatpush.bf16.msra.mxu0 %v8365
        %8756 = vmatpush.bf16.msra.mxu0 %v8357
        %8757 = vmatpush.bf16.msra.mxu0 %v8349
        %8758 = vmatpush.bf16.msra.mxu0 %v8341
        %8759 = vmatmul.bf16.gmra.mxu0 %v7165
        %v8760 = vpop.f32.mrf.mxu0
        %v8761 = vadd.f32 %v8748, %v8760
        %v8762 = vpop.f32.mrf.mxu0
        %8763 = vdwg.mxu0
        %8764 = vmatpush.bf16.msra.mxu0 %v8461
        %8765 = vmatpush.bf16.msra.mxu0 %v8453
        %8766 = vmatpush.bf16.msra.mxu0 %v8445
        %8767 = vmatpush.bf16.msra.mxu0 %v8437
        %8768 = vmatpush.bf16.msra.mxu0 %v8429
        %8769 = vmatpush.bf16.msra.mxu0 %v8421
        %8770 = vmatpush.bf16.msra.mxu0 %v8413
        %8771 = vmatpush.bf16.msra.mxu0 %v8405
        %8772 = vmatmul.bf16.gmra.mxu0 %v7169
        %v8773 = vpop.f32.mrf.mxu0
        %v8774 = vadd.f32 %v8761, %v8773
        %v8775 = vpop.f32.mrf.mxu0
        %8776 = vdwg.mxu0
        %8777 = vmatpush.bf16.msra.mxu0 %v8270
        %8778 = vmatpush.bf16.msra.mxu0 %v8262
        %8779 = vmatpush.bf16.msra.mxu0 %v8254
        %8780 = vmatpush.bf16.msra.mxu0 %v8246
        %8781 = vmatpush.bf16.msra.mxu0 %v8238
        %8782 = vmatpush.bf16.msra.mxu0 %v8230
        %8783 = vmatpush.bf16.msra.mxu0 %v8222
        %8784 = vmatpush.bf16.msra.mxu0 %v8214
        %8785 = vmatmul.bf16.gmra.mxu0 %v7157
        %v8786 = vpop.f32.mrf.mxu0
        %v8787 = vadd.f32 %v7430, %v8786
        %v8788 = vpop.f32.mrf.mxu0
        %8789 = vdwg.mxu0
        %8790 = vmatpush.bf16.msra.mxu0 %v8334
        %8791 = vmatpush.bf16.msra.mxu0 %v8326
        %8792 = vmatpush.bf16.msra.mxu0 %v8318
        %8793 = vmatpush.bf16.msra.mxu0 %v8310
        %8794 = vmatpush.bf16.msra.mxu0 %v8302
        %8795 = vmatpush.bf16.msra.mxu0 %v8294
        %8796 = vmatpush.bf16.msra.mxu0 %v8286
        %8797 = vmatpush.bf16.msra.mxu0 %v8278
        %8798 = vmatmul.bf16.gmra.mxu0 %v7161
        %v8799 = vpop.f32.mrf.mxu0
        %v8800 = vadd.f32 %v8787, %v8799
        %v8801 = vpop.f32.mrf.mxu0
        %8802 = vdwg.mxu0
        %8803 = vmatpush.bf16.msra.mxu0 %v8398
        %8804 = vmatpush.bf16.msra.mxu0 %v8390
        %8805 = vmatpush.bf16.msra.mxu0 %v8382
        %8806 = vmatpush.bf16.msra.mxu0 %v8374
        %8807 = vmatpush.bf16.msra.mxu0 %v8366
        %8808 = vmatpush.bf16.msra.mxu0 %v8358
        %8809 = vmatpush.bf16.msra.mxu0 %v8350
        %8810 = vmatpush.bf16.msra.mxu0 %v8342
        %8811 = vmatmul.bf16.gmra.mxu0 %v7165
        %v8812 = vpop.f32.mrf.mxu0
        %v8813 = vadd.f32 %v8800, %v8812
        %v8814 = vpop.f32.mrf.mxu0
        %8815 = vdwg.mxu0
        %8816 = vmatpush.bf16.msra.mxu0 %v8462
        %8817 = vmatpush.bf16.msra.mxu0 %v8454
        %8818 = vmatpush.bf16.msra.mxu0 %v8446
        %8819 = vmatpush.bf16.msra.mxu0 %v8438
        %8820 = vmatpush.bf16.msra.mxu0 %v8430
        %8821 = vmatpush.bf16.msra.mxu0 %v8422
        %8822 = vmatpush.bf16.msra.mxu0 %v8414
        %8823 = vmatpush.bf16.msra.mxu0 %v8406
        %8824 = vmatmul.bf16.gmra.mxu0 %v7169
        %v8825 = vpop.f32.mrf.mxu0
        %v8826 = vadd.f32 %v8813, %v8825
        %v8827 = vpop.f32.mrf.mxu0
        %8828 = vdwg.mxu0
        %8829 = vmatpush.bf16.msra.mxu0 %v8271
        %8830 = vmatpush.bf16.msra.mxu0 %v8263
        %8831 = vmatpush.bf16.msra.mxu0 %v8255
        %8832 = vmatpush.bf16.msra.mxu0 %v8247
        %8833 = vmatpush.bf16.msra.mxu0 %v8239
        %8834 = vmatpush.bf16.msra.mxu0 %v8231
        %8835 = vmatpush.bf16.msra.mxu0 %v8223
        %8836 = vmatpush.bf16.msra.mxu0 %v8215
        %8837 = vmatmul.bf16.gmra.mxu0 %v7157
        %v8838 = vpop.f32.mrf.mxu0
        %v8839 = vadd.f32 %v7431, %v8838
        %v8840 = vpop.f32.mrf.mxu0
        %8841 = vdwg.mxu0
        %8842 = vmatpush.bf16.msra.mxu0 %v8335
        %8843 = vmatpush.bf16.msra.mxu0 %v8327
        %8844 = vmatpush.bf16.msra.mxu0 %v8319
        %8845 = vmatpush.bf16.msra.mxu0 %v8311
        %8846 = vmatpush.bf16.msra.mxu0 %v8303
        %8847 = vmatpush.bf16.msra.mxu0 %v8295
        %8848 = vmatpush.bf16.msra.mxu0 %v8287
        %8849 = vmatpush.bf16.msra.mxu0 %v8279
        %8850 = vmatmul.bf16.gmra.mxu0 %v7161
        %v8851 = vpop.f32.mrf.mxu0
        %v8852 = vadd.f32 %v8839, %v8851
        %v8853 = vpop.f32.mrf.mxu0
        %8854 = vdwg.mxu0
        %8855 = vmatpush.bf16.msra.mxu0 %v8399
        %8856 = vmatpush.bf16.msra.mxu0 %v8391
        %8857 = vmatpush.bf16.msra.mxu0 %v8383
        %8858 = vmatpush.bf16.msra.mxu0 %v8375
        %8859 = vmatpush.bf16.msra.mxu0 %v8367
        %8860 = vmatpush.bf16.msra.mxu0 %v8359
        %8861 = vmatpush.bf16.msra.mxu0 %v8351
        %8862 = vmatpush.bf16.msra.mxu0 %v8343
        %8863 = vmatmul.bf16.gmra.mxu0 %v7165
        %v8864 = vpop.f32.mrf.mxu0
        %v8865 = vadd.f32 %v8852, %v8864
        %v8866 = vpop.f32.mrf.mxu0
        %8867 = vdwg.mxu0
        %8868 = vmatpush.bf16.msra.mxu0 %v8463
        %8869 = vmatpush.bf16.msra.mxu0 %v8455
        %8870 = vmatpush.bf16.msra.mxu0 %v8447
        %8871 = vmatpush.bf16.msra.mxu0 %v8439
        %8872 = vmatpush.bf16.msra.mxu0 %v8431
        %8873 = vmatpush.bf16.msra.mxu0 %v8423
        %8874 = vmatpush.bf16.msra.mxu0 %v8415
        %8875 = vmatpush.bf16.msra.mxu0 %v8407
        %8876 = vmatmul.bf16.gmra.mxu0 %v7169
        %v8877 = vpop.f32.mrf.mxu0
        %v8878 = vadd.f32 %v8865, %v8877
        %v8879 = vpop.f32.mrf.mxu0
        %8880 = vdwg.mxu0
        %8881 = vmatpush.bf16.msra.mxu0 %v8272
        %8882 = vmatpush.bf16.msra.mxu0 %v8264
        %8883 = vmatpush.bf16.msra.mxu0 %v8256
        %8884 = vmatpush.bf16.msra.mxu0 %v8248
        %8885 = vmatpush.bf16.msra.mxu0 %v8240
        %8886 = vmatpush.bf16.msra.mxu0 %v8232
        %8887 = vmatpush.bf16.msra.mxu0 %v8224
        %8888 = vmatpush.bf16.msra.mxu0 %v8216
        %8889 = vmatmul.bf16.gmra.mxu0 %v7157
        %v8890 = vpop.f32.mrf.mxu0
        %v8891 = vadd.f32 %v7432, %v8890
        %v8892 = vpop.f32.mrf.mxu0
        %8893 = vdwg.mxu0
        %8894 = vmatpush.bf16.msra.mxu0 %v8336
        %8895 = vmatpush.bf16.msra.mxu0 %v8328
        %8896 = vmatpush.bf16.msra.mxu0 %v8320
        %8897 = vmatpush.bf16.msra.mxu0 %v8312
        %8898 = vmatpush.bf16.msra.mxu0 %v8304
        %8899 = vmatpush.bf16.msra.mxu0 %v8296
        %8900 = vmatpush.bf16.msra.mxu0 %v8288
        %8901 = vmatpush.bf16.msra.mxu0 %v8280
        %8902 = vmatmul.bf16.gmra.mxu0 %v7161
        %v8903 = vpop.f32.mrf.mxu0
        %v8904 = vadd.f32 %v8891, %v8903
        %v8905 = vpop.f32.mrf.mxu0
        %8906 = vdwg.mxu0
        %8907 = vmatpush.bf16.msra.mxu0 %v8400
        %8908 = vmatpush.bf16.msra.mxu0 %v8392
        %8909 = vmatpush.bf16.msra.mxu0 %v8384
        %8910 = vmatpush.bf16.msra.mxu0 %v8376
        %8911 = vmatpush.bf16.msra.mxu0 %v8368
        %8912 = vmatpush.bf16.msra.mxu0 %v8360
        %8913 = vmatpush.bf16.msra.mxu0 %v8352
        %8914 = vmatpush.bf16.msra.mxu0 %v8344
        %8915 = vmatmul.bf16.gmra.mxu0 %v7165
        %v8916 = vpop.f32.mrf.mxu0
        %v8917 = vadd.f32 %v8904, %v8916
        %v8918 = vpop.f32.mrf.mxu0
        %8919 = vdwg.mxu0
        %8920 = vmatpush.bf16.msra.mxu0 %v8464
        %8921 = vmatpush.bf16.msra.mxu0 %v8456
        %8922 = vmatpush.bf16.msra.mxu0 %v8448
        %8923 = vmatpush.bf16.msra.mxu0 %v8440
        %8924 = vmatpush.bf16.msra.mxu0 %v8432
        %8925 = vmatpush.bf16.msra.mxu0 %v8424
        %8926 = vmatpush.bf16.msra.mxu0 %v8416
        %8927 = vmatpush.bf16.msra.mxu0 %v8408
        %8928 = vmatmul.bf16.gmra.mxu0 %v7169
        %v8929 = vpop.f32.mrf.mxu0
        %v8930 = vadd.f32 %v8917, %v8929
        %v8931 = vpop.f32.mrf.mxu0
        %8932 = vdwg.mxu0
        %8933 = vmatpush.bf16.msra.mxu0 %v8273
        %8934 = vmatpush.bf16.msra.mxu0 %v8265
        %8935 = vmatpush.bf16.msra.mxu0 %v8257
        %8936 = vmatpush.bf16.msra.mxu0 %v8249
        %8937 = vmatpush.bf16.msra.mxu0 %v8241
        %8938 = vmatpush.bf16.msra.mxu0 %v8233
        %8939 = vmatpush.bf16.msra.mxu0 %v8225
        %8940 = vmatpush.bf16.msra.mxu0 %v8217
        %8941 = vmatmul.bf16.gmra.mxu0 %v7157
        %v8942 = vpop.f32.mrf.mxu0
        %v8943 = vadd.f32 %v7433, %v8942
        %v8944 = vpop.f32.mrf.mxu0
        %8945 = vdwg.mxu0
        %8946 = vmatpush.bf16.msra.mxu0 %v8337
        %8947 = vmatpush.bf16.msra.mxu0 %v8329
        %8948 = vmatpush.bf16.msra.mxu0 %v8321
        %8949 = vmatpush.bf16.msra.mxu0 %v8313
        %8950 = vmatpush.bf16.msra.mxu0 %v8305
        %8951 = vmatpush.bf16.msra.mxu0 %v8297
        %8952 = vmatpush.bf16.msra.mxu0 %v8289
        %8953 = vmatpush.bf16.msra.mxu0 %v8281
        %8954 = vmatmul.bf16.gmra.mxu0 %v7161
        %v8955 = vpop.f32.mrf.mxu0
        %v8956 = vadd.f32 %v8943, %v8955
        %v8957 = vpop.f32.mrf.mxu0
        %8958 = vdwg.mxu0
        %8959 = vmatpush.bf16.msra.mxu0 %v8401
        %8960 = vmatpush.bf16.msra.mxu0 %v8393
        %8961 = vmatpush.bf16.msra.mxu0 %v8385
        %8962 = vmatpush.bf16.msra.mxu0 %v8377
        %8963 = vmatpush.bf16.msra.mxu0 %v8369
        %8964 = vmatpush.bf16.msra.mxu0 %v8361
        %8965 = vmatpush.bf16.msra.mxu0 %v8353
        %8966 = vmatpush.bf16.msra.mxu0 %v8345
        %8967 = vmatmul.bf16.gmra.mxu0 %v7165
        %v8968 = vpop.f32.mrf.mxu0
        %v8969 = vadd.f32 %v8956, %v8968
        %v8970 = vpop.f32.mrf.mxu0
        %8971 = vdwg.mxu0
        %8972 = vmatpush.bf16.msra.mxu0 %v8465
        %8973 = vmatpush.bf16.msra.mxu0 %v8457
        %8974 = vmatpush.bf16.msra.mxu0 %v8449
        %8975 = vmatpush.bf16.msra.mxu0 %v8441
        %8976 = vmatpush.bf16.msra.mxu0 %v8433
        %8977 = vmatpush.bf16.msra.mxu0 %v8425
        %8978 = vmatpush.bf16.msra.mxu0 %v8417
        %8979 = vmatpush.bf16.msra.mxu0 %v8409
        %8980 = vmatmul.bf16.gmra.mxu0 %v7169
        %v8981 = vpop.f32.mrf.mxu0
        %v8982 = vadd.f32 %v8969, %v8981
        %v8983 = vpop.f32.mrf.mxu0
        %8984 = vdwg.mxu0
        %8985 = vmatpush.bf16.msra.mxu0 %v8274
        %8986 = vmatpush.bf16.msra.mxu0 %v8266
        %8987 = vmatpush.bf16.msra.mxu0 %v8258
        %8988 = vmatpush.bf16.msra.mxu0 %v8250
        %8989 = vmatpush.bf16.msra.mxu0 %v8242
        %8990 = vmatpush.bf16.msra.mxu0 %v8234
        %8991 = vmatpush.bf16.msra.mxu0 %v8226
        %8992 = vmatpush.bf16.msra.mxu0 %v8218
        %8993 = vmatmul.bf16.gmra.mxu0 %v7157
        %v8994 = vpop.f32.mrf.mxu0
        %v8995 = vadd.f32 %v7434, %v8994
        %v8996 = vpop.f32.mrf.mxu0
        %8997 = vdwg.mxu0
        %8998 = vmatpush.bf16.msra.mxu0 %v8338
        %8999 = vmatpush.bf16.msra.mxu0 %v8330
        %9000 = vmatpush.bf16.msra.mxu0 %v8322
        %9001 = vmatpush.bf16.msra.mxu0 %v8314
        %9002 = vmatpush.bf16.msra.mxu0 %v8306
        %9003 = vmatpush.bf16.msra.mxu0 %v8298
        %9004 = vmatpush.bf16.msra.mxu0 %v8290
        %9005 = vmatpush.bf16.msra.mxu0 %v8282
        %9006 = vmatmul.bf16.gmra.mxu0 %v7161
        %v9007 = vpop.f32.mrf.mxu0
        %v9008 = vadd.f32 %v8995, %v9007
        %v9009 = vpop.f32.mrf.mxu0
        %9010 = vdwg.mxu0
        %9011 = vmatpush.bf16.msra.mxu0 %v8402
        %9012 = vmatpush.bf16.msra.mxu0 %v8394
        %9013 = vmatpush.bf16.msra.mxu0 %v8386
        %9014 = vmatpush.bf16.msra.mxu0 %v8378
        %9015 = vmatpush.bf16.msra.mxu0 %v8370
        %9016 = vmatpush.bf16.msra.mxu0 %v8362
        %9017 = vmatpush.bf16.msra.mxu0 %v8354
        %9018 = vmatpush.bf16.msra.mxu0 %v8346
        %9019 = vmatmul.bf16.gmra.mxu0 %v7165
        %v9020 = vpop.f32.mrf.mxu0
        %v9021 = vadd.f32 %v9008, %v9020
        %v9022 = vpop.f32.mrf.mxu0
        %9023 = vdwg.mxu0
        %9024 = vmatpush.bf16.msra.mxu0 %v8466
        %9025 = vmatpush.bf16.msra.mxu0 %v8458
        %9026 = vmatpush.bf16.msra.mxu0 %v8450
        %9027 = vmatpush.bf16.msra.mxu0 %v8442
        %9028 = vmatpush.bf16.msra.mxu0 %v8434
        %9029 = vmatpush.bf16.msra.mxu0 %v8426
        %9030 = vmatpush.bf16.msra.mxu0 %v8418
        %9031 = vmatpush.bf16.msra.mxu0 %v8410
        %9032 = vmatmul.bf16.gmra.mxu0 %v7169
        %v9033 = vpop.f32.mrf.mxu0
        %v9034 = vadd.f32 %v9021, %v9033
        %v9035 = vpop.f32.mrf.mxu0
        %9036 = vdwg.mxu0
        %9037 = vmatpush.bf16.msra.mxu0 %v8275
        %9038 = vmatpush.bf16.msra.mxu0 %v8267
        %9039 = vmatpush.bf16.msra.mxu0 %v8259
        %9040 = vmatpush.bf16.msra.mxu0 %v8251
        %9041 = vmatpush.bf16.msra.mxu0 %v8243
        %9042 = vmatpush.bf16.msra.mxu0 %v8235
        %9043 = vmatpush.bf16.msra.mxu0 %v8227
        %9044 = vmatpush.bf16.msra.mxu0 %v8219
        %9045 = vmatmul.bf16.gmra.mxu0 %v7157
        %v9046 = vpop.f32.mrf.mxu0
        %v9047 = vadd.f32 %v7435, %v9046
        %v9048 = vpop.f32.mrf.mxu0
        %9049 = vdwg.mxu0
        %9050 = vmatpush.bf16.msra.mxu0 %v8339
        %9051 = vmatpush.bf16.msra.mxu0 %v8331
        %9052 = vmatpush.bf16.msra.mxu0 %v8323
        %9053 = vmatpush.bf16.msra.mxu0 %v8315
        %9054 = vmatpush.bf16.msra.mxu0 %v8307
        %9055 = vmatpush.bf16.msra.mxu0 %v8299
        %9056 = vmatpush.bf16.msra.mxu0 %v8291
        %9057 = vmatpush.bf16.msra.mxu0 %v8283
        %9058 = vmatmul.bf16.gmra.mxu0 %v7161
        %v9059 = vpop.f32.mrf.mxu0
        %v9060 = vadd.f32 %v9047, %v9059
        %v9061 = vpop.f32.mrf.mxu0
        %9062 = vdwg.mxu0
        %9063 = vmatpush.bf16.msra.mxu0 %v8403
        %9064 = vmatpush.bf16.msra.mxu0 %v8395
        %9065 = vmatpush.bf16.msra.mxu0 %v8387
        %9066 = vmatpush.bf16.msra.mxu0 %v8379
        %9067 = vmatpush.bf16.msra.mxu0 %v8371
        %9068 = vmatpush.bf16.msra.mxu0 %v8363
        %9069 = vmatpush.bf16.msra.mxu0 %v8355
        %9070 = vmatpush.bf16.msra.mxu0 %v8347
        %9071 = vmatmul.bf16.gmra.mxu0 %v7165
        %v9072 = vpop.f32.mrf.mxu0
        %v9073 = vadd.f32 %v9060, %v9072
        %v9074 = vpop.f32.mrf.mxu0
        %9075 = vdwg.mxu0
        %9076 = vmatpush.bf16.msra.mxu0 %v8467
        %9077 = vmatpush.bf16.msra.mxu0 %v8459
        %9078 = vmatpush.bf16.msra.mxu0 %v8451
        %9079 = vmatpush.bf16.msra.mxu0 %v8443
        %9080 = vmatpush.bf16.msra.mxu0 %v8435
        %9081 = vmatpush.bf16.msra.mxu0 %v8427
        %9082 = vmatpush.bf16.msra.mxu0 %v8419
        %9083 = vmatpush.bf16.msra.mxu0 %v8411
        %9084 = vmatmul.bf16.gmra.mxu0 %v7169
        %v9085 = vpop.f32.mrf.mxu0
        %v9086 = vadd.f32 %v9073, %v9085
        %v9087 = vpop.f32.mrf.mxu0
        %9088 = vdwg.mxu0
        %9089 = vmatpush.bf16.msra.mxu0 %v8276
        %9090 = vmatpush.bf16.msra.mxu0 %v8268
        %9091 = vmatpush.bf16.msra.mxu0 %v8260
        %9092 = vmatpush.bf16.msra.mxu0 %v8252
        %9093 = vmatpush.bf16.msra.mxu0 %v8244
        %9094 = vmatpush.bf16.msra.mxu0 %v8236
        %9095 = vmatpush.bf16.msra.mxu0 %v8228
        %9096 = vmatpush.bf16.msra.mxu0 %v8220
        %9097 = vmatmul.bf16.gmra.mxu0 %v7157
        %v9098 = vpop.f32.mrf.mxu0
        %v9099 = vadd.f32 %v7436, %v9098
        %v9100 = vpop.f32.mrf.mxu0
        %9101 = vdwg.mxu0
        %9102 = vmatpush.bf16.msra.mxu0 %v8340
        %9103 = vmatpush.bf16.msra.mxu0 %v8332
        %9104 = vmatpush.bf16.msra.mxu0 %v8324
        %9105 = vmatpush.bf16.msra.mxu0 %v8316
        %9106 = vmatpush.bf16.msra.mxu0 %v8308
        %9107 = vmatpush.bf16.msra.mxu0 %v8300
        %9108 = vmatpush.bf16.msra.mxu0 %v8292
        %9109 = vmatpush.bf16.msra.mxu0 %v8284
        %9110 = vmatmul.bf16.gmra.mxu0 %v7161
        %v9111 = vpop.f32.mrf.mxu0
        %v9112 = vadd.f32 %v9099, %v9111
        %v9113 = vpop.f32.mrf.mxu0
        %9114 = vdwg.mxu0
        %9115 = vmatpush.bf16.msra.mxu0 %v8404
        %9116 = vmatpush.bf16.msra.mxu0 %v8396
        %9117 = vmatpush.bf16.msra.mxu0 %v8388
        %9118 = vmatpush.bf16.msra.mxu0 %v8380
        %9119 = vmatpush.bf16.msra.mxu0 %v8372
        %9120 = vmatpush.bf16.msra.mxu0 %v8364
        %9121 = vmatpush.bf16.msra.mxu0 %v8356
        %9122 = vmatpush.bf16.msra.mxu0 %v8348
        %9123 = vmatmul.bf16.gmra.mxu0 %v7165
        %v9124 = vpop.f32.mrf.mxu0
        %v9125 = vadd.f32 %v9112, %v9124
        %v9126 = vpop.f32.mrf.mxu0
        %9127 = vdwg.mxu0
        %9128 = vmatpush.bf16.msra.mxu0 %v8468
        %9129 = vmatpush.bf16.msra.mxu0 %v8460
        %9130 = vmatpush.bf16.msra.mxu0 %v8452
        %9131 = vmatpush.bf16.msra.mxu0 %v8444
        %9132 = vmatpush.bf16.msra.mxu0 %v8436
        %9133 = vmatpush.bf16.msra.mxu0 %v8428
        %9134 = vmatpush.bf16.msra.mxu0 %v8420
        %9135 = vmatpush.bf16.msra.mxu0 %v8412
        %9136 = vmatmul.bf16.gmra.mxu0 %v7169
        %v9137 = vpop.f32.mrf.mxu0
        %v9138 = vadd.f32 %v9125, %v9137
        %v9139 = vpop.f32.mrf.mxu0
        %9140 = vdwg.mxu0
        %v9141 = vmax.f32 %v8774, 0.0
        %v9142 = vmax.f32 %v8826, 0.0
        %v9143 = vmax.f32 %v8878, 0.0
        %v9144 = vmax.f32 %v8930, 0.0
        %v9145 = vmax.f32 %v8982, 0.0
        %v9146 = vmax.f32 %v9034, 0.0
        %v9147 = vmax.f32 %v9086, 0.0
        %v9148 = vmax.f32 %v9138, 0.0
        %v9149 = vpack.c.bf16 %v9141, %v9141
        %v9150 = vpack.c.bf16 %v9142, %v9142
        %v9151 = vpack.c.bf16 %v9143, %v9143
        %v9152 = vpack.c.bf16 %v9144, %v9144
        %v9153 = vpack.c.bf16 %v9145, %v9145
        %v9154 = vpack.c.bf16 %v9146, %v9146
        %v9155 = vpack.c.bf16 %v9147, %v9147
        %v9156 = vpack.c.bf16 %v9148, %v9148
        %v9157 = vld [vmem:[%s11] sm:$0xf]
        %v9158 = vld [vmem:[%s11 + $0x4] sm:$0xf]
        %v9159 = vld [vmem:[%s11 + $0x8] sm:$0xf]
        %v9160 = vld [vmem:[%s11 + $0xc] sm:$0xf]
        %v9161 = vld [vmem:[%s11 + $0x10] sm:$0xf]
        %v9162 = vld [vmem:[%s11 + $0x14] sm:$0xf]
        %v9163 = vld [vmem:[%s11 + $0x18] sm:$0xf]
        %v9164 = vld [vmem:[%s11 + $0x1c] sm:$0xf]
        %v9165 = vld [vmem:[%s11 + $0x20] sm:$0xf]
        %v9166 = vld [vmem:[%s11 + $0x24] sm:$0xf]
        %v9167 = vld [vmem:[%s11 + $0x28] sm:$0xf]
        %v9168 = vld [vmem:[%s11 + $0x2c] sm:$0xf]
        %v9169 = vld [vmem:[%s11 + $0x30] sm:$0xf]
        %v9170 = vld [vmem:[%s11 + $0x34] sm:$0xf]
        %v9171 = vld [vmem:[%s11 + $0x38] sm:$0xf]
        %v9172 = vld [vmem:[%s11 + $0x3c] sm:$0xf]
        %v9173 = vld [vmem:[%s11 + $0x40] sm:$0xf]
        %v9174 = vld [vmem:[%s11 + $0x44] sm:$0xf]
        %v9175 = vld [vmem:[%s11 + $0x48] sm:$0xf]
        %v9176 = vld [vmem:[%s11 + $0x4c] sm:$0xf]
        %v9177 = vld [vmem:[%s11 + $0x50] sm:$0xf]
        %v9178 = vld [vmem:[%s11 + $0x54] sm:$0xf]
        %v9179 = vld [vmem:[%s11 + $0x58] sm:$0xf]
        %v9180 = vld [vmem:[%s11 + $0x5c] sm:$0xf]
        %v9181 = vld [vmem:[%s11 + $0x60] sm:$0xf]
        %v9182 = vld [vmem:[%s11 + $0x64] sm:$0xf]
        %v9183 = vld [vmem:[%s11 + $0x68] sm:$0xf]
        %v9184 = vld [vmem:[%s11 + $0x6c] sm:$0xf]
        %v9185 = vld [vmem:[%s11 + $0x70] sm:$0xf]
        %v9186 = vld [vmem:[%s11 + $0x74] sm:$0xf]
        %v9187 = vld [vmem:[%s11 + $0x78] sm:$0xf]
        %v9188 = vld [vmem:[%s11 + $0x7c] sm:$0xf]
        %v9189 = vld [vmem:[%s11 + $0x80] sm:$0xf]
        %v9190 = vld [vmem:[%s11 + $0x84] sm:$0xf]
        %v9191 = vld [vmem:[%s11 + $0x88] sm:$0xf]
        %v9192 = vld [vmem:[%s11 + $0x8c] sm:$0xf]
        %v9193 = vld [vmem:[%s11 + $0x90] sm:$0xf]
        %v9194 = vld [vmem:[%s11 + $0x94] sm:$0xf]
        %v9195 = vld [vmem:[%s11 + $0x98] sm:$0xf]
        %v9196 = vld [vmem:[%s11 + $0x9c] sm:$0xf]
        %v9197 = vld [vmem:[%s11 + $0xa0] sm:$0xf]
        %v9198 = vld [vmem:[%s11 + $0xa4] sm:$0xf]
        %v9199 = vld [vmem:[%s11 + $0xa8] sm:$0xf]
        %v9200 = vld [vmem:[%s11 + $0xac] sm:$0xf]
        %v9201 = vld [vmem:[%s11 + $0xb0] sm:$0xf]
        %v9202 = vld [vmem:[%s11 + $0xb4] sm:$0xf]
        %v9203 = vld [vmem:[%s11 + $0xb8] sm:$0xf]
        %v9204 = vld [vmem:[%s11 + $0xbc] sm:$0xf]
        %v9205 = vld [vmem:[%s11 + $0xc0] sm:$0xf]
        %v9206 = vld [vmem:[%s11 + $0xc4] sm:$0xf]
        %v9207 = vld [vmem:[%s11 + $0xc8] sm:$0xf]
        %v9208 = vld [vmem:[%s11 + $0xcc] sm:$0xf]
        %v9209 = vld [vmem:[%s11 + $0xd0] sm:$0xf]
        %v9210 = vld [vmem:[%s11 + $0xd4] sm:$0xf]
        %v9211 = vld [vmem:[%s11 + $0xd8] sm:$0xf]
        %v9212 = vld [vmem:[%s11 + $0xdc] sm:$0xf]
        %v9213 = vld [vmem:[%s11 + $0xe0] sm:$0xf]
        %v9214 = vld [vmem:[%s11 + $0xe4] sm:$0xf]
        %v9215 = vld [vmem:[%s11 + $0xe8] sm:$0xf]
        %v9216 = vld [vmem:[%s11 + $0xec] sm:$0xf]
        %v9217 = vld [vmem:[%s11 + $0xf0] sm:$0xf]
        %v9218 = vld [vmem:[%s11 + $0xf4] sm:$0xf]
        %v9219 = vld [vmem:[%s11 + $0xf8] sm:$0xf]
        %v9220 = vld [vmem:[%s11 + $0xfc] sm:$0xf]
        %v9221 = vld [vmem:[%s11 + $0x100] sm:$0xf]
        %v9222 = vld [vmem:[%s11 + $0x104] sm:$0xf]
        %v9223 = vld [vmem:[%s11 + $0x108] sm:$0xf]
        %v9224 = vld [vmem:[%s11 + $0x10c] sm:$0xf]
        %v9225 = vld [vmem:[%s11 + $0x110] sm:$0xf]
        %v9226 = vld [vmem:[%s11 + $0x114] sm:$0xf]
        %v9227 = vld [vmem:[%s11 + $0x118] sm:$0xf]
        %v9228 = vld [vmem:[%s11 + $0x11c] sm:$0xf]
        %v9229 = vld [vmem:[%s11 + $0x120] sm:$0xf]
        %v9230 = vld [vmem:[%s11 + $0x124] sm:$0xf]
        %v9231 = vld [vmem:[%s11 + $0x128] sm:$0xf]
        %v9232 = vld [vmem:[%s11 + $0x12c] sm:$0xf]
        %v9233 = vld [vmem:[%s11 + $0x130] sm:$0xf]
        %v9234 = vld [vmem:[%s11 + $0x134] sm:$0xf]
        %v9235 = vld [vmem:[%s11 + $0x138] sm:$0xf]
        %v9236 = vld [vmem:[%s11 + $0x13c] sm:$0xf]
        %v9237 = vld [vmem:[%s11 + $0x140] sm:$0xf]
        %v9238 = vld [vmem:[%s11 + $0x144] sm:$0xf]
        %v9239 = vld [vmem:[%s11 + $0x148] sm:$0xf]
        %v9240 = vld [vmem:[%s11 + $0x14c] sm:$0xf]
        %v9241 = vld [vmem:[%s11 + $0x150] sm:$0xf]
        %v9242 = vld [vmem:[%s11 + $0x154] sm:$0xf]
        %v9243 = vld [vmem:[%s11 + $0x158] sm:$0xf]
        %v9244 = vld [vmem:[%s11 + $0x15c] sm:$0xf]
        %v9245 = vld [vmem:[%s11 + $0x160] sm:$0xf]
        %v9246 = vld [vmem:[%s11 + $0x164] sm:$0xf]
        %v9247 = vld [vmem:[%s11 + $0x168] sm:$0xf]
        %v9248 = vld [vmem:[%s11 + $0x16c] sm:$0xf]
        %v9249 = vld [vmem:[%s11 + $0x170] sm:$0xf]
        %v9250 = vld [vmem:[%s11 + $0x174] sm:$0xf]
        %v9251 = vld [vmem:[%s11 + $0x178] sm:$0xf]
        %v9252 = vld [vmem:[%s11 + $0x17c] sm:$0xf]
        %v9253 = vld [vmem:[%s11 + $0x180] sm:$0xf]
        %v9254 = vld [vmem:[%s11 + $0x184] sm:$0xf]
        %v9255 = vld [vmem:[%s11 + $0x188] sm:$0xf]
        %v9256 = vld [vmem:[%s11 + $0x18c] sm:$0xf]
        %v9257 = vld [vmem:[%s11 + $0x190] sm:$0xf]
        %v9258 = vld [vmem:[%s11 + $0x194] sm:$0xf]
        %v9259 = vld [vmem:[%s11 + $0x198] sm:$0xf]
        %v9260 = vld [vmem:[%s11 + $0x19c] sm:$0xf]
        %v9261 = vld [vmem:[%s11 + $0x1a0] sm:$0xf]
        %v9262 = vld [vmem:[%s11 + $0x1a4] sm:$0xf]
        %v9263 = vld [vmem:[%s11 + $0x1a8] sm:$0xf]
        %v9264 = vld [vmem:[%s11 + $0x1ac] sm:$0xf]
        %v9265 = vld [vmem:[%s11 + $0x1b0] sm:$0xf]
        %v9266 = vld [vmem:[%s11 + $0x1b4] sm:$0xf]
        %v9267 = vld [vmem:[%s11 + $0x1b8] sm:$0xf]
        %v9268 = vld [vmem:[%s11 + $0x1bc] sm:$0xf]
        %v9269 = vld [vmem:[%s11 + $0x1c0] sm:$0xf]
        %v9270 = vld [vmem:[%s11 + $0x1c4] sm:$0xf]
        %v9271 = vld [vmem:[%s11 + $0x1c8] sm:$0xf]
        %v9272 = vld [vmem:[%s11 + $0x1cc] sm:$0xf]
        %v9273 = vld [vmem:[%s11 + $0x1d0] sm:$0xf]
        %v9274 = vld [vmem:[%s11 + $0x1d4] sm:$0xf]
        %v9275 = vld [vmem:[%s11 + $0x1d8] sm:$0xf]
        %v9276 = vld [vmem:[%s11 + $0x1dc] sm:$0xf]
        %v9277 = vld [vmem:[%s11 + $0x1e0] sm:$0xf]
        %v9278 = vld [vmem:[%s11 + $0x1e4] sm:$0xf]
        %v9279 = vld [vmem:[%s11 + $0x1e8] sm:$0xf]
        %v9280 = vld [vmem:[%s11 + $0x1ec] sm:$0xf]
        %v9281 = vld [vmem:[%s11 + $0x1f0] sm:$0xf]
        %v9282 = vld [vmem:[%s11 + $0x1f4] sm:$0xf]
        %v9283 = vld [vmem:[%s11 + $0x1f8] sm:$0xf]
        %v9284 = vld [vmem:[%s11 + $0x1fc] sm:$0xf]
        %v9285 = vld [vmem:[#allocation2] sm:$0x1]
        %v9287 = vperm.slane %v9285, 0
        %v9417 = vunpack.c.l.b16 %v9157
        %v9418 = vunpack.c.l.b16 %v9158
        %v9419 = vunpack.c.l.b16 %v9159
        %v9420 = vunpack.c.l.b16 %v9160
        %v9421 = vunpack.c.l.b16 %v9161
        %v9422 = vunpack.c.l.b16 %v9162
        %v9423 = vunpack.c.l.b16 %v9163
        %v9424 = vunpack.c.l.b16 %v9164
        %v9425 = vunpack.c.l.b16 %v9165
        %v9426 = vunpack.c.l.b16 %v9166
        %v9427 = vunpack.c.l.b16 %v9167
        %v9428 = vunpack.c.l.b16 %v9168
        %v9429 = vunpack.c.l.b16 %v9169
        %v9430 = vunpack.c.l.b16 %v9170
        %v9431 = vunpack.c.l.b16 %v9171
        %v9432 = vunpack.c.l.b16 %v9172
        %v9433 = vunpack.c.l.b16 %v9173
        %v9434 = vunpack.c.l.b16 %v9174
        %v9435 = vunpack.c.l.b16 %v9175
        %v9436 = vunpack.c.l.b16 %v9176
        %v9437 = vunpack.c.l.b16 %v9177
        %v9438 = vunpack.c.l.b16 %v9178
        %v9439 = vunpack.c.l.b16 %v9179
        %v9440 = vunpack.c.l.b16 %v9180
        %v9441 = vunpack.c.l.b16 %v9181
        %v9442 = vunpack.c.l.b16 %v9182
        %v9443 = vunpack.c.l.b16 %v9183
        %v9444 = vunpack.c.l.b16 %v9184
        %v9445 = vunpack.c.l.b16 %v9185
        %v9446 = vunpack.c.l.b16 %v9186
        %v9447 = vunpack.c.l.b16 %v9187
        %v9448 = vunpack.c.l.b16 %v9188
        %v9449 = vunpack.c.l.b16 %v9189
        %v9450 = vunpack.c.l.b16 %v9190
        %v9451 = vunpack.c.l.b16 %v9191
        %v9452 = vunpack.c.l.b16 %v9192
        %v9453 = vunpack.c.l.b16 %v9193
        %v9454 = vunpack.c.l.b16 %v9194
        %v9455 = vunpack.c.l.b16 %v9195
        %v9456 = vunpack.c.l.b16 %v9196
        %v9457 = vunpack.c.l.b16 %v9197
        %v9458 = vunpack.c.l.b16 %v9198
        %v9459 = vunpack.c.l.b16 %v9199
        %v9460 = vunpack.c.l.b16 %v9200
        %v9461 = vunpack.c.l.b16 %v9201
        %v9462 = vunpack.c.l.b16 %v9202
        %v9463 = vunpack.c.l.b16 %v9203
        %v9464 = vunpack.c.l.b16 %v9204
        %v9465 = vunpack.c.l.b16 %v9205
        %v9466 = vunpack.c.l.b16 %v9206
        %v9467 = vunpack.c.l.b16 %v9207
        %v9468 = vunpack.c.l.b16 %v9208
        %v9469 = vunpack.c.l.b16 %v9209
        %v9470 = vunpack.c.l.b16 %v9210
        %v9471 = vunpack.c.l.b16 %v9211
        %v9472 = vunpack.c.l.b16 %v9212
        %v9473 = vunpack.c.l.b16 %v9213
        %v9474 = vunpack.c.l.b16 %v9214
        %v9475 = vunpack.c.l.b16 %v9215
        %v9476 = vunpack.c.l.b16 %v9216
        %v9477 = vunpack.c.l.b16 %v9217
        %v9478 = vunpack.c.l.b16 %v9218
        %v9479 = vunpack.c.l.b16 %v9219
        %v9480 = vunpack.c.l.b16 %v9220
        %v9481 = vunpack.c.l.b16 %v9221
        %v9482 = vunpack.c.l.b16 %v9222
        %v9483 = vunpack.c.l.b16 %v9223
        %v9484 = vunpack.c.l.b16 %v9224
        %v9485 = vunpack.c.l.b16 %v9225
        %v9486 = vunpack.c.l.b16 %v9226
        %v9487 = vunpack.c.l.b16 %v9227
        %v9488 = vunpack.c.l.b16 %v9228
        %v9489 = vunpack.c.l.b16 %v9229
        %v9490 = vunpack.c.l.b16 %v9230
        %v9491 = vunpack.c.l.b16 %v9231
        %v9492 = vunpack.c.l.b16 %v9232
        %v9493 = vunpack.c.l.b16 %v9233
        %v9494 = vunpack.c.l.b16 %v9234
        %v9495 = vunpack.c.l.b16 %v9235
        %v9496 = vunpack.c.l.b16 %v9236
        %v9497 = vunpack.c.l.b16 %v9237
        %v9498 = vunpack.c.l.b16 %v9238
        %v9499 = vunpack.c.l.b16 %v9239
        %v9500 = vunpack.c.l.b16 %v9240
        %v9501 = vunpack.c.l.b16 %v9241
        %v9502 = vunpack.c.l.b16 %v9242
        %v9503 = vunpack.c.l.b16 %v9243
        %v9504 = vunpack.c.l.b16 %v9244
        %v9505 = vunpack.c.l.b16 %v9245
        %v9506 = vunpack.c.l.b16 %v9246
        %v9507 = vunpack.c.l.b16 %v9247
        %v9508 = vunpack.c.l.b16 %v9248
        %v9509 = vunpack.c.l.b16 %v9249
        %v9510 = vunpack.c.l.b16 %v9250
        %v9511 = vunpack.c.l.b16 %v9251
        %v9512 = vunpack.c.l.b16 %v9252
        %v9513 = vunpack.c.l.b16 %v9253
        %v9514 = vunpack.c.l.b16 %v9254
        %v9515 = vunpack.c.l.b16 %v9255
        %v9516 = vunpack.c.l.b16 %v9256
        %v9517 = vunpack.c.l.b16 %v9257
        %v9518 = vunpack.c.l.b16 %v9258
        %v9519 = vunpack.c.l.b16 %v9259
        %v9520 = vunpack.c.l.b16 %v9260
        %v9521 = vunpack.c.l.b16 %v9261
        %v9522 = vunpack.c.l.b16 %v9262
        %v9523 = vunpack.c.l.b16 %v9263
        %v9524 = vunpack.c.l.b16 %v9264
        %v9525 = vunpack.c.l.b16 %v9265
        %v9526 = vunpack.c.l.b16 %v9266
        %v9527 = vunpack.c.l.b16 %v9267
        %v9528 = vunpack.c.l.b16 %v9268
        %v9529 = vunpack.c.l.b16 %v9269
        %v9530 = vunpack.c.l.b16 %v9270
        %v9531 = vunpack.c.l.b16 %v9271
        %v9532 = vunpack.c.l.b16 %v9272
        %v9533 = vunpack.c.l.b16 %v9273
        %v9534 = vunpack.c.l.b16 %v9274
        %v9535 = vunpack.c.l.b16 %v9275
        %v9536 = vunpack.c.l.b16 %v9276
        %v9537 = vunpack.c.l.b16 %v9277
        %v9538 = vunpack.c.l.b16 %v9278
        %v9539 = vunpack.c.l.b16 %v9279
        %v9540 = vunpack.c.l.b16 %v9280
        %v9541 = vunpack.c.l.b16 %v9281
        %v9542 = vunpack.c.l.b16 %v9282
        %v9543 = vunpack.c.l.b16 %v9283
        %v9544 = vunpack.c.l.b16 %v9284
        %v9545 = vpack.c.b16 %v9418, %v9417
        %v9546 = vpack.c.b16 %v9420, %v9419
        %v9547 = vpack.c.b16 %v9422, %v9421
        %v9548 = vpack.c.b16 %v9424, %v9423
        %v9549 = vpack.c.b16 %v9426, %v9425
        %v9550 = vpack.c.b16 %v9428, %v9427
        %v9551 = vpack.c.b16 %v9430, %v9429
        %v9552 = vpack.c.b16 %v9432, %v9431
        %v9553 = vpack.c.b16 %v9434, %v9433
        %v9554 = vpack.c.b16 %v9436, %v9435
        %v9555 = vpack.c.b16 %v9438, %v9437
        %v9556 = vpack.c.b16 %v9440, %v9439
        %v9557 = vpack.c.b16 %v9442, %v9441
        %v9558 = vpack.c.b16 %v9444, %v9443
        %v9559 = vpack.c.b16 %v9446, %v9445
        %v9560 = vpack.c.b16 %v9448, %v9447
        %v9561 = vpack.c.b16 %v9450, %v9449
        %v9562 = vpack.c.b16 %v9452, %v9451
        %v9563 = vpack.c.b16 %v9454, %v9453
        %v9564 = vpack.c.b16 %v9456, %v9455
        %v9565 = vpack.c.b16 %v9458, %v9457
        %v9566 = vpack.c.b16 %v9460, %v9459
        %v9567 = vpack.c.b16 %v9462, %v9461
        %v9568 = vpack.c.b16 %v9464, %v9463
        %v9569 = vpack.c.b16 %v9466, %v9465
        %v9570 = vpack.c.b16 %v9468, %v9467
        %v9571 = vpack.c.b16 %v9470, %v9469
        %v9572 = vpack.c.b16 %v9472, %v9471
        %v9573 = vpack.c.b16 %v9474, %v9473
        %v9574 = vpack.c.b16 %v9476, %v9475
        %v9575 = vpack.c.b16 %v9478, %v9477
        %v9576 = vpack.c.b16 %v9480, %v9479
        %v9577 = vpack.c.b16 %v9482, %v9481
        %v9578 = vpack.c.b16 %v9484, %v9483
        %v9579 = vpack.c.b16 %v9486, %v9485
        %v9580 = vpack.c.b16 %v9488, %v9487
        %v9581 = vpack.c.b16 %v9490, %v9489
        %v9582 = vpack.c.b16 %v9492, %v9491
        %v9583 = vpack.c.b16 %v9494, %v9493
        %v9584 = vpack.c.b16 %v9496, %v9495
        %v9585 = vpack.c.b16 %v9498, %v9497
        %v9586 = vpack.c.b16 %v9500, %v9499
        %v9587 = vpack.c.b16 %v9502, %v9501
        %v9588 = vpack.c.b16 %v9504, %v9503
        %v9589 = vpack.c.b16 %v9506, %v9505
        %v9590 = vpack.c.b16 %v9508, %v9507
        %v9591 = vpack.c.b16 %v9510, %v9509
        %v9592 = vpack.c.b16 %v9512, %v9511
        %v9593 = vpack.c.b16 %v9514, %v9513
        %v9594 = vpack.c.b16 %v9516, %v9515
        %v9595 = vpack.c.b16 %v9518, %v9517
        %v9596 = vpack.c.b16 %v9520, %v9519
        %v9597 = vpack.c.b16 %v9522, %v9521
        %v9598 = vpack.c.b16 %v9524, %v9523
        %v9599 = vpack.c.b16 %v9526, %v9525
        %v9600 = vpack.c.b16 %v9528, %v9527
        %v9601 = vpack.c.b16 %v9530, %v9529
        %v9602 = vpack.c.b16 %v9532, %v9531
        %v9603 = vpack.c.b16 %v9534, %v9533
        %v9604 = vpack.c.b16 %v9536, %v9535
        %v9605 = vpack.c.b16 %v9538, %v9537
        %v9606 = vpack.c.b16 %v9540, %v9539
        %v9607 = vpack.c.b16 %v9542, %v9541
        %v9608 = vpack.c.b16 %v9544, %v9543
        %9673 = vmatpush.bf16.msra.mxu0 %v9552
        %9674 = vmatpush.bf16.msra.mxu0 %v9551
        %9675 = vmatpush.bf16.msra.mxu0 %v9550
        %9676 = vmatpush.bf16.msra.mxu0 %v9549
        %9677 = vmatpush.bf16.msra.mxu0 %v9548
        %9678 = vmatpush.bf16.msra.mxu0 %v9547
        %9679 = vmatpush.bf16.msra.mxu0 %v9546
        %9680 = vmatpush.bf16.msra.mxu0 %v9545
        %9681 = vmatmul.bf16.gmra.mxu0 %v9149
        %v9682 = vpop.f32.mrf.mxu0
        %v9683 = vadd.f32 %v9287, %v9682
        %v9684 = vpop.f32.mrf.mxu0
        %9685 = vdwg.mxu0
        %9686 = vmatpush.bf16.msra.mxu0 %v9560
        %9687 = vmatpush.bf16.msra.mxu0 %v9559
        %9688 = vmatpush.bf16.msra.mxu0 %v9558
        %9689 = vmatpush.bf16.msra.mxu0 %v9557
        %9690 = vmatpush.bf16.msra.mxu0 %v9556
        %9691 = vmatpush.bf16.msra.mxu0 %v9555
        %9692 = vmatpush.bf16.msra.mxu0 %v9554
        %9693 = vmatpush.bf16.msra.mxu0 %v9553
        %9694 = vmatmul.bf16.gmra.mxu0 %v9150
        %v9695 = vpop.f32.mrf.mxu0
        %v9696 = vadd.f32 %v9683, %v9695
        %v9697 = vpop.f32.mrf.mxu0
        %9698 = vdwg.mxu0
        %9699 = vmatpush.bf16.msra.mxu0 %v9568
        %9700 = vmatpush.bf16.msra.mxu0 %v9567
        %9701 = vmatpush.bf16.msra.mxu0 %v9566
        %9702 = vmatpush.bf16.msra.mxu0 %v9565
        %9703 = vmatpush.bf16.msra.mxu0 %v9564
        %9704 = vmatpush.bf16.msra.mxu0 %v9563
        %9705 = vmatpush.bf16.msra.mxu0 %v9562
        %9706 = vmatpush.bf16.msra.mxu0 %v9561
        %9707 = vmatmul.bf16.gmra.mxu0 %v9151
        %v9708 = vpop.f32.mrf.mxu0
        %v9709 = vadd.f32 %v9696, %v9708
        %v9710 = vpop.f32.mrf.mxu0
        %9711 = vdwg.mxu0
        %9712 = vmatpush.bf16.msra.mxu0 %v9576
        %9713 = vmatpush.bf16.msra.mxu0 %v9575
        %9714 = vmatpush.bf16.msra.mxu0 %v9574
        %9715 = vmatpush.bf16.msra.mxu0 %v9573
        %9716 = vmatpush.bf16.msra.mxu0 %v9572
        %9717 = vmatpush.bf16.msra.mxu0 %v9571
        %9718 = vmatpush.bf16.msra.mxu0 %v9570
        %9719 = vmatpush.bf16.msra.mxu0 %v9569
        %9720 = vmatmul.bf16.gmra.mxu0 %v9152
        %v9721 = vpop.f32.mrf.mxu0
        %v9722 = vadd.f32 %v9709, %v9721
        %v9723 = vpop.f32.mrf.mxu0
        %9724 = vdwg.mxu0
        %9725 = vmatpush.bf16.msra.mxu0 %v9584
        %9726 = vmatpush.bf16.msra.mxu0 %v9583
        %9727 = vmatpush.bf16.msra.mxu0 %v9582
        %9728 = vmatpush.bf16.msra.mxu0 %v9581
        %9729 = vmatpush.bf16.msra.mxu0 %v9580
        %9730 = vmatpush.bf16.msra.mxu0 %v9579
        %9731 = vmatpush.bf16.msra.mxu0 %v9578
        %9732 = vmatpush.bf16.msra.mxu0 %v9577
        %9733 = vmatmul.bf16.gmra.mxu0 %v9153
        %v9734 = vpop.f32.mrf.mxu0
        %v9735 = vadd.f32 %v9722, %v9734
        %v9736 = vpop.f32.mrf.mxu0
        %9737 = vdwg.mxu0
        %9738 = vmatpush.bf16.msra.mxu0 %v9592
        %9739 = vmatpush.bf16.msra.mxu0 %v9591
        %9740 = vmatpush.bf16.msra.mxu0 %v9590
        %9741 = vmatpush.bf16.msra.mxu0 %v9589
        %9742 = vmatpush.bf16.msra.mxu0 %v9588
        %9743 = vmatpush.bf16.msra.mxu0 %v9587
        %9744 = vmatpush.bf16.msra.mxu0 %v9586
        %9745 = vmatpush.bf16.msra.mxu0 %v9585
        %9746 = vmatmul.bf16.gmra.mxu0 %v9154
        %v9747 = vpop.f32.mrf.mxu0
        %v9748 = vadd.f32 %v9735, %v9747
        %v9749 = vpop.f32.mrf.mxu0
        %9750 = vdwg.mxu0
        %9751 = vmatpush.bf16.msra.mxu0 %v9600
        %9752 = vmatpush.bf16.msra.mxu0 %v9599
        %9753 = vmatpush.bf16.msra.mxu0 %v9598
        %9754 = vmatpush.bf16.msra.mxu0 %v9597
        %9755 = vmatpush.bf16.msra.mxu0 %v9596
        %9756 = vmatpush.bf16.msra.mxu0 %v9595
        %9757 = vmatpush.bf16.msra.mxu0 %v9594
        %9758 = vmatpush.bf16.msra.mxu0 %v9593
        %9759 = vmatmul.bf16.gmra.mxu0 %v9155
        %v9760 = vpop.f32.mrf.mxu0
        %v9761 = vadd.f32 %v9748, %v9760
        %v9762 = vpop.f32.mrf.mxu0
        %9763 = vdwg.mxu0
        %9764 = vmatpush.bf16.msra.mxu0 %v9608
        %9765 = vmatpush.bf16.msra.mxu0 %v9607
        %9766 = vmatpush.bf16.msra.mxu0 %v9606
        %9767 = vmatpush.bf16.msra.mxu0 %v9605
        %9768 = vmatpush.bf16.msra.mxu0 %v9604
        %9769 = vmatpush.bf16.msra.mxu0 %v9603
        %9770 = vmatpush.bf16.msra.mxu0 %v9602
        %9771 = vmatpush.bf16.msra.mxu0 %v9601
        %9772 = vmatmul.bf16.gmra.mxu0 %v9156
        %v9773 = vpop.f32.mrf.mxu0
        %v9774 = vadd.f32 %v9761, %v9773
        %v9775 = vpop.f32.mrf.mxu0
        %9776 = vdwg.mxu0
        %vm9777 = vcmask 7168
        %9778 = vst.msk [vmem:[%s492] sm:$0xff] %vm9777, %v9774
        %p9779 = scmp.lt.s32.totalorder %s28, 1
        %s9780 = scalar_select %p9779, %s28, 1
        %s9781 = smul.addr %s9780, 8
        %s9782 = scalar_lea.vmem %s13, %s9781
        // Predicated region
        $region85: #{noise_detector_forward.1} parent=71 // pred_check
          %p9783 = pneg %p324
        $region86: #{noise_detector_forward.1} parent=71 // pred_check_branch
          %9785 = sbr.rel (%p9783) target = $region88
        $region87: #{noise_detector_forward.1} parent=71 // pred_region
          _
        $region88: #{noise_detector_forward.1} parent=71 // pred_fallthru
          _
      $region72: #{noise_detector_forward.1} parent=5 // pred_fallthru
        _
      %p9786 = scmp.le.s32.totalorder 2, %s23
      // Predicated region
      $region89: #{noise_detector_forward.1} parent=5 // pred_check
        %p9787 = pneg %p9786
      $region90: #{noise_detector_forward.1} parent=5 // pred_check_branch
        %9789 = sbr.rel (%p9787) target = $region92
      $region91: #{noise_detector_forward.1} parent=5 // pred_region
        %s9790 = ssub.s32 %s23, 2
        // Predicated region
        $region93: #{noise_detector_forward.1} parent=91 // pred_check
          %p9791 = pneg %p330
        $region94: #{noise_detector_forward.1} parent=91 // pred_check_branch
          %9793 = sbr.rel (%p9791) target = $region96
        $region95: #{noise_detector_forward.1} parent=91 // pred_region
          %p9794 = scmp.lt.s32.totalorder %s29, 1
          %s9795 = scalar_select %p9794, %s29, 1
          %s9796 = smul.addr %s9795, 8
          %s9797 = scalar_lea.vmem %s13, %s9796
        $region96: #{noise_detector_forward.1} parent=91 // pred_fallthru
          _
      $region92: #{noise_detector_forward.1} parent=5 // pred_fallthru
        _
    $region6: #{noise_detector_forward.1} parent=1 // loop_footer
      %s27 = sadd.s32 1, %s23
    $region7: #{noise_detector_forward.1} parent=1 // loop_footer_branch
      %22 = sbr.rel target = $region3
    $region8: #{noise_detector_forward.1} parent=1 // loop_exit
      _
    %9798 = vsyncpa [#allocation4], 1
    %s9799 = scalar_lea.sflag [#allocation4], 1
    %9800 = vsyncpa %s9799, 1
    %9801 = vsyncpa [#allocation6], 1

</llo_original>
